<compile_context>
chip_gen: v6e
topology: v6e:2x2x1
jax: 0.10.0
libtpu: 0.0.40
codegen_flags: <defaults>
</compile_context>

<pallas_src>
import jax
import jax.numpy as jnp
from jax.experimental import pallas as pl
from jax.experimental.pallas import tpu as pltpu

# --- small, synthetic stand-in sizes for resnet50 / BYOL projector ---
B      = 8       # batch (>= 8 so matmul M / BN stats fill a sublane tile)
C_IN   = 3       # RGB input, like resnet50
H_SP   = 16
W_SP   = 16
C_FEAT = 128     # stand-in for resnet50's 2048-dim avgpool feature (layer=-2)
HIDDEN = 512     # stand-in for projection_hidden_size = 4096
PROJ   = 256     # projection_size = 256
BN_EPS = 1e-5


def _make_fused_kernel(hw):
    """Fused backbone (avgpool hook) + SimSiamMLP projector kernel."""
    inv_hw = 1.0 / float(hw)

    def kernel(x_ref, wc_ref, w1_ref, g1_ref, b1_ref,
               w2_ref, g2_ref, b2_ref, w3_ref,
               proj_ref, rep_ref):
        k = pl.program_id(0)
        nb, cin, t = x_ref.shape          # (B, C_in, tile_hw), pixels on lanes
        cfeat = wc_ref.shape[0]

        @pl.when(k == 0)
        def _init():
            rep_ref[...] = jnp.zeros_like(rep_ref)

        # ---- backbone pixel tile -------------------------------------------
        # 1x1 conv over C_in(=3) as f32 VPU outer-product FMAs (column of the
        # conv weight x lane-row of pixels), chunked over <=128 lanes so the
        # live f32 working set stays well under the 64-vreg register file.
        # The per-image spatial partial sum is an f32 MXU dot with a ones-row,
        # which yields a lane-dense (1, C_feat) row with no transposes; it is
        # accumulated straight into the resident representation block.
        chunk = 128 if t % 128 == 0 else t
        nchunks = t // chunk
        ones_row = jnp.ones((1, chunk), jnp.float32)

        for bi in range(nb):                       # static unroll over batch
            row = jnp.zeros((1, cfeat), jnp.float32)
            for j in range(nchunks):               # static <=128-lane chunks
                lo = j * chunk
                y = None
                for c in range(cin):               # static C_in (=3)
                    term = wc_ref[:, c:c + 1] * x_ref[bi, c:c + 1, lo:lo + chunk]
                    y = term if y is None else y + term
                y = jnp.maximum(y, 0.0)            # (C_feat, chunk) f32
                row = row + jax.lax.dot_general(   # spatial sum on the MXU
                    ones_row, y, (((1,), (1,)), ((), ())),
                    preferred_element_type=jnp.float32)
            rep_ref[bi:bi + 1, :] += row

        # ---- last pixel tile: finish the mean (avgpool + flatten hook) and
        #      run the fused SimSiamMLP projector entirely in VMEM. -----------
        @pl.when(k == pl.num_programs(0) - 1)
        def _finalize():
            rep_ref[...] = rep_ref[...] * inv_hw
            rep = rep_ref[...]

            def bn(z, gamma=None, beta=None):      # batch stats, biased var
                mu = jnp.mean(z, axis=0, keepdims=True)
                var = jnp.mean((z - mu) * (z - mu), axis=0, keepdims=True)
                zn = (z - mu) * jax.lax.rsqrt(var + BN_EPS)
                if gamma is not None:
                    zn = zn * gamma + beta
                return zn

            # Native bf16 x bf16 MXU dots with f32 accumulation (no f32 weight
            # upcast); BN / ReLU stay in f32.
            z = jnp.dot(rep.astype(jnp.bfloat16), w1_ref[...],
                        preferred_element_type=jnp.float32)
            z = jnp.maximum(bn(z, g1_ref[...], b1_ref[...]), 0.0)
            z = jnp.dot(z.astype(jnp.bfloat16), w2_ref[...],
                        preferred_element_type=jnp.float32)
            z = jnp.maximum(bn(z, g2_ref[...], b2_ref[...]), 0.0)
            z = jnp.dot(z.astype(jnp.bfloat16), w3_ref[...],
                        preferred_element_type=jnp.float32)
            proj_ref[...] = bn(z)                  # final BN: affine=False

    return kernel


def net_wrapper_forward(x_nchw, w_conv, params, return_projection=True,
                        return_representation=False):
    """Mirrors NetWrapper.forward(x).

    x_nchw : (B, C_in, H, W) float32  -- same layout the PyTorch module takes.
    w_conv : (C_feat, C_in) float32   -- stand-in trunk 1x1 conv weight
                                         (PyTorch conv (out_ch, in_ch) layout).
    params : dict with w1/w2/w3 (bf16, stored transposed: (in, out)) and
             g1/b1/g2/b2 ((1, hidden) f32) for the SimSiamMLP projector.
    """
    assert return_projection or return_representation, \
        'must return at least one between projection and representation'

    b, c_in, h, w = x_nchw.shape
    hw = h * w
    c_feat = w_conv.shape[0]
    hidden = params["w1"].shape[1]
    proj = params["w3"].shape[1]

    # NCHW -> (B, C_in, H*W): layout-preserving flatten (no transpose, no pad);
    # the pixel axis maps to lanes, so the streamed DMA is lane-dense.
    x3 = x_nchw.reshape(b, c_in, hw)

    # Adaptive spatial tiling (see header).
    if hw > 4096 and hw % 512 == 0:
        tile_hw = 512
    else:
        tile_hw = hw
    grid = (hw // tile_hw,)

    def _const(shape):
        # Fetched once, reused across all pixel tiles: single-buffer these
        # blocks (default double buffering wastes VMEM and is a hard blocker
        # for real hidden=4096 weights on v7x's 64 MiB VMEM).
        return pl.BlockSpec(shape, lambda k: (0,) * len(shape),
                            pipeline_mode=pl.Buffered(1))

    in_specs = [
        pl.BlockSpec((b, c_in, tile_hw), lambda k: (0, 0, k)),  # streamed pixels
        _const((c_feat, c_in)),      # trunk 1x1 conv weight (out, in)
        _const((c_feat, hidden)),    # w1 (bf16)
        _const((1, hidden)),         # g1
        _const((1, hidden)),         # b1
        _const((hidden, hidden)),    # w2 (bf16)
        _const((1, hidden)),         # g2
        _const((1, hidden)),         # b2
        _const((hidden, proj)),      # w3 (bf16)
    ]
    out_specs = (
        _const((b, proj)),           # projection (written on the last tile)
        _const((b, c_feat)),         # representation (spatial-sum accumulator)
    )
    out_shape = (
        jax.ShapeDtypeStruct((b, proj), jnp.float32),
        jax.ShapeDtypeStruct((b, c_feat), jnp.float32),
    )

    projection, representation = pl.pallas_call(
        _make_fused_kernel(hw),
        grid=grid,
        in_specs=in_specs,
        out_specs=out_specs,
        out_shape=out_shape,
        compiler_params=pltpu.CompilerParams(
            dimension_semantics=("arbitrary",),      # spatial reduction axis
            vmem_limit_bytes=32 * 1024 * 1024),      # fits v7x 32 MiB default
    )(x3, w_conv, params["w1"], params["g1"], params["b1"],
      params["w2"], params["g2"], params["b2"], params["w3"])

    if not return_projection:
        return representation
    if not return_representation:
        return projection
    return projection, representation


# --- pure-JAX reference (same numeric recipe) for a sanity check ------------
def _reference(x_nchw, w_conv, p):
    y = jnp.maximum(
        jnp.einsum("bchw,fc->bfhw", x_nchw, w_conv,
                   precision=jax.lax.Precision.HIGHEST), 0.0)
    rep = jnp.mean(y, axis=(2, 3))                       # avgpool + flatten

    def bn(z, g=None, be=None):
        mu = jnp.mean(z, axis=0, keepdims=True)
        var = jnp.mean((z - mu) ** 2, axis=0, keepdims=True)
        zn = (z - mu) * jax.lax.rsqrt(var + BN_EPS)
        return zn * g + be if g is not None else zn

    z = jnp.dot(rep.astype(jnp.bfloat16), p["w1"], preferred_element_type=jnp.float32)
    z = jnp.maximum(bn(z, p["g1"], p["b1"]), 0.0)
    z = jnp.dot(z.astype(jnp.bfloat16), p["w2"], preferred_element_type=jnp.float32)
    z = jnp.maximum(bn(z, p["g2"], p["b2"]), 0.0)
    z = jnp.dot(z.astype(jnp.bfloat16), p["w3"], preferred_element_type=jnp.float32)
    return bn(z), rep


if __name__ == "__main__":
    key = jax.random.PRNGKey(0)
    kx, kc, k1, k2, k3 = jax.random.split(key, 5)

    # NCHW input, exactly like the PyTorch module.
    x = jax.random.normal(kx, (B, C_IN, H_SP, W_SP), jnp.float32)
    w_conv = jax.random.normal(kc, (C_FEAT, C_IN), jnp.float32) * 0.2

    params = dict(
        w1=(jax.random.normal(k1, (C_FEAT, HIDDEN), jnp.float32)
            * 0.1).astype(jnp.bfloat16),
        g1=jnp.ones((1, HIDDEN), jnp.float32),
        b1=jnp.zeros((1, HIDDEN), jnp.float32),
        w2=(jax.random.normal(k2, (HIDDEN, HIDDEN), jnp.float32)
            * 0.05).astype(jnp.bfloat16),
        g2=jnp.ones((1, HIDDEN), jnp.float32),
        b2=jnp.zeros((1, HIDDEN), jnp.float32),
        w3=(jax.random.normal(k3, (HIDDEN, PROJ), jnp.float32)
            * 0.05).astype(jnp.bfloat16),
    )

    projection, representation = net_wrapper_forward(
        x, w_conv, params, return_projection=True, return_representation=True)
    jax.block_until_ready(projection)

    ref_proj, ref_rep = _reference(x, w_conv, params)
    assert representation.shape == (B, C_FEAT)
    assert projection.shape == (B, PROJ)
    assert jnp.allclose(representation, ref_rep, atol=1e-3, rtol=1e-3), \
        float(jnp.max(jnp.abs(representation - ref_rep)))
    # bf16 MXU dots + BN amplification vs the XLA reference: keep a tolerance
    # that is loose to rounding-order effects but tight against real bugs.
    assert jnp.allclose(projection, ref_proj, atol=1e-2, rtol=1e-2), \
        float(jnp.max(jnp.abs(projection - ref_proj)))

    print("KERNEL_OK")
</pallas_src>

<mosaic_0001>
module attributes {stable_mosaic.version = 11 : i64} {
  func.func @kernel(%arg0: i32, %arg1: memref<8x3x256xf32, #tpu.memory_space<vmem>>, %arg2: memref<128x3xf32, #tpu.memory_space<vmem>>, %arg3: memref<128x512xbf16, #tpu.memory_space<vmem>>, %arg4: memref<1x512xf32, #tpu.memory_space<vmem>>, %arg5: memref<1x512xf32, #tpu.memory_space<vmem>>, %arg6: memref<512x512xbf16, #tpu.memory_space<vmem>>, %arg7: memref<1x512xf32, #tpu.memory_space<vmem>>, %arg8: memref<1x512xf32, #tpu.memory_space<vmem>>, %arg9: memref<512x256xbf16, #tpu.memory_space<vmem>>, %arg10: memref<8x256xf32, #tpu.memory_space<vmem>>, %arg11: memref<8x128xf32, #tpu.memory_space<vmem>>) attributes {dimension_semantics = [#tpu.dimension_semantics<arbitrary>], iteration_bounds = array<i64: 1>, scalar_prefetch = 0 : i64, scratch_operands = 0 : i64, tpu.core_type = #tpu.core_type<tc>, window_params = [{transform_indices = @transform_0, window_bounds = array<i64: 8, 3, 256>}, {pipeline_mode = #tpu.pipeline_mode<synchronous>, transform_indices = @transform_1, window_bounds = array<i64: 128, 3>}, {pipeline_mode = #tpu.pipeline_mode<synchronous>, transform_indices = @transform_2, window_bounds = array<i64: 128, 512>}, {pipeline_mode = #tpu.pipeline_mode<synchronous>, transform_indices = @transform_3, window_bounds = array<i64: 1, 512>}, {pipeline_mode = #tpu.pipeline_mode<synchronous>, transform_indices = @transform_4, window_bounds = array<i64: 1, 512>}, {pipeline_mode = #tpu.pipeline_mode<synchronous>, transform_indices = @transform_5, window_bounds = array<i64: 512, 512>}, {pipeline_mode = #tpu.pipeline_mode<synchronous>, transform_indices = @transform_6, window_bounds = array<i64: 1, 512>}, {pipeline_mode = #tpu.pipeline_mode<synchronous>, transform_indices = @transform_7, window_bounds = array<i64: 1, 512>}, {pipeline_mode = #tpu.pipeline_mode<synchronous>, transform_indices = @transform_8, window_bounds = array<i64: 512, 256>}, {pipeline_mode = #tpu.pipeline_mode<synchronous>, transform_indices = @transform_9, window_bounds = array<i64: 8, 256>}, {pipeline_mode = #tpu.pipeline_mode<synchronous>, transform_indices = @transform_10, window_bounds = array<i64: 8, 128>}]} {
    %c0_i32 = arith.constant 0 : i32
    %0 = arith.cmpi eq, %arg0, %c0_i32 : i32
    %1 = arith.extui %0 : i1 to i32
    %c0_i32_0 = arith.constant 0 : i32
    %2 = arith.cmpi ne, %1, %c0_i32_0 : i32
    scf.if %2 {
      %cst_306 = arith.constant 0.000000e+00 : f32
      %423 = vector.broadcast %cst_306 : f32 to vector<8x128xf32>
      %c0_307 = arith.constant 0 : index
      %c0_308 = arith.constant 0 : index
      %424 = vector.load %arg11[%c0_307, %c0_308] : memref<8x128xf32, #tpu.memory_space<vmem>>, vector<8x128xf32>
      tpu.vector_store %arg11[%c0_307, %c0_308], %423 {strides = array<i32>} : memref<8x128xf32, #tpu.memory_space<vmem>>, vector<8x128xf32>,
    } else {
    }
    %cst = arith.constant 1.000000e+00 : f32
    %3 = vector.broadcast %cst : f32 to vector<1x128xf32>
    %cst_1 = arith.constant 0.000000e+00 : f32
    %4 = vector.broadcast %cst_1 : f32 to vector<1x128xf32>
    %c0 = arith.constant 0 : index
    %c0_2 = arith.constant 0 : index
    %5 = vector.load %arg2[%c0, %c0_2] : memref<128x3xf32, #tpu.memory_space<vmem>>, vector<128x1xf32>
    %c0_3 = arith.constant 0 : index
    %c0_4 = arith.constant 0 : index
    %c0_5 = arith.constant 0 : index
    %6 = vector.load %arg1[%c0_3, %c0_4, %c0_5] : memref<8x3x256xf32, #tpu.memory_space<vmem>>, vector<1x1x128xf32>
    %7 = vector.shape_cast %6 : vector<1x1x128xf32> to vector<1x128xf32>
    %8 = vector.broadcast %5 : vector<128x1xf32> to vector<128x128xf32>
    %9 = vector.broadcast %7 : vector<1x128xf32> to vector<128x128xf32>
    %10 = arith.mulf %8, %9 : vector<128x128xf32>
    %c0_6 = arith.constant 0 : index
    %c1 = arith.constant 1 : index
    %11 = vector.load %arg2[%c0_6, %c1] : memref<128x3xf32, #tpu.memory_space<vmem>>, vector<128x1xf32>
    %c0_7 = arith.constant 0 : index
    %c1_8 = arith.constant 1 : index
    %c0_9 = arith.constant 0 : index
    %12 = vector.load %arg1[%c0_7, %c1_8, %c0_9] : memref<8x3x256xf32, #tpu.memory_space<vmem>>, vector<1x1x128xf32>
    %13 = vector.shape_cast %12 : vector<1x1x128xf32> to vector<1x128xf32>
    %14 = vector.broadcast %11 : vector<128x1xf32> to vector<128x128xf32>
    %15 = vector.broadcast %13 : vector<1x128xf32> to vector<128x128xf32>
    %16 = arith.mulf %14, %15 : vector<128x128xf32>
    %17 = arith.addf %10, %16 : vector<128x128xf32>
    %c0_10 = arith.constant 0 : index
    %c2 = arith.constant 2 : index
    %18 = vector.load %arg2[%c0_10, %c2] : memref<128x3xf32, #tpu.memory_space<vmem>>, vector<128x1xf32>
    %c0_11 = arith.constant 0 : index
    %c2_12 = arith.constant 2 : index
    %c0_13 = arith.constant 0 : index
    %19 = vector.load %arg1[%c0_11, %c2_12, %c0_13] : memref<8x3x256xf32, #tpu.memory_space<vmem>>, vector<1x1x128xf32>
    %20 = vector.shape_cast %19 : vector<1x1x128xf32> to vector<1x128xf32>
    %21 = vector.broadcast %18 : vector<128x1xf32> to vector<128x128xf32>
    %22 = vector.broadcast %20 : vector<1x128xf32> to vector<128x128xf32>
    %23 = arith.mulf %21, %22 : vector<128x128xf32>
    %24 = arith.addf %17, %23 : vector<128x128xf32>
    %cst_14 = arith.constant 0.000000e+00 : f32
    %25 = vector.broadcast %cst_14 : f32 to vector<128x128xf32>
    %26 = arith.maximumf %24, %25 : vector<128x128xf32>
    %cst_15 = arith.constant dense<0.000000e+00> : vector<1x128xf32>
    %27 = tpu.matmul %3, %26, %cst_15 {dimension_numbers = #tpu.dot_dimension_numbers<[1], [1], [0], [0], [0, 0, 1, 0], [], []>} : vector<1x128xf32>, vector<128x128xf32>, vector<1x128xf32> -> vector<1x128xf32>
    %28 = arith.addf %4, %27 : vector<1x128xf32>
    %c0_16 = arith.constant 0 : index
    %c0_17 = arith.constant 0 : index
    %29 = vector.load %arg2[%c0_16, %c0_17] : memref<128x3xf32, #tpu.memory_space<vmem>>, vector<128x1xf32>
    %c0_18 = arith.constant 0 : index
    %c0_19 = arith.constant 0 : index
    %c128 = arith.constant 128 : index
    %30 = vector.load %arg1[%c0_18, %c0_19, %c128] : memref<8x3x256xf32, #tpu.memory_space<vmem>>, vector<1x1x128xf32>
    %31 = vector.shape_cast %30 : vector<1x1x128xf32> to vector<1x128xf32>
    %32 = vector.broadcast %29 : vector<128x1xf32> to vector<128x128xf32>
    %33 = vector.broadcast %31 : vector<1x128xf32> to vector<128x128xf32>
    %34 = arith.mulf %32, %33 : vector<128x128xf32>
    %c0_20 = arith.constant 0 : index
    %c1_21 = arith.constant 1 : index
    %35 = vector.load %arg2[%c0_20, %c1_21] : memref<128x3xf32, #tpu.memory_space<vmem>>, vector<128x1xf32>
    %c0_22 = arith.constant 0 : index
    %c1_23 = arith.constant 1 : index
    %c128_24 = arith.constant 128 : index
    %36 = vector.load %arg1[%c0_22, %c1_23, %c128_24] : memref<8x3x256xf32, #tpu.memory_space<vmem>>, vector<1x1x128xf32>
    %37 = vector.shape_cast %36 : vector<1x1x128xf32> to vector<1x128xf32>
    %38 = vector.broadcast %35 : vector<128x1xf32> to vector<128x128xf32>
    %39 = vector.broadcast %37 : vector<1x128xf32> to vector<128x128xf32>
    %40 = arith.mulf %38, %39 : vector<128x128xf32>
    %41 = arith.addf %34, %40 : vector<128x128xf32>
    %c0_25 = arith.constant 0 : index
    %c2_26 = arith.constant 2 : index
    %42 = vector.load %arg2[%c0_25, %c2_26] : memref<128x3xf32, #tpu.memory_space<vmem>>, vector<128x1xf32>
    %c0_27 = arith.constant 0 : index
    %c2_28 = arith.constant 2 : index
    %c128_29 = arith.constant 128 : index
    %43 = vector.load %arg1[%c0_27, %c2_28, %c128_29] : memref<8x3x256xf32, #tpu.memory_space<vmem>>, vector<1x1x128xf32>
    %44 = vector.shape_cast %43 : vector<1x1x128xf32> to vector<1x128xf32>
    %45 = vector.broadcast %42 : vector<128x1xf32> to vector<128x128xf32>
    %46 = vector.broadcast %44 : vector<1x128xf32> to vector<128x128xf32>
    %47 = arith.mulf %45, %46 : vector<128x128xf32>
    %48 = arith.addf %41, %47 : vector<128x128xf32>
    %cst_30 = arith.constant 0.000000e+00 : f32
    %49 = vector.broadcast %cst_30 : f32 to vector<128x128xf32>
    %50 = arith.maximumf %48, %49 : vector<128x128xf32>
    %cst_31 = arith.constant dense<0.000000e+00> : vector<1x128xf32>
    %51 = tpu.matmul %3, %50, %cst_31 {dimension_numbers = #tpu.dot_dimension_numbers<[1], [1], [0], [0], [0, 0, 1, 0], [], []>} : vector<1x128xf32>, vector<128x128xf32>, vector<1x128xf32> -> vector<1x128xf32>
    %52 = arith.addf %28, %51 : vector<1x128xf32>
    %c0_32 = arith.constant 0 : index
    %c0_33 = arith.constant 0 : index
    %53 = vector.load %arg11[%c0_32, %c0_33] : memref<8x128xf32, #tpu.memory_space<vmem>>, vector<1x128xf32>
    %54 = arith.addf %53, %52 : vector<1x128xf32>
    %c0_34 = arith.constant 0 : index
    %c0_35 = arith.constant 0 : index
    %55 = vector.load %arg11[%c0_34, %c0_35] : memref<8x128xf32, #tpu.memory_space<vmem>>, vector<1x128xf32>
    tpu.vector_store %arg11[%c0_34, %c0_35], %54 {strides = array<i32>} : memref<8x128xf32, #tpu.memory_space<vmem>>, vector<1x128xf32>,
    %cst_36 = arith.constant 0.000000e+00 : f32
    %56 = vector.broadcast %cst_36 : f32 to vector<1x128xf32>
    %c0_37 = arith.constant 0 : index
    %c0_38 = arith.constant 0 : index
    %57 = vector.load %arg2[%c0_37, %c0_38] : memref<128x3xf32, #tpu.memory_space<vmem>>, vector<128x1xf32>
    %c1_39 = arith.constant 1 : index
    %c0_40 = arith.constant 0 : index
    %c0_41 = arith.constant 0 : index
    %58 = vector.load %arg1[%c1_39, %c0_40, %c0_41] : memref<8x3x256xf32, #tpu.memory_space<vmem>>, vector<1x1x128xf32>
    %59 = vector.shape_cast %58 : vector<1x1x128xf32> to vector<1x128xf32>
    %60 = vector.broadcast %57 : vector<128x1xf32> to vector<128x128xf32>
    %61 = vector.broadcast %59 : vector<1x128xf32> to vector<128x128xf32>
    %62 = arith.mulf %60, %61 : vector<128x128xf32>
    %c0_42 = arith.constant 0 : index
    %c1_43 = arith.constant 1 : index
    %63 = vector.load %arg2[%c0_42, %c1_43] : memref<128x3xf32, #tpu.memory_space<vmem>>, vector<128x1xf32>
    %c1_44 = arith.constant 1 : index
    %c1_45 = arith.constant 1 : index
    %c0_46 = arith.constant 0 : index
    %64 = vector.load %arg1[%c1_44, %c1_45, %c0_46] : memref<8x3x256xf32, #tpu.memory_space<vmem>>, vector<1x1x128xf32>
    %65 = vector.shape_cast %64 : vector<1x1x128xf32> to vector<1x128xf32>
    %66 = vector.broadcast %63 : vector<128x1xf32> to vector<128x128xf32>
    %67 = vector.broadcast %65 : vector<1x128xf32> to vector<128x128xf32>
    %68 = arith.mulf %66, %67 : vector<128x128xf32>
    %69 = arith.addf %62, %68 : vector<128x128xf32>
    %c0_47 = arith.constant 0 : index
    %c2_48 = arith.constant 2 : index
    %70 = vector.load %arg2[%c0_47, %c2_48] : memref<128x3xf32, #tpu.memory_space<vmem>>, vector<128x1xf32>
    %c1_49 = arith.constant 1 : index
    %c2_50 = arith.constant 2 : index
    %c0_51 = arith.constant 0 : index
    %71 = vector.load %arg1[%c1_49, %c2_50, %c0_51] : memref<8x3x256xf32, #tpu.memory_space<vmem>>, vector<1x1x128xf32>
    %72 = vector.shape_cast %71 : vector<1x1x128xf32> to vector<1x128xf32>
    %73 = vector.broadcast %70 : vector<128x1xf32> to vector<128x128xf32>
    %74 = vector.broadcast %72 : vector<1x128xf32> to vector<128x128xf32>
    %75 = arith.mulf %73, %74 : vector<128x128xf32>
    %76 = arith.addf %69, %75 : vector<128x128xf32>
    %cst_52 = arith.constant 0.000000e+00 : f32
    %77 = vector.broadcast %cst_52 : f32 to vector<128x128xf32>
    %78 = arith.maximumf %76, %77 : vector<128x128xf32>
    %cst_53 = arith.constant dense<0.000000e+00> : vector<1x128xf32>
    %79 = tpu.matmul %3, %78, %cst_53 {dimension_numbers = #tpu.dot_dimension_numbers<[1], [1], [0], [0], [0, 0, 1, 0], [], []>} : vector<1x128xf32>, vector<128x128xf32>, vector<1x128xf32> -> vector<1x128xf32>
    %80 = arith.addf %56, %79 : vector<1x128xf32>
    %c0_54 = arith.constant 0 : index
    %c0_55 = arith.constant 0 : index
    %81 = vector.load %arg2[%c0_54, %c0_55] : memref<128x3xf32, #tpu.memory_space<vmem>>, vector<128x1xf32>
    %c1_56 = arith.constant 1 : index
    %c0_57 = arith.constant 0 : index
    %c128_58 = arith.constant 128 : index
    %82 = vector.load %arg1[%c1_56, %c0_57, %c128_58] : memref<8x3x256xf32, #tpu.memory_space<vmem>>, vector<1x1x128xf32>
    %83 = vector.shape_cast %82 : vector<1x1x128xf32> to vector<1x128xf32>
    %84 = vector.broadcast %81 : vector<128x1xf32> to vector<128x128xf32>
    %85 = vector.broadcast %83 : vector<1x128xf32> to vector<128x128xf32>
    %86 = arith.mulf %84, %85 : vector<128x128xf32>
    %c0_59 = arith.constant 0 : index
    %c1_60 = arith.constant 1 : index
    %87 = vector.load %arg2[%c0_59, %c1_60] : memref<128x3xf32, #tpu.memory_space<vmem>>, vector<128x1xf32>
    %c1_61 = arith.constant 1 : index
    %c1_62 = arith.constant 1 : index
    %c128_63 = arith.constant 128 : index
    %88 = vector.load %arg1[%c1_61, %c1_62, %c128_63] : memref<8x3x256xf32, #tpu.memory_space<vmem>>, vector<1x1x128xf32>
    %89 = vector.shape_cast %88 : vector<1x1x128xf32> to vector<1x128xf32>
    %90 = vector.broadcast %87 : vector<128x1xf32> to vector<128x128xf32>
    %91 = vector.broadcast %89 : vector<1x128xf32> to vector<128x128xf32>
    %92 = arith.mulf %90, %91 : vector<128x128xf32>
    %93 = arith.addf %86, %92 : vector<128x128xf32>
    %c0_64 = arith.constant 0 : index
    %c2_65 = arith.constant 2 : index
    %94 = vector.load %arg2[%c0_64, %c2_65] : memref<128x3xf32, #tpu.memory_space<vmem>>, vector<128x1xf32>
    %c1_66 = arith.constant 1 : index
    %c2_67 = arith.constant 2 : index
    %c128_68 = arith.constant 128 : index
    %95 = vector.load %arg1[%c1_66, %c2_67, %c128_68] : memref<8x3x256xf32, #tpu.memory_space<vmem>>, vector<1x1x128xf32>
    %96 = vector.shape_cast %95 : vector<1x1x128xf32> to vector<1x128xf32>
    %97 = vector.broadcast %94 : vector<128x1xf32> to vector<128x128xf32>
    %98 = vector.broadcast %96 : vector<1x128xf32> to vector<128x128xf32>
    %99 = arith.mulf %97, %98 : vector<128x128xf32>
    %100 = arith.addf %93, %99 : vector<128x128xf32>
    %cst_69 = arith.constant 0.000000e+00 : f32
    %101 = vector.broadcast %cst_69 : f32 to vector<128x128xf32>
    %102 = arith.maximumf %100, %101 : vector<128x128xf32>
    %cst_70 = arith.constant dense<0.000000e+00> : vector<1x128xf32>
    %103 = tpu.matmul %3, %102, %cst_70 {dimension_numbers = #tpu.dot_dimension_numbers<[1], [1], [0], [0], [0, 0, 1, 0], [], []>} : vector<1x128xf32>, vector<128x128xf32>, vector<1x128xf32> -> vector<1x128xf32>
    %104 = arith.addf %80, %103 : vector<1x128xf32>
    %c1_71 = arith.constant 1 : index
    %c0_72 = arith.constant 0 : index
    %105 = vector.load %arg11[%c1_71, %c0_72] : memref<8x128xf32, #tpu.memory_space<vmem>>, vector<1x128xf32>
    %106 = arith.addf %105, %104 : vector<1x128xf32>
    %c1_73 = arith.constant 1 : index
    %c0_74 = arith.constant 0 : index
    %107 = vector.load %arg11[%c1_73, %c0_74] : memref<8x128xf32, #tpu.memory_space<vmem>>, vector<1x128xf32>
    tpu.vector_store %arg11[%c1_73, %c0_74], %106 {strides = array<i32>} : memref<8x128xf32, #tpu.memory_space<vmem>>, vector<1x128xf32>,
    %cst_75 = arith.constant 0.000000e+00 : f32
    %108 = vector.broadcast %cst_75 : f32 to vector<1x128xf32>
    %c0_76 = arith.constant 0 : index
    %c0_77 = arith.constant 0 : index
    %109 = vector.load %arg2[%c0_76, %c0_77] : memref<128x3xf32, #tpu.memory_space<vmem>>, vector<128x1xf32>
    %c2_78 = arith.constant 2 : index
    %c0_79 = arith.constant 0 : index
    %c0_80 = arith.constant 0 : index
    %110 = vector.load %arg1[%c2_78, %c0_79, %c0_80] : memref<8x3x256xf32, #tpu.memory_space<vmem>>, vector<1x1x128xf32>
    %111 = vector.shape_cast %110 : vector<1x1x128xf32> to vector<1x128xf32>
    %112 = vector.broadcast %109 : vector<128x1xf32> to vector<128x128xf32>
    %113 = vector.broadcast %111 : vector<1x128xf32> to vector<128x128xf32>
    %114 = arith.mulf %112, %113 : vector<128x128xf32>
    %c0_81 = arith.constant 0 : index
    %c1_82 = arith.constant 1 : index
    %115 = vector.load %arg2[%c0_81, %c1_82] : memref<128x3xf32, #tpu.memory_space<vmem>>, vector<128x1xf32>
    %c2_83 = arith.constant 2 : index
    %c1_84 = arith.constant 1 : index
    %c0_85 = arith.constant 0 : index
    %116 = vector.load %arg1[%c2_83, %c1_84, %c0_85] : memref<8x3x256xf32, #tpu.memory_space<vmem>>, vector<1x1x128xf32>
    %117 = vector.shape_cast %116 : vector<1x1x128xf32> to vector<1x128xf32>
    %118 = vector.broadcast %115 : vector<128x1xf32> to vector<128x128xf32>
    %119 = vector.broadcast %117 : vector<1x128xf32> to vector<128x128xf32>
    %120 = arith.mulf %118, %119 : vector<128x128xf32>
    %121 = arith.addf %114, %120 : vector<128x128xf32>
    %c0_86 = arith.constant 0 : index
    %c2_87 = arith.constant 2 : index
    %122 = vector.load %arg2[%c0_86, %c2_87] : memref<128x3xf32, #tpu.memory_space<vmem>>, vector<128x1xf32>
    %c2_88 = arith.constant 2 : index
    %c2_89 = arith.constant 2 : index
    %c0_90 = arith.constant 0 : index
    %123 = vector.load %arg1[%c2_88, %c2_89, %c0_90] : memref<8x3x256xf32, #tpu.memory_space<vmem>>, vector<1x1x128xf32>
    %124 = vector.shape_cast %123 : vector<1x1x128xf32> to vector<1x128xf32>
    %125 = vector.broadcast %122 : vector<128x1xf32> to vector<128x128xf32>
    %126 = vector.broadcast %124 : vector<1x128xf32> to vector<128x128xf32>
    %127 = arith.mulf %125, %126 : vector<128x128xf32>
    %128 = arith.addf %121, %127 : vector<128x128xf32>
    %cst_91 = arith.constant 0.000000e+00 : f32
    %129 = vector.broadcast %cst_91 : f32 to vector<128x128xf32>
    %130 = arith.maximumf %128, %129 : vector<128x128xf32>
    %cst_92 = arith.constant dense<0.000000e+00> : vector<1x128xf32>
    %131 = tpu.matmul %3, %130, %cst_92 {dimension_numbers = #tpu.dot_dimension_numbers<[1], [1], [0], [0], [0, 0, 1, 0], [], []>} : vector<1x128xf32>, vector<128x128xf32>, vector<1x128xf32> -> vector<1x128xf32>
    %132 = arith.addf %108, %131 : vector<1x128xf32>
    %c0_93 = arith.constant 0 : index
    %c0_94 = arith.constant 0 : index
    %133 = vector.load %arg2[%c0_93, %c0_94] : memref<128x3xf32, #tpu.memory_space<vmem>>, vector<128x1xf32>
    %c2_95 = arith.constant 2 : index
    %c0_96 = arith.constant 0 : index
    %c128_97 = arith.constant 128 : index
    %134 = vector.load %arg1[%c2_95, %c0_96, %c128_97] : memref<8x3x256xf32, #tpu.memory_space<vmem>>, vector<1x1x128xf32>
    %135 = vector.shape_cast %134 : vector<1x1x128xf32> to vector<1x128xf32>
    %136 = vector.broadcast %133 : vector<128x1xf32> to vector<128x128xf32>
    %137 = vector.broadcast %135 : vector<1x128xf32> to vector<128x128xf32>
    %138 = arith.mulf %136, %137 : vector<128x128xf32>
    %c0_98 = arith.constant 0 : index
    %c1_99 = arith.constant 1 : index
    %139 = vector.load %arg2[%c0_98, %c1_99] : memref<128x3xf32, #tpu.memory_space<vmem>>, vector<128x1xf32>
    %c2_100 = arith.constant 2 : index
    %c1_101 = arith.constant 1 : index
    %c128_102 = arith.constant 128 : index
    %140 = vector.load %arg1[%c2_100, %c1_101, %c128_102] : memref<8x3x256xf32, #tpu.memory_space<vmem>>, vector<1x1x128xf32>
    %141 = vector.shape_cast %140 : vector<1x1x128xf32> to vector<1x128xf32>
    %142 = vector.broadcast %139 : vector<128x1xf32> to vector<128x128xf32>
    %143 = vector.broadcast %141 : vector<1x128xf32> to vector<128x128xf32>
    %144 = arith.mulf %142, %143 : vector<128x128xf32>
    %145 = arith.addf %138, %144 : vector<128x128xf32>
    %c0_103 = arith.constant 0 : index
    %c2_104 = arith.constant 2 : index
    %146 = vector.load %arg2[%c0_103, %c2_104] : memref<128x3xf32, #tpu.memory_space<vmem>>, vector<128x1xf32>
    %c2_105 = arith.constant 2 : index
    %c2_106 = arith.constant 2 : index
    %c128_107 = arith.constant 128 : index
    %147 = vector.load %arg1[%c2_105, %c2_106, %c128_107] : memref<8x3x256xf32, #tpu.memory_space<vmem>>, vector<1x1x128xf32>
    %148 = vector.shape_cast %147 : vector<1x1x128xf32> to vector<1x128xf32>
    %149 = vector.broadcast %146 : vector<128x1xf32> to vector<128x128xf32>
    %150 = vector.broadcast %148 : vector<1x128xf32> to vector<128x128xf32>
    %151 = arith.mulf %149, %150 : vector<128x128xf32>
    %152 = arith.addf %145, %151 : vector<128x128xf32>
    %cst_108 = arith.constant 0.000000e+00 : f32
    %153 = vector.broadcast %cst_108 : f32 to vector<128x128xf32>
    %154 = arith.maximumf %152, %153 : vector<128x128xf32>
    %cst_109 = arith.constant dense<0.000000e+00> : vector<1x128xf32>
    %155 = tpu.matmul %3, %154, %cst_109 {dimension_numbers = #tpu.dot_dimension_numbers<[1], [1], [0], [0], [0, 0, 1, 0], [], []>} : vector<1x128xf32>, vector<128x128xf32>, vector<1x128xf32> -> vector<1x128xf32>
    %156 = arith.addf %132, %155 : vector<1x128xf32>
    %c2_110 = arith.constant 2 : index
    %c0_111 = arith.constant 0 : index
    %157 = vector.load %arg11[%c2_110, %c0_111] : memref<8x128xf32, #tpu.memory_space<vmem>>, vector<1x128xf32>
    %158 = arith.addf %157, %156 : vector<1x128xf32>
    %c2_112 = arith.constant 2 : index
    %c0_113 = arith.constant 0 : index
    %159 = vector.load %arg11[%c2_112, %c0_113] : memref<8x128xf32, #tpu.memory_space<vmem>>, vector<1x128xf32>
    tpu.vector_store %arg11[%c2_112, %c0_113], %158 {strides = array<i32>} : memref<8x128xf32, #tpu.memory_space<vmem>>, vector<1x128xf32>,
    %cst_114 = arith.constant 0.000000e+00 : f32
    %160 = vector.broadcast %cst_114 : f32 to vector<1x128xf32>
    %c0_115 = arith.constant 0 : index
    %c0_116 = arith.constant 0 : index
    %161 = vector.load %arg2[%c0_115, %c0_116] : memref<128x3xf32, #tpu.memory_space<vmem>>, vector<128x1xf32>
    %c3 = arith.constant 3 : index
    %c0_117 = arith.constant 0 : index
    %c0_118 = arith.constant 0 : index
    %162 = vector.load %arg1[%c3, %c0_117, %c0_118] : memref<8x3x256xf32, #tpu.memory_space<vmem>>, vector<1x1x128xf32>
    %163 = vector.shape_cast %162 : vector<1x1x128xf32> to vector<1x128xf32>
    %164 = vector.broadcast %161 : vector<128x1xf32> to vector<128x128xf32>
    %165 = vector.broadcast %163 : vector<1x128xf32> to vector<128x128xf32>
    %166 = arith.mulf %164, %165 : vector<128x128xf32>
    %c0_119 = arith.constant 0 : index
    %c1_120 = arith.constant 1 : index
    %167 = vector.load %arg2[%c0_119, %c1_120] : memref<128x3xf32, #tpu.memory_space<vmem>>, vector<128x1xf32>
    %c3_121 = arith.constant 3 : index
    %c1_122 = arith.constant 1 : index
    %c0_123 = arith.constant 0 : index
    %168 = vector.load %arg1[%c3_121, %c1_122, %c0_123] : memref<8x3x256xf32, #tpu.memory_space<vmem>>, vector<1x1x128xf32>
    %169 = vector.shape_cast %168 : vector<1x1x128xf32> to vector<1x128xf32>
    %170 = vector.broadcast %167 : vector<128x1xf32> to vector<128x128xf32>
    %171 = vector.broadcast %169 : vector<1x128xf32> to vector<128x128xf32>
    %172 = arith.mulf %170, %171 : vector<128x128xf32>
    %173 = arith.addf %166, %172 : vector<128x128xf32>
    %c0_124 = arith.constant 0 : index
    %c2_125 = arith.constant 2 : index
    %174 = vector.load %arg2[%c0_124, %c2_125] : memref<128x3xf32, #tpu.memory_space<vmem>>, vector<128x1xf32>
    %c3_126 = arith.constant 3 : index
    %c2_127 = arith.constant 2 : index
    %c0_128 = arith.constant 0 : index
    %175 = vector.load %arg1[%c3_126, %c2_127, %c0_128] : memref<8x3x256xf32, #tpu.memory_space<vmem>>, vector<1x1x128xf32>
    %176 = vector.shape_cast %175 : vector<1x1x128xf32> to vector<1x128xf32>
    %177 = vector.broadcast %174 : vector<128x1xf32> to vector<128x128xf32>
    %178 = vector.broadcast %176 : vector<1x128xf32> to vector<128x128xf32>
    %179 = arith.mulf %177, %178 : vector<128x128xf32>
    %180 = arith.addf %173, %179 : vector<128x128xf32>
    %cst_129 = arith.constant 0.000000e+00 : f32
    %181 = vector.broadcast %cst_129 : f32 to vector<128x128xf32>
    %182 = arith.maximumf %180, %181 : vector<128x128xf32>
    %cst_130 = arith.constant dense<0.000000e+00> : vector<1x128xf32>
    %183 = tpu.matmul %3, %182, %cst_130 {dimension_numbers = #tpu.dot_dimension_numbers<[1], [1], [0], [0], [0, 0, 1, 0], [], []>} : vector<1x128xf32>, vector<128x128xf32>, vector<1x128xf32> -> vector<1x128xf32>
    %184 = arith.addf %160, %183 : vector<1x128xf32>
    %c0_131 = arith.constant 0 : index
    %c0_132 = arith.constant 0 : index
    %185 = vector.load %arg2[%c0_131, %c0_132] : memref<128x3xf32, #tpu.memory_space<vmem>>, vector<128x1xf32>
    %c3_133 = arith.constant 3 : index
    %c0_134 = arith.constant 0 : index
    %c128_135 = arith.constant 128 : index
    %186 = vector.load %arg1[%c3_133, %c0_134, %c128_135] : memref<8x3x256xf32, #tpu.memory_space<vmem>>, vector<1x1x128xf32>
    %187 = vector.shape_cast %186 : vector<1x1x128xf32> to vector<1x128xf32>
    %188 = vector.broadcast %185 : vector<128x1xf32> to vector<128x128xf32>
    %189 = vector.broadcast %187 : vector<1x128xf32> to vector<128x128xf32>
    %190 = arith.mulf %188, %189 : vector<128x128xf32>
    %c0_136 = arith.constant 0 : index
    %c1_137 = arith.constant 1 : index
    %191 = vector.load %arg2[%c0_136, %c1_137] : memref<128x3xf32, #tpu.memory_space<vmem>>, vector<128x1xf32>
    %c3_138 = arith.constant 3 : index
    %c1_139 = arith.constant 1 : index
    %c128_140 = arith.constant 128 : index
    %192 = vector.load %arg1[%c3_138, %c1_139, %c128_140] : memref<8x3x256xf32, #tpu.memory_space<vmem>>, vector<1x1x128xf32>
    %193 = vector.shape_cast %192 : vector<1x1x128xf32> to vector<1x128xf32>
    %194 = vector.broadcast %191 : vector<128x1xf32> to vector<128x128xf32>
    %195 = vector.broadcast %193 : vector<1x128xf32> to vector<128x128xf32>
    %196 = arith.mulf %194, %195 : vector<128x128xf32>
    %197 = arith.addf %190, %196 : vector<128x128xf32>
    %c0_141 = arith.constant 0 : index
    %c2_142 = arith.constant 2 : index
    %198 = vector.load %arg2[%c0_141, %c2_142] : memref<128x3xf32, #tpu.memory_space<vmem>>, vector<128x1xf32>
    %c3_143 = arith.constant 3 : index
    %c2_144 = arith.constant 2 : index
    %c128_145 = arith.constant 128 : index
    %199 = vector.load %arg1[%c3_143, %c2_144, %c128_145] : memref<8x3x256xf32, #tpu.memory_space<vmem>>, vector<1x1x128xf32>
    %200 = vector.shape_cast %199 : vector<1x1x128xf32> to vector<1x128xf32>
    %201 = vector.broadcast %198 : vector<128x1xf32> to vector<128x128xf32>
    %202 = vector.broadcast %200 : vector<1x128xf32> to vector<128x128xf32>
    %203 = arith.mulf %201, %202 : vector<128x128xf32>
    %204 = arith.addf %197, %203 : vector<128x128xf32>
    %cst_146 = arith.constant 0.000000e+00 : f32
    %205 = vector.broadcast %cst_146 : f32 to vector<128x128xf32>
    %206 = arith.maximumf %204, %205 : vector<128x128xf32>
    %cst_147 = arith.constant dense<0.000000e+00> : vector<1x128xf32>
    %207 = tpu.matmul %3, %206, %cst_147 {dimension_numbers = #tpu.dot_dimension_numbers<[1], [1], [0], [0], [0, 0, 1, 0], [], []>} : vector<1x128xf32>, vector<128x128xf32>, vector<1x128xf32> -> vector<1x128xf32>
    %208 = arith.addf %184, %207 : vector<1x128xf32>
    %c3_148 = arith.constant 3 : index
    %c0_149 = arith.constant 0 : index
    %209 = vector.load %arg11[%c3_148, %c0_149] : memref<8x128xf32, #tpu.memory_space<vmem>>, vector<1x128xf32>
    %210 = arith.addf %209, %208 : vector<1x128xf32>
    %c3_150 = arith.constant 3 : index
    %c0_151 = arith.constant 0 : index
    %211 = vector.load %arg11[%c3_150, %c0_151] : memref<8x128xf32, #tpu.memory_space<vmem>>, vector<1x128xf32>
    tpu.vector_store %arg11[%c3_150, %c0_151], %210 {strides = array<i32>} : memref<8x128xf32, #tpu.memory_space<vmem>>, vector<1x128xf32>,
    %cst_152 = arith.constant 0.000000e+00 : f32
    %212 = vector.broadcast %cst_152 : f32 to vector<1x128xf32>
    %c0_153 = arith.constant 0 : index
    %c0_154 = arith.constant 0 : index
    %213 = vector.load %arg2[%c0_153, %c0_154] : memref<128x3xf32, #tpu.memory_space<vmem>>, vector<128x1xf32>
    %c4 = arith.constant 4 : index
    %c0_155 = arith.constant 0 : index
    %c0_156 = arith.constant 0 : index
    %214 = vector.load %arg1[%c4, %c0_155, %c0_156] : memref<8x3x256xf32, #tpu.memory_space<vmem>>, vector<1x1x128xf32>
    %215 = vector.shape_cast %214 : vector<1x1x128xf32> to vector<1x128xf32>
    %216 = vector.broadcast %213 : vector<128x1xf32> to vector<128x128xf32>
    %217 = vector.broadcast %215 : vector<1x128xf32> to vector<128x128xf32>
    %218 = arith.mulf %216, %217 : vector<128x128xf32>
    %c0_157 = arith.constant 0 : index
    %c1_158 = arith.constant 1 : index
    %219 = vector.load %arg2[%c0_157, %c1_158] : memref<128x3xf32, #tpu.memory_space<vmem>>, vector<128x1xf32>
    %c4_159 = arith.constant 4 : index
    %c1_160 = arith.constant 1 : index
    %c0_161 = arith.constant 0 : index
    %220 = vector.load %arg1[%c4_159, %c1_160, %c0_161] : memref<8x3x256xf32, #tpu.memory_space<vmem>>, vector<1x1x128xf32>
    %221 = vector.shape_cast %220 : vector<1x1x128xf32> to vector<1x128xf32>
    %222 = vector.broadcast %219 : vector<128x1xf32> to vector<128x128xf32>
    %223 = vector.broadcast %221 : vector<1x128xf32> to vector<128x128xf32>
    %224 = arith.mulf %222, %223 : vector<128x128xf32>
    %225 = arith.addf %218, %224 : vector<128x128xf32>
    %c0_162 = arith.constant 0 : index
    %c2_163 = arith.constant 2 : index
    %226 = vector.load %arg2[%c0_162, %c2_163] : memref<128x3xf32, #tpu.memory_space<vmem>>, vector<128x1xf32>
    %c4_164 = arith.constant 4 : index
    %c2_165 = arith.constant 2 : index
    %c0_166 = arith.constant 0 : index
    %227 = vector.load %arg1[%c4_164, %c2_165, %c0_166] : memref<8x3x256xf32, #tpu.memory_space<vmem>>, vector<1x1x128xf32>
    %228 = vector.shape_cast %227 : vector<1x1x128xf32> to vector<1x128xf32>
    %229 = vector.broadcast %226 : vector<128x1xf32> to vector<128x128xf32>
    %230 = vector.broadcast %228 : vector<1x128xf32> to vector<128x128xf32>
    %231 = arith.mulf %229, %230 : vector<128x128xf32>
    %232 = arith.addf %225, %231 : vector<128x128xf32>
    %cst_167 = arith.constant 0.000000e+00 : f32
    %233 = vector.broadcast %cst_167 : f32 to vector<128x128xf32>
    %234 = arith.maximumf %232, %233 : vector<128x128xf32>
    %cst_168 = arith.constant dense<0.000000e+00> : vector<1x128xf32>
    %235 = tpu.matmul %3, %234, %cst_168 {dimension_numbers = #tpu.dot_dimension_numbers<[1], [1], [0], [0], [0, 0, 1, 0], [], []>} : vector<1x128xf32>, vector<128x128xf32>, vector<1x128xf32> -> vector<1x128xf32>
    %236 = arith.addf %212, %235 : vector<1x128xf32>
    %c0_169 = arith.constant 0 : index
    %c0_170 = arith.constant 0 : index
    %237 = vector.load %arg2[%c0_169, %c0_170] : memref<128x3xf32, #tpu.memory_space<vmem>>, vector<128x1xf32>
    %c4_171 = arith.constant 4 : index
    %c0_172 = arith.constant 0 : index
    %c128_173 = arith.constant 128 : index
    %238 = vector.load %arg1[%c4_171, %c0_172, %c128_173] : memref<8x3x256xf32, #tpu.memory_space<vmem>>, vector<1x1x128xf32>
    %239 = vector.shape_cast %238 : vector<1x1x128xf32> to vector<1x128xf32>
    %240 = vector.broadcast %237 : vector<128x1xf32> to vector<128x128xf32>
    %241 = vector.broadcast %239 : vector<1x128xf32> to vector<128x128xf32>
    %242 = arith.mulf %240, %241 : vector<128x128xf32>
    %c0_174 = arith.constant 0 : index
    %c1_175 = arith.constant 1 : index
    %243 = vector.load %arg2[%c0_174, %c1_175] : memref<128x3xf32, #tpu.memory_space<vmem>>, vector<128x1xf32>
    %c4_176 = arith.constant 4 : index
    %c1_177 = arith.constant 1 : index
    %c128_178 = arith.constant 128 : index
    %244 = vector.load %arg1[%c4_176, %c1_177, %c128_178] : memref<8x3x256xf32, #tpu.memory_space<vmem>>, vector<1x1x128xf32>
    %245 = vector.shape_cast %244 : vector<1x1x128xf32> to vector<1x128xf32>
    %246 = vector.broadcast %243 : vector<128x1xf32> to vector<128x128xf32>
    %247 = vector.broadcast %245 : vector<1x128xf32> to vector<128x128xf32>
    %248 = arith.mulf %246, %247 : vector<128x128xf32>
    %249 = arith.addf %242, %248 : vector<128x128xf32>
    %c0_179 = arith.constant 0 : index
    %c2_180 = arith.constant 2 : index
    %250 = vector.load %arg2[%c0_179, %c2_180] : memref<128x3xf32, #tpu.memory_space<vmem>>, vector<128x1xf32>
    %c4_181 = arith.constant 4 : index
    %c2_182 = arith.constant 2 : index
    %c128_183 = arith.constant 128 : index
    %251 = vector.load %arg1[%c4_181, %c2_182, %c128_183] : memref<8x3x256xf32, #tpu.memory_space<vmem>>, vector<1x1x128xf32>
    %252 = vector.shape_cast %251 : vector<1x1x128xf32> to vector<1x128xf32>
    %253 = vector.broadcast %250 : vector<128x1xf32> to vector<128x128xf32>
    %254 = vector.broadcast %252 : vector<1x128xf32> to vector<128x128xf32>
    %255 = arith.mulf %253, %254 : vector<128x128xf32>
    %256 = arith.addf %249, %255 : vector<128x128xf32>
    %cst_184 = arith.constant 0.000000e+00 : f32
    %257 = vector.broadcast %cst_184 : f32 to vector<128x128xf32>
    %258 = arith.maximumf %256, %257 : vector<128x128xf32>
    %cst_185 = arith.constant dense<0.000000e+00> : vector<1x128xf32>
    %259 = tpu.matmul %3, %258, %cst_185 {dimension_numbers = #tpu.dot_dimension_numbers<[1], [1], [0], [0], [0, 0, 1, 0], [], []>} : vector<1x128xf32>, vector<128x128xf32>, vector<1x128xf32> -> vector<1x128xf32>
    %260 = arith.addf %236, %259 : vector<1x128xf32>
    %c4_186 = arith.constant 4 : index
    %c0_187 = arith.constant 0 : index
    %261 = vector.load %arg11[%c4_186, %c0_187] : memref<8x128xf32, #tpu.memory_space<vmem>>, vector<1x128xf32>
    %262 = arith.addf %261, %260 : vector<1x128xf32>
    %c4_188 = arith.constant 4 : index
    %c0_189 = arith.constant 0 : index
    %263 = vector.load %arg11[%c4_188, %c0_189] : memref<8x128xf32, #tpu.memory_space<vmem>>, vector<1x128xf32>
    tpu.vector_store %arg11[%c4_188, %c0_189], %262 {strides = array<i32>} : memref<8x128xf32, #tpu.memory_space<vmem>>, vector<1x128xf32>,
    %cst_190 = arith.constant 0.000000e+00 : f32
    %264 = vector.broadcast %cst_190 : f32 to vector<1x128xf32>
    %c0_191 = arith.constant 0 : index
    %c0_192 = arith.constant 0 : index
    %265 = vector.load %arg2[%c0_191, %c0_192] : memref<128x3xf32, #tpu.memory_space<vmem>>, vector<128x1xf32>
    %c5 = arith.constant 5 : index
    %c0_193 = arith.constant 0 : index
    %c0_194 = arith.constant 0 : index
    %266 = vector.load %arg1[%c5, %c0_193, %c0_194] : memref<8x3x256xf32, #tpu.memory_space<vmem>>, vector<1x1x128xf32>
    %267 = vector.shape_cast %266 : vector<1x1x128xf32> to vector<1x128xf32>
    %268 = vector.broadcast %265 : vector<128x1xf32> to vector<128x128xf32>
    %269 = vector.broadcast %267 : vector<1x128xf32> to vector<128x128xf32>
    %270 = arith.mulf %268, %269 : vector<128x128xf32>
    %c0_195 = arith.constant 0 : index
    %c1_196 = arith.constant 1 : index
    %271 = vector.load %arg2[%c0_195, %c1_196] : memref<128x3xf32, #tpu.memory_space<vmem>>, vector<128x1xf32>
    %c5_197 = arith.constant 5 : index
    %c1_198 = arith.constant 1 : index
    %c0_199 = arith.constant 0 : index
    %272 = vector.load %arg1[%c5_197, %c1_198, %c0_199] : memref<8x3x256xf32, #tpu.memory_space<vmem>>, vector<1x1x128xf32>
    %273 = vector.shape_cast %272 : vector<1x1x128xf32> to vector<1x128xf32>
    %274 = vector.broadcast %271 : vector<128x1xf32> to vector<128x128xf32>
    %275 = vector.broadcast %273 : vector<1x128xf32> to vector<128x128xf32>
    %276 = arith.mulf %274, %275 : vector<128x128xf32>
    %277 = arith.addf %270, %276 : vector<128x128xf32>
    %c0_200 = arith.constant 0 : index
    %c2_201 = arith.constant 2 : index
    %278 = vector.load %arg2[%c0_200, %c2_201] : memref<128x3xf32, #tpu.memory_space<vmem>>, vector<128x1xf32>
    %c5_202 = arith.constant 5 : index
    %c2_203 = arith.constant 2 : index
    %c0_204 = arith.constant 0 : index
    %279 = vector.load %arg1[%c5_202, %c2_203, %c0_204] : memref<8x3x256xf32, #tpu.memory_space<vmem>>, vector<1x1x128xf32>
    %280 = vector.shape_cast %279 : vector<1x1x128xf32> to vector<1x128xf32>
    %281 = vector.broadcast %278 : vector<128x1xf32> to vector<128x128xf32>
    %282 = vector.broadcast %280 : vector<1x128xf32> to vector<128x128xf32>
    %283 = arith.mulf %281, %282 : vector<128x128xf32>
    %284 = arith.addf %277, %283 : vector<128x128xf32>
    %cst_205 = arith.constant 0.000000e+00 : f32
    %285 = vector.broadcast %cst_205 : f32 to vector<128x128xf32>
    %286 = arith.maximumf %284, %285 : vector<128x128xf32>
    %cst_206 = arith.constant dense<0.000000e+00> : vector<1x128xf32>
    %287 = tpu.matmul %3, %286, %cst_206 {dimension_numbers = #tpu.dot_dimension_numbers<[1], [1], [0], [0], [0, 0, 1, 0], [], []>} : vector<1x128xf32>, vector<128x128xf32>, vector<1x128xf32> -> vector<1x128xf32>
    %288 = arith.addf %264, %287 : vector<1x128xf32>
    %c0_207 = arith.constant 0 : index
    %c0_208 = arith.constant 0 : index
    %289 = vector.load %arg2[%c0_207, %c0_208] : memref<128x3xf32, #tpu.memory_space<vmem>>, vector<128x1xf32>
    %c5_209 = arith.constant 5 : index
    %c0_210 = arith.constant 0 : index
    %c128_211 = arith.constant 128 : index
    %290 = vector.load %arg1[%c5_209, %c0_210, %c128_211] : memref<8x3x256xf32, #tpu.memory_space<vmem>>, vector<1x1x128xf32>
    %291 = vector.shape_cast %290 : vector<1x1x128xf32> to vector<1x128xf32>
    %292 = vector.broadcast %289 : vector<128x1xf32> to vector<128x128xf32>
    %293 = vector.broadcast %291 : vector<1x128xf32> to vector<128x128xf32>
    %294 = arith.mulf %292, %293 : vector<128x128xf32>
    %c0_212 = arith.constant 0 : index
    %c1_213 = arith.constant 1 : index
    %295 = vector.load %arg2[%c0_212, %c1_213] : memref<128x3xf32, #tpu.memory_space<vmem>>, vector<128x1xf32>
    %c5_214 = arith.constant 5 : index
    %c1_215 = arith.constant 1 : index
    %c128_216 = arith.constant 128 : index
    %296 = vector.load %arg1[%c5_214, %c1_215, %c128_216] : memref<8x3x256xf32, #tpu.memory_space<vmem>>, vector<1x1x128xf32>
    %297 = vector.shape_cast %296 : vector<1x1x128xf32> to vector<1x128xf32>
    %298 = vector.broadcast %295 : vector<128x1xf32> to vector<128x128xf32>
    %299 = vector.broadcast %297 : vector<1x128xf32> to vector<128x128xf32>
    %300 = arith.mulf %298, %299 : vector<128x128xf32>
    %301 = arith.addf %294, %300 : vector<128x128xf32>
    %c0_217 = arith.constant 0 : index
    %c2_218 = arith.constant 2 : index
    %302 = vector.load %arg2[%c0_217, %c2_218] : memref<128x3xf32, #tpu.memory_space<vmem>>, vector<128x1xf32>
    %c5_219 = arith.constant 5 : index
    %c2_220 = arith.constant 2 : index
    %c128_221 = arith.constant 128 : index
    %303 = vector.load %arg1[%c5_219, %c2_220, %c128_221] : memref<8x3x256xf32, #tpu.memory_space<vmem>>, vector<1x1x128xf32>
    %304 = vector.shape_cast %303 : vector<1x1x128xf32> to vector<1x128xf32>
    %305 = vector.broadcast %302 : vector<128x1xf32> to vector<128x128xf32>
    %306 = vector.broadcast %304 : vector<1x128xf32> to vector<128x128xf32>
    %307 = arith.mulf %305, %306 : vector<128x128xf32>
    %308 = arith.addf %301, %307 : vector<128x128xf32>
    %cst_222 = arith.constant 0.000000e+00 : f32
    %309 = vector.broadcast %cst_222 : f32 to vector<128x128xf32>
    %310 = arith.maximumf %308, %309 : vector<128x128xf32>
    %cst_223 = arith.constant dense<0.000000e+00> : vector<1x128xf32>
    %311 = tpu.matmul %3, %310, %cst_223 {dimension_numbers = #tpu.dot_dimension_numbers<[1], [1], [0], [0], [0, 0, 1, 0], [], []>} : vector<1x128xf32>, vector<128x128xf32>, vector<1x128xf32> -> vector<1x128xf32>
    %312 = arith.addf %288, %311 : vector<1x128xf32>
    %c5_224 = arith.constant 5 : index
    %c0_225 = arith.constant 0 : index
    %313 = vector.load %arg11[%c5_224, %c0_225] : memref<8x128xf32, #tpu.memory_space<vmem>>, vector<1x128xf32>
    %314 = arith.addf %313, %312 : vector<1x128xf32>
    %c5_226 = arith.constant 5 : index
    %c0_227 = arith.constant 0 : index
    %315 = vector.load %arg11[%c5_226, %c0_227] : memref<8x128xf32, #tpu.memory_space<vmem>>, vector<1x128xf32>
    tpu.vector_store %arg11[%c5_226, %c0_227], %314 {strides = array<i32>} : memref<8x128xf32, #tpu.memory_space<vmem>>, vector<1x128xf32>,
    %cst_228 = arith.constant 0.000000e+00 : f32
    %316 = vector.broadcast %cst_228 : f32 to vector<1x128xf32>
    %c0_229 = arith.constant 0 : index
    %c0_230 = arith.constant 0 : index
    %317 = vector.load %arg2[%c0_229, %c0_230] : memref<128x3xf32, #tpu.memory_space<vmem>>, vector<128x1xf32>
    %c6 = arith.constant 6 : index
    %c0_231 = arith.constant 0 : index
    %c0_232 = arith.constant 0 : index
    %318 = vector.load %arg1[%c6, %c0_231, %c0_232] : memref<8x3x256xf32, #tpu.memory_space<vmem>>, vector<1x1x128xf32>
    %319 = vector.shape_cast %318 : vector<1x1x128xf32> to vector<1x128xf32>
    %320 = vector.broadcast %317 : vector<128x1xf32> to vector<128x128xf32>
    %321 = vector.broadcast %319 : vector<1x128xf32> to vector<128x128xf32>
    %322 = arith.mulf %320, %321 : vector<128x128xf32>
    %c0_233 = arith.constant 0 : index
    %c1_234 = arith.constant 1 : index
    %323 = vector.load %arg2[%c0_233, %c1_234] : memref<128x3xf32, #tpu.memory_space<vmem>>, vector<128x1xf32>
    %c6_235 = arith.constant 6 : index
    %c1_236 = arith.constant 1 : index
    %c0_237 = arith.constant 0 : index
    %324 = vector.load %arg1[%c6_235, %c1_236, %c0_237] : memref<8x3x256xf32, #tpu.memory_space<vmem>>, vector<1x1x128xf32>
    %325 = vector.shape_cast %324 : vector<1x1x128xf32> to vector<1x128xf32>
    %326 = vector.broadcast %323 : vector<128x1xf32> to vector<128x128xf32>
    %327 = vector.broadcast %325 : vector<1x128xf32> to vector<128x128xf32>
    %328 = arith.mulf %326, %327 : vector<128x128xf32>
    %329 = arith.addf %322, %328 : vector<128x128xf32>
    %c0_238 = arith.constant 0 : index
    %c2_239 = arith.constant 2 : index
    %330 = vector.load %arg2[%c0_238, %c2_239] : memref<128x3xf32, #tpu.memory_space<vmem>>, vector<128x1xf32>
    %c6_240 = arith.constant 6 : index
    %c2_241 = arith.constant 2 : index
    %c0_242 = arith.constant 0 : index
    %331 = vector.load %arg1[%c6_240, %c2_241, %c0_242] : memref<8x3x256xf32, #tpu.memory_space<vmem>>, vector<1x1x128xf32>
    %332 = vector.shape_cast %331 : vector<1x1x128xf32> to vector<1x128xf32>
    %333 = vector.broadcast %330 : vector<128x1xf32> to vector<128x128xf32>
    %334 = vector.broadcast %332 : vector<1x128xf32> to vector<128x128xf32>
    %335 = arith.mulf %333, %334 : vector<128x128xf32>
    %336 = arith.addf %329, %335 : vector<128x128xf32>
    %cst_243 = arith.constant 0.000000e+00 : f32
    %337 = vector.broadcast %cst_243 : f32 to vector<128x128xf32>
    %338 = arith.maximumf %336, %337 : vector<128x128xf32>
    %cst_244 = arith.constant dense<0.000000e+00> : vector<1x128xf32>
    %339 = tpu.matmul %3, %338, %cst_244 {dimension_numbers = #tpu.dot_dimension_numbers<[1], [1], [0], [0], [0, 0, 1, 0], [], []>} : vector<1x128xf32>, vector<128x128xf32>, vector<1x128xf32> -> vector<1x128xf32>
    %340 = arith.addf %316, %339 : vector<1x128xf32>
    %c0_245 = arith.constant 0 : index
    %c0_246 = arith.constant 0 : index
    %341 = vector.load %arg2[%c0_245, %c0_246] : memref<128x3xf32, #tpu.memory_space<vmem>>, vector<128x1xf32>
    %c6_247 = arith.constant 6 : index
    %c0_248 = arith.constant 0 : index
    %c128_249 = arith.constant 128 : index
    %342 = vector.load %arg1[%c6_247, %c0_248, %c128_249] : memref<8x3x256xf32, #tpu.memory_space<vmem>>, vector<1x1x128xf32>
    %343 = vector.shape_cast %342 : vector<1x1x128xf32> to vector<1x128xf32>
    %344 = vector.broadcast %341 : vector<128x1xf32> to vector<128x128xf32>
    %345 = vector.broadcast %343 : vector<1x128xf32> to vector<128x128xf32>
    %346 = arith.mulf %344, %345 : vector<128x128xf32>
    %c0_250 = arith.constant 0 : index
    %c1_251 = arith.constant 1 : index
    %347 = vector.load %arg2[%c0_250, %c1_251] : memref<128x3xf32, #tpu.memory_space<vmem>>, vector<128x1xf32>
    %c6_252 = arith.constant 6 : index
    %c1_253 = arith.constant 1 : index
    %c128_254 = arith.constant 128 : index
    %348 = vector.load %arg1[%c6_252, %c1_253, %c128_254] : memref<8x3x256xf32, #tpu.memory_space<vmem>>, vector<1x1x128xf32>
    %349 = vector.shape_cast %348 : vector<1x1x128xf32> to vector<1x128xf32>
    %350 = vector.broadcast %347 : vector<128x1xf32> to vector<128x128xf32>
    %351 = vector.broadcast %349 : vector<1x128xf32> to vector<128x128xf32>
    %352 = arith.mulf %350, %351 : vector<128x128xf32>
    %353 = arith.addf %346, %352 : vector<128x128xf32>
    %c0_255 = arith.constant 0 : index
    %c2_256 = arith.constant 2 : index
    %354 = vector.load %arg2[%c0_255, %c2_256] : memref<128x3xf32, #tpu.memory_space<vmem>>, vector<128x1xf32>
    %c6_257 = arith.constant 6 : index
    %c2_258 = arith.constant 2 : index
    %c128_259 = arith.constant 128 : index
    %355 = vector.load %arg1[%c6_257, %c2_258, %c128_259] : memref<8x3x256xf32, #tpu.memory_space<vmem>>, vector<1x1x128xf32>
    %356 = vector.shape_cast %355 : vector<1x1x128xf32> to vector<1x128xf32>
    %357 = vector.broadcast %354 : vector<128x1xf32> to vector<128x128xf32>
    %358 = vector.broadcast %356 : vector<1x128xf32> to vector<128x128xf32>
    %359 = arith.mulf %357, %358 : vector<128x128xf32>
    %360 = arith.addf %353, %359 : vector<128x128xf32>
    %cst_260 = arith.constant 0.000000e+00 : f32
    %361 = vector.broadcast %cst_260 : f32 to vector<128x128xf32>
    %362 = arith.maximumf %360, %361 : vector<128x128xf32>
    %cst_261 = arith.constant dense<0.000000e+00> : vector<1x128xf32>
    %363 = tpu.matmul %3, %362, %cst_261 {dimension_numbers = #tpu.dot_dimension_numbers<[1], [1], [0], [0], [0, 0, 1, 0], [], []>} : vector<1x128xf32>, vector<128x128xf32>, vector<1x128xf32> -> vector<1x128xf32>
    %364 = arith.addf %340, %363 : vector<1x128xf32>
    %c6_262 = arith.constant 6 : index
    %c0_263 = arith.constant 0 : index
    %365 = vector.load %arg11[%c6_262, %c0_263] : memref<8x128xf32, #tpu.memory_space<vmem>>, vector<1x128xf32>
    %366 = arith.addf %365, %364 : vector<1x128xf32>
    %c6_264 = arith.constant 6 : index
    %c0_265 = arith.constant 0 : index
    %367 = vector.load %arg11[%c6_264, %c0_265] : memref<8x128xf32, #tpu.memory_space<vmem>>, vector<1x128xf32>
    tpu.vector_store %arg11[%c6_264, %c0_265], %366 {strides = array<i32>} : memref<8x128xf32, #tpu.memory_space<vmem>>, vector<1x128xf32>,
    %cst_266 = arith.constant 0.000000e+00 : f32
    %368 = vector.broadcast %cst_266 : f32 to vector<1x128xf32>
    %c0_267 = arith.constant 0 : index
    %c0_268 = arith.constant 0 : index
    %369 = vector.load %arg2[%c0_267, %c0_268] : memref<128x3xf32, #tpu.memory_space<vmem>>, vector<128x1xf32>
    %c7 = arith.constant 7 : index
    %c0_269 = arith.constant 0 : index
    %c0_270 = arith.constant 0 : index
    %370 = vector.load %arg1[%c7, %c0_269, %c0_270] : memref<8x3x256xf32, #tpu.memory_space<vmem>>, vector<1x1x128xf32>
    %371 = vector.shape_cast %370 : vector<1x1x128xf32> to vector<1x128xf32>
    %372 = vector.broadcast %369 : vector<128x1xf32> to vector<128x128xf32>
    %373 = vector.broadcast %371 : vector<1x128xf32> to vector<128x128xf32>
    %374 = arith.mulf %372, %373 : vector<128x128xf32>
    %c0_271 = arith.constant 0 : index
    %c1_272 = arith.constant 1 : index
    %375 = vector.load %arg2[%c0_271, %c1_272] : memref<128x3xf32, #tpu.memory_space<vmem>>, vector<128x1xf32>
    %c7_273 = arith.constant 7 : index
    %c1_274 = arith.constant 1 : index
    %c0_275 = arith.constant 0 : index
    %376 = vector.load %arg1[%c7_273, %c1_274, %c0_275] : memref<8x3x256xf32, #tpu.memory_space<vmem>>, vector<1x1x128xf32>
    %377 = vector.shape_cast %376 : vector<1x1x128xf32> to vector<1x128xf32>
    %378 = vector.broadcast %375 : vector<128x1xf32> to vector<128x128xf32>
    %379 = vector.broadcast %377 : vector<1x128xf32> to vector<128x128xf32>
    %380 = arith.mulf %378, %379 : vector<128x128xf32>
    %381 = arith.addf %374, %380 : vector<128x128xf32>
    %c0_276 = arith.constant 0 : index
    %c2_277 = arith.constant 2 : index
    %382 = vector.load %arg2[%c0_276, %c2_277] : memref<128x3xf32, #tpu.memory_space<vmem>>, vector<128x1xf32>
    %c7_278 = arith.constant 7 : index
    %c2_279 = arith.constant 2 : index
    %c0_280 = arith.constant 0 : index
    %383 = vector.load %arg1[%c7_278, %c2_279, %c0_280] : memref<8x3x256xf32, #tpu.memory_space<vmem>>, vector<1x1x128xf32>
    %384 = vector.shape_cast %383 : vector<1x1x128xf32> to vector<1x128xf32>
    %385 = vector.broadcast %382 : vector<128x1xf32> to vector<128x128xf32>
    %386 = vector.broadcast %384 : vector<1x128xf32> to vector<128x128xf32>
    %387 = arith.mulf %385, %386 : vector<128x128xf32>
    %388 = arith.addf %381, %387 : vector<128x128xf32>
    %cst_281 = arith.constant 0.000000e+00 : f32
    %389 = vector.broadcast %cst_281 : f32 to vector<128x128xf32>
    %390 = arith.maximumf %388, %389 : vector<128x128xf32>
    %cst_282 = arith.constant dense<0.000000e+00> : vector<1x128xf32>
    %391 = tpu.matmul %3, %390, %cst_282 {dimension_numbers = #tpu.dot_dimension_numbers<[1], [1], [0], [0], [0, 0, 1, 0], [], []>} : vector<1x128xf32>, vector<128x128xf32>, vector<1x128xf32> -> vector<1x128xf32>
    %392 = arith.addf %368, %391 : vector<1x128xf32>
    %c0_283 = arith.constant 0 : index
    %c0_284 = arith.constant 0 : index
    %393 = vector.load %arg2[%c0_283, %c0_284] : memref<128x3xf32, #tpu.memory_space<vmem>>, vector<128x1xf32>
    %c7_285 = arith.constant 7 : index
    %c0_286 = arith.constant 0 : index
    %c128_287 = arith.constant 128 : index
    %394 = vector.load %arg1[%c7_285, %c0_286, %c128_287] : memref<8x3x256xf32, #tpu.memory_space<vmem>>, vector<1x1x128xf32>
    %395 = vector.shape_cast %394 : vector<1x1x128xf32> to vector<1x128xf32>
    %396 = vector.broadcast %393 : vector<128x1xf32> to vector<128x128xf32>
    %397 = vector.broadcast %395 : vector<1x128xf32> to vector<128x128xf32>
    %398 = arith.mulf %396, %397 : vector<128x128xf32>
    %c0_288 = arith.constant 0 : index
    %c1_289 = arith.constant 1 : index
    %399 = vector.load %arg2[%c0_288, %c1_289] : memref<128x3xf32, #tpu.memory_space<vmem>>, vector<128x1xf32>
    %c7_290 = arith.constant 7 : index
    %c1_291 = arith.constant 1 : index
    %c128_292 = arith.constant 128 : index
    %400 = vector.load %arg1[%c7_290, %c1_291, %c128_292] : memref<8x3x256xf32, #tpu.memory_space<vmem>>, vector<1x1x128xf32>
    %401 = vector.shape_cast %400 : vector<1x1x128xf32> to vector<1x128xf32>
    %402 = vector.broadcast %399 : vector<128x1xf32> to vector<128x128xf32>
    %403 = vector.broadcast %401 : vector<1x128xf32> to vector<128x128xf32>
    %404 = arith.mulf %402, %403 : vector<128x128xf32>
    %405 = arith.addf %398, %404 : vector<128x128xf32>
    %c0_293 = arith.constant 0 : index
    %c2_294 = arith.constant 2 : index
    %406 = vector.load %arg2[%c0_293, %c2_294] : memref<128x3xf32, #tpu.memory_space<vmem>>, vector<128x1xf32>
    %c7_295 = arith.constant 7 : index
    %c2_296 = arith.constant 2 : index
    %c128_297 = arith.constant 128 : index
    %407 = vector.load %arg1[%c7_295, %c2_296, %c128_297] : memref<8x3x256xf32, #tpu.memory_space<vmem>>, vector<1x1x128xf32>
    %408 = vector.shape_cast %407 : vector<1x1x128xf32> to vector<1x128xf32>
    %409 = vector.broadcast %406 : vector<128x1xf32> to vector<128x128xf32>
    %410 = vector.broadcast %408 : vector<1x128xf32> to vector<128x128xf32>
    %411 = arith.mulf %409, %410 : vector<128x128xf32>
    %412 = arith.addf %405, %411 : vector<128x128xf32>
    %cst_298 = arith.constant 0.000000e+00 : f32
    %413 = vector.broadcast %cst_298 : f32 to vector<128x128xf32>
    %414 = arith.maximumf %412, %413 : vector<128x128xf32>
    %cst_299 = arith.constant dense<0.000000e+00> : vector<1x128xf32>
    %415 = tpu.matmul %3, %414, %cst_299 {dimension_numbers = #tpu.dot_dimension_numbers<[1], [1], [0], [0], [0, 0, 1, 0], [], []>} : vector<1x128xf32>, vector<128x128xf32>, vector<1x128xf32> -> vector<1x128xf32>
    %416 = arith.addf %392, %415 : vector<1x128xf32>
    %c7_300 = arith.constant 7 : index
    %c0_301 = arith.constant 0 : index
    %417 = vector.load %arg11[%c7_300, %c0_301] : memref<8x128xf32, #tpu.memory_space<vmem>>, vector<1x128xf32>
    %418 = arith.addf %417, %416 : vector<1x128xf32>
    %c7_302 = arith.constant 7 : index
    %c0_303 = arith.constant 0 : index
    %419 = vector.load %arg11[%c7_302, %c0_303] : memref<8x128xf32, #tpu.memory_space<vmem>>, vector<1x128xf32>
    tpu.vector_store %arg11[%c7_302, %c0_303], %418 {strides = array<i32>} : memref<8x128xf32, #tpu.memory_space<vmem>>, vector<1x128xf32>,
    %c0_i32_304 = arith.constant 0 : i32
    %420 = arith.cmpi eq, %arg0, %c0_i32_304 : i32
    %421 = arith.extui %420 : i1 to i32
    %c0_i32_305 = arith.constant 0 : i32
    %422 = arith.cmpi ne, %421, %c0_i32_305 : i32
    scf.if %422 {
      %c0_306 = arith.constant 0 : index
      %c0_307 = arith.constant 0 : index
      %423 = vector.load %arg11[%c0_306, %c0_307] : memref<8x128xf32, #tpu.memory_space<vmem>>, vector<8x128xf32>
      %cst_308 = arith.constant 3.906250e-03 : f32
      %424 = vector.broadcast %cst_308 : f32 to vector<8x128xf32>
      %425 = arith.mulf %423, %424 : vector<8x128xf32>
      %c0_309 = arith.constant 0 : index
      %c0_310 = arith.constant 0 : index
      %426 = vector.load %arg11[%c0_309, %c0_310] : memref<8x128xf32, #tpu.memory_space<vmem>>, vector<8x128xf32>
      tpu.vector_store %arg11[%c0_309, %c0_310], %425 {strides = array<i32>} : memref<8x128xf32, #tpu.memory_space<vmem>>, vector<8x128xf32>,
      %c0_311 = arith.constant 0 : index
      %c0_312 = arith.constant 0 : index
      %427 = vector.load %arg11[%c0_311, %c0_312] : memref<8x128xf32, #tpu.memory_space<vmem>>, vector<8x128xf32>
      %428 = arith.truncf %427 : vector<8x128xf32> to vector<8x128xbf16>
      %c0_313 = arith.constant 0 : index
      %c0_314 = arith.constant 0 : index
      %429 = vector.load %arg3[%c0_313, %c0_314] : memref<128x512xbf16, #tpu.memory_space<vmem>>, vector<128x512xbf16>
      %cst_315 = arith.constant dense<0.000000e+00> : vector<8x512xf32>
      %430 = tpu.matmul %428, %429, %cst_315 {dimension_numbers = #tpu.dot_dimension_numbers<[1], [0], [0], [1], [0, 0, 1, 1], [], []>} : vector<8x128xbf16>, vector<128x512xbf16>, vector<8x512xf32> -> vector<8x512xf32>
      %c0_316 = arith.constant 0 : index
      %c0_317 = arith.constant 0 : index
      %431 = vector.load %arg4[%c0_316, %c0_317] : memref<1x512xf32, #tpu.memory_space<vmem>>, vector<1x512xf32>
      %c0_318 = arith.constant 0 : index
      %c0_319 = arith.constant 0 : index
      %432 = vector.load %arg5[%c0_318, %c0_319] : memref<1x512xf32, #tpu.memory_space<vmem>>, vector<1x512xf32>
      %cst_320 = arith.constant dense<0.000000e+00> : vector<512xf32>
      %433 = vector.multi_reduction <add>, %430, %cst_320 [0] : vector<8x512xf32> to vector<512xf32>
      %434 = vector.shape_cast %433 : vector<512xf32> to vector<1x512xf32>
      %cst_321 = arith.constant 8.000000e+00 : f32
      %435 = vector.broadcast %cst_321 : f32 to vector<1x512xf32>
      %436 = arith.divf %434, %435 : vector<1x512xf32>
      %437 = vector.broadcast %436 : vector<1x512xf32> to vector<8x512xf32>
      %438 = arith.subf %430, %437 : vector<8x512xf32>
      %439 = vector.broadcast %436 : vector<1x512xf32> to vector<8x512xf32>
      %440 = arith.subf %430, %439 : vector<8x512xf32>
      %441 = arith.mulf %438, %440 : vector<8x512xf32>
      %cst_322 = arith.constant dense<0.000000e+00> : vector<512xf32>
      %442 = vector.multi_reduction <add>, %441, %cst_322 [0] : vector<8x512xf32> to vector<512xf32>
      %443 = vector.shape_cast %442 : vector<512xf32> to vector<1x512xf32>
      %cst_323 = arith.constant 8.000000e+00 : f32
      %444 = vector.broadcast %cst_323 : f32 to vector<1x512xf32>
      %445 = arith.divf %443, %444 : vector<1x512xf32>
      %446 = vector.broadcast %436 : vector<1x512xf32> to vector<8x512xf32>
      %447 = arith.subf %430, %446 : vector<8x512xf32>
      %cst_324 = arith.constant 9.99999974E-6 : f32
      %448 = vector.broadcast %cst_324 : f32 to vector<1x512xf32>
      %449 = arith.addf %445, %448 : vector<1x512xf32>
      %450 = math.rsqrt %449 : vector<1x512xf32>
      %451 = vector.broadcast %450 : vector<1x512xf32> to vector<8x512xf32>
      %452 = arith.mulf %447, %451 : vector<8x512xf32>
      %453 = vector.broadcast %431 : vector<1x512xf32> to vector<8x512xf32>
      %454 = arith.mulf %452, %453 : vector<8x512xf32>
      %455 = vector.broadcast %432 : vector<1x512xf32> to vector<8x512xf32>
      %456 = arith.addf %454, %455 : vector<8x512xf32>
      %cst_325 = arith.constant 0.000000e+00 : f32
      %457 = vector.broadcast %cst_325 : f32 to vector<8x512xf32>
      %458 = arith.maximumf %456, %457 : vector<8x512xf32>
      %459 = arith.truncf %458 : vector<8x512xf32> to vector<8x512xbf16>
      %c0_326 = arith.constant 0 : index
      %c0_327 = arith.constant 0 : index
      %460 = vector.load %arg6[%c0_326, %c0_327] : memref<512x512xbf16, #tpu.memory_space<vmem>>, vector<512x512xbf16>
      %cst_328 = arith.constant dense<0.000000e+00> : vector<8x512xf32>
      %461 = tpu.matmul %459, %460, %cst_328 {dimension_numbers = #tpu.dot_dimension_numbers<[1], [0], [0], [1], [0, 0, 1, 1], [], []>} : vector<8x512xbf16>, vector<512x512xbf16>, vector<8x512xf32> -> vector<8x512xf32>
      %c0_329 = arith.constant 0 : index
      %c0_330 = arith.constant 0 : index
      %462 = vector.load %arg7[%c0_329, %c0_330] : memref<1x512xf32, #tpu.memory_space<vmem>>, vector<1x512xf32>
      %c0_331 = arith.constant 0 : index
      %c0_332 = arith.constant 0 : index
      %463 = vector.load %arg8[%c0_331, %c0_332] : memref<1x512xf32, #tpu.memory_space<vmem>>, vector<1x512xf32>
      %cst_333 = arith.constant dense<0.000000e+00> : vector<512xf32>
      %464 = vector.multi_reduction <add>, %461, %cst_333 [0] : vector<8x512xf32> to vector<512xf32>
      %465 = vector.shape_cast %464 : vector<512xf32> to vector<1x512xf32>
      %cst_334 = arith.constant 8.000000e+00 : f32
      %466 = vector.broadcast %cst_334 : f32 to vector<1x512xf32>
      %467 = arith.divf %465, %466 : vector<1x512xf32>
      %468 = vector.broadcast %467 : vector<1x512xf32> to vector<8x512xf32>
      %469 = arith.subf %461, %468 : vector<8x512xf32>
      %470 = vector.broadcast %467 : vector<1x512xf32> to vector<8x512xf32>
      %471 = arith.subf %461, %470 : vector<8x512xf32>
      %472 = arith.mulf %469, %471 : vector<8x512xf32>
      %cst_335 = arith.constant dense<0.000000e+00> : vector<512xf32>
      %473 = vector.multi_reduction <add>, %472, %cst_335 [0] : vector<8x512xf32> to vector<512xf32>
      %474 = vector.shape_cast %473 : vector<512xf32> to vector<1x512xf32>
      %cst_336 = arith.constant 8.000000e+00 : f32
      %475 = vector.broadcast %cst_336 : f32 to vector<1x512xf32>
      %476 = arith.divf %474, %475 : vector<1x512xf32>
      %477 = vector.broadcast %467 : vector<1x512xf32> to vector<8x512xf32>
      %478 = arith.subf %461, %477 : vector<8x512xf32>
      %cst_337 = arith.constant 9.99999974E-6 : f32
      %479 = vector.broadcast %cst_337 : f32 to vector<1x512xf32>
      %480 = arith.addf %476, %479 : vector<1x512xf32>
      %481 = math.rsqrt %480 : vector<1x512xf32>
      %482 = vector.broadcast %481 : vector<1x512xf32> to vector<8x512xf32>
      %483 = arith.mulf %478, %482 : vector<8x512xf32>
      %484 = vector.broadcast %462 : vector<1x512xf32> to vector<8x512xf32>
      %485 = arith.mulf %483, %484 : vector<8x512xf32>
      %486 = vector.broadcast %463 : vector<1x512xf32> to vector<8x512xf32>
      %487 = arith.addf %485, %486 : vector<8x512xf32>
      %cst_338 = arith.constant 0.000000e+00 : f32
      %488 = vector.broadcast %cst_338 : f32 to vector<8x512xf32>
      %489 = arith.maximumf %487, %488 : vector<8x512xf32>
      %490 = arith.truncf %489 : vector<8x512xf32> to vector<8x512xbf16>
      %c0_339 = arith.constant 0 : index
      %c0_340 = arith.constant 0 : index
      %491 = vector.load %arg9[%c0_339, %c0_340] : memref<512x256xbf16, #tpu.memory_space<vmem>>, vector<512x256xbf16>
      %cst_341 = arith.constant dense<0.000000e+00> : vector<8x256xf32>
      %492 = tpu.matmul %490, %491, %cst_341 {dimension_numbers = #tpu.dot_dimension_numbers<[1], [0], [0], [1], [0, 0, 1, 1], [], []>} : vector<8x512xbf16>, vector<512x256xbf16>, vector<8x256xf32> -> vector<8x256xf32>
      %cst_342 = arith.constant dense<0.000000e+00> : vector<256xf32>
      %493 = vector.multi_reduction <add>, %492, %cst_342 [0] : vector<8x256xf32> to vector<256xf32>
      %494 = vector.shape_cast %493 : vector<256xf32> to vector<1x256xf32>
      %cst_343 = arith.constant 8.000000e+00 : f32
      %495 = vector.broadcast %cst_343 : f32 to vector<1x256xf32>
      %496 = arith.divf %494, %495 : vector<1x256xf32>
      %497 = vector.broadcast %496 : vector<1x256xf32> to vector<8x256xf32>
      %498 = arith.subf %492, %497 : vector<8x256xf32>
      %499 = vector.broadcast %496 : vector<1x256xf32> to vector<8x256xf32>
      %500 = arith.subf %492, %499 : vector<8x256xf32>
      %501 = arith.mulf %498, %500 : vector<8x256xf32>
      %cst_344 = arith.constant dense<0.000000e+00> : vector<256xf32>
      %502 = vector.multi_reduction <add>, %501, %cst_344 [0] : vector<8x256xf32> to vector<256xf32>
      %503 = vector.shape_cast %502 : vector<256xf32> to vector<1x256xf32>
      %cst_345 = arith.constant 8.000000e+00 : f32
      %504 = vector.broadcast %cst_345 : f32 to vector<1x256xf32>
      %505 = arith.divf %503, %504 : vector<1x256xf32>
      %506 = vector.broadcast %496 : vector<1x256xf32> to vector<8x256xf32>
      %507 = arith.subf %492, %506 : vector<8x256xf32>
      %cst_346 = arith.constant 9.99999974E-6 : f32
      %508 = vector.broadcast %cst_346 : f32 to vector<1x256xf32>
      %509 = arith.addf %505, %508 : vector<1x256xf32>
      %510 = math.rsqrt %509 : vector<1x256xf32>
      %511 = vector.broadcast %510 : vector<1x256xf32> to vector<8x256xf32>
      %512 = arith.mulf %507, %511 : vector<8x256xf32>
      %c0_347 = arith.constant 0 : index
      %c0_348 = arith.constant 0 : index
      %513 = vector.load %arg10[%c0_347, %c0_348] : memref<8x256xf32, #tpu.memory_space<vmem>>, vector<8x256xf32>
      tpu.vector_store %arg10[%c0_347, %c0_348], %512 {strides = array<i32>} : memref<8x256xf32, #tpu.memory_space<vmem>>, vector<8x256xf32>,
    } else {
    }
    return
  }
  func.func @transform_0(%arg0: i32) -> (i32, i32, i32) {
    %c0_i32 = arith.constant 0 : i32
    %c0_i32_0 = arith.constant 0 : i32
    %c0_i32_1 = arith.constant 0 : i32
    return %c0_i32, %c0_i32_0, %arg0 : i32, i32, i32
  }
  func.func @transform_1(%arg0: i32) -> (i32, i32) {
    %c0_i32 = arith.constant 0 : i32
    %c0_i32_0 = arith.constant 0 : i32
    %c0_i32_1 = arith.constant 0 : i32
    return %c0_i32, %c0_i32_0 : i32, i32
  }
  func.func @transform_2(%arg0: i32) -> (i32, i32) {
    %c0_i32 = arith.constant 0 : i32
    %c0_i32_0 = arith.constant 0 : i32
    %c0_i32_1 = arith.constant 0 : i32
    return %c0_i32, %c0_i32_0 : i32, i32
  }
  func.func @transform_3(%arg0: i32) -> (i32, i32) {
    %c0_i32 = arith.constant 0 : i32
    %c0_i32_0 = arith.constant 0 : i32
    %c0_i32_1 = arith.constant 0 : i32
    return %c0_i32, %c0_i32_0 : i32, i32
  }
  func.func @transform_4(%arg0: i32) -> (i32, i32) {
    %c0_i32 = arith.constant 0 : i32
    %c0_i32_0 = arith.constant 0 : i32
    %c0_i32_1 = arith.constant 0 : i32
    return %c0_i32, %c0_i32_0 : i32, i32
  }
  func.func @transform_5(%arg0: i32) -> (i32, i32) {
    %c0_i32 = arith.constant 0 : i32
    %c0_i32_0 = arith.constant 0 : i32
    %c0_i32_1 = arith.constant 0 : i32
    return %c0_i32, %c0_i32_0 : i32, i32
  }
  func.func @transform_6(%arg0: i32) -> (i32, i32) {
    %c0_i32 = arith.constant 0 : i32
    %c0_i32_0 = arith.constant 0 : i32
    %c0_i32_1 = arith.constant 0 : i32
    return %c0_i32, %c0_i32_0 : i32, i32
  }
  func.func @transform_7(%arg0: i32) -> (i32, i32) {
    %c0_i32 = arith.constant 0 : i32
    %c0_i32_0 = arith.constant 0 : i32
    %c0_i32_1 = arith.constant 0 : i32
    return %c0_i32, %c0_i32_0 : i32, i32
  }
  func.func @transform_8(%arg0: i32) -> (i32, i32) {
    %c0_i32 = arith.constant 0 : i32
    %c0_i32_0 = arith.constant 0 : i32
    %c0_i32_1 = arith.constant 0 : i32
    return %c0_i32, %c0_i32_0 : i32, i32
  }
  func.func @transform_9(%arg0: i32) -> (i32, i32) {
    %c0_i32 = arith.constant 0 : i32
    %c0_i32_0 = arith.constant 0 : i32
    %c0_i32_1 = arith.constant 0 : i32
    return %c0_i32, %c0_i32_0 : i32, i32
  }
  func.func @transform_10(%arg0: i32) -> (i32, i32) {
    %c0_i32 = arith.constant 0 : i32
    %c0_i32_0 = arith.constant 0 : i32
    %c0_i32_1 = arith.constant 0 : i32
    return %c0_i32, %c0_i32_0 : i32, i32
  }
}

</mosaic_0001>

<llo_original>
// kernel: tpu_custom_call.1
$region0: #{tpu_custom_call.1}
  #allocation0 [shape = 'u32[]', space=smem, size = 0x4, offset = 0x4, fixed_abs, tag = 'smem constant byte address 0x4 - core index']
  #allocation1 [shape = 'u32[144,128]{1,0:T(1,128)}', space=vmem, size = 0x12000, scoped, tag = 'internal scratch']
  %s0 = inlined_call_operand.vmem [shape: f32[8,3,256], index: 0, kind: input, shape index: {}]
  %s1 = inlined_call_operand.vmem [shape: f32[128,3], index: 1, kind: input, shape index: {}]
  %s2 = inlined_call_operand.hbm [shape: bf16[128,512], index: 2, kind: input, shape index: {}]
  %s3 = inlined_call_operand.vmem [shape: f32[1,512], index: 3, kind: input, shape index: {}]
  %s4 = inlined_call_operand.vmem [shape: f32[1,512], index: 4, kind: input, shape index: {}]
  %s5 = inlined_call_operand.hbm [shape: bf16[512,512], index: 5, kind: input, shape index: {}]
  %s6 = inlined_call_operand.vmem [shape: f32[1,512], index: 6, kind: input, shape index: {}]
  %s7 = inlined_call_operand.vmem [shape: f32[1,512], index: 7, kind: input, shape index: {}]
  %s8 = inlined_call_operand.hbm [shape: bf16[512,256], index: 8, kind: input, shape index: {}]
  %s9 = inlined_call_operand.hbm [shape: f32[8,256], index: 9, kind: output, shape index: {0}]
  %s10 = inlined_call_operand.hbm [shape: f32[8,128], index: 10, kind: output, shape index: {1}]
  %11 = xla_tuple %s9, %s10
  %s12 = sld [smem:[#allocation0]]
  $region74: #{tpu_custom_call.1} parent=0
    _
  %s14 = ssub.s32 1, %s12
  %s15 = scalar_select 0, %s14, %s12
  $region1: #{tpu_custom_call.1} parent=0
    #allocation2 [shape = 'u8[131072]{0}', space=vmem, size = 0x20000, scoped, tag = 'input window, operand 2, single buffered']
    #allocation3 [shape = 's32[1]{0}', space=sflag, size = 0x4, scoped, tag = 'scoped memory for tpu_custom_call.1']
    #allocation4 [shape = 's32[1]{0}', space=sflag, size = 0x4, scoped, tag = 'scoped memory for tpu_custom_call.1']
    #allocation5 [shape = 'u8[524288]{0}', space=vmem, size = 0x80000, scoped, tag = 'input window, operand 5, single buffered']
    #allocation6 [shape = 's32[1]{0}', space=sflag, size = 0x4, scoped, tag = 'scoped memory for tpu_custom_call.1']
    #allocation7 [shape = 'u8[262144]{0}', space=vmem, size = 0x40000, scoped, tag = 'input window, operand 8, single buffered']
    #allocation8 [shape = 'u8[8192]{0}', space=vmem, size = 0x2000, scoped, tag = 'output window, operand 0, single buffered']
    #allocation9 [shape = 'u8[4096]{0}', space=vmem, size = 0x1000, scoped, tag = 'output window, operand 1, single buffered']
    #allocation10 [shape = 's32[1]{0}', space=sflag, size = 0x4, scoped, tag = 'scoped memory for tpu_custom_call.1']
    %16 = vsyncpa [#allocation3], 0
    %17 = vsyncpa [#allocation6], 0
    %18 = vsyncpa [#allocation4], 0
    %19 = vsyncpa [#allocation10], 0
    // Predicated region
    $region2: #{tpu_custom_call.1} parent=1 // pred_check
      _
    $region3: #{tpu_custom_call.1} parent=1 // pred_check_branch
      %21 = sbr.rel (0) target = $region5
    $region4: #{tpu_custom_call.1} parent=1 // pred_region
      _
    $region5: #{tpu_custom_call.1} parent=1 // pred_fallthru
      _
    // Predicated region
    $region6: #{tpu_custom_call.1} parent=1 // pred_check
      _
    $region7: #{tpu_custom_call.1} parent=1 // pred_check_branch
      %23 = sbr.rel (0) target = $region9
    $region8: #{tpu_custom_call.1} parent=1 // pred_region
      _
    $region9: #{tpu_custom_call.1} parent=1 // pred_fallthru
      _
    // Predicated region
    $region10: #{tpu_custom_call.1} parent=1 // pred_check
      _
    $region11: #{tpu_custom_call.1} parent=1 // pred_check_branch
      %25 = sbr.rel (0) target = $region13
    $region12: #{tpu_custom_call.1} parent=1 // pred_region
      %s27 = ssub.s32 4096, 4096
      %28 = vsyncadd [#allocation3], %s27
      %s29 = sshll.u32 [#allocation2], 4
      %s30 = int_to_ptr.vmem [resolvable:$true] %s29
      %35 = dma.hbm_to_vmem [thread:$0]  %s2, 4096, %s30, [#allocation3], 256, 256, 16
    $region13: #{tpu_custom_call.1} parent=1 // pred_fallthru
      _
    // Predicated region
    $region14: #{tpu_custom_call.1} parent=1 // pred_check
      _
    $region15: #{tpu_custom_call.1} parent=1 // pred_check_branch
      %37 = sbr.rel (0) target = $region17
    $region16: #{tpu_custom_call.1} parent=1 // pred_region
      _
    $region17: #{tpu_custom_call.1} parent=1 // pred_fallthru
      _
    // Predicated region
    $region18: #{tpu_custom_call.1} parent=1 // pred_check
      _
    $region19: #{tpu_custom_call.1} parent=1 // pred_check_branch
      %39 = sbr.rel (0) target = $region21
    $region20: #{tpu_custom_call.1} parent=1 // pred_region
      _
    $region21: #{tpu_custom_call.1} parent=1 // pred_fallthru
      _
    // Predicated region
    $region22: #{tpu_custom_call.1} parent=1 // pred_check
      _
    $region23: #{tpu_custom_call.1} parent=1 // pred_check_branch
      %41 = sbr.rel (0) target = $region25
    $region24: #{tpu_custom_call.1} parent=1 // pred_region
      %s43 = ssub.s32 16384, 16384
      %44 = vsyncadd [#allocation6], %s43
      %s45 = sshll.u32 [#allocation5], 4
      %s46 = int_to_ptr.vmem [resolvable:$true] %s45
      %51 = dma.hbm_to_vmem [thread:$0]  %s5, 16384, %s46, [#allocation6], 256, 256, 16
    $region25: #{tpu_custom_call.1} parent=1 // pred_fallthru
      _
    // Predicated region
    $region26: #{tpu_custom_call.1} parent=1 // pred_check
      _
    $region27: #{tpu_custom_call.1} parent=1 // pred_check_branch
      %53 = sbr.rel (0) target = $region29
    $region28: #{tpu_custom_call.1} parent=1 // pred_region
      _
    $region29: #{tpu_custom_call.1} parent=1 // pred_fallthru
      _
    // Predicated region
    $region30: #{tpu_custom_call.1} parent=1 // pred_check
      _
    $region31: #{tpu_custom_call.1} parent=1 // pred_check_branch
      %55 = sbr.rel (0) target = $region33
    $region32: #{tpu_custom_call.1} parent=1 // pred_region
      _
    $region33: #{tpu_custom_call.1} parent=1 // pred_fallthru
      _
    // Predicated region
    $region34: #{tpu_custom_call.1} parent=1 // pred_check
      _
    $region35: #{tpu_custom_call.1} parent=1 // pred_check_branch
      %57 = sbr.rel (0) target = $region37
    $region36: #{tpu_custom_call.1} parent=1 // pred_region
      %s59 = ssub.s32 8192, 8192
      %60 = vsyncadd [#allocation6], %s59
      %s61 = sshll.u32 [#allocation7], 4
      %s62 = int_to_ptr.vmem [resolvable:$true] %s61
      %67 = dma.hbm_to_vmem [thread:$0]  %s8, 8192, %s62, [#allocation6], 128, 128, 8
    $region37: #{tpu_custom_call.1} parent=1 // pred_fallthru
      _
    // Predicated region
    $region38: #{tpu_custom_call.1} parent=1 // pred_check
      _
    $region39: #{tpu_custom_call.1} parent=1 // pred_check_branch
      %69 = sbr.rel (0) target = $region41
    $region40: #{tpu_custom_call.1} parent=1 // pred_region
      %70 = dma.done [#allocation3], 4096
    $region41: #{tpu_custom_call.1} parent=1 // pred_fallthru
      _
    // Predicated region
    $region42: #{tpu_custom_call.1} parent=1 // pred_check
      _
    $region43: #{tpu_custom_call.1} parent=1 // pred_check_branch
      %72 = sbr.rel (0) target = $region45
    $region44: #{tpu_custom_call.1} parent=1 // pred_region
      %73 = dma.done [#allocation6], 16384
    $region45: #{tpu_custom_call.1} parent=1 // pred_fallthru
      _
    // Predicated region
    $region46: #{tpu_custom_call.1} parent=1 // pred_check
      _
    $region47: #{tpu_custom_call.1} parent=1 // pred_check_branch
      %75 = sbr.rel (0) target = $region49
    $region48: #{tpu_custom_call.1} parent=1 // pred_region
      %76 = dma.done [#allocation6], 8192
    $region49: #{tpu_custom_call.1} parent=1 // pred_fallthru
      _
    %p78 = scmp.eq.s32.totalorder 0, 0
    // Predicated region
    $region50: #{tpu_custom_call.1} parent=1 // pred_check
      %p79 = pneg %p78
    $region51: #{tpu_custom_call.1} parent=1 // pred_check_branch
      %81 = sbr.rel (%p79) target = $region53
    $region52: #{tpu_custom_call.1} parent=1 // pred_region
      %82 = vst [vmem:[#allocation9] sm:$0xff] 0.0
    $region53: #{tpu_custom_call.1} parent=1 // pred_fallthru
      _
    %v83 = vld [vmem:[%s1] sm:$0xff]
    %v84 = vld [vmem:[%s1 + $0x8] sm:$0xff]
    %v85 = vld [vmem:[%s1 + $0x10] sm:$0xff]
    %v86 = vld [vmem:[%s1 + $0x18] sm:$0xff]
    %v87 = vld [vmem:[%s1 + $0x20] sm:$0xff]
    %v88 = vld [vmem:[%s1 + $0x28] sm:$0xff]
    %v89 = vld [vmem:[%s1 + $0x30] sm:$0xff]
    %v90 = vld [vmem:[%s1 + $0x38] sm:$0xff]
    %v91 = vld [vmem:[%s1 + $0x40] sm:$0xff]
    %v92 = vld [vmem:[%s1 + $0x48] sm:$0xff]
    %v93 = vld [vmem:[%s1 + $0x50] sm:$0xff]
    %v94 = vld [vmem:[%s1 + $0x58] sm:$0xff]
    %v95 = vld [vmem:[%s1 + $0x60] sm:$0xff]
    %v96 = vld [vmem:[%s1 + $0x68] sm:$0xff]
    %v97 = vld [vmem:[%s1 + $0x70] sm:$0xff]
    %v98 = vld [vmem:[%s1 + $0x78] sm:$0xff]
    %v99 = vld [vmem:[%s0] sm:$0x1]
    %101 = vset.pattern.permute.xlu0 0
    %102 = vperm.xlu0 %101, %v83
    %v103 = vpop.permute.xlu0 %102
    %106 = vset.pattern.permute.xlu0 0
    %107 = vperm.xlu0 %106, %v84
    %v108 = vpop.permute.xlu0 %107
    %111 = vset.pattern.permute.xlu0 0
    %112 = vperm.xlu0 %111, %v85
    %v113 = vpop.permute.xlu0 %112
    %116 = vset.pattern.permute.xlu0 0
    %117 = vperm.xlu0 %116, %v86
    %v118 = vpop.permute.xlu0 %117
    %121 = vset.pattern.permute.xlu0 0
    %122 = vperm.xlu0 %121, %v87
    %v123 = vpop.permute.xlu0 %122
    %126 = vset.pattern.permute.xlu0 0
    %127 = vperm.xlu0 %126, %v88
    %v128 = vpop.permute.xlu0 %127
    %131 = vset.pattern.permute.xlu0 0
    %132 = vperm.xlu0 %131, %v89
    %v133 = vpop.permute.xlu0 %132
    %136 = vset.pattern.permute.xlu0 0
    %137 = vperm.xlu0 %136, %v90
    %v138 = vpop.permute.xlu0 %137
    %141 = vset.pattern.permute.xlu0 0
    %142 = vperm.xlu0 %141, %v91
    %v143 = vpop.permute.xlu0 %142
    %146 = vset.pattern.permute.xlu0 0
    %147 = vperm.xlu0 %146, %v92
    %v148 = vpop.permute.xlu0 %147
    %151 = vset.pattern.permute.xlu0 0
    %152 = vperm.xlu0 %151, %v93
    %v153 = vpop.permute.xlu0 %152
    %156 = vset.pattern.permute.xlu0 0
    %157 = vperm.xlu0 %156, %v94
    %v158 = vpop.permute.xlu0 %157
    %161 = vset.pattern.permute.xlu0 0
    %162 = vperm.xlu0 %161, %v95
    %v163 = vpop.permute.xlu0 %162
    %166 = vset.pattern.permute.xlu0 0
    %167 = vperm.xlu0 %166, %v96
    %v168 = vpop.permute.xlu0 %167
    %171 = vset.pattern.permute.xlu0 0
    %172 = vperm.xlu0 %171, %v97
    %v173 = vpop.permute.xlu0 %172
    %176 = vset.pattern.permute.xlu0 0
    %177 = vperm.xlu0 %176, %v98
    %v178 = vpop.permute.xlu0 %177
    %v180 = vlaneseq
    %v181 = vshrl.u32 %v180, 7
    %v182 = vsub.s32 0, %v181
    %v183 = vrot.slane %v99, %v182
    %v184 = vmul.f32 %v103, %v183
    %v185 = vmul.f32 %v108, %v183
    %v186 = vmul.f32 %v113, %v183
    %v187 = vmul.f32 %v118, %v183
    %v188 = vmul.f32 %v123, %v183
    %v189 = vmul.f32 %v128, %v183
    %v190 = vmul.f32 %v133, %v183
    %v191 = vmul.f32 %v138, %v183
    %v192 = vmul.f32 %v143, %v183
    %v193 = vmul.f32 %v148, %v183
    %v194 = vmul.f32 %v153, %v183
    %v195 = vmul.f32 %v158, %v183
    %v196 = vmul.f32 %v163, %v183
    %v197 = vmul.f32 %v168, %v183
    %v198 = vmul.f32 %v173, %v183
    %v199 = vmul.f32 %v178, %v183
    %v200 = vld [vmem:[%s0 + $0x1] sm:$0x1]
    %201 = vset.pattern.permute.xlu0 1
    %202 = vperm.xlu0 %201, %v83
    %v203 = vpop.permute.xlu0 %202
    %205 = vset.pattern.permute.xlu0 1
    %206 = vperm.xlu0 %205, %v84
    %v207 = vpop.permute.xlu0 %206
    %209 = vset.pattern.permute.xlu0 1
    %210 = vperm.xlu0 %209, %v85
    %v211 = vpop.permute.xlu0 %210
    %213 = vset.pattern.permute.xlu0 1
    %214 = vperm.xlu0 %213, %v86
    %v215 = vpop.permute.xlu0 %214
    %217 = vset.pattern.permute.xlu0 1
    %218 = vperm.xlu0 %217, %v87
    %v219 = vpop.permute.xlu0 %218
    %221 = vset.pattern.permute.xlu0 1
    %222 = vperm.xlu0 %221, %v88
    %v223 = vpop.permute.xlu0 %222
    %225 = vset.pattern.permute.xlu0 1
    %226 = vperm.xlu0 %225, %v89
    %v227 = vpop.permute.xlu0 %226
    %229 = vset.pattern.permute.xlu0 1
    %230 = vperm.xlu0 %229, %v90
    %v231 = vpop.permute.xlu0 %230
    %233 = vset.pattern.permute.xlu0 1
    %234 = vperm.xlu0 %233, %v91
    %v235 = vpop.permute.xlu0 %234
    %237 = vset.pattern.permute.xlu0 1
    %238 = vperm.xlu0 %237, %v92
    %v239 = vpop.permute.xlu0 %238
    %241 = vset.pattern.permute.xlu0 1
    %242 = vperm.xlu0 %241, %v93
    %v243 = vpop.permute.xlu0 %242
    %245 = vset.pattern.permute.xlu0 1
    %246 = vperm.xlu0 %245, %v94
    %v247 = vpop.permute.xlu0 %246
    %249 = vset.pattern.permute.xlu0 1
    %250 = vperm.xlu0 %249, %v95
    %v251 = vpop.permute.xlu0 %250
    %253 = vset.pattern.permute.xlu0 1
    %254 = vperm.xlu0 %253, %v96
    %v255 = vpop.permute.xlu0 %254
    %257 = vset.pattern.permute.xlu0 1
    %258 = vperm.xlu0 %257, %v97
    %v259 = vpop.permute.xlu0 %258
    %261 = vset.pattern.permute.xlu0 1
    %262 = vperm.xlu0 %261, %v98
    %v263 = vpop.permute.xlu0 %262
    %v265 = vlaneseq
    %v266 = vshrl.u32 %v265, 7
    %v267 = vsub.s32 0, %v266
    %v268 = vrot.slane %v200, %v267
    %v269 = vmul.f32 %v203, %v268
    %v270 = vmul.f32 %v207, %v268
    %v271 = vmul.f32 %v211, %v268
    %v272 = vmul.f32 %v215, %v268
    %v273 = vmul.f32 %v219, %v268
    %v274 = vmul.f32 %v223, %v268
    %v275 = vmul.f32 %v227, %v268
    %v276 = vmul.f32 %v231, %v268
    %v277 = vmul.f32 %v235, %v268
    %v278 = vmul.f32 %v239, %v268
    %v279 = vmul.f32 %v243, %v268
    %v280 = vmul.f32 %v247, %v268
    %v281 = vmul.f32 %v251, %v268
    %v282 = vmul.f32 %v255, %v268
    %v283 = vmul.f32 %v259, %v268
    %v284 = vmul.f32 %v263, %v268
    %v285 = vadd.f32 %v184, %v269
    %v286 = vadd.f32 %v185, %v270
    %v287 = vadd.f32 %v186, %v271
    %v288 = vadd.f32 %v187, %v272
    %v289 = vadd.f32 %v188, %v273
    %v290 = vadd.f32 %v189, %v274
    %v291 = vadd.f32 %v190, %v275
    %v292 = vadd.f32 %v191, %v276
    %v293 = vadd.f32 %v192, %v277
    %v294 = vadd.f32 %v193, %v278
    %v295 = vadd.f32 %v194, %v279
    %v296 = vadd.f32 %v195, %v280
    %v297 = vadd.f32 %v196, %v281
    %v298 = vadd.f32 %v197, %v282
    %v299 = vadd.f32 %v198, %v283
    %v300 = vadd.f32 %v199, %v284
    %v301 = vld [vmem:[%s0 + $0x2] sm:$0x1]
    %302 = vset.pattern.permute.xlu0 2
    %303 = vperm.xlu0 %302, %v83
    %v304 = vpop.permute.xlu0 %303
    %306 = vset.pattern.permute.xlu0 2
    %307 = vperm.xlu0 %306, %v84
    %v308 = vpop.permute.xlu0 %307
    %310 = vset.pattern.permute.xlu0 2
    %311 = vperm.xlu0 %310, %v85
    %v312 = vpop.permute.xlu0 %311
    %314 = vset.pattern.permute.xlu0 2
    %315 = vperm.xlu0 %314, %v86
    %v316 = vpop.permute.xlu0 %315
    %318 = vset.pattern.permute.xlu0 2
    %319 = vperm.xlu0 %318, %v87
    %v320 = vpop.permute.xlu0 %319
    %322 = vset.pattern.permute.xlu0 2
    %323 = vperm.xlu0 %322, %v88
    %v324 = vpop.permute.xlu0 %323
    %326 = vset.pattern.permute.xlu0 2
    %327 = vperm.xlu0 %326, %v89
    %v328 = vpop.permute.xlu0 %327
    %330 = vset.pattern.permute.xlu0 2
    %331 = vperm.xlu0 %330, %v90
    %v332 = vpop.permute.xlu0 %331
    %334 = vset.pattern.permute.xlu0 2
    %335 = vperm.xlu0 %334, %v91
    %v336 = vpop.permute.xlu0 %335
    %338 = vset.pattern.permute.xlu0 2
    %339 = vperm.xlu0 %338, %v92
    %v340 = vpop.permute.xlu0 %339
    %342 = vset.pattern.permute.xlu0 2
    %343 = vperm.xlu0 %342, %v93
    %v344 = vpop.permute.xlu0 %343
    %346 = vset.pattern.permute.xlu0 2
    %347 = vperm.xlu0 %346, %v94
    %v348 = vpop.permute.xlu0 %347
    %350 = vset.pattern.permute.xlu0 2
    %351 = vperm.xlu0 %350, %v95
    %v352 = vpop.permute.xlu0 %351
    %354 = vset.pattern.permute.xlu0 2
    %355 = vperm.xlu0 %354, %v96
    %v356 = vpop.permute.xlu0 %355
    %358 = vset.pattern.permute.xlu0 2
    %359 = vperm.xlu0 %358, %v97
    %v360 = vpop.permute.xlu0 %359
    %362 = vset.pattern.permute.xlu0 2
    %363 = vperm.xlu0 %362, %v98
    %v364 = vpop.permute.xlu0 %363
    %v366 = vlaneseq
    %v367 = vshrl.u32 %v366, 7
    %v368 = vsub.s32 0, %v367
    %v369 = vrot.slane %v301, %v368
    %v370 = vmul.f32 %v304, %v369
    %v371 = vmul.f32 %v308, %v369
    %v372 = vmul.f32 %v312, %v369
    %v373 = vmul.f32 %v316, %v369
    %v374 = vmul.f32 %v320, %v369
    %v375 = vmul.f32 %v324, %v369
    %v376 = vmul.f32 %v328, %v369
    %v377 = vmul.f32 %v332, %v369
    %v378 = vmul.f32 %v336, %v369
    %v379 = vmul.f32 %v340, %v369
    %v380 = vmul.f32 %v344, %v369
    %v381 = vmul.f32 %v348, %v369
    %v382 = vmul.f32 %v352, %v369
    %v383 = vmul.f32 %v356, %v369
    %v384 = vmul.f32 %v360, %v369
    %v385 = vmul.f32 %v364, %v369
    %v386 = vadd.f32 %v285, %v370
    %v387 = vadd.f32 %v286, %v371
    %v388 = vadd.f32 %v287, %v372
    %v389 = vadd.f32 %v288, %v373
    %v390 = vadd.f32 %v289, %v374
    %v391 = vadd.f32 %v290, %v375
    %v392 = vadd.f32 %v291, %v376
    %v393 = vadd.f32 %v292, %v377
    %v394 = vadd.f32 %v293, %v378
    %v395 = vadd.f32 %v294, %v379
    %v396 = vadd.f32 %v295, %v380
    %v397 = vadd.f32 %v296, %v381
    %v398 = vadd.f32 %v297, %v382
    %v399 = vadd.f32 %v298, %v383
    %v400 = vadd.f32 %v299, %v384
    %v401 = vadd.f32 %v300, %v385
    %v402 = vmax.f32 %v386, 0.0
    %v403 = vmax.f32 %v387, 0.0
    %v404 = vmax.f32 %v388, 0.0
    %v405 = vmax.f32 %v389, 0.0
    %v406 = vmax.f32 %v390, 0.0
    %v407 = vmax.f32 %v391, 0.0
    %v408 = vmax.f32 %v392, 0.0
    %v409 = vmax.f32 %v393, 0.0
    %v410 = vmax.f32 %v394, 0.0
    %v411 = vmax.f32 %v395, 0.0
    %v412 = vmax.f32 %v396, 0.0
    %v413 = vmax.f32 %v397, 0.0
    %v414 = vmax.f32 %v398, 0.0
    %v415 = vmax.f32 %v399, 0.0
    %v416 = vmax.f32 %v400, 0.0
    %v417 = vmax.f32 %v401, 0.0
    %v418 = vld [vmem:[%s0 + $0x4] sm:$0x1]
    %v419 = vlaneseq
    %v420 = vshrl.u32 %v419, 7
    %v421 = vsub.s32 0, %v420
    %v422 = vrot.slane %v418, %v421
    %v423 = vmul.f32 %v103, %v422
    %v424 = vmul.f32 %v108, %v422
    %v425 = vmul.f32 %v113, %v422
    %v426 = vmul.f32 %v118, %v422
    %v427 = vmul.f32 %v123, %v422
    %v428 = vmul.f32 %v128, %v422
    %v429 = vmul.f32 %v133, %v422
    %v430 = vmul.f32 %v138, %v422
    %v431 = vmul.f32 %v143, %v422
    %v432 = vmul.f32 %v148, %v422
    %v433 = vmul.f32 %v153, %v422
    %v434 = vmul.f32 %v158, %v422
    %v435 = vmul.f32 %v163, %v422
    %v436 = vmul.f32 %v168, %v422
    %v437 = vmul.f32 %v173, %v422
    %v438 = vmul.f32 %v178, %v422
    %v439 = vld [vmem:[%s0 + $0x5] sm:$0x1]
    %v440 = vlaneseq
    %v441 = vshrl.u32 %v440, 7
    %v442 = vsub.s32 0, %v441
    %v443 = vrot.slane %v439, %v442
    %v444 = vmul.f32 %v203, %v443
    %v445 = vmul.f32 %v207, %v443
    %v446 = vmul.f32 %v211, %v443
    %v447 = vmul.f32 %v215, %v443
    %v448 = vmul.f32 %v219, %v443
    %v449 = vmul.f32 %v223, %v443
    %v450 = vmul.f32 %v227, %v443
    %v451 = vmul.f32 %v231, %v443
    %v452 = vmul.f32 %v235, %v443
    %v453 = vmul.f32 %v239, %v443
    %v454 = vmul.f32 %v243, %v443
    %v455 = vmul.f32 %v247, %v443
    %v456 = vmul.f32 %v251, %v443
    %v457 = vmul.f32 %v255, %v443
    %v458 = vmul.f32 %v259, %v443
    %v459 = vmul.f32 %v263, %v443
    %v460 = vadd.f32 %v423, %v444
    %v461 = vadd.f32 %v424, %v445
    %v462 = vadd.f32 %v425, %v446
    %v463 = vadd.f32 %v426, %v447
    %v464 = vadd.f32 %v427, %v448
    %v465 = vadd.f32 %v428, %v449
    %v466 = vadd.f32 %v429, %v450
    %v467 = vadd.f32 %v430, %v451
    %v468 = vadd.f32 %v431, %v452
    %v469 = vadd.f32 %v432, %v453
    %v470 = vadd.f32 %v433, %v454
    %v471 = vadd.f32 %v434, %v455
    %v472 = vadd.f32 %v435, %v456
    %v473 = vadd.f32 %v436, %v457
    %v474 = vadd.f32 %v437, %v458
    %v475 = vadd.f32 %v438, %v459
    %v476 = vld [vmem:[%s0 + $0x6] sm:$0x1]
    %v477 = vlaneseq
    %v478 = vshrl.u32 %v477, 7
    %v479 = vsub.s32 0, %v478
    %v480 = vrot.slane %v476, %v479
    %v481 = vmul.f32 %v304, %v480
    %v482 = vmul.f32 %v308, %v480
    %v483 = vmul.f32 %v312, %v480
    %v484 = vmul.f32 %v316, %v480
    %v485 = vmul.f32 %v320, %v480
    %v486 = vmul.f32 %v324, %v480
    %v487 = vmul.f32 %v328, %v480
    %v488 = vmul.f32 %v332, %v480
    %v489 = vmul.f32 %v336, %v480
    %v490 = vmul.f32 %v340, %v480
    %v491 = vmul.f32 %v344, %v480
    %v492 = vmul.f32 %v348, %v480
    %v493 = vmul.f32 %v352, %v480
    %v494 = vmul.f32 %v356, %v480
    %v495 = vmul.f32 %v360, %v480
    %v496 = vmul.f32 %v364, %v480
    %v497 = vadd.f32 %v460, %v481
    %v498 = vadd.f32 %v461, %v482
    %v499 = vadd.f32 %v462, %v483
    %v500 = vadd.f32 %v463, %v484
    %v501 = vadd.f32 %v464, %v485
    %v502 = vadd.f32 %v465, %v486
    %v503 = vadd.f32 %v466, %v487
    %v504 = vadd.f32 %v467, %v488
    %v505 = vadd.f32 %v468, %v489
    %v506 = vadd.f32 %v469, %v490
    %v507 = vadd.f32 %v470, %v491
    %v508 = vadd.f32 %v471, %v492
    %v509 = vadd.f32 %v472, %v493
    %v510 = vadd.f32 %v473, %v494
    %v511 = vadd.f32 %v474, %v495
    %v512 = vadd.f32 %v475, %v496
    %v513 = vmax.f32 %v497, 0.0
    %v514 = vmax.f32 %v498, 0.0
    %v515 = vmax.f32 %v499, 0.0
    %v516 = vmax.f32 %v500, 0.0
    %v517 = vmax.f32 %v501, 0.0
    %v518 = vmax.f32 %v502, 0.0
    %v519 = vmax.f32 %v503, 0.0
    %v520 = vmax.f32 %v504, 0.0
    %v521 = vmax.f32 %v505, 0.0
    %v522 = vmax.f32 %v506, 0.0
    %v523 = vmax.f32 %v507, 0.0
    %v524 = vmax.f32 %v508, 0.0
    %v525 = vmax.f32 %v509, 0.0
    %v526 = vmax.f32 %v510, 0.0
    %v527 = vmax.f32 %v511, 0.0
    %v528 = vmax.f32 %v512, 0.0
    %529 = vmatprep.subr.mxu0 0.0
    %530 = vmatpush1.xpose.msra.mxu0 %v528
    %531 = vmatprep.subr.mxu0 0.0
    %532 = vmatpush1.xpose.msra.mxu0 %v527
    %533 = vmatprep.subr.mxu0 0.0
    %534 = vmatpush1.xpose.msra.mxu0 %v526
    %535 = vmatprep.subr.mxu0 0.0
    %536 = vmatpush1.xpose.msra.mxu0 %v525
    %537 = vmatprep.subr.mxu0 0.0
    %538 = vmatpush1.xpose.msra.mxu0 %v524
    %539 = vmatprep.subr.mxu0 0.0
    %540 = vmatpush1.xpose.msra.mxu0 %v523
    %541 = vmatprep.subr.mxu0 0.0
    %542 = vmatpush1.xpose.msra.mxu0 %v522
    %543 = vmatprep.subr.mxu0 0.0
    %544 = vmatpush1.xpose.msra.mxu0 %v521
    %545 = vmatprep.subr.mxu0 0.0
    %546 = vmatpush1.xpose.msra.mxu0 %v520
    %547 = vmatprep.subr.mxu0 0.0
    %548 = vmatpush1.xpose.msra.mxu0 %v519
    %549 = vmatprep.subr.mxu0 0.0
    %550 = vmatpush1.xpose.msra.mxu0 %v518
    %551 = vmatprep.subr.mxu0 0.0
    %552 = vmatpush1.xpose.msra.mxu0 %v517
    %553 = vmatprep.subr.mxu0 0.0
    %554 = vmatpush1.xpose.msra.mxu0 %v516
    %555 = vmatprep.subr.mxu0 0.0
    %556 = vmatpush1.xpose.msra.mxu0 %v515
    %557 = vmatprep.subr.mxu0 0.0
    %558 = vmatpush1.xpose.msra.mxu0 %v514
    %559 = vmatprep.subr.mxu0 0.0
    %560 = vmatpush1.xpose.msra.mxu0 %v513
    %561 = vmatprep.subr.mxu0 0.0
    %562 = vmatpush2.xpose.msra.mxu0 0.0
    %563 = vmatprep.subr.mxu0 0.0
    %564 = vmatpush2.xpose.msra.mxu0 0.0
    %565 = vmatprep.subr.mxu0 0.0
    %566 = vmatpush2.xpose.msra.mxu0 0.0
    %567 = vmatprep.subr.mxu0 0.0
    %568 = vmatpush2.xpose.msra.mxu0 0.0
    %569 = vmatprep.subr.mxu0 0.0
    %570 = vmatpush2.xpose.msra.mxu0 0.0
    %571 = vmatprep.subr.mxu0 0.0
    %572 = vmatpush2.xpose.msra.mxu0 0.0
    %573 = vmatprep.subr.mxu0 0.0
    %574 = vmatpush2.xpose.msra.mxu0 0.0
    %575 = vmatprep.subr.mxu0 0.0
    %576 = vmatpush2.xpose.msra.mxu0 0.0
    %577 = vmatprep.subr.mxu0 0.0
    %578 = vmatpush2.xpose.msra.mxu0 0.0
    %579 = vmatprep.subr.mxu0 0.0
    %580 = vmatpush2.xpose.msra.mxu0 0.0
    %581 = vmatprep.subr.mxu0 0.0
    %582 = vmatpush2.xpose.msra.mxu0 0.0
    %583 = vmatprep.subr.mxu0 0.0
    %584 = vmatpush2.xpose.msra.mxu0 0.0
    %585 = vmatprep.subr.mxu0 0.0
    %586 = vmatpush2.xpose.msra.mxu0 0.0
    %587 = vmatprep.subr.mxu0 0.0
    %588 = vmatpush2.xpose.msra.mxu0 0.0
    %589 = vmatprep.subr.mxu0 0.0
    %590 = vmatpush2.xpose.msra.mxu0 0.0
    %591 = vmatprep.subr.mxu0 0.0
    %592 = vmatpush2.xpose.msra.mxu0 0.0
    %593 = vmatprep.mubr.f32.mxu0 0.0
    %594 = vmatmul.mubr.f32.gmra.mxu0 1.0
    %v595 = vpop.f32.mrf.mxu0
    %v596 = vadd.f32 0.0, %v595
    %v597 = vpop.f32.mrf.mxu0
    %598 = vdwg.mxu0
    %599 = vmatprep.subr.mxu0 0.0
    %600 = vmatpush1.xpose.msra.mxu0 %v417
    %601 = vmatprep.subr.mxu0 0.0
    %602 = vmatpush1.xpose.msra.mxu0 %v416
    %603 = vmatprep.subr.mxu0 0.0
    %604 = vmatpush1.xpose.msra.mxu0 %v415
    %605 = vmatprep.subr.mxu0 0.0
    %606 = vmatpush1.xpose.msra.mxu0 %v414
    %607 = vmatprep.subr.mxu0 0.0
    %608 = vmatpush1.xpose.msra.mxu0 %v413
    %609 = vmatprep.subr.mxu0 0.0
    %610 = vmatpush1.xpose.msra.mxu0 %v412
    %611 = vmatprep.subr.mxu0 0.0
    %612 = vmatpush1.xpose.msra.mxu0 %v411
    %613 = vmatprep.subr.mxu0 0.0
    %614 = vmatpush1.xpose.msra.mxu0 %v410
    %615 = vmatprep.subr.mxu0 0.0
    %616 = vmatpush1.xpose.msra.mxu0 %v409
    %617 = vmatprep.subr.mxu0 0.0
    %618 = vmatpush1.xpose.msra.mxu0 %v408
    %619 = vmatprep.subr.mxu0 0.0
    %620 = vmatpush1.xpose.msra.mxu0 %v407
    %621 = vmatprep.subr.mxu0 0.0
    %622 = vmatpush1.xpose.msra.mxu0 %v406
    %623 = vmatprep.subr.mxu0 0.0
    %624 = vmatpush1.xpose.msra.mxu0 %v405
    %625 = vmatprep.subr.mxu0 0.0
    %626 = vmatpush1.xpose.msra.mxu0 %v404
    %627 = vmatprep.subr.mxu0 0.0
    %628 = vmatpush1.xpose.msra.mxu0 %v403
    %629 = vmatprep.subr.mxu0 0.0
    %630 = vmatpush1.xpose.msra.mxu0 %v402
    %631 = vmatprep.subr.mxu0 0.0
    %632 = vmatpush2.xpose.msra.mxu0 0.0
    %633 = vmatprep.subr.mxu0 0.0
    %634 = vmatpush2.xpose.msra.mxu0 0.0
    %635 = vmatprep.subr.mxu0 0.0
    %636 = vmatpush2.xpose.msra.mxu0 0.0
    %637 = vmatprep.subr.mxu0 0.0
    %638 = vmatpush2.xpose.msra.mxu0 0.0
    %639 = vmatprep.subr.mxu0 0.0
    %640 = vmatpush2.xpose.msra.mxu0 0.0
    %641 = vmatprep.subr.mxu0 0.0
    %642 = vmatpush2.xpose.msra.mxu0 0.0
    %643 = vmatprep.subr.mxu0 0.0
    %644 = vmatpush2.xpose.msra.mxu0 0.0
    %645 = vmatprep.subr.mxu0 0.0
    %646 = vmatpush2.xpose.msra.mxu0 0.0
    %647 = vmatprep.subr.mxu0 0.0
    %648 = vmatpush2.xpose.msra.mxu0 0.0
    %649 = vmatprep.subr.mxu0 0.0
    %650 = vmatpush2.xpose.msra.mxu0 0.0
    %651 = vmatprep.subr.mxu0 0.0
    %652 = vmatpush2.xpose.msra.mxu0 0.0
    %653 = vmatprep.subr.mxu0 0.0
    %654 = vmatpush2.xpose.msra.mxu0 0.0
    %655 = vmatprep.subr.mxu0 0.0
    %656 = vmatpush2.xpose.msra.mxu0 0.0
    %657 = vmatprep.subr.mxu0 0.0
    %658 = vmatpush2.xpose.msra.mxu0 0.0
    %659 = vmatprep.subr.mxu0 0.0
    %660 = vmatpush2.xpose.msra.mxu0 0.0
    %661 = vmatprep.subr.mxu0 0.0
    %662 = vmatpush2.xpose.msra.mxu0 0.0
    %663 = vmatprep.mubr.f32.mxu0 0.0
    %664 = vmatmul.mubr.f32.gmra.mxu0 1.0
    %v665 = vpop.f32.mrf.mxu0
    %v666 = vadd.f32 %v596, %v665
    %v667 = vpop.f32.mrf.mxu0
    %668 = vdwg.mxu0
    %v669 = vld [vmem:[#allocation9] sm:$0x1]
    %v670 = vadd.f32 %v669, %v666
    %671 = vst [vmem:[#allocation9] sm:$0x1] %v670
    %v672 = vld [vmem:[%s1] sm:$0xff]
    %v673 = vld [vmem:[%s1 + $0x8] sm:$0xff]
    %v674 = vld [vmem:[%s1 + $0x10] sm:$0xff]
    %v675 = vld [vmem:[%s1 + $0x18] sm:$0xff]
    %v676 = vld [vmem:[%s1 + $0x20] sm:$0xff]
    %v677 = vld [vmem:[%s1 + $0x28] sm:$0xff]
    %v678 = vld [vmem:[%s1 + $0x30] sm:$0xff]
    %v679 = vld [vmem:[%s1 + $0x38] sm:$0xff]
    %v680 = vld [vmem:[%s1 + $0x40] sm:$0xff]
    %v681 = vld [vmem:[%s1 + $0x48] sm:$0xff]
    %v682 = vld [vmem:[%s1 + $0x50] sm:$0xff]
    %v683 = vld [vmem:[%s1 + $0x58] sm:$0xff]
    %v684 = vld [vmem:[%s1 + $0x60] sm:$0xff]
    %v685 = vld [vmem:[%s1 + $0x68] sm:$0xff]
    %v686 = vld [vmem:[%s1 + $0x70] sm:$0xff]
    %v687 = vld [vmem:[%s1 + $0x78] sm:$0xff]
    %s688 = scalar_lea.vmem %s0, 8
    %v689 = vld [vmem:[%s688] sm:$0x1]
    %691 = vset.pattern.permute.xlu0 0
    %692 = vperm.xlu0 %691, %v672
    %v693 = vpop.permute.xlu0 %692
    %696 = vset.pattern.permute.xlu0 0
    %697 = vperm.xlu0 %696, %v673
    %v698 = vpop.permute.xlu0 %697
    %701 = vset.pattern.permute.xlu0 0
    %702 = vperm.xlu0 %701, %v674
    %v703 = vpop.permute.xlu0 %702
    %706 = vset.pattern.permute.xlu0 0
    %707 = vperm.xlu0 %706, %v675
    %v708 = vpop.permute.xlu0 %707
    %711 = vset.pattern.permute.xlu0 0
    %712 = vperm.xlu0 %711, %v676
    %v713 = vpop.permute.xlu0 %712
    %716 = vset.pattern.permute.xlu0 0
    %717 = vperm.xlu0 %716, %v677
    %v718 = vpop.permute.xlu0 %717
    %721 = vset.pattern.permute.xlu0 0
    %722 = vperm.xlu0 %721, %v678
    %v723 = vpop.permute.xlu0 %722
    %726 = vset.pattern.permute.xlu0 0
    %727 = vperm.xlu0 %726, %v679
    %v728 = vpop.permute.xlu0 %727
    %731 = vset.pattern.permute.xlu0 0
    %732 = vperm.xlu0 %731, %v680
    %v733 = vpop.permute.xlu0 %732
    %736 = vset.pattern.permute.xlu0 0
    %737 = vperm.xlu0 %736, %v681
    %v738 = vpop.permute.xlu0 %737
    %741 = vset.pattern.permute.xlu0 0
    %742 = vperm.xlu0 %741, %v682
    %v743 = vpop.permute.xlu0 %742
    %746 = vset.pattern.permute.xlu0 0
    %747 = vperm.xlu0 %746, %v683
    %v748 = vpop.permute.xlu0 %747
    %751 = vset.pattern.permute.xlu0 0
    %752 = vperm.xlu0 %751, %v684
    %v753 = vpop.permute.xlu0 %752
    %756 = vset.pattern.permute.xlu0 0
    %757 = vperm.xlu0 %756, %v685
    %v758 = vpop.permute.xlu0 %757
    %761 = vset.pattern.permute.xlu0 0
    %762 = vperm.xlu0 %761, %v686
    %v763 = vpop.permute.xlu0 %762
    %766 = vset.pattern.permute.xlu0 0
    %767 = vperm.xlu0 %766, %v687
    %v768 = vpop.permute.xlu0 %767
    %v770 = vlaneseq
    %v771 = vshrl.u32 %v770, 7
    %v772 = vsub.s32 0, %v771
    %v773 = vrot.slane %v689, %v772
    %v774 = vmul.f32 %v693, %v773
    %v775 = vmul.f32 %v698, %v773
    %v776 = vmul.f32 %v703, %v773
    %v777 = vmul.f32 %v708, %v773
    %v778 = vmul.f32 %v713, %v773
    %v779 = vmul.f32 %v718, %v773
    %v780 = vmul.f32 %v723, %v773
    %v781 = vmul.f32 %v728, %v773
    %v782 = vmul.f32 %v733, %v773
    %v783 = vmul.f32 %v738, %v773
    %v784 = vmul.f32 %v743, %v773
    %v785 = vmul.f32 %v748, %v773
    %v786 = vmul.f32 %v753, %v773
    %v787 = vmul.f32 %v758, %v773
    %v788 = vmul.f32 %v763, %v773
    %v789 = vmul.f32 %v768, %v773
    %v790 = vld [vmem:[%s688 + $0x1] sm:$0x1]
    %791 = vset.pattern.permute.xlu0 1
    %792 = vperm.xlu0 %791, %v672
    %v793 = vpop.permute.xlu0 %792
    %795 = vset.pattern.permute.xlu0 1
    %796 = vperm.xlu0 %795, %v673
    %v797 = vpop.permute.xlu0 %796
    %799 = vset.pattern.permute.xlu0 1
    %800 = vperm.xlu0 %799, %v674
    %v801 = vpop.permute.xlu0 %800
    %803 = vset.pattern.permute.xlu0 1
    %804 = vperm.xlu0 %803, %v675
    %v805 = vpop.permute.xlu0 %804
    %807 = vset.pattern.permute.xlu0 1
    %808 = vperm.xlu0 %807, %v676
    %v809 = vpop.permute.xlu0 %808
    %811 = vset.pattern.permute.xlu0 1
    %812 = vperm.xlu0 %811, %v677
    %v813 = vpop.permute.xlu0 %812
    %815 = vset.pattern.permute.xlu0 1
    %816 = vperm.xlu0 %815, %v678
    %v817 = vpop.permute.xlu0 %816
    %819 = vset.pattern.permute.xlu0 1
    %820 = vperm.xlu0 %819, %v679
    %v821 = vpop.permute.xlu0 %820
    %823 = vset.pattern.permute.xlu0 1
    %824 = vperm.xlu0 %823, %v680
    %v825 = vpop.permute.xlu0 %824
    %827 = vset.pattern.permute.xlu0 1
    %828 = vperm.xlu0 %827, %v681
    %v829 = vpop.permute.xlu0 %828
    %831 = vset.pattern.permute.xlu0 1
    %832 = vperm.xlu0 %831, %v682
    %v833 = vpop.permute.xlu0 %832
    %835 = vset.pattern.permute.xlu0 1
    %836 = vperm.xlu0 %835, %v683
    %v837 = vpop.permute.xlu0 %836
    %839 = vset.pattern.permute.xlu0 1
    %840 = vperm.xlu0 %839, %v684
    %v841 = vpop.permute.xlu0 %840
    %843 = vset.pattern.permute.xlu0 1
    %844 = vperm.xlu0 %843, %v685
    %v845 = vpop.permute.xlu0 %844
    %847 = vset.pattern.permute.xlu0 1
    %848 = vperm.xlu0 %847, %v686
    %v849 = vpop.permute.xlu0 %848
    %851 = vset.pattern.permute.xlu0 1
    %852 = vperm.xlu0 %851, %v687
    %v853 = vpop.permute.xlu0 %852
    %v855 = vlaneseq
    %v856 = vshrl.u32 %v855, 7
    %v857 = vsub.s32 0, %v856
    %v858 = vrot.slane %v790, %v857
    %v859 = vmul.f32 %v793, %v858
    %v860 = vmul.f32 %v797, %v858
    %v861 = vmul.f32 %v801, %v858
    %v862 = vmul.f32 %v805, %v858
    %v863 = vmul.f32 %v809, %v858
    %v864 = vmul.f32 %v813, %v858
    %v865 = vmul.f32 %v817, %v858
    %v866 = vmul.f32 %v821, %v858
    %v867 = vmul.f32 %v825, %v858
    %v868 = vmul.f32 %v829, %v858
    %v869 = vmul.f32 %v833, %v858
    %v870 = vmul.f32 %v837, %v858
    %v871 = vmul.f32 %v841, %v858
    %v872 = vmul.f32 %v845, %v858
    %v873 = vmul.f32 %v849, %v858
    %v874 = vmul.f32 %v853, %v858
    %v875 = vadd.f32 %v774, %v859
    %v876 = vadd.f32 %v775, %v860
    %v877 = vadd.f32 %v776, %v861
    %v878 = vadd.f32 %v777, %v862
    %v879 = vadd.f32 %v778, %v863
    %v880 = vadd.f32 %v779, %v864
    %v881 = vadd.f32 %v780, %v865
    %v882 = vadd.f32 %v781, %v866
    %v883 = vadd.f32 %v782, %v867
    %v884 = vadd.f32 %v783, %v868
    %v885 = vadd.f32 %v784, %v869
    %v886 = vadd.f32 %v785, %v870
    %v887 = vadd.f32 %v786, %v871
    %v888 = vadd.f32 %v787, %v872
    %v889 = vadd.f32 %v788, %v873
    %v890 = vadd.f32 %v789, %v874
    %v891 = vld [vmem:[%s688 + $0x2] sm:$0x1]
    %892 = vset.pattern.permute.xlu0 2
    %893 = vperm.xlu0 %892, %v672
    %v894 = vpop.permute.xlu0 %893
    %896 = vset.pattern.permute.xlu0 2
    %897 = vperm.xlu0 %896, %v673
    %v898 = vpop.permute.xlu0 %897
    %900 = vset.pattern.permute.xlu0 2
    %901 = vperm.xlu0 %900, %v674
    %v902 = vpop.permute.xlu0 %901
    %904 = vset.pattern.permute.xlu0 2
    %905 = vperm.xlu0 %904, %v675
    %v906 = vpop.permute.xlu0 %905
    %908 = vset.pattern.permute.xlu0 2
    %909 = vperm.xlu0 %908, %v676
    %v910 = vpop.permute.xlu0 %909
    %912 = vset.pattern.permute.xlu0 2
    %913 = vperm.xlu0 %912, %v677
    %v914 = vpop.permute.xlu0 %913
    %916 = vset.pattern.permute.xlu0 2
    %917 = vperm.xlu0 %916, %v678
    %v918 = vpop.permute.xlu0 %917
    %920 = vset.pattern.permute.xlu0 2
    %921 = vperm.xlu0 %920, %v679
    %v922 = vpop.permute.xlu0 %921
    %924 = vset.pattern.permute.xlu0 2
    %925 = vperm.xlu0 %924, %v680
    %v926 = vpop.permute.xlu0 %925
    %928 = vset.pattern.permute.xlu0 2
    %929 = vperm.xlu0 %928, %v681
    %v930 = vpop.permute.xlu0 %929
    %932 = vset.pattern.permute.xlu0 2
    %933 = vperm.xlu0 %932, %v682
    %v934 = vpop.permute.xlu0 %933
    %936 = vset.pattern.permute.xlu0 2
    %937 = vperm.xlu0 %936, %v683
    %v938 = vpop.permute.xlu0 %937
    %940 = vset.pattern.permute.xlu0 2
    %941 = vperm.xlu0 %940, %v684
    %v942 = vpop.permute.xlu0 %941
    %944 = vset.pattern.permute.xlu0 2
    %945 = vperm.xlu0 %944, %v685
    %v946 = vpop.permute.xlu0 %945
    %948 = vset.pattern.permute.xlu0 2
    %949 = vperm.xlu0 %948, %v686
    %v950 = vpop.permute.xlu0 %949
    %952 = vset.pattern.permute.xlu0 2
    %953 = vperm.xlu0 %952, %v687
    %v954 = vpop.permute.xlu0 %953
    %v956 = vlaneseq
    %v957 = vshrl.u32 %v956, 7
    %v958 = vsub.s32 0, %v957
    %v959 = vrot.slane %v891, %v958
    %v960 = vmul.f32 %v894, %v959
    %v961 = vmul.f32 %v898, %v959
    %v962 = vmul.f32 %v902, %v959
    %v963 = vmul.f32 %v906, %v959
    %v964 = vmul.f32 %v910, %v959
    %v965 = vmul.f32 %v914, %v959
    %v966 = vmul.f32 %v918, %v959
    %v967 = vmul.f32 %v922, %v959
    %v968 = vmul.f32 %v926, %v959
    %v969 = vmul.f32 %v930, %v959
    %v970 = vmul.f32 %v934, %v959
    %v971 = vmul.f32 %v938, %v959
    %v972 = vmul.f32 %v942, %v959
    %v973 = vmul.f32 %v946, %v959
    %v974 = vmul.f32 %v950, %v959
    %v975 = vmul.f32 %v954, %v959
    %v976 = vadd.f32 %v875, %v960
    %v977 = vadd.f32 %v876, %v961
    %v978 = vadd.f32 %v877, %v962
    %v979 = vadd.f32 %v878, %v963
    %v980 = vadd.f32 %v879, %v964
    %v981 = vadd.f32 %v880, %v965
    %v982 = vadd.f32 %v881, %v966
    %v983 = vadd.f32 %v882, %v967
    %v984 = vadd.f32 %v883, %v968
    %v985 = vadd.f32 %v884, %v969
    %v986 = vadd.f32 %v885, %v970
    %v987 = vadd.f32 %v886, %v971
    %v988 = vadd.f32 %v887, %v972
    %v989 = vadd.f32 %v888, %v973
    %v990 = vadd.f32 %v889, %v974
    %v991 = vadd.f32 %v890, %v975
    %v992 = vmax.f32 %v976, 0.0
    %v993 = vmax.f32 %v977, 0.0
    %v994 = vmax.f32 %v978, 0.0
    %v995 = vmax.f32 %v979, 0.0
    %v996 = vmax.f32 %v980, 0.0
    %v997 = vmax.f32 %v981, 0.0
    %v998 = vmax.f32 %v982, 0.0
    %v999 = vmax.f32 %v983, 0.0
    %v1000 = vmax.f32 %v984, 0.0
    %v1001 = vmax.f32 %v985, 0.0
    %v1002 = vmax.f32 %v986, 0.0
    %v1003 = vmax.f32 %v987, 0.0
    %v1004 = vmax.f32 %v988, 0.0
    %v1005 = vmax.f32 %v989, 0.0
    %v1006 = vmax.f32 %v990, 0.0
    %v1007 = vmax.f32 %v991, 0.0
    %v1008 = vld [vmem:[%s688 + $0x4] sm:$0x1]
    %v1009 = vlaneseq
    %v1010 = vshrl.u32 %v1009, 7
    %v1011 = vsub.s32 0, %v1010
    %v1012 = vrot.slane %v1008, %v1011
    %v1013 = vmul.f32 %v693, %v1012
    %v1014 = vmul.f32 %v698, %v1012
    %v1015 = vmul.f32 %v703, %v1012
    %v1016 = vmul.f32 %v708, %v1012
    %v1017 = vmul.f32 %v713, %v1012
    %v1018 = vmul.f32 %v718, %v1012
    %v1019 = vmul.f32 %v723, %v1012
    %v1020 = vmul.f32 %v728, %v1012
    %v1021 = vmul.f32 %v733, %v1012
    %v1022 = vmul.f32 %v738, %v1012
    %v1023 = vmul.f32 %v743, %v1012
    %v1024 = vmul.f32 %v748, %v1012
    %v1025 = vmul.f32 %v753, %v1012
    %v1026 = vmul.f32 %v758, %v1012
    %v1027 = vmul.f32 %v763, %v1012
    %v1028 = vmul.f32 %v768, %v1012
    %v1029 = vld [vmem:[%s688 + $0x5] sm:$0x1]
    %v1030 = vlaneseq
    %v1031 = vshrl.u32 %v1030, 7
    %v1032 = vsub.s32 0, %v1031
    %v1033 = vrot.slane %v1029, %v1032
    %v1034 = vmul.f32 %v793, %v1033
    %v1035 = vmul.f32 %v797, %v1033
    %v1036 = vmul.f32 %v801, %v1033
    %v1037 = vmul.f32 %v805, %v1033
    %v1038 = vmul.f32 %v809, %v1033
    %v1039 = vmul.f32 %v813, %v1033
    %v1040 = vmul.f32 %v817, %v1033
    %v1041 = vmul.f32 %v821, %v1033
    %v1042 = vmul.f32 %v825, %v1033
    %v1043 = vmul.f32 %v829, %v1033
    %v1044 = vmul.f32 %v833, %v1033
    %v1045 = vmul.f32 %v837, %v1033
    %v1046 = vmul.f32 %v841, %v1033
    %v1047 = vmul.f32 %v845, %v1033
    %v1048 = vmul.f32 %v849, %v1033
    %v1049 = vmul.f32 %v853, %v1033
    %v1050 = vadd.f32 %v1013, %v1034
    %v1051 = vadd.f32 %v1014, %v1035
    %v1052 = vadd.f32 %v1015, %v1036
    %v1053 = vadd.f32 %v1016, %v1037
    %v1054 = vadd.f32 %v1017, %v1038
    %v1055 = vadd.f32 %v1018, %v1039
    %v1056 = vadd.f32 %v1019, %v1040
    %v1057 = vadd.f32 %v1020, %v1041
    %v1058 = vadd.f32 %v1021, %v1042
    %v1059 = vadd.f32 %v1022, %v1043
    %v1060 = vadd.f32 %v1023, %v1044
    %v1061 = vadd.f32 %v1024, %v1045
    %v1062 = vadd.f32 %v1025, %v1046
    %v1063 = vadd.f32 %v1026, %v1047
    %v1064 = vadd.f32 %v1027, %v1048
    %v1065 = vadd.f32 %v1028, %v1049
    %v1066 = vld [vmem:[%s688 + $0x6] sm:$0x1]
    %v1067 = vlaneseq
    %v1068 = vshrl.u32 %v1067, 7
    %v1069 = vsub.s32 0, %v1068
    %v1070 = vrot.slane %v1066, %v1069
    %v1071 = vmul.f32 %v894, %v1070
    %v1072 = vmul.f32 %v898, %v1070
    %v1073 = vmul.f32 %v902, %v1070
    %v1074 = vmul.f32 %v906, %v1070
    %v1075 = vmul.f32 %v910, %v1070
    %v1076 = vmul.f32 %v914, %v1070
    %v1077 = vmul.f32 %v918, %v1070
    %v1078 = vmul.f32 %v922, %v1070
    %v1079 = vmul.f32 %v926, %v1070
    %v1080 = vmul.f32 %v930, %v1070
    %v1081 = vmul.f32 %v934, %v1070
    %v1082 = vmul.f32 %v938, %v1070
    %v1083 = vmul.f32 %v942, %v1070
    %v1084 = vmul.f32 %v946, %v1070
    %v1085 = vmul.f32 %v950, %v1070
    %v1086 = vmul.f32 %v954, %v1070
    %v1087 = vadd.f32 %v1050, %v1071
    %v1088 = vadd.f32 %v1051, %v1072
    %v1089 = vadd.f32 %v1052, %v1073
    %v1090 = vadd.f32 %v1053, %v1074
    %v1091 = vadd.f32 %v1054, %v1075
    %v1092 = vadd.f32 %v1055, %v1076
    %v1093 = vadd.f32 %v1056, %v1077
    %v1094 = vadd.f32 %v1057, %v1078
    %v1095 = vadd.f32 %v1058, %v1079
    %v1096 = vadd.f32 %v1059, %v1080
    %v1097 = vadd.f32 %v1060, %v1081
    %v1098 = vadd.f32 %v1061, %v1082
    %v1099 = vadd.f32 %v1062, %v1083
    %v1100 = vadd.f32 %v1063, %v1084
    %v1101 = vadd.f32 %v1064, %v1085
    %v1102 = vadd.f32 %v1065, %v1086
    %v1103 = vmax.f32 %v1087, 0.0
    %v1104 = vmax.f32 %v1088, 0.0
    %v1105 = vmax.f32 %v1089, 0.0
    %v1106 = vmax.f32 %v1090, 0.0
    %v1107 = vmax.f32 %v1091, 0.0
    %v1108 = vmax.f32 %v1092, 0.0
    %v1109 = vmax.f32 %v1093, 0.0
    %v1110 = vmax.f32 %v1094, 0.0
    %v1111 = vmax.f32 %v1095, 0.0
    %v1112 = vmax.f32 %v1096, 0.0
    %v1113 = vmax.f32 %v1097, 0.0
    %v1114 = vmax.f32 %v1098, 0.0
    %v1115 = vmax.f32 %v1099, 0.0
    %v1116 = vmax.f32 %v1100, 0.0
    %v1117 = vmax.f32 %v1101, 0.0
    %v1118 = vmax.f32 %v1102, 0.0
    %1119 = vmatprep.subr.mxu0 0.0
    %1120 = vmatpush1.xpose.msra.mxu0 %v1118
    %1121 = vmatprep.subr.mxu0 0.0
    %1122 = vmatpush1.xpose.msra.mxu0 %v1117
    %1123 = vmatprep.subr.mxu0 0.0
    %1124 = vmatpush1.xpose.msra.mxu0 %v1116
    %1125 = vmatprep.subr.mxu0 0.0
    %1126 = vmatpush1.xpose.msra.mxu0 %v1115
    %1127 = vmatprep.subr.mxu0 0.0
    %1128 = vmatpush1.xpose.msra.mxu0 %v1114
    %1129 = vmatprep.subr.mxu0 0.0
    %1130 = vmatpush1.xpose.msra.mxu0 %v1113
    %1131 = vmatprep.subr.mxu0 0.0
    %1132 = vmatpush1.xpose.msra.mxu0 %v1112
    %1133 = vmatprep.subr.mxu0 0.0
    %1134 = vmatpush1.xpose.msra.mxu0 %v1111
    %1135 = vmatprep.subr.mxu0 0.0
    %1136 = vmatpush1.xpose.msra.mxu0 %v1110
    %1137 = vmatprep.subr.mxu0 0.0
    %1138 = vmatpush1.xpose.msra.mxu0 %v1109
    %1139 = vmatprep.subr.mxu0 0.0
    %1140 = vmatpush1.xpose.msra.mxu0 %v1108
    %1141 = vmatprep.subr.mxu0 0.0
    %1142 = vmatpush1.xpose.msra.mxu0 %v1107
    %1143 = vmatprep.subr.mxu0 0.0
    %1144 = vmatpush1.xpose.msra.mxu0 %v1106
    %1145 = vmatprep.subr.mxu0 0.0
    %1146 = vmatpush1.xpose.msra.mxu0 %v1105
    %1147 = vmatprep.subr.mxu0 0.0
    %1148 = vmatpush1.xpose.msra.mxu0 %v1104
    %1149 = vmatprep.subr.mxu0 0.0
    %1150 = vmatpush1.xpose.msra.mxu0 %v1103
    %1151 = vmatprep.subr.mxu0 0.0
    %1152 = vmatpush2.xpose.msra.mxu0 0.0
    %1153 = vmatprep.subr.mxu0 0.0
    %1154 = vmatpush2.xpose.msra.mxu0 0.0
    %1155 = vmatprep.subr.mxu0 0.0
    %1156 = vmatpush2.xpose.msra.mxu0 0.0
    %1157 = vmatprep.subr.mxu0 0.0
    %1158 = vmatpush2.xpose.msra.mxu0 0.0
    %1159 = vmatprep.subr.mxu0 0.0
    %1160 = vmatpush2.xpose.msra.mxu0 0.0
    %1161 = vmatprep.subr.mxu0 0.0
    %1162 = vmatpush2.xpose.msra.mxu0 0.0
    %1163 = vmatprep.subr.mxu0 0.0
    %1164 = vmatpush2.xpose.msra.mxu0 0.0
    %1165 = vmatprep.subr.mxu0 0.0
    %1166 = vmatpush2.xpose.msra.mxu0 0.0
    %1167 = vmatprep.subr.mxu0 0.0
    %1168 = vmatpush2.xpose.msra.mxu0 0.0
    %1169 = vmatprep.subr.mxu0 0.0
    %1170 = vmatpush2.xpose.msra.mxu0 0.0
    %1171 = vmatprep.subr.mxu0 0.0
    %1172 = vmatpush2.xpose.msra.mxu0 0.0
    %1173 = vmatprep.subr.mxu0 0.0
    %1174 = vmatpush2.xpose.msra.mxu0 0.0
    %1175 = vmatprep.subr.mxu0 0.0
    %1176 = vmatpush2.xpose.msra.mxu0 0.0
    %1177 = vmatprep.subr.mxu0 0.0
    %1178 = vmatpush2.xpose.msra.mxu0 0.0
    %1179 = vmatprep.subr.mxu0 0.0
    %1180 = vmatpush2.xpose.msra.mxu0 0.0
    %1181 = vmatprep.subr.mxu0 0.0
    %1182 = vmatpush2.xpose.msra.mxu0 0.0
    %1183 = vmatprep.mubr.f32.mxu0 0.0
    %1184 = vmatmul.mubr.f32.gmra.mxu0 1.0
    %v1185 = vpop.f32.mrf.mxu0
    %v1186 = vadd.f32 0.0, %v1185
    %v1187 = vpop.f32.mrf.mxu0
    %1188 = vdwg.mxu0
    %1189 = vmatprep.subr.mxu0 0.0
    %1190 = vmatpush1.xpose.msra.mxu0 %v1007
    %1191 = vmatprep.subr.mxu0 0.0
    %1192 = vmatpush1.xpose.msra.mxu0 %v1006
    %1193 = vmatprep.subr.mxu0 0.0
    %1194 = vmatpush1.xpose.msra.mxu0 %v1005
    %1195 = vmatprep.subr.mxu0 0.0
    %1196 = vmatpush1.xpose.msra.mxu0 %v1004
    %1197 = vmatprep.subr.mxu0 0.0
    %1198 = vmatpush1.xpose.msra.mxu0 %v1003
    %1199 = vmatprep.subr.mxu0 0.0
    %1200 = vmatpush1.xpose.msra.mxu0 %v1002
    %1201 = vmatprep.subr.mxu0 0.0
    %1202 = vmatpush1.xpose.msra.mxu0 %v1001
    %1203 = vmatprep.subr.mxu0 0.0
    %1204 = vmatpush1.xpose.msra.mxu0 %v1000
    %1205 = vmatprep.subr.mxu0 0.0
    %1206 = vmatpush1.xpose.msra.mxu0 %v999
    %1207 = vmatprep.subr.mxu0 0.0
    %1208 = vmatpush1.xpose.msra.mxu0 %v998
    %1209 = vmatprep.subr.mxu0 0.0
    %1210 = vmatpush1.xpose.msra.mxu0 %v997
    %1211 = vmatprep.subr.mxu0 0.0
    %1212 = vmatpush1.xpose.msra.mxu0 %v996
    %1213 = vmatprep.subr.mxu0 0.0
    %1214 = vmatpush1.xpose.msra.mxu0 %v995
    %1215 = vmatprep.subr.mxu0 0.0
    %1216 = vmatpush1.xpose.msra.mxu0 %v994
    %1217 = vmatprep.subr.mxu0 0.0
    %1218 = vmatpush1.xpose.msra.mxu0 %v993
    %1219 = vmatprep.subr.mxu0 0.0
    %1220 = vmatpush1.xpose.msra.mxu0 %v992
    %1221 = vmatprep.subr.mxu0 0.0
    %1222 = vmatpush2.xpose.msra.mxu0 0.0
    %1223 = vmatprep.subr.mxu0 0.0
    %1224 = vmatpush2.xpose.msra.mxu0 0.0
    %1225 = vmatprep.subr.mxu0 0.0
    %1226 = vmatpush2.xpose.msra.mxu0 0.0
    %1227 = vmatprep.subr.mxu0 0.0
    %1228 = vmatpush2.xpose.msra.mxu0 0.0
    %1229 = vmatprep.subr.mxu0 0.0
    %1230 = vmatpush2.xpose.msra.mxu0 0.0
    %1231 = vmatprep.subr.mxu0 0.0
    %1232 = vmatpush2.xpose.msra.mxu0 0.0
    %1233 = vmatprep.subr.mxu0 0.0
    %1234 = vmatpush2.xpose.msra.mxu0 0.0
    %1235 = vmatprep.subr.mxu0 0.0
    %1236 = vmatpush2.xpose.msra.mxu0 0.0
    %1237 = vmatprep.subr.mxu0 0.0
    %1238 = vmatpush2.xpose.msra.mxu0 0.0
    %1239 = vmatprep.subr.mxu0 0.0
    %1240 = vmatpush2.xpose.msra.mxu0 0.0
    %1241 = vmatprep.subr.mxu0 0.0
    %1242 = vmatpush2.xpose.msra.mxu0 0.0
    %1243 = vmatprep.subr.mxu0 0.0
    %1244 = vmatpush2.xpose.msra.mxu0 0.0
    %1245 = vmatprep.subr.mxu0 0.0
    %1246 = vmatpush2.xpose.msra.mxu0 0.0
    %1247 = vmatprep.subr.mxu0 0.0
    %1248 = vmatpush2.xpose.msra.mxu0 0.0
    %1249 = vmatprep.subr.mxu0 0.0
    %1250 = vmatpush2.xpose.msra.mxu0 0.0
    %1251 = vmatprep.subr.mxu0 0.0
    %1252 = vmatpush2.xpose.msra.mxu0 0.0
    %1253 = vmatprep.mubr.f32.mxu0 0.0
    %1254 = vmatmul.mubr.f32.gmra.mxu0 1.0
    %v1255 = vpop.f32.mrf.mxu0
    %v1256 = vadd.f32 %v1186, %v1255
    %v1257 = vpop.f32.mrf.mxu0
    %1258 = vdwg.mxu0
    %v1259 = vld [vmem:[#allocation9 + $0x1] sm:$0x1]
    %v1260 = vadd.f32 %v1259, %v1256
    %1261 = vst [vmem:[#allocation9 + $0x1] sm:$0x1] %v1260
    %v1262 = vld [vmem:[%s1] sm:$0xff]
    %v1263 = vld [vmem:[%s1 + $0x8] sm:$0xff]
    %v1264 = vld [vmem:[%s1 + $0x10] sm:$0xff]
    %v1265 = vld [vmem:[%s1 + $0x18] sm:$0xff]
    %v1266 = vld [vmem:[%s1 + $0x20] sm:$0xff]
    %v1267 = vld [vmem:[%s1 + $0x28] sm:$0xff]
    %v1268 = vld [vmem:[%s1 + $0x30] sm:$0xff]
    %v1269 = vld [vmem:[%s1 + $0x38] sm:$0xff]
    %v1270 = vld [vmem:[%s1 + $0x40] sm:$0xff]
    %v1271 = vld [vmem:[%s1 + $0x48] sm:$0xff]
    %v1272 = vld [vmem:[%s1 + $0x50] sm:$0xff]
    %v1273 = vld [vmem:[%s1 + $0x58] sm:$0xff]
    %v1274 = vld [vmem:[%s1 + $0x60] sm:$0xff]
    %v1275 = vld [vmem:[%s1 + $0x68] sm:$0xff]
    %v1276 = vld [vmem:[%s1 + $0x70] sm:$0xff]
    %v1277 = vld [vmem:[%s1 + $0x78] sm:$0xff]
    %s1278 = scalar_lea.vmem %s0, 16
    %v1279 = vld [vmem:[%s1278] sm:$0x1]
    %1281 = vset.pattern.permute.xlu0 0
    %1282 = vperm.xlu0 %1281, %v1262
    %v1283 = vpop.permute.xlu0 %1282
    %1286 = vset.pattern.permute.xlu0 0
    %1287 = vperm.xlu0 %1286, %v1263
    %v1288 = vpop.permute.xlu0 %1287
    %1291 = vset.pattern.permute.xlu0 0
    %1292 = vperm.xlu0 %1291, %v1264
    %v1293 = vpop.permute.xlu0 %1292
    %1296 = vset.pattern.permute.xlu0 0
    %1297 = vperm.xlu0 %1296, %v1265
    %v1298 = vpop.permute.xlu0 %1297
    %1301 = vset.pattern.permute.xlu0 0
    %1302 = vperm.xlu0 %1301, %v1266
    %v1303 = vpop.permute.xlu0 %1302
    %1306 = vset.pattern.permute.xlu0 0
    %1307 = vperm.xlu0 %1306, %v1267
    %v1308 = vpop.permute.xlu0 %1307
    %1311 = vset.pattern.permute.xlu0 0
    %1312 = vperm.xlu0 %1311, %v1268
    %v1313 = vpop.permute.xlu0 %1312
    %1316 = vset.pattern.permute.xlu0 0
    %1317 = vperm.xlu0 %1316, %v1269
    %v1318 = vpop.permute.xlu0 %1317
    %1321 = vset.pattern.permute.xlu0 0
    %1322 = vperm.xlu0 %1321, %v1270
    %v1323 = vpop.permute.xlu0 %1322
    %1326 = vset.pattern.permute.xlu0 0
    %1327 = vperm.xlu0 %1326, %v1271
    %v1328 = vpop.permute.xlu0 %1327
    %1331 = vset.pattern.permute.xlu0 0
    %1332 = vperm.xlu0 %1331, %v1272
    %v1333 = vpop.permute.xlu0 %1332
    %1336 = vset.pattern.permute.xlu0 0
    %1337 = vperm.xlu0 %1336, %v1273
    %v1338 = vpop.permute.xlu0 %1337
    %1341 = vset.pattern.permute.xlu0 0
    %1342 = vperm.xlu0 %1341, %v1274
    %v1343 = vpop.permute.xlu0 %1342
    %1346 = vset.pattern.permute.xlu0 0
    %1347 = vperm.xlu0 %1346, %v1275
    %v1348 = vpop.permute.xlu0 %1347
    %1351 = vset.pattern.permute.xlu0 0
    %1352 = vperm.xlu0 %1351, %v1276
    %v1353 = vpop.permute.xlu0 %1352
    %1356 = vset.pattern.permute.xlu0 0
    %1357 = vperm.xlu0 %1356, %v1277
    %v1358 = vpop.permute.xlu0 %1357
    %v1360 = vlaneseq
    %v1361 = vshrl.u32 %v1360, 7
    %v1362 = vsub.s32 0, %v1361
    %v1363 = vrot.slane %v1279, %v1362
    %v1364 = vmul.f32 %v1283, %v1363
    %v1365 = vmul.f32 %v1288, %v1363
    %v1366 = vmul.f32 %v1293, %v1363
    %v1367 = vmul.f32 %v1298, %v1363
    %v1368 = vmul.f32 %v1303, %v1363
    %v1369 = vmul.f32 %v1308, %v1363
    %v1370 = vmul.f32 %v1313, %v1363
    %v1371 = vmul.f32 %v1318, %v1363
    %v1372 = vmul.f32 %v1323, %v1363
    %v1373 = vmul.f32 %v1328, %v1363
    %v1374 = vmul.f32 %v1333, %v1363
    %v1375 = vmul.f32 %v1338, %v1363
    %v1376 = vmul.f32 %v1343, %v1363
    %v1377 = vmul.f32 %v1348, %v1363
    %v1378 = vmul.f32 %v1353, %v1363
    %v1379 = vmul.f32 %v1358, %v1363
    %v1380 = vld [vmem:[%s1278 + $0x1] sm:$0x1]
    %1381 = vset.pattern.permute.xlu0 1
    %1382 = vperm.xlu0 %1381, %v1262
    %v1383 = vpop.permute.xlu0 %1382
    %1385 = vset.pattern.permute.xlu0 1
    %1386 = vperm.xlu0 %1385, %v1263
    %v1387 = vpop.permute.xlu0 %1386
    %1389 = vset.pattern.permute.xlu0 1
    %1390 = vperm.xlu0 %1389, %v1264
    %v1391 = vpop.permute.xlu0 %1390
    %1393 = vset.pattern.permute.xlu0 1
    %1394 = vperm.xlu0 %1393, %v1265
    %v1395 = vpop.permute.xlu0 %1394
    %1397 = vset.pattern.permute.xlu0 1
    %1398 = vperm.xlu0 %1397, %v1266
    %v1399 = vpop.permute.xlu0 %1398
    %1401 = vset.pattern.permute.xlu0 1
    %1402 = vperm.xlu0 %1401, %v1267
    %v1403 = vpop.permute.xlu0 %1402
    %1405 = vset.pattern.permute.xlu0 1
    %1406 = vperm.xlu0 %1405, %v1268
    %v1407 = vpop.permute.xlu0 %1406
    %1409 = vset.pattern.permute.xlu0 1
    %1410 = vperm.xlu0 %1409, %v1269
    %v1411 = vpop.permute.xlu0 %1410
    %1413 = vset.pattern.permute.xlu0 1
    %1414 = vperm.xlu0 %1413, %v1270
    %v1415 = vpop.permute.xlu0 %1414
    %1417 = vset.pattern.permute.xlu0 1
    %1418 = vperm.xlu0 %1417, %v1271
    %v1419 = vpop.permute.xlu0 %1418
    %1421 = vset.pattern.permute.xlu0 1
    %1422 = vperm.xlu0 %1421, %v1272
    %v1423 = vpop.permute.xlu0 %1422
    %1425 = vset.pattern.permute.xlu0 1
    %1426 = vperm.xlu0 %1425, %v1273
    %v1427 = vpop.permute.xlu0 %1426
    %1429 = vset.pattern.permute.xlu0 1
    %1430 = vperm.xlu0 %1429, %v1274
    %v1431 = vpop.permute.xlu0 %1430
    %1433 = vset.pattern.permute.xlu0 1
    %1434 = vperm.xlu0 %1433, %v1275
    %v1435 = vpop.permute.xlu0 %1434
    %1437 = vset.pattern.permute.xlu0 1
    %1438 = vperm.xlu0 %1437, %v1276
    %v1439 = vpop.permute.xlu0 %1438
    %1441 = vset.pattern.permute.xlu0 1
    %1442 = vperm.xlu0 %1441, %v1277
    %v1443 = vpop.permute.xlu0 %1442
    %v1445 = vlaneseq
    %v1446 = vshrl.u32 %v1445, 7
    %v1447 = vsub.s32 0, %v1446
    %v1448 = vrot.slane %v1380, %v1447
    %v1449 = vmul.f32 %v1383, %v1448
    %v1450 = vmul.f32 %v1387, %v1448
    %v1451 = vmul.f32 %v1391, %v1448
    %v1452 = vmul.f32 %v1395, %v1448
    %v1453 = vmul.f32 %v1399, %v1448
    %v1454 = vmul.f32 %v1403, %v1448
    %v1455 = vmul.f32 %v1407, %v1448
    %v1456 = vmul.f32 %v1411, %v1448
    %v1457 = vmul.f32 %v1415, %v1448
    %v1458 = vmul.f32 %v1419, %v1448
    %v1459 = vmul.f32 %v1423, %v1448
    %v1460 = vmul.f32 %v1427, %v1448
    %v1461 = vmul.f32 %v1431, %v1448
    %v1462 = vmul.f32 %v1435, %v1448
    %v1463 = vmul.f32 %v1439, %v1448
    %v1464 = vmul.f32 %v1443, %v1448
    %v1465 = vadd.f32 %v1364, %v1449
    %v1466 = vadd.f32 %v1365, %v1450
    %v1467 = vadd.f32 %v1366, %v1451
    %v1468 = vadd.f32 %v1367, %v1452
    %v1469 = vadd.f32 %v1368, %v1453
    %v1470 = vadd.f32 %v1369, %v1454
    %v1471 = vadd.f32 %v1370, %v1455
    %v1472 = vadd.f32 %v1371, %v1456
    %v1473 = vadd.f32 %v1372, %v1457
    %v1474 = vadd.f32 %v1373, %v1458
    %v1475 = vadd.f32 %v1374, %v1459
    %v1476 = vadd.f32 %v1375, %v1460
    %v1477 = vadd.f32 %v1376, %v1461
    %v1478 = vadd.f32 %v1377, %v1462
    %v1479 = vadd.f32 %v1378, %v1463
    %v1480 = vadd.f32 %v1379, %v1464
    %v1481 = vld [vmem:[%s1278 + $0x2] sm:$0x1]
    %1482 = vset.pattern.permute.xlu0 2
    %1483 = vperm.xlu0 %1482, %v1262
    %v1484 = vpop.permute.xlu0 %1483
    %1486 = vset.pattern.permute.xlu0 2
    %1487 = vperm.xlu0 %1486, %v1263
    %v1488 = vpop.permute.xlu0 %1487
    %1490 = vset.pattern.permute.xlu0 2
    %1491 = vperm.xlu0 %1490, %v1264
    %v1492 = vpop.permute.xlu0 %1491
    %1494 = vset.pattern.permute.xlu0 2
    %1495 = vperm.xlu0 %1494, %v1265
    %v1496 = vpop.permute.xlu0 %1495
    %1498 = vset.pattern.permute.xlu0 2
    %1499 = vperm.xlu0 %1498, %v1266
    %v1500 = vpop.permute.xlu0 %1499
    %1502 = vset.pattern.permute.xlu0 2
    %1503 = vperm.xlu0 %1502, %v1267
    %v1504 = vpop.permute.xlu0 %1503
    %1506 = vset.pattern.permute.xlu0 2
    %1507 = vperm.xlu0 %1506, %v1268
    %v1508 = vpop.permute.xlu0 %1507
    %1510 = vset.pattern.permute.xlu0 2
    %1511 = vperm.xlu0 %1510, %v1269
    %v1512 = vpop.permute.xlu0 %1511
    %1514 = vset.pattern.permute.xlu0 2
    %1515 = vperm.xlu0 %1514, %v1270
    %v1516 = vpop.permute.xlu0 %1515
    %1518 = vset.pattern.permute.xlu0 2
    %1519 = vperm.xlu0 %1518, %v1271
    %v1520 = vpop.permute.xlu0 %1519
    %1522 = vset.pattern.permute.xlu0 2
    %1523 = vperm.xlu0 %1522, %v1272
    %v1524 = vpop.permute.xlu0 %1523
    %1526 = vset.pattern.permute.xlu0 2
    %1527 = vperm.xlu0 %1526, %v1273
    %v1528 = vpop.permute.xlu0 %1527
    %1530 = vset.pattern.permute.xlu0 2
    %1531 = vperm.xlu0 %1530, %v1274
    %v1532 = vpop.permute.xlu0 %1531
    %1534 = vset.pattern.permute.xlu0 2
    %1535 = vperm.xlu0 %1534, %v1275
    %v1536 = vpop.permute.xlu0 %1535
    %1538 = vset.pattern.permute.xlu0 2
    %1539 = vperm.xlu0 %1538, %v1276
    %v1540 = vpop.permute.xlu0 %1539
    %1542 = vset.pattern.permute.xlu0 2
    %1543 = vperm.xlu0 %1542, %v1277
    %v1544 = vpop.permute.xlu0 %1543
    %v1546 = vlaneseq
    %v1547 = vshrl.u32 %v1546, 7
    %v1548 = vsub.s32 0, %v1547
    %v1549 = vrot.slane %v1481, %v1548
    %v1550 = vmul.f32 %v1484, %v1549
    %v1551 = vmul.f32 %v1488, %v1549
    %v1552 = vmul.f32 %v1492, %v1549
    %v1553 = vmul.f32 %v1496, %v1549
    %v1554 = vmul.f32 %v1500, %v1549
    %v1555 = vmul.f32 %v1504, %v1549
    %v1556 = vmul.f32 %v1508, %v1549
    %v1557 = vmul.f32 %v1512, %v1549
    %v1558 = vmul.f32 %v1516, %v1549
    %v1559 = vmul.f32 %v1520, %v1549
    %v1560 = vmul.f32 %v1524, %v1549
    %v1561 = vmul.f32 %v1528, %v1549
    %v1562 = vmul.f32 %v1532, %v1549
    %v1563 = vmul.f32 %v1536, %v1549
    %v1564 = vmul.f32 %v1540, %v1549
    %v1565 = vmul.f32 %v1544, %v1549
    %v1566 = vadd.f32 %v1465, %v1550
    %v1567 = vadd.f32 %v1466, %v1551
    %v1568 = vadd.f32 %v1467, %v1552
    %v1569 = vadd.f32 %v1468, %v1553
    %v1570 = vadd.f32 %v1469, %v1554
    %v1571 = vadd.f32 %v1470, %v1555
    %v1572 = vadd.f32 %v1471, %v1556
    %v1573 = vadd.f32 %v1472, %v1557
    %v1574 = vadd.f32 %v1473, %v1558
    %v1575 = vadd.f32 %v1474, %v1559
    %v1576 = vadd.f32 %v1475, %v1560
    %v1577 = vadd.f32 %v1476, %v1561
    %v1578 = vadd.f32 %v1477, %v1562
    %v1579 = vadd.f32 %v1478, %v1563
    %v1580 = vadd.f32 %v1479, %v1564
    %v1581 = vadd.f32 %v1480, %v1565
    %v1582 = vmax.f32 %v1566, 0.0
    %v1583 = vmax.f32 %v1567, 0.0
    %v1584 = vmax.f32 %v1568, 0.0
    %v1585 = vmax.f32 %v1569, 0.0
    %v1586 = vmax.f32 %v1570, 0.0
    %v1587 = vmax.f32 %v1571, 0.0
    %v1588 = vmax.f32 %v1572, 0.0
    %v1589 = vmax.f32 %v1573, 0.0
    %v1590 = vmax.f32 %v1574, 0.0
    %v1591 = vmax.f32 %v1575, 0.0
    %v1592 = vmax.f32 %v1576, 0.0
    %v1593 = vmax.f32 %v1577, 0.0
    %v1594 = vmax.f32 %v1578, 0.0
    %v1595 = vmax.f32 %v1579, 0.0
    %v1596 = vmax.f32 %v1580, 0.0
    %v1597 = vmax.f32 %v1581, 0.0
    %v1598 = vld [vmem:[%s1278 + $0x4] sm:$0x1]
    %v1599 = vlaneseq
    %v1600 = vshrl.u32 %v1599, 7
    %v1601 = vsub.s32 0, %v1600
    %v1602 = vrot.slane %v1598, %v1601
    %v1603 = vmul.f32 %v1283, %v1602
    %v1604 = vmul.f32 %v1288, %v1602
    %v1605 = vmul.f32 %v1293, %v1602
    %v1606 = vmul.f32 %v1298, %v1602
    %v1607 = vmul.f32 %v1303, %v1602
    %v1608 = vmul.f32 %v1308, %v1602
    %v1609 = vmul.f32 %v1313, %v1602
    %v1610 = vmul.f32 %v1318, %v1602
    %v1611 = vmul.f32 %v1323, %v1602
    %v1612 = vmul.f32 %v1328, %v1602
    %v1613 = vmul.f32 %v1333, %v1602
    %v1614 = vmul.f32 %v1338, %v1602
    %v1615 = vmul.f32 %v1343, %v1602
    %v1616 = vmul.f32 %v1348, %v1602
    %v1617 = vmul.f32 %v1353, %v1602
    %v1618 = vmul.f32 %v1358, %v1602
    %v1619 = vld [vmem:[%s1278 + $0x5] sm:$0x1]
    %v1620 = vlaneseq
    %v1621 = vshrl.u32 %v1620, 7
    %v1622 = vsub.s32 0, %v1621
    %v1623 = vrot.slane %v1619, %v1622
    %v1624 = vmul.f32 %v1383, %v1623
    %v1625 = vmul.f32 %v1387, %v1623
    %v1626 = vmul.f32 %v1391, %v1623
    %v1627 = vmul.f32 %v1395, %v1623
    %v1628 = vmul.f32 %v1399, %v1623
    %v1629 = vmul.f32 %v1403, %v1623
    %v1630 = vmul.f32 %v1407, %v1623
    %v1631 = vmul.f32 %v1411, %v1623
    %v1632 = vmul.f32 %v1415, %v1623
    %v1633 = vmul.f32 %v1419, %v1623
    %v1634 = vmul.f32 %v1423, %v1623
    %v1635 = vmul.f32 %v1427, %v1623
    %v1636 = vmul.f32 %v1431, %v1623
    %v1637 = vmul.f32 %v1435, %v1623
    %v1638 = vmul.f32 %v1439, %v1623
    %v1639 = vmul.f32 %v1443, %v1623
    %v1640 = vadd.f32 %v1603, %v1624
    %v1641 = vadd.f32 %v1604, %v1625
    %v1642 = vadd.f32 %v1605, %v1626
    %v1643 = vadd.f32 %v1606, %v1627
    %v1644 = vadd.f32 %v1607, %v1628
    %v1645 = vadd.f32 %v1608, %v1629
    %v1646 = vadd.f32 %v1609, %v1630
    %v1647 = vadd.f32 %v1610, %v1631
    %v1648 = vadd.f32 %v1611, %v1632
    %v1649 = vadd.f32 %v1612, %v1633
    %v1650 = vadd.f32 %v1613, %v1634
    %v1651 = vadd.f32 %v1614, %v1635
    %v1652 = vadd.f32 %v1615, %v1636
    %v1653 = vadd.f32 %v1616, %v1637
    %v1654 = vadd.f32 %v1617, %v1638
    %v1655 = vadd.f32 %v1618, %v1639
    %v1656 = vld [vmem:[%s1278 + $0x6] sm:$0x1]
    %v1657 = vlaneseq
    %v1658 = vshrl.u32 %v1657, 7
    %v1659 = vsub.s32 0, %v1658
    %v1660 = vrot.slane %v1656, %v1659
    %v1661 = vmul.f32 %v1484, %v1660
    %v1662 = vmul.f32 %v1488, %v1660
    %v1663 = vmul.f32 %v1492, %v1660
    %v1664 = vmul.f32 %v1496, %v1660
    %v1665 = vmul.f32 %v1500, %v1660
    %v1666 = vmul.f32 %v1504, %v1660
    %v1667 = vmul.f32 %v1508, %v1660
    %v1668 = vmul.f32 %v1512, %v1660
    %v1669 = vmul.f32 %v1516, %v1660
    %v1670 = vmul.f32 %v1520, %v1660
    %v1671 = vmul.f32 %v1524, %v1660
    %v1672 = vmul.f32 %v1528, %v1660
    %v1673 = vmul.f32 %v1532, %v1660
    %v1674 = vmul.f32 %v1536, %v1660
    %v1675 = vmul.f32 %v1540, %v1660
    %v1676 = vmul.f32 %v1544, %v1660
    %v1677 = vadd.f32 %v1640, %v1661
    %v1678 = vadd.f32 %v1641, %v1662
    %v1679 = vadd.f32 %v1642, %v1663
    %v1680 = vadd.f32 %v1643, %v1664
    %v1681 = vadd.f32 %v1644, %v1665
    %v1682 = vadd.f32 %v1645, %v1666
    %v1683 = vadd.f32 %v1646, %v1667
    %v1684 = vadd.f32 %v1647, %v1668
    %v1685 = vadd.f32 %v1648, %v1669
    %v1686 = vadd.f32 %v1649, %v1670
    %v1687 = vadd.f32 %v1650, %v1671
    %v1688 = vadd.f32 %v1651, %v1672
    %v1689 = vadd.f32 %v1652, %v1673
    %v1690 = vadd.f32 %v1653, %v1674
    %v1691 = vadd.f32 %v1654, %v1675
    %v1692 = vadd.f32 %v1655, %v1676
    %v1693 = vmax.f32 %v1677, 0.0
    %v1694 = vmax.f32 %v1678, 0.0
    %v1695 = vmax.f32 %v1679, 0.0
    %v1696 = vmax.f32 %v1680, 0.0
    %v1697 = vmax.f32 %v1681, 0.0
    %v1698 = vmax.f32 %v1682, 0.0
    %v1699 = vmax.f32 %v1683, 0.0
    %v1700 = vmax.f32 %v1684, 0.0
    %v1701 = vmax.f32 %v1685, 0.0
    %v1702 = vmax.f32 %v1686, 0.0
    %v1703 = vmax.f32 %v1687, 0.0
    %v1704 = vmax.f32 %v1688, 0.0
    %v1705 = vmax.f32 %v1689, 0.0
    %v1706 = vmax.f32 %v1690, 0.0
    %v1707 = vmax.f32 %v1691, 0.0
    %v1708 = vmax.f32 %v1692, 0.0
    %1709 = vmatprep.subr.mxu0 0.0
    %1710 = vmatpush1.xpose.msra.mxu0 %v1708
    %1711 = vmatprep.subr.mxu0 0.0
    %1712 = vmatpush1.xpose.msra.mxu0 %v1707
    %1713 = vmatprep.subr.mxu0 0.0
    %1714 = vmatpush1.xpose.msra.mxu0 %v1706
    %1715 = vmatprep.subr.mxu0 0.0
    %1716 = vmatpush1.xpose.msra.mxu0 %v1705
    %1717 = vmatprep.subr.mxu0 0.0
    %1718 = vmatpush1.xpose.msra.mxu0 %v1704
    %1719 = vmatprep.subr.mxu0 0.0
    %1720 = vmatpush1.xpose.msra.mxu0 %v1703
    %1721 = vmatprep.subr.mxu0 0.0
    %1722 = vmatpush1.xpose.msra.mxu0 %v1702
    %1723 = vmatprep.subr.mxu0 0.0
    %1724 = vmatpush1.xpose.msra.mxu0 %v1701
    %1725 = vmatprep.subr.mxu0 0.0
    %1726 = vmatpush1.xpose.msra.mxu0 %v1700
    %1727 = vmatprep.subr.mxu0 0.0
    %1728 = vmatpush1.xpose.msra.mxu0 %v1699
    %1729 = vmatprep.subr.mxu0 0.0
    %1730 = vmatpush1.xpose.msra.mxu0 %v1698
    %1731 = vmatprep.subr.mxu0 0.0
    %1732 = vmatpush1.xpose.msra.mxu0 %v1697
    %1733 = vmatprep.subr.mxu0 0.0
    %1734 = vmatpush1.xpose.msra.mxu0 %v1696
    %1735 = vmatprep.subr.mxu0 0.0
    %1736 = vmatpush1.xpose.msra.mxu0 %v1695
    %1737 = vmatprep.subr.mxu0 0.0
    %1738 = vmatpush1.xpose.msra.mxu0 %v1694
    %1739 = vmatprep.subr.mxu0 0.0
    %1740 = vmatpush1.xpose.msra.mxu0 %v1693
    %1741 = vmatprep.subr.mxu0 0.0
    %1742 = vmatpush2.xpose.msra.mxu0 0.0
    %1743 = vmatprep.subr.mxu0 0.0
    %1744 = vmatpush2.xpose.msra.mxu0 0.0
    %1745 = vmatprep.subr.mxu0 0.0
    %1746 = vmatpush2.xpose.msra.mxu0 0.0
    %1747 = vmatprep.subr.mxu0 0.0
    %1748 = vmatpush2.xpose.msra.mxu0 0.0
    %1749 = vmatprep.subr.mxu0 0.0
    %1750 = vmatpush2.xpose.msra.mxu0 0.0
    %1751 = vmatprep.subr.mxu0 0.0
    %1752 = vmatpush2.xpose.msra.mxu0 0.0
    %1753 = vmatprep.subr.mxu0 0.0
    %1754 = vmatpush2.xpose.msra.mxu0 0.0
    %1755 = vmatprep.subr.mxu0 0.0
    %1756 = vmatpush2.xpose.msra.mxu0 0.0
    %1757 = vmatprep.subr.mxu0 0.0
    %1758 = vmatpush2.xpose.msra.mxu0 0.0
    %1759 = vmatprep.subr.mxu0 0.0
    %1760 = vmatpush2.xpose.msra.mxu0 0.0
    %1761 = vmatprep.subr.mxu0 0.0
    %1762 = vmatpush2.xpose.msra.mxu0 0.0
    %1763 = vmatprep.subr.mxu0 0.0
    %1764 = vmatpush2.xpose.msra.mxu0 0.0
    %1765 = vmatprep.subr.mxu0 0.0
    %1766 = vmatpush2.xpose.msra.mxu0 0.0
    %1767 = vmatprep.subr.mxu0 0.0
    %1768 = vmatpush2.xpose.msra.mxu0 0.0
    %1769 = vmatprep.subr.mxu0 0.0
    %1770 = vmatpush2.xpose.msra.mxu0 0.0
    %1771 = vmatprep.subr.mxu0 0.0
    %1772 = vmatpush2.xpose.msra.mxu0 0.0
    %1773 = vmatprep.mubr.f32.mxu0 0.0
    %1774 = vmatmul.mubr.f32.gmra.mxu0 1.0
    %v1775 = vpop.f32.mrf.mxu0
    %v1776 = vadd.f32 0.0, %v1775
    %v1777 = vpop.f32.mrf.mxu0
    %1778 = vdwg.mxu0
    %1779 = vmatprep.subr.mxu0 0.0
    %1780 = vmatpush1.xpose.msra.mxu0 %v1597
    %1781 = vmatprep.subr.mxu0 0.0
    %1782 = vmatpush1.xpose.msra.mxu0 %v1596
    %1783 = vmatprep.subr.mxu0 0.0
    %1784 = vmatpush1.xpose.msra.mxu0 %v1595
    %1785 = vmatprep.subr.mxu0 0.0
    %1786 = vmatpush1.xpose.msra.mxu0 %v1594
    %1787 = vmatprep.subr.mxu0 0.0
    %1788 = vmatpush1.xpose.msra.mxu0 %v1593
    %1789 = vmatprep.subr.mxu0 0.0
    %1790 = vmatpush1.xpose.msra.mxu0 %v1592
    %1791 = vmatprep.subr.mxu0 0.0
    %1792 = vmatpush1.xpose.msra.mxu0 %v1591
    %1793 = vmatprep.subr.mxu0 0.0
    %1794 = vmatpush1.xpose.msra.mxu0 %v1590
    %1795 = vmatprep.subr.mxu0 0.0
    %1796 = vmatpush1.xpose.msra.mxu0 %v1589
    %1797 = vmatprep.subr.mxu0 0.0
    %1798 = vmatpush1.xpose.msra.mxu0 %v1588
    %1799 = vmatprep.subr.mxu0 0.0
    %1800 = vmatpush1.xpose.msra.mxu0 %v1587
    %1801 = vmatprep.subr.mxu0 0.0
    %1802 = vmatpush1.xpose.msra.mxu0 %v1586
    %1803 = vmatprep.subr.mxu0 0.0
    %1804 = vmatpush1.xpose.msra.mxu0 %v1585
    %1805 = vmatprep.subr.mxu0 0.0
    %1806 = vmatpush1.xpose.msra.mxu0 %v1584
    %1807 = vmatprep.subr.mxu0 0.0
    %1808 = vmatpush1.xpose.msra.mxu0 %v1583
    %1809 = vmatprep.subr.mxu0 0.0
    %1810 = vmatpush1.xpose.msra.mxu0 %v1582
    %1811 = vmatprep.subr.mxu0 0.0
    %1812 = vmatpush2.xpose.msra.mxu0 0.0
    %1813 = vmatprep.subr.mxu0 0.0
    %1814 = vmatpush2.xpose.msra.mxu0 0.0
    %1815 = vmatprep.subr.mxu0 0.0
    %1816 = vmatpush2.xpose.msra.mxu0 0.0
    %1817 = vmatprep.subr.mxu0 0.0
    %1818 = vmatpush2.xpose.msra.mxu0 0.0
    %1819 = vmatprep.subr.mxu0 0.0
    %1820 = vmatpush2.xpose.msra.mxu0 0.0
    %1821 = vmatprep.subr.mxu0 0.0
    %1822 = vmatpush2.xpose.msra.mxu0 0.0
    %1823 = vmatprep.subr.mxu0 0.0
    %1824 = vmatpush2.xpose.msra.mxu0 0.0
    %1825 = vmatprep.subr.mxu0 0.0
    %1826 = vmatpush2.xpose.msra.mxu0 0.0
    %1827 = vmatprep.subr.mxu0 0.0
    %1828 = vmatpush2.xpose.msra.mxu0 0.0
    %1829 = vmatprep.subr.mxu0 0.0
    %1830 = vmatpush2.xpose.msra.mxu0 0.0
    %1831 = vmatprep.subr.mxu0 0.0
    %1832 = vmatpush2.xpose.msra.mxu0 0.0
    %1833 = vmatprep.subr.mxu0 0.0
    %1834 = vmatpush2.xpose.msra.mxu0 0.0
    %1835 = vmatprep.subr.mxu0 0.0
    %1836 = vmatpush2.xpose.msra.mxu0 0.0
    %1837 = vmatprep.subr.mxu0 0.0
    %1838 = vmatpush2.xpose.msra.mxu0 0.0
    %1839 = vmatprep.subr.mxu0 0.0
    %1840 = vmatpush2.xpose.msra.mxu0 0.0
    %1841 = vmatprep.subr.mxu0 0.0
    %1842 = vmatpush2.xpose.msra.mxu0 0.0
    %1843 = vmatprep.mubr.f32.mxu0 0.0
    %1844 = vmatmul.mubr.f32.gmra.mxu0 1.0
    %v1845 = vpop.f32.mrf.mxu0
    %v1846 = vadd.f32 %v1776, %v1845
    %v1847 = vpop.f32.mrf.mxu0
    %1848 = vdwg.mxu0
    %v1849 = vld [vmem:[#allocation9 + $0x2] sm:$0x1]
    %v1850 = vadd.f32 %v1849, %v1846
    %1851 = vst [vmem:[#allocation9 + $0x2] sm:$0x1] %v1850
    %v1852 = vld [vmem:[%s1] sm:$0xff]
    %v1853 = vld [vmem:[%s1 + $0x8] sm:$0xff]
    %v1854 = vld [vmem:[%s1 + $0x10] sm:$0xff]
    %v1855 = vld [vmem:[%s1 + $0x18] sm:$0xff]
    %v1856 = vld [vmem:[%s1 + $0x20] sm:$0xff]
    %v1857 = vld [vmem:[%s1 + $0x28] sm:$0xff]
    %v1858 = vld [vmem:[%s1 + $0x30] sm:$0xff]
    %v1859 = vld [vmem:[%s1 + $0x38] sm:$0xff]
    %v1860 = vld [vmem:[%s1 + $0x40] sm:$0xff]
    %v1861 = vld [vmem:[%s1 + $0x48] sm:$0xff]
    %v1862 = vld [vmem:[%s1 + $0x50] sm:$0xff]
    %v1863 = vld [vmem:[%s1 + $0x58] sm:$0xff]
    %v1864 = vld [vmem:[%s1 + $0x60] sm:$0xff]
    %v1865 = vld [vmem:[%s1 + $0x68] sm:$0xff]
    %v1866 = vld [vmem:[%s1 + $0x70] sm:$0xff]
    %v1867 = vld [vmem:[%s1 + $0x78] sm:$0xff]
    %s1868 = scalar_lea.vmem %s0, 24
    %v1869 = vld [vmem:[%s1868] sm:$0x1]
    %1871 = vset.pattern.permute.xlu0 0
    %1872 = vperm.xlu0 %1871, %v1852
    %v1873 = vpop.permute.xlu0 %1872
    %1876 = vset.pattern.permute.xlu0 0
    %1877 = vperm.xlu0 %1876, %v1853
    %v1878 = vpop.permute.xlu0 %1877
    %1881 = vset.pattern.permute.xlu0 0
    %1882 = vperm.xlu0 %1881, %v1854
    %v1883 = vpop.permute.xlu0 %1882
    %1886 = vset.pattern.permute.xlu0 0
    %1887 = vperm.xlu0 %1886, %v1855
    %v1888 = vpop.permute.xlu0 %1887
    %1891 = vset.pattern.permute.xlu0 0
    %1892 = vperm.xlu0 %1891, %v1856
    %v1893 = vpop.permute.xlu0 %1892
    %1896 = vset.pattern.permute.xlu0 0
    %1897 = vperm.xlu0 %1896, %v1857
    %v1898 = vpop.permute.xlu0 %1897
    %1901 = vset.pattern.permute.xlu0 0
    %1902 = vperm.xlu0 %1901, %v1858
    %v1903 = vpop.permute.xlu0 %1902
    %1906 = vset.pattern.permute.xlu0 0
    %1907 = vperm.xlu0 %1906, %v1859
    %v1908 = vpop.permute.xlu0 %1907
    %1911 = vset.pattern.permute.xlu0 0
    %1912 = vperm.xlu0 %1911, %v1860
    %v1913 = vpop.permute.xlu0 %1912
    %1916 = vset.pattern.permute.xlu0 0
    %1917 = vperm.xlu0 %1916, %v1861
    %v1918 = vpop.permute.xlu0 %1917
    %1921 = vset.pattern.permute.xlu0 0
    %1922 = vperm.xlu0 %1921, %v1862
    %v1923 = vpop.permute.xlu0 %1922
    %1926 = vset.pattern.permute.xlu0 0
    %1927 = vperm.xlu0 %1926, %v1863
    %v1928 = vpop.permute.xlu0 %1927
    %1931 = vset.pattern.permute.xlu0 0
    %1932 = vperm.xlu0 %1931, %v1864
    %v1933 = vpop.permute.xlu0 %1932
    %1936 = vset.pattern.permute.xlu0 0
    %1937 = vperm.xlu0 %1936, %v1865
    %v1938 = vpop.permute.xlu0 %1937
    %1941 = vset.pattern.permute.xlu0 0
    %1942 = vperm.xlu0 %1941, %v1866
    %v1943 = vpop.permute.xlu0 %1942
    %1946 = vset.pattern.permute.xlu0 0
    %1947 = vperm.xlu0 %1946, %v1867
    %v1948 = vpop.permute.xlu0 %1947
    %v1950 = vlaneseq
    %v1951 = vshrl.u32 %v1950, 7
    %v1952 = vsub.s32 0, %v1951
    %v1953 = vrot.slane %v1869, %v1952
    %v1954 = vmul.f32 %v1873, %v1953
    %v1955 = vmul.f32 %v1878, %v1953
    %v1956 = vmul.f32 %v1883, %v1953
    %v1957 = vmul.f32 %v1888, %v1953
    %v1958 = vmul.f32 %v1893, %v1953
    %v1959 = vmul.f32 %v1898, %v1953
    %v1960 = vmul.f32 %v1903, %v1953
    %v1961 = vmul.f32 %v1908, %v1953
    %v1962 = vmul.f32 %v1913, %v1953
    %v1963 = vmul.f32 %v1918, %v1953
    %v1964 = vmul.f32 %v1923, %v1953
    %v1965 = vmul.f32 %v1928, %v1953
    %v1966 = vmul.f32 %v1933, %v1953
    %v1967 = vmul.f32 %v1938, %v1953
    %v1968 = vmul.f32 %v1943, %v1953
    %v1969 = vmul.f32 %v1948, %v1953
    %v1970 = vld [vmem:[%s1868 + $0x1] sm:$0x1]
    %1971 = vset.pattern.permute.xlu0 1
    %1972 = vperm.xlu0 %1971, %v1852
    %v1973 = vpop.permute.xlu0 %1972
    %1975 = vset.pattern.permute.xlu0 1
    %1976 = vperm.xlu0 %1975, %v1853
    %v1977 = vpop.permute.xlu0 %1976
    %1979 = vset.pattern.permute.xlu0 1
    %1980 = vperm.xlu0 %1979, %v1854
    %v1981 = vpop.permute.xlu0 %1980
    %1983 = vset.pattern.permute.xlu0 1
    %1984 = vperm.xlu0 %1983, %v1855
    %v1985 = vpop.permute.xlu0 %1984
    %1987 = vset.pattern.permute.xlu0 1
    %1988 = vperm.xlu0 %1987, %v1856
    %v1989 = vpop.permute.xlu0 %1988
    %1991 = vset.pattern.permute.xlu0 1
    %1992 = vperm.xlu0 %1991, %v1857
    %v1993 = vpop.permute.xlu0 %1992
    %1995 = vset.pattern.permute.xlu0 1
    %1996 = vperm.xlu0 %1995, %v1858
    %v1997 = vpop.permute.xlu0 %1996
    %1999 = vset.pattern.permute.xlu0 1
    %2000 = vperm.xlu0 %1999, %v1859
    %v2001 = vpop.permute.xlu0 %2000
    %2003 = vset.pattern.permute.xlu0 1
    %2004 = vperm.xlu0 %2003, %v1860
    %v2005 = vpop.permute.xlu0 %2004
    %2007 = vset.pattern.permute.xlu0 1
    %2008 = vperm.xlu0 %2007, %v1861
    %v2009 = vpop.permute.xlu0 %2008
    %2011 = vset.pattern.permute.xlu0 1
    %2012 = vperm.xlu0 %2011, %v1862
    %v2013 = vpop.permute.xlu0 %2012
    %2015 = vset.pattern.permute.xlu0 1
    %2016 = vperm.xlu0 %2015, %v1863
    %v2017 = vpop.permute.xlu0 %2016
    %2019 = vset.pattern.permute.xlu0 1
    %2020 = vperm.xlu0 %2019, %v1864
    %v2021 = vpop.permute.xlu0 %2020
    %2023 = vset.pattern.permute.xlu0 1
    %2024 = vperm.xlu0 %2023, %v1865
    %v2025 = vpop.permute.xlu0 %2024
    %2027 = vset.pattern.permute.xlu0 1
    %2028 = vperm.xlu0 %2027, %v1866
    %v2029 = vpop.permute.xlu0 %2028
    %2031 = vset.pattern.permute.xlu0 1
    %2032 = vperm.xlu0 %2031, %v1867
    %v2033 = vpop.permute.xlu0 %2032
    %v2035 = vlaneseq
    %v2036 = vshrl.u32 %v2035, 7
    %v2037 = vsub.s32 0, %v2036
    %v2038 = vrot.slane %v1970, %v2037
    %v2039 = vmul.f32 %v1973, %v2038
    %v2040 = vmul.f32 %v1977, %v2038
    %v2041 = vmul.f32 %v1981, %v2038
    %v2042 = vmul.f32 %v1985, %v2038
    %v2043 = vmul.f32 %v1989, %v2038
    %v2044 = vmul.f32 %v1993, %v2038
    %v2045 = vmul.f32 %v1997, %v2038
    %v2046 = vmul.f32 %v2001, %v2038
    %v2047 = vmul.f32 %v2005, %v2038
    %v2048 = vmul.f32 %v2009, %v2038
    %v2049 = vmul.f32 %v2013, %v2038
    %v2050 = vmul.f32 %v2017, %v2038
    %v2051 = vmul.f32 %v2021, %v2038
    %v2052 = vmul.f32 %v2025, %v2038
    %v2053 = vmul.f32 %v2029, %v2038
    %v2054 = vmul.f32 %v2033, %v2038
    %v2055 = vadd.f32 %v1954, %v2039
    %v2056 = vadd.f32 %v1955, %v2040
    %v2057 = vadd.f32 %v1956, %v2041
    %v2058 = vadd.f32 %v1957, %v2042
    %v2059 = vadd.f32 %v1958, %v2043
    %v2060 = vadd.f32 %v1959, %v2044
    %v2061 = vadd.f32 %v1960, %v2045
    %v2062 = vadd.f32 %v1961, %v2046
    %v2063 = vadd.f32 %v1962, %v2047
    %v2064 = vadd.f32 %v1963, %v2048
    %v2065 = vadd.f32 %v1964, %v2049
    %v2066 = vadd.f32 %v1965, %v2050
    %v2067 = vadd.f32 %v1966, %v2051
    %v2068 = vadd.f32 %v1967, %v2052
    %v2069 = vadd.f32 %v1968, %v2053
    %v2070 = vadd.f32 %v1969, %v2054
    %v2071 = vld [vmem:[%s1868 + $0x2] sm:$0x1]
    %2072 = vset.pattern.permute.xlu0 2
    %2073 = vperm.xlu0 %2072, %v1852
    %v2074 = vpop.permute.xlu0 %2073
    %2076 = vset.pattern.permute.xlu0 2
    %2077 = vperm.xlu0 %2076, %v1853
    %v2078 = vpop.permute.xlu0 %2077
    %2080 = vset.pattern.permute.xlu0 2
    %2081 = vperm.xlu0 %2080, %v1854
    %v2082 = vpop.permute.xlu0 %2081
    %2084 = vset.pattern.permute.xlu0 2
    %2085 = vperm.xlu0 %2084, %v1855
    %v2086 = vpop.permute.xlu0 %2085
    %2088 = vset.pattern.permute.xlu0 2
    %2089 = vperm.xlu0 %2088, %v1856
    %v2090 = vpop.permute.xlu0 %2089
    %2092 = vset.pattern.permute.xlu0 2
    %2093 = vperm.xlu0 %2092, %v1857
    %v2094 = vpop.permute.xlu0 %2093
    %2096 = vset.pattern.permute.xlu0 2
    %2097 = vperm.xlu0 %2096, %v1858
    %v2098 = vpop.permute.xlu0 %2097
    %2100 = vset.pattern.permute.xlu0 2
    %2101 = vperm.xlu0 %2100, %v1859
    %v2102 = vpop.permute.xlu0 %2101
    %2104 = vset.pattern.permute.xlu0 2
    %2105 = vperm.xlu0 %2104, %v1860
    %v2106 = vpop.permute.xlu0 %2105
    %2108 = vset.pattern.permute.xlu0 2
    %2109 = vperm.xlu0 %2108, %v1861
    %v2110 = vpop.permute.xlu0 %2109
    %2112 = vset.pattern.permute.xlu0 2
    %2113 = vperm.xlu0 %2112, %v1862
    %v2114 = vpop.permute.xlu0 %2113
    %2116 = vset.pattern.permute.xlu0 2
    %2117 = vperm.xlu0 %2116, %v1863
    %v2118 = vpop.permute.xlu0 %2117
    %2120 = vset.pattern.permute.xlu0 2
    %2121 = vperm.xlu0 %2120, %v1864
    %v2122 = vpop.permute.xlu0 %2121
    %2124 = vset.pattern.permute.xlu0 2
    %2125 = vperm.xlu0 %2124, %v1865
    %v2126 = vpop.permute.xlu0 %2125
    %2128 = vset.pattern.permute.xlu0 2
    %2129 = vperm.xlu0 %2128, %v1866
    %v2130 = vpop.permute.xlu0 %2129
    %2132 = vset.pattern.permute.xlu0 2
    %2133 = vperm.xlu0 %2132, %v1867
    %v2134 = vpop.permute.xlu0 %2133
    %v2136 = vlaneseq
    %v2137 = vshrl.u32 %v2136, 7
    %v2138 = vsub.s32 0, %v2137
    %v2139 = vrot.slane %v2071, %v2138
    %v2140 = vmul.f32 %v2074, %v2139
    %v2141 = vmul.f32 %v2078, %v2139
    %v2142 = vmul.f32 %v2082, %v2139
    %v2143 = vmul.f32 %v2086, %v2139
    %v2144 = vmul.f32 %v2090, %v2139
    %v2145 = vmul.f32 %v2094, %v2139
    %v2146 = vmul.f32 %v2098, %v2139
    %v2147 = vmul.f32 %v2102, %v2139
    %v2148 = vmul.f32 %v2106, %v2139
    %v2149 = vmul.f32 %v2110, %v2139
    %v2150 = vmul.f32 %v2114, %v2139
    %v2151 = vmul.f32 %v2118, %v2139
    %v2152 = vmul.f32 %v2122, %v2139
    %v2153 = vmul.f32 %v2126, %v2139
    %v2154 = vmul.f32 %v2130, %v2139
    %v2155 = vmul.f32 %v2134, %v2139
    %v2156 = vadd.f32 %v2055, %v2140
    %v2157 = vadd.f32 %v2056, %v2141
    %v2158 = vadd.f32 %v2057, %v2142
    %v2159 = vadd.f32 %v2058, %v2143
    %v2160 = vadd.f32 %v2059, %v2144
    %v2161 = vadd.f32 %v2060, %v2145
    %v2162 = vadd.f32 %v2061, %v2146
    %v2163 = vadd.f32 %v2062, %v2147
    %v2164 = vadd.f32 %v2063, %v2148
    %v2165 = vadd.f32 %v2064, %v2149
    %v2166 = vadd.f32 %v2065, %v2150
    %v2167 = vadd.f32 %v2066, %v2151
    %v2168 = vadd.f32 %v2067, %v2152
    %v2169 = vadd.f32 %v2068, %v2153
    %v2170 = vadd.f32 %v2069, %v2154
    %v2171 = vadd.f32 %v2070, %v2155
    %v2172 = vmax.f32 %v2156, 0.0
    %v2173 = vmax.f32 %v2157, 0.0
    %v2174 = vmax.f32 %v2158, 0.0
    %v2175 = vmax.f32 %v2159, 0.0
    %v2176 = vmax.f32 %v2160, 0.0
    %v2177 = vmax.f32 %v2161, 0.0
    %v2178 = vmax.f32 %v2162, 0.0
    %v2179 = vmax.f32 %v2163, 0.0
    %v2180 = vmax.f32 %v2164, 0.0
    %v2181 = vmax.f32 %v2165, 0.0
    %v2182 = vmax.f32 %v2166, 0.0
    %v2183 = vmax.f32 %v2167, 0.0
    %v2184 = vmax.f32 %v2168, 0.0
    %v2185 = vmax.f32 %v2169, 0.0
    %v2186 = vmax.f32 %v2170, 0.0
    %v2187 = vmax.f32 %v2171, 0.0
    %v2188 = vld [vmem:[%s1868 + $0x4] sm:$0x1]
    %v2189 = vlaneseq
    %v2190 = vshrl.u32 %v2189, 7
    %v2191 = vsub.s32 0, %v2190
    %v2192 = vrot.slane %v2188, %v2191
    %v2193 = vmul.f32 %v1873, %v2192
    %v2194 = vmul.f32 %v1878, %v2192
    %v2195 = vmul.f32 %v1883, %v2192
    %v2196 = vmul.f32 %v1888, %v2192
    %v2197 = vmul.f32 %v1893, %v2192
    %v2198 = vmul.f32 %v1898, %v2192
    %v2199 = vmul.f32 %v1903, %v2192
    %v2200 = vmul.f32 %v1908, %v2192
    %v2201 = vmul.f32 %v1913, %v2192
    %v2202 = vmul.f32 %v1918, %v2192
    %v2203 = vmul.f32 %v1923, %v2192
    %v2204 = vmul.f32 %v1928, %v2192
    %v2205 = vmul.f32 %v1933, %v2192
    %v2206 = vmul.f32 %v1938, %v2192
    %v2207 = vmul.f32 %v1943, %v2192
    %v2208 = vmul.f32 %v1948, %v2192
    %v2209 = vld [vmem:[%s1868 + $0x5] sm:$0x1]
    %v2210 = vlaneseq
    %v2211 = vshrl.u32 %v2210, 7
    %v2212 = vsub.s32 0, %v2211
    %v2213 = vrot.slane %v2209, %v2212
    %v2214 = vmul.f32 %v1973, %v2213
    %v2215 = vmul.f32 %v1977, %v2213
    %v2216 = vmul.f32 %v1981, %v2213
    %v2217 = vmul.f32 %v1985, %v2213
    %v2218 = vmul.f32 %v1989, %v2213
    %v2219 = vmul.f32 %v1993, %v2213
    %v2220 = vmul.f32 %v1997, %v2213
    %v2221 = vmul.f32 %v2001, %v2213
    %v2222 = vmul.f32 %v2005, %v2213
    %v2223 = vmul.f32 %v2009, %v2213
    %v2224 = vmul.f32 %v2013, %v2213
    %v2225 = vmul.f32 %v2017, %v2213
    %v2226 = vmul.f32 %v2021, %v2213
    %v2227 = vmul.f32 %v2025, %v2213
    %v2228 = vmul.f32 %v2029, %v2213
    %v2229 = vmul.f32 %v2033, %v2213
    %v2230 = vadd.f32 %v2193, %v2214
    %v2231 = vadd.f32 %v2194, %v2215
    %v2232 = vadd.f32 %v2195, %v2216
    %v2233 = vadd.f32 %v2196, %v2217
    %v2234 = vadd.f32 %v2197, %v2218
    %v2235 = vadd.f32 %v2198, %v2219
    %v2236 = vadd.f32 %v2199, %v2220
    %v2237 = vadd.f32 %v2200, %v2221
    %v2238 = vadd.f32 %v2201, %v2222
    %v2239 = vadd.f32 %v2202, %v2223
    %v2240 = vadd.f32 %v2203, %v2224
    %v2241 = vadd.f32 %v2204, %v2225
    %v2242 = vadd.f32 %v2205, %v2226
    %v2243 = vadd.f32 %v2206, %v2227
    %v2244 = vadd.f32 %v2207, %v2228
    %v2245 = vadd.f32 %v2208, %v2229
    %v2246 = vld [vmem:[%s1868 + $0x6] sm:$0x1]
    %v2247 = vlaneseq
    %v2248 = vshrl.u32 %v2247, 7
    %v2249 = vsub.s32 0, %v2248
    %v2250 = vrot.slane %v2246, %v2249
    %v2251 = vmul.f32 %v2074, %v2250
    %v2252 = vmul.f32 %v2078, %v2250
    %v2253 = vmul.f32 %v2082, %v2250
    %v2254 = vmul.f32 %v2086, %v2250
    %v2255 = vmul.f32 %v2090, %v2250
    %v2256 = vmul.f32 %v2094, %v2250
    %v2257 = vmul.f32 %v2098, %v2250
    %v2258 = vmul.f32 %v2102, %v2250
    %v2259 = vmul.f32 %v2106, %v2250
    %v2260 = vmul.f32 %v2110, %v2250
    %v2261 = vmul.f32 %v2114, %v2250
    %v2262 = vmul.f32 %v2118, %v2250
    %v2263 = vmul.f32 %v2122, %v2250
    %v2264 = vmul.f32 %v2126, %v2250
    %v2265 = vmul.f32 %v2130, %v2250
    %v2266 = vmul.f32 %v2134, %v2250
    %v2267 = vadd.f32 %v2230, %v2251
    %v2268 = vadd.f32 %v2231, %v2252
    %v2269 = vadd.f32 %v2232, %v2253
    %v2270 = vadd.f32 %v2233, %v2254
    %v2271 = vadd.f32 %v2234, %v2255
    %v2272 = vadd.f32 %v2235, %v2256
    %v2273 = vadd.f32 %v2236, %v2257
    %v2274 = vadd.f32 %v2237, %v2258
    %v2275 = vadd.f32 %v2238, %v2259
    %v2276 = vadd.f32 %v2239, %v2260
    %v2277 = vadd.f32 %v2240, %v2261
    %v2278 = vadd.f32 %v2241, %v2262
    %v2279 = vadd.f32 %v2242, %v2263
    %v2280 = vadd.f32 %v2243, %v2264
    %v2281 = vadd.f32 %v2244, %v2265
    %v2282 = vadd.f32 %v2245, %v2266
    %v2283 = vmax.f32 %v2267, 0.0
    %v2284 = vmax.f32 %v2268, 0.0
    %v2285 = vmax.f32 %v2269, 0.0
    %v2286 = vmax.f32 %v2270, 0.0
    %v2287 = vmax.f32 %v2271, 0.0
    %v2288 = vmax.f32 %v2272, 0.0
    %v2289 = vmax.f32 %v2273, 0.0
    %v2290 = vmax.f32 %v2274, 0.0
    %v2291 = vmax.f32 %v2275, 0.0
    %v2292 = vmax.f32 %v2276, 0.0
    %v2293 = vmax.f32 %v2277, 0.0
    %v2294 = vmax.f32 %v2278, 0.0
    %v2295 = vmax.f32 %v2279, 0.0
    %v2296 = vmax.f32 %v2280, 0.0
    %v2297 = vmax.f32 %v2281, 0.0
    %v2298 = vmax.f32 %v2282, 0.0
    %2299 = vmatprep.subr.mxu0 0.0
    %2300 = vmatpush1.xpose.msra.mxu0 %v2298
    %2301 = vmatprep.subr.mxu0 0.0
    %2302 = vmatpush1.xpose.msra.mxu0 %v2297
    %2303 = vmatprep.subr.mxu0 0.0
    %2304 = vmatpush1.xpose.msra.mxu0 %v2296
    %2305 = vmatprep.subr.mxu0 0.0
    %2306 = vmatpush1.xpose.msra.mxu0 %v2295
    %2307 = vmatprep.subr.mxu0 0.0
    %2308 = vmatpush1.xpose.msra.mxu0 %v2294
    %2309 = vmatprep.subr.mxu0 0.0
    %2310 = vmatpush1.xpose.msra.mxu0 %v2293
    %2311 = vmatprep.subr.mxu0 0.0
    %2312 = vmatpush1.xpose.msra.mxu0 %v2292
    %2313 = vmatprep.subr.mxu0 0.0
    %2314 = vmatpush1.xpose.msra.mxu0 %v2291
    %2315 = vmatprep.subr.mxu0 0.0
    %2316 = vmatpush1.xpose.msra.mxu0 %v2290
    %2317 = vmatprep.subr.mxu0 0.0
    %2318 = vmatpush1.xpose.msra.mxu0 %v2289
    %2319 = vmatprep.subr.mxu0 0.0
    %2320 = vmatpush1.xpose.msra.mxu0 %v2288
    %2321 = vmatprep.subr.mxu0 0.0
    %2322 = vmatpush1.xpose.msra.mxu0 %v2287
    %2323 = vmatprep.subr.mxu0 0.0
    %2324 = vmatpush1.xpose.msra.mxu0 %v2286
    %2325 = vmatprep.subr.mxu0 0.0
    %2326 = vmatpush1.xpose.msra.mxu0 %v2285
    %2327 = vmatprep.subr.mxu0 0.0
    %2328 = vmatpush1.xpose.msra.mxu0 %v2284
    %2329 = vmatprep.subr.mxu0 0.0
    %2330 = vmatpush1.xpose.msra.mxu0 %v2283
    %2331 = vmatprep.subr.mxu0 0.0
    %2332 = vmatpush2.xpose.msra.mxu0 0.0
    %2333 = vmatprep.subr.mxu0 0.0
    %2334 = vmatpush2.xpose.msra.mxu0 0.0
    %2335 = vmatprep.subr.mxu0 0.0
    %2336 = vmatpush2.xpose.msra.mxu0 0.0
    %2337 = vmatprep.subr.mxu0 0.0
    %2338 = vmatpush2.xpose.msra.mxu0 0.0
    %2339 = vmatprep.subr.mxu0 0.0
    %2340 = vmatpush2.xpose.msra.mxu0 0.0
    %2341 = vmatprep.subr.mxu0 0.0
    %2342 = vmatpush2.xpose.msra.mxu0 0.0
    %2343 = vmatprep.subr.mxu0 0.0
    %2344 = vmatpush2.xpose.msra.mxu0 0.0
    %2345 = vmatprep.subr.mxu0 0.0
    %2346 = vmatpush2.xpose.msra.mxu0 0.0
    %2347 = vmatprep.subr.mxu0 0.0
    %2348 = vmatpush2.xpose.msra.mxu0 0.0
    %2349 = vmatprep.subr.mxu0 0.0
    %2350 = vmatpush2.xpose.msra.mxu0 0.0
    %2351 = vmatprep.subr.mxu0 0.0
    %2352 = vmatpush2.xpose.msra.mxu0 0.0
    %2353 = vmatprep.subr.mxu0 0.0
    %2354 = vmatpush2.xpose.msra.mxu0 0.0
    %2355 = vmatprep.subr.mxu0 0.0
    %2356 = vmatpush2.xpose.msra.mxu0 0.0
    %2357 = vmatprep.subr.mxu0 0.0
    %2358 = vmatpush2.xpose.msra.mxu0 0.0
    %2359 = vmatprep.subr.mxu0 0.0
    %2360 = vmatpush2.xpose.msra.mxu0 0.0
    %2361 = vmatprep.subr.mxu0 0.0
    %2362 = vmatpush2.xpose.msra.mxu0 0.0
    %2363 = vmatprep.mubr.f32.mxu0 0.0
    %2364 = vmatmul.mubr.f32.gmra.mxu0 1.0
    %v2365 = vpop.f32.mrf.mxu0
    %v2366 = vadd.f32 0.0, %v2365
    %v2367 = vpop.f32.mrf.mxu0
    %2368 = vdwg.mxu0
    %2369 = vmatprep.subr.mxu0 0.0
    %2370 = vmatpush1.xpose.msra.mxu0 %v2187
    %2371 = vmatprep.subr.mxu0 0.0
    %2372 = vmatpush1.xpose.msra.mxu0 %v2186
    %2373 = vmatprep.subr.mxu0 0.0
    %2374 = vmatpush1.xpose.msra.mxu0 %v2185
    %2375 = vmatprep.subr.mxu0 0.0
    %2376 = vmatpush1.xpose.msra.mxu0 %v2184
    %2377 = vmatprep.subr.mxu0 0.0
    %2378 = vmatpush1.xpose.msra.mxu0 %v2183
    %2379 = vmatprep.subr.mxu0 0.0
    %2380 = vmatpush1.xpose.msra.mxu0 %v2182
    %2381 = vmatprep.subr.mxu0 0.0
    %2382 = vmatpush1.xpose.msra.mxu0 %v2181
    %2383 = vmatprep.subr.mxu0 0.0
    %2384 = vmatpush1.xpose.msra.mxu0 %v2180
    %2385 = vmatprep.subr.mxu0 0.0
    %2386 = vmatpush1.xpose.msra.mxu0 %v2179
    %2387 = vmatprep.subr.mxu0 0.0
    %2388 = vmatpush1.xpose.msra.mxu0 %v2178
    %2389 = vmatprep.subr.mxu0 0.0
    %2390 = vmatpush1.xpose.msra.mxu0 %v2177
    %2391 = vmatprep.subr.mxu0 0.0
    %2392 = vmatpush1.xpose.msra.mxu0 %v2176
    %2393 = vmatprep.subr.mxu0 0.0
    %2394 = vmatpush1.xpose.msra.mxu0 %v2175
    %2395 = vmatprep.subr.mxu0 0.0
    %2396 = vmatpush1.xpose.msra.mxu0 %v2174
    %2397 = vmatprep.subr.mxu0 0.0
    %2398 = vmatpush1.xpose.msra.mxu0 %v2173
    %2399 = vmatprep.subr.mxu0 0.0
    %2400 = vmatpush1.xpose.msra.mxu0 %v2172
    %2401 = vmatprep.subr.mxu0 0.0
    %2402 = vmatpush2.xpose.msra.mxu0 0.0
    %2403 = vmatprep.subr.mxu0 0.0
    %2404 = vmatpush2.xpose.msra.mxu0 0.0
    %2405 = vmatprep.subr.mxu0 0.0
    %2406 = vmatpush2.xpose.msra.mxu0 0.0
    %2407 = vmatprep.subr.mxu0 0.0
    %2408 = vmatpush2.xpose.msra.mxu0 0.0
    %2409 = vmatprep.subr.mxu0 0.0
    %2410 = vmatpush2.xpose.msra.mxu0 0.0
    %2411 = vmatprep.subr.mxu0 0.0
    %2412 = vmatpush2.xpose.msra.mxu0 0.0
    %2413 = vmatprep.subr.mxu0 0.0
    %2414 = vmatpush2.xpose.msra.mxu0 0.0
    %2415 = vmatprep.subr.mxu0 0.0
    %2416 = vmatpush2.xpose.msra.mxu0 0.0
    %2417 = vmatprep.subr.mxu0 0.0
    %2418 = vmatpush2.xpose.msra.mxu0 0.0
    %2419 = vmatprep.subr.mxu0 0.0
    %2420 = vmatpush2.xpose.msra.mxu0 0.0
    %2421 = vmatprep.subr.mxu0 0.0
    %2422 = vmatpush2.xpose.msra.mxu0 0.0
    %2423 = vmatprep.subr.mxu0 0.0
    %2424 = vmatpush2.xpose.msra.mxu0 0.0
    %2425 = vmatprep.subr.mxu0 0.0
    %2426 = vmatpush2.xpose.msra.mxu0 0.0
    %2427 = vmatprep.subr.mxu0 0.0
    %2428 = vmatpush2.xpose.msra.mxu0 0.0
    %2429 = vmatprep.subr.mxu0 0.0
    %2430 = vmatpush2.xpose.msra.mxu0 0.0
    %2431 = vmatprep.subr.mxu0 0.0
    %2432 = vmatpush2.xpose.msra.mxu0 0.0
    %2433 = vmatprep.mubr.f32.mxu0 0.0
    %2434 = vmatmul.mubr.f32.gmra.mxu0 1.0
    %v2435 = vpop.f32.mrf.mxu0
    %v2436 = vadd.f32 %v2366, %v2435
    %v2437 = vpop.f32.mrf.mxu0
    %2438 = vdwg.mxu0
    %v2439 = vld [vmem:[#allocation9 + $0x3] sm:$0x1]
    %v2440 = vadd.f32 %v2439, %v2436
    %2441 = vst [vmem:[#allocation9 + $0x3] sm:$0x1] %v2440
    %v2442 = vld [vmem:[%s1] sm:$0xff]
    %v2443 = vld [vmem:[%s1 + $0x8] sm:$0xff]
    %v2444 = vld [vmem:[%s1 + $0x10] sm:$0xff]
    %v2445 = vld [vmem:[%s1 + $0x18] sm:$0xff]
    %v2446 = vld [vmem:[%s1 + $0x20] sm:$0xff]
    %v2447 = vld [vmem:[%s1 + $0x28] sm:$0xff]
    %v2448 = vld [vmem:[%s1 + $0x30] sm:$0xff]
    %v2449 = vld [vmem:[%s1 + $0x38] sm:$0xff]
    %v2450 = vld [vmem:[%s1 + $0x40] sm:$0xff]
    %v2451 = vld [vmem:[%s1 + $0x48] sm:$0xff]
    %v2452 = vld [vmem:[%s1 + $0x50] sm:$0xff]
    %v2453 = vld [vmem:[%s1 + $0x58] sm:$0xff]
    %v2454 = vld [vmem:[%s1 + $0x60] sm:$0xff]
    %v2455 = vld [vmem:[%s1 + $0x68] sm:$0xff]
    %v2456 = vld [vmem:[%s1 + $0x70] sm:$0xff]
    %v2457 = vld [vmem:[%s1 + $0x78] sm:$0xff]
    %s2458 = scalar_lea.vmem %s0, 32
    %v2459 = vld [vmem:[%s2458] sm:$0x1]
    %2461 = vset.pattern.permute.xlu0 0
    %2462 = vperm.xlu0 %2461, %v2442
    %v2463 = vpop.permute.xlu0 %2462
    %2466 = vset.pattern.permute.xlu0 0
    %2467 = vperm.xlu0 %2466, %v2443
    %v2468 = vpop.permute.xlu0 %2467
    %2471 = vset.pattern.permute.xlu0 0
    %2472 = vperm.xlu0 %2471, %v2444
    %v2473 = vpop.permute.xlu0 %2472
    %2476 = vset.pattern.permute.xlu0 0
    %2477 = vperm.xlu0 %2476, %v2445
    %v2478 = vpop.permute.xlu0 %2477
    %2481 = vset.pattern.permute.xlu0 0
    %2482 = vperm.xlu0 %2481, %v2446
    %v2483 = vpop.permute.xlu0 %2482
    %2486 = vset.pattern.permute.xlu0 0
    %2487 = vperm.xlu0 %2486, %v2447
    %v2488 = vpop.permute.xlu0 %2487
    %2491 = vset.pattern.permute.xlu0 0
    %2492 = vperm.xlu0 %2491, %v2448
    %v2493 = vpop.permute.xlu0 %2492
    %2496 = vset.pattern.permute.xlu0 0
    %2497 = vperm.xlu0 %2496, %v2449
    %v2498 = vpop.permute.xlu0 %2497
    %2501 = vset.pattern.permute.xlu0 0
    %2502 = vperm.xlu0 %2501, %v2450
    %v2503 = vpop.permute.xlu0 %2502
    %2506 = vset.pattern.permute.xlu0 0
    %2507 = vperm.xlu0 %2506, %v2451
    %v2508 = vpop.permute.xlu0 %2507
    %2511 = vset.pattern.permute.xlu0 0
    %2512 = vperm.xlu0 %2511, %v2452
    %v2513 = vpop.permute.xlu0 %2512
    %2516 = vset.pattern.permute.xlu0 0
    %2517 = vperm.xlu0 %2516, %v2453
    %v2518 = vpop.permute.xlu0 %2517
    %2521 = vset.pattern.permute.xlu0 0
    %2522 = vperm.xlu0 %2521, %v2454
    %v2523 = vpop.permute.xlu0 %2522
    %2526 = vset.pattern.permute.xlu0 0
    %2527 = vperm.xlu0 %2526, %v2455
    %v2528 = vpop.permute.xlu0 %2527
    %2531 = vset.pattern.permute.xlu0 0
    %2532 = vperm.xlu0 %2531, %v2456
    %v2533 = vpop.permute.xlu0 %2532
    %2536 = vset.pattern.permute.xlu0 0
    %2537 = vperm.xlu0 %2536, %v2457
    %v2538 = vpop.permute.xlu0 %2537
    %v2540 = vlaneseq
    %v2541 = vshrl.u32 %v2540, 7
    %v2542 = vsub.s32 0, %v2541
    %v2543 = vrot.slane %v2459, %v2542
    %v2544 = vmul.f32 %v2463, %v2543
    %v2545 = vmul.f32 %v2468, %v2543
    %v2546 = vmul.f32 %v2473, %v2543
    %v2547 = vmul.f32 %v2478, %v2543
    %v2548 = vmul.f32 %v2483, %v2543
    %v2549 = vmul.f32 %v2488, %v2543
    %v2550 = vmul.f32 %v2493, %v2543
    %v2551 = vmul.f32 %v2498, %v2543
    %v2552 = vmul.f32 %v2503, %v2543
    %v2553 = vmul.f32 %v2508, %v2543
    %v2554 = vmul.f32 %v2513, %v2543
    %v2555 = vmul.f32 %v2518, %v2543
    %v2556 = vmul.f32 %v2523, %v2543
    %v2557 = vmul.f32 %v2528, %v2543
    %v2558 = vmul.f32 %v2533, %v2543
    %v2559 = vmul.f32 %v2538, %v2543
    %v2560 = vld [vmem:[%s2458 + $0x1] sm:$0x1]
    %2561 = vset.pattern.permute.xlu0 1
    %2562 = vperm.xlu0 %2561, %v2442
    %v2563 = vpop.permute.xlu0 %2562
    %2565 = vset.pattern.permute.xlu0 1
    %2566 = vperm.xlu0 %2565, %v2443
    %v2567 = vpop.permute.xlu0 %2566
    %2569 = vset.pattern.permute.xlu0 1
    %2570 = vperm.xlu0 %2569, %v2444
    %v2571 = vpop.permute.xlu0 %2570
    %2573 = vset.pattern.permute.xlu0 1
    %2574 = vperm.xlu0 %2573, %v2445
    %v2575 = vpop.permute.xlu0 %2574
    %2577 = vset.pattern.permute.xlu0 1
    %2578 = vperm.xlu0 %2577, %v2446
    %v2579 = vpop.permute.xlu0 %2578
    %2581 = vset.pattern.permute.xlu0 1
    %2582 = vperm.xlu0 %2581, %v2447
    %v2583 = vpop.permute.xlu0 %2582
    %2585 = vset.pattern.permute.xlu0 1
    %2586 = vperm.xlu0 %2585, %v2448
    %v2587 = vpop.permute.xlu0 %2586
    %2589 = vset.pattern.permute.xlu0 1
    %2590 = vperm.xlu0 %2589, %v2449
    %v2591 = vpop.permute.xlu0 %2590
    %2593 = vset.pattern.permute.xlu0 1
    %2594 = vperm.xlu0 %2593, %v2450
    %v2595 = vpop.permute.xlu0 %2594
    %2597 = vset.pattern.permute.xlu0 1
    %2598 = vperm.xlu0 %2597, %v2451
    %v2599 = vpop.permute.xlu0 %2598
    %2601 = vset.pattern.permute.xlu0 1
    %2602 = vperm.xlu0 %2601, %v2452
    %v2603 = vpop.permute.xlu0 %2602
    %2605 = vset.pattern.permute.xlu0 1
    %2606 = vperm.xlu0 %2605, %v2453
    %v2607 = vpop.permute.xlu0 %2606
    %2609 = vset.pattern.permute.xlu0 1
    %2610 = vperm.xlu0 %2609, %v2454
    %v2611 = vpop.permute.xlu0 %2610
    %2613 = vset.pattern.permute.xlu0 1
    %2614 = vperm.xlu0 %2613, %v2455
    %v2615 = vpop.permute.xlu0 %2614
    %2617 = vset.pattern.permute.xlu0 1
    %2618 = vperm.xlu0 %2617, %v2456
    %v2619 = vpop.permute.xlu0 %2618
    %2621 = vset.pattern.permute.xlu0 1
    %2622 = vperm.xlu0 %2621, %v2457
    %v2623 = vpop.permute.xlu0 %2622
    %v2625 = vlaneseq
    %v2626 = vshrl.u32 %v2625, 7
    %v2627 = vsub.s32 0, %v2626
    %v2628 = vrot.slane %v2560, %v2627
    %v2629 = vmul.f32 %v2563, %v2628
    %v2630 = vmul.f32 %v2567, %v2628
    %v2631 = vmul.f32 %v2571, %v2628
    %v2632 = vmul.f32 %v2575, %v2628
    %v2633 = vmul.f32 %v2579, %v2628
    %v2634 = vmul.f32 %v2583, %v2628
    %v2635 = vmul.f32 %v2587, %v2628
    %v2636 = vmul.f32 %v2591, %v2628
    %v2637 = vmul.f32 %v2595, %v2628
    %v2638 = vmul.f32 %v2599, %v2628
    %v2639 = vmul.f32 %v2603, %v2628
    %v2640 = vmul.f32 %v2607, %v2628
    %v2641 = vmul.f32 %v2611, %v2628
    %v2642 = vmul.f32 %v2615, %v2628
    %v2643 = vmul.f32 %v2619, %v2628
    %v2644 = vmul.f32 %v2623, %v2628
    %v2645 = vadd.f32 %v2544, %v2629
    %v2646 = vadd.f32 %v2545, %v2630
    %v2647 = vadd.f32 %v2546, %v2631
    %v2648 = vadd.f32 %v2547, %v2632
    %v2649 = vadd.f32 %v2548, %v2633
    %v2650 = vadd.f32 %v2549, %v2634
    %v2651 = vadd.f32 %v2550, %v2635
    %v2652 = vadd.f32 %v2551, %v2636
    %v2653 = vadd.f32 %v2552, %v2637
    %v2654 = vadd.f32 %v2553, %v2638
    %v2655 = vadd.f32 %v2554, %v2639
    %v2656 = vadd.f32 %v2555, %v2640
    %v2657 = vadd.f32 %v2556, %v2641
    %v2658 = vadd.f32 %v2557, %v2642
    %v2659 = vadd.f32 %v2558, %v2643
    %v2660 = vadd.f32 %v2559, %v2644
    %v2661 = vld [vmem:[%s2458 + $0x2] sm:$0x1]
    %2662 = vset.pattern.permute.xlu0 2
    %2663 = vperm.xlu0 %2662, %v2442
    %v2664 = vpop.permute.xlu0 %2663
    %2666 = vset.pattern.permute.xlu0 2
    %2667 = vperm.xlu0 %2666, %v2443
    %v2668 = vpop.permute.xlu0 %2667
    %2670 = vset.pattern.permute.xlu0 2
    %2671 = vperm.xlu0 %2670, %v2444
    %v2672 = vpop.permute.xlu0 %2671
    %2674 = vset.pattern.permute.xlu0 2
    %2675 = vperm.xlu0 %2674, %v2445
    %v2676 = vpop.permute.xlu0 %2675
    %2678 = vset.pattern.permute.xlu0 2
    %2679 = vperm.xlu0 %2678, %v2446
    %v2680 = vpop.permute.xlu0 %2679
    %2682 = vset.pattern.permute.xlu0 2
    %2683 = vperm.xlu0 %2682, %v2447
    %v2684 = vpop.permute.xlu0 %2683
    %2686 = vset.pattern.permute.xlu0 2
    %2687 = vperm.xlu0 %2686, %v2448
    %v2688 = vpop.permute.xlu0 %2687
    %2690 = vset.pattern.permute.xlu0 2
    %2691 = vperm.xlu0 %2690, %v2449
    %v2692 = vpop.permute.xlu0 %2691
    %2694 = vset.pattern.permute.xlu0 2
    %2695 = vperm.xlu0 %2694, %v2450
    %v2696 = vpop.permute.xlu0 %2695
    %2698 = vset.pattern.permute.xlu0 2
    %2699 = vperm.xlu0 %2698, %v2451
    %v2700 = vpop.permute.xlu0 %2699
    %2702 = vset.pattern.permute.xlu0 2
    %2703 = vperm.xlu0 %2702, %v2452
    %v2704 = vpop.permute.xlu0 %2703
    %2706 = vset.pattern.permute.xlu0 2
    %2707 = vperm.xlu0 %2706, %v2453
    %v2708 = vpop.permute.xlu0 %2707
    %2710 = vset.pattern.permute.xlu0 2
    %2711 = vperm.xlu0 %2710, %v2454
    %v2712 = vpop.permute.xlu0 %2711
    %2714 = vset.pattern.permute.xlu0 2
    %2715 = vperm.xlu0 %2714, %v2455
    %v2716 = vpop.permute.xlu0 %2715
    %2718 = vset.pattern.permute.xlu0 2
    %2719 = vperm.xlu0 %2718, %v2456
    %v2720 = vpop.permute.xlu0 %2719
    %2722 = vset.pattern.permute.xlu0 2
    %2723 = vperm.xlu0 %2722, %v2457
    %v2724 = vpop.permute.xlu0 %2723
    %v2726 = vlaneseq
    %v2727 = vshrl.u32 %v2726, 7
    %v2728 = vsub.s32 0, %v2727
    %v2729 = vrot.slane %v2661, %v2728
    %v2730 = vmul.f32 %v2664, %v2729
    %v2731 = vmul.f32 %v2668, %v2729
    %v2732 = vmul.f32 %v2672, %v2729
    %v2733 = vmul.f32 %v2676, %v2729
    %v2734 = vmul.f32 %v2680, %v2729
    %v2735 = vmul.f32 %v2684, %v2729
    %v2736 = vmul.f32 %v2688, %v2729
    %v2737 = vmul.f32 %v2692, %v2729
    %v2738 = vmul.f32 %v2696, %v2729
    %v2739 = vmul.f32 %v2700, %v2729
    %v2740 = vmul.f32 %v2704, %v2729
    %v2741 = vmul.f32 %v2708, %v2729
    %v2742 = vmul.f32 %v2712, %v2729
    %v2743 = vmul.f32 %v2716, %v2729
    %v2744 = vmul.f32 %v2720, %v2729
    %v2745 = vmul.f32 %v2724, %v2729
    %v2746 = vadd.f32 %v2645, %v2730
    %v2747 = vadd.f32 %v2646, %v2731
    %v2748 = vadd.f32 %v2647, %v2732
    %v2749 = vadd.f32 %v2648, %v2733
    %v2750 = vadd.f32 %v2649, %v2734
    %v2751 = vadd.f32 %v2650, %v2735
    %v2752 = vadd.f32 %v2651, %v2736
    %v2753 = vadd.f32 %v2652, %v2737
    %v2754 = vadd.f32 %v2653, %v2738
    %v2755 = vadd.f32 %v2654, %v2739
    %v2756 = vadd.f32 %v2655, %v2740
    %v2757 = vadd.f32 %v2656, %v2741
    %v2758 = vadd.f32 %v2657, %v2742
    %v2759 = vadd.f32 %v2658, %v2743
    %v2760 = vadd.f32 %v2659, %v2744
    %v2761 = vadd.f32 %v2660, %v2745
    %v2762 = vmax.f32 %v2746, 0.0
    %v2763 = vmax.f32 %v2747, 0.0
    %v2764 = vmax.f32 %v2748, 0.0
    %v2765 = vmax.f32 %v2749, 0.0
    %v2766 = vmax.f32 %v2750, 0.0
    %v2767 = vmax.f32 %v2751, 0.0
    %v2768 = vmax.f32 %v2752, 0.0
    %v2769 = vmax.f32 %v2753, 0.0
    %v2770 = vmax.f32 %v2754, 0.0
    %v2771 = vmax.f32 %v2755, 0.0
    %v2772 = vmax.f32 %v2756, 0.0
    %v2773 = vmax.f32 %v2757, 0.0
    %v2774 = vmax.f32 %v2758, 0.0
    %v2775 = vmax.f32 %v2759, 0.0
    %v2776 = vmax.f32 %v2760, 0.0
    %v2777 = vmax.f32 %v2761, 0.0
    %v2778 = vld [vmem:[%s2458 + $0x4] sm:$0x1]
    %v2779 = vlaneseq
    %v2780 = vshrl.u32 %v2779, 7
    %v2781 = vsub.s32 0, %v2780
    %v2782 = vrot.slane %v2778, %v2781
    %v2783 = vmul.f32 %v2463, %v2782
    %v2784 = vmul.f32 %v2468, %v2782
    %v2785 = vmul.f32 %v2473, %v2782
    %v2786 = vmul.f32 %v2478, %v2782
    %v2787 = vmul.f32 %v2483, %v2782
    %v2788 = vmul.f32 %v2488, %v2782
    %v2789 = vmul.f32 %v2493, %v2782
    %v2790 = vmul.f32 %v2498, %v2782
    %v2791 = vmul.f32 %v2503, %v2782
    %v2792 = vmul.f32 %v2508, %v2782
    %v2793 = vmul.f32 %v2513, %v2782
    %v2794 = vmul.f32 %v2518, %v2782
    %v2795 = vmul.f32 %v2523, %v2782
    %v2796 = vmul.f32 %v2528, %v2782
    %v2797 = vmul.f32 %v2533, %v2782
    %v2798 = vmul.f32 %v2538, %v2782
    %v2799 = vld [vmem:[%s2458 + $0x5] sm:$0x1]
    %v2800 = vlaneseq
    %v2801 = vshrl.u32 %v2800, 7
    %v2802 = vsub.s32 0, %v2801
    %v2803 = vrot.slane %v2799, %v2802
    %v2804 = vmul.f32 %v2563, %v2803
    %v2805 = vmul.f32 %v2567, %v2803
    %v2806 = vmul.f32 %v2571, %v2803
    %v2807 = vmul.f32 %v2575, %v2803
    %v2808 = vmul.f32 %v2579, %v2803
    %v2809 = vmul.f32 %v2583, %v2803
    %v2810 = vmul.f32 %v2587, %v2803
    %v2811 = vmul.f32 %v2591, %v2803
    %v2812 = vmul.f32 %v2595, %v2803
    %v2813 = vmul.f32 %v2599, %v2803
    %v2814 = vmul.f32 %v2603, %v2803
    %v2815 = vmul.f32 %v2607, %v2803
    %v2816 = vmul.f32 %v2611, %v2803
    %v2817 = vmul.f32 %v2615, %v2803
    %v2818 = vmul.f32 %v2619, %v2803
    %v2819 = vmul.f32 %v2623, %v2803
    %v2820 = vadd.f32 %v2783, %v2804
    %v2821 = vadd.f32 %v2784, %v2805
    %v2822 = vadd.f32 %v2785, %v2806
    %v2823 = vadd.f32 %v2786, %v2807
    %v2824 = vadd.f32 %v2787, %v2808
    %v2825 = vadd.f32 %v2788, %v2809
    %v2826 = vadd.f32 %v2789, %v2810
    %v2827 = vadd.f32 %v2790, %v2811
    %v2828 = vadd.f32 %v2791, %v2812
    %v2829 = vadd.f32 %v2792, %v2813
    %v2830 = vadd.f32 %v2793, %v2814
    %v2831 = vadd.f32 %v2794, %v2815
    %v2832 = vadd.f32 %v2795, %v2816
    %v2833 = vadd.f32 %v2796, %v2817
    %v2834 = vadd.f32 %v2797, %v2818
    %v2835 = vadd.f32 %v2798, %v2819
    %v2836 = vld [vmem:[%s2458 + $0x6] sm:$0x1]
    %v2837 = vlaneseq
    %v2838 = vshrl.u32 %v2837, 7
    %v2839 = vsub.s32 0, %v2838
    %v2840 = vrot.slane %v2836, %v2839
    %v2841 = vmul.f32 %v2664, %v2840
    %v2842 = vmul.f32 %v2668, %v2840
    %v2843 = vmul.f32 %v2672, %v2840
    %v2844 = vmul.f32 %v2676, %v2840
    %v2845 = vmul.f32 %v2680, %v2840
    %v2846 = vmul.f32 %v2684, %v2840
    %v2847 = vmul.f32 %v2688, %v2840
    %v2848 = vmul.f32 %v2692, %v2840
    %v2849 = vmul.f32 %v2696, %v2840
    %v2850 = vmul.f32 %v2700, %v2840
    %v2851 = vmul.f32 %v2704, %v2840
    %v2852 = vmul.f32 %v2708, %v2840
    %v2853 = vmul.f32 %v2712, %v2840
    %v2854 = vmul.f32 %v2716, %v2840
    %v2855 = vmul.f32 %v2720, %v2840
    %v2856 = vmul.f32 %v2724, %v2840
    %v2857 = vadd.f32 %v2820, %v2841
    %v2858 = vadd.f32 %v2821, %v2842
    %v2859 = vadd.f32 %v2822, %v2843
    %v2860 = vadd.f32 %v2823, %v2844
    %v2861 = vadd.f32 %v2824, %v2845
    %v2862 = vadd.f32 %v2825, %v2846
    %v2863 = vadd.f32 %v2826, %v2847
    %v2864 = vadd.f32 %v2827, %v2848
    %v2865 = vadd.f32 %v2828, %v2849
    %v2866 = vadd.f32 %v2829, %v2850
    %v2867 = vadd.f32 %v2830, %v2851
    %v2868 = vadd.f32 %v2831, %v2852
    %v2869 = vadd.f32 %v2832, %v2853
    %v2870 = vadd.f32 %v2833, %v2854
    %v2871 = vadd.f32 %v2834, %v2855
    %v2872 = vadd.f32 %v2835, %v2856
    %v2873 = vmax.f32 %v2857, 0.0
    %v2874 = vmax.f32 %v2858, 0.0
    %v2875 = vmax.f32 %v2859, 0.0
    %v2876 = vmax.f32 %v2860, 0.0
    %v2877 = vmax.f32 %v2861, 0.0
    %v2878 = vmax.f32 %v2862, 0.0
    %v2879 = vmax.f32 %v2863, 0.0
    %v2880 = vmax.f32 %v2864, 0.0
    %v2881 = vmax.f32 %v2865, 0.0
    %v2882 = vmax.f32 %v2866, 0.0
    %v2883 = vmax.f32 %v2867, 0.0
    %v2884 = vmax.f32 %v2868, 0.0
    %v2885 = vmax.f32 %v2869, 0.0
    %v2886 = vmax.f32 %v2870, 0.0
    %v2887 = vmax.f32 %v2871, 0.0
    %v2888 = vmax.f32 %v2872, 0.0
    %2889 = vmatprep.subr.mxu0 0.0
    %2890 = vmatpush1.xpose.msra.mxu0 %v2888
    %2891 = vmatprep.subr.mxu0 0.0
    %2892 = vmatpush1.xpose.msra.mxu0 %v2887
    %2893 = vmatprep.subr.mxu0 0.0
    %2894 = vmatpush1.xpose.msra.mxu0 %v2886
    %2895 = vmatprep.subr.mxu0 0.0
    %2896 = vmatpush1.xpose.msra.mxu0 %v2885
    %2897 = vmatprep.subr.mxu0 0.0
    %2898 = vmatpush1.xpose.msra.mxu0 %v2884
    %2899 = vmatprep.subr.mxu0 0.0
    %2900 = vmatpush1.xpose.msra.mxu0 %v2883
    %2901 = vmatprep.subr.mxu0 0.0
    %2902 = vmatpush1.xpose.msra.mxu0 %v2882
    %2903 = vmatprep.subr.mxu0 0.0
    %2904 = vmatpush1.xpose.msra.mxu0 %v2881
    %2905 = vmatprep.subr.mxu0 0.0
    %2906 = vmatpush1.xpose.msra.mxu0 %v2880
    %2907 = vmatprep.subr.mxu0 0.0
    %2908 = vmatpush1.xpose.msra.mxu0 %v2879
    %2909 = vmatprep.subr.mxu0 0.0
    %2910 = vmatpush1.xpose.msra.mxu0 %v2878
    %2911 = vmatprep.subr.mxu0 0.0
    %2912 = vmatpush1.xpose.msra.mxu0 %v2877
    %2913 = vmatprep.subr.mxu0 0.0
    %2914 = vmatpush1.xpose.msra.mxu0 %v2876
    %2915 = vmatprep.subr.mxu0 0.0
    %2916 = vmatpush1.xpose.msra.mxu0 %v2875
    %2917 = vmatprep.subr.mxu0 0.0
    %2918 = vmatpush1.xpose.msra.mxu0 %v2874
    %2919 = vmatprep.subr.mxu0 0.0
    %2920 = vmatpush1.xpose.msra.mxu0 %v2873
    %2921 = vmatprep.subr.mxu0 0.0
    %2922 = vmatpush2.xpose.msra.mxu0 0.0
    %2923 = vmatprep.subr.mxu0 0.0
    %2924 = vmatpush2.xpose.msra.mxu0 0.0
    %2925 = vmatprep.subr.mxu0 0.0
    %2926 = vmatpush2.xpose.msra.mxu0 0.0
    %2927 = vmatprep.subr.mxu0 0.0
    %2928 = vmatpush2.xpose.msra.mxu0 0.0
    %2929 = vmatprep.subr.mxu0 0.0
    %2930 = vmatpush2.xpose.msra.mxu0 0.0
    %2931 = vmatprep.subr.mxu0 0.0
    %2932 = vmatpush2.xpose.msra.mxu0 0.0
    %2933 = vmatprep.subr.mxu0 0.0
    %2934 = vmatpush2.xpose.msra.mxu0 0.0
    %2935 = vmatprep.subr.mxu0 0.0
    %2936 = vmatpush2.xpose.msra.mxu0 0.0
    %2937 = vmatprep.subr.mxu0 0.0
    %2938 = vmatpush2.xpose.msra.mxu0 0.0
    %2939 = vmatprep.subr.mxu0 0.0
    %2940 = vmatpush2.xpose.msra.mxu0 0.0
    %2941 = vmatprep.subr.mxu0 0.0
    %2942 = vmatpush2.xpose.msra.mxu0 0.0
    %2943 = vmatprep.subr.mxu0 0.0
    %2944 = vmatpush2.xpose.msra.mxu0 0.0
    %2945 = vmatprep.subr.mxu0 0.0
    %2946 = vmatpush2.xpose.msra.mxu0 0.0
    %2947 = vmatprep.subr.mxu0 0.0
    %2948 = vmatpush2.xpose.msra.mxu0 0.0
    %2949 = vmatprep.subr.mxu0 0.0
    %2950 = vmatpush2.xpose.msra.mxu0 0.0
    %2951 = vmatprep.subr.mxu0 0.0
    %2952 = vmatpush2.xpose.msra.mxu0 0.0
    %2953 = vmatprep.mubr.f32.mxu0 0.0
    %2954 = vmatmul.mubr.f32.gmra.mxu0 1.0
    %v2955 = vpop.f32.mrf.mxu0
    %v2956 = vadd.f32 0.0, %v2955
    %v2957 = vpop.f32.mrf.mxu0
    %2958 = vdwg.mxu0
    %2959 = vmatprep.subr.mxu0 0.0
    %2960 = vmatpush1.xpose.msra.mxu0 %v2777
    %2961 = vmatprep.subr.mxu0 0.0
    %2962 = vmatpush1.xpose.msra.mxu0 %v2776
    %2963 = vmatprep.subr.mxu0 0.0
    %2964 = vmatpush1.xpose.msra.mxu0 %v2775
    %2965 = vmatprep.subr.mxu0 0.0
    %2966 = vmatpush1.xpose.msra.mxu0 %v2774
    %2967 = vmatprep.subr.mxu0 0.0
    %2968 = vmatpush1.xpose.msra.mxu0 %v2773
    %2969 = vmatprep.subr.mxu0 0.0
    %2970 = vmatpush1.xpose.msra.mxu0 %v2772
    %2971 = vmatprep.subr.mxu0 0.0
    %2972 = vmatpush1.xpose.msra.mxu0 %v2771
    %2973 = vmatprep.subr.mxu0 0.0
    %2974 = vmatpush1.xpose.msra.mxu0 %v2770
    %2975 = vmatprep.subr.mxu0 0.0
    %2976 = vmatpush1.xpose.msra.mxu0 %v2769
    %2977 = vmatprep.subr.mxu0 0.0
    %2978 = vmatpush1.xpose.msra.mxu0 %v2768
    %2979 = vmatprep.subr.mxu0 0.0
    %2980 = vmatpush1.xpose.msra.mxu0 %v2767
    %2981 = vmatprep.subr.mxu0 0.0
    %2982 = vmatpush1.xpose.msra.mxu0 %v2766
    %2983 = vmatprep.subr.mxu0 0.0
    %2984 = vmatpush1.xpose.msra.mxu0 %v2765
    %2985 = vmatprep.subr.mxu0 0.0
    %2986 = vmatpush1.xpose.msra.mxu0 %v2764
    %2987 = vmatprep.subr.mxu0 0.0
    %2988 = vmatpush1.xpose.msra.mxu0 %v2763
    %2989 = vmatprep.subr.mxu0 0.0
    %2990 = vmatpush1.xpose.msra.mxu0 %v2762
    %2991 = vmatprep.subr.mxu0 0.0
    %2992 = vmatpush2.xpose.msra.mxu0 0.0
    %2993 = vmatprep.subr.mxu0 0.0
    %2994 = vmatpush2.xpose.msra.mxu0 0.0
    %2995 = vmatprep.subr.mxu0 0.0
    %2996 = vmatpush2.xpose.msra.mxu0 0.0
    %2997 = vmatprep.subr.mxu0 0.0
    %2998 = vmatpush2.xpose.msra.mxu0 0.0
    %2999 = vmatprep.subr.mxu0 0.0
    %3000 = vmatpush2.xpose.msra.mxu0 0.0
    %3001 = vmatprep.subr.mxu0 0.0
    %3002 = vmatpush2.xpose.msra.mxu0 0.0
    %3003 = vmatprep.subr.mxu0 0.0
    %3004 = vmatpush2.xpose.msra.mxu0 0.0
    %3005 = vmatprep.subr.mxu0 0.0
    %3006 = vmatpush2.xpose.msra.mxu0 0.0
    %3007 = vmatprep.subr.mxu0 0.0
    %3008 = vmatpush2.xpose.msra.mxu0 0.0
    %3009 = vmatprep.subr.mxu0 0.0
    %3010 = vmatpush2.xpose.msra.mxu0 0.0
    %3011 = vmatprep.subr.mxu0 0.0
    %3012 = vmatpush2.xpose.msra.mxu0 0.0
    %3013 = vmatprep.subr.mxu0 0.0
    %3014 = vmatpush2.xpose.msra.mxu0 0.0
    %3015 = vmatprep.subr.mxu0 0.0
    %3016 = vmatpush2.xpose.msra.mxu0 0.0
    %3017 = vmatprep.subr.mxu0 0.0
    %3018 = vmatpush2.xpose.msra.mxu0 0.0
    %3019 = vmatprep.subr.mxu0 0.0
    %3020 = vmatpush2.xpose.msra.mxu0 0.0
    %3021 = vmatprep.subr.mxu0 0.0
    %3022 = vmatpush2.xpose.msra.mxu0 0.0
    %3023 = vmatprep.mubr.f32.mxu0 0.0
    %3024 = vmatmul.mubr.f32.gmra.mxu0 1.0
    %v3025 = vpop.f32.mrf.mxu0
    %v3026 = vadd.f32 %v2956, %v3025
    %v3027 = vpop.f32.mrf.mxu0
    %3028 = vdwg.mxu0
    %v3029 = vld [vmem:[#allocation9 + $0x4] sm:$0x1]
    %v3030 = vadd.f32 %v3029, %v3026
    %3031 = vst [vmem:[#allocation9 + $0x4] sm:$0x1] %v3030
    %v3032 = vld [vmem:[%s1] sm:$0xff]
    %v3033 = vld [vmem:[%s1 + $0x8] sm:$0xff]
    %v3034 = vld [vmem:[%s1 + $0x10] sm:$0xff]
    %v3035 = vld [vmem:[%s1 + $0x18] sm:$0xff]
    %v3036 = vld [vmem:[%s1 + $0x20] sm:$0xff]
    %v3037 = vld [vmem:[%s1 + $0x28] sm:$0xff]
    %v3038 = vld [vmem:[%s1 + $0x30] sm:$0xff]
    %v3039 = vld [vmem:[%s1 + $0x38] sm:$0xff]
    %v3040 = vld [vmem:[%s1 + $0x40] sm:$0xff]
    %v3041 = vld [vmem:[%s1 + $0x48] sm:$0xff]
    %v3042 = vld [vmem:[%s1 + $0x50] sm:$0xff]
    %v3043 = vld [vmem:[%s1 + $0x58] sm:$0xff]
    %v3044 = vld [vmem:[%s1 + $0x60] sm:$0xff]
    %v3045 = vld [vmem:[%s1 + $0x68] sm:$0xff]
    %v3046 = vld [vmem:[%s1 + $0x70] sm:$0xff]
    %v3047 = vld [vmem:[%s1 + $0x78] sm:$0xff]
    %s3048 = scalar_lea.vmem %s0, 40
    %v3049 = vld [vmem:[%s3048] sm:$0x1]
    %3051 = vset.pattern.permute.xlu0 0
    %3052 = vperm.xlu0 %3051, %v3032
    %v3053 = vpop.permute.xlu0 %3052
    %3056 = vset.pattern.permute.xlu0 0
    %3057 = vperm.xlu0 %3056, %v3033
    %v3058 = vpop.permute.xlu0 %3057
    %3061 = vset.pattern.permute.xlu0 0
    %3062 = vperm.xlu0 %3061, %v3034
    %v3063 = vpop.permute.xlu0 %3062
    %3066 = vset.pattern.permute.xlu0 0
    %3067 = vperm.xlu0 %3066, %v3035
    %v3068 = vpop.permute.xlu0 %3067
    %3071 = vset.pattern.permute.xlu0 0
    %3072 = vperm.xlu0 %3071, %v3036
    %v3073 = vpop.permute.xlu0 %3072
    %3076 = vset.pattern.permute.xlu0 0
    %3077 = vperm.xlu0 %3076, %v3037
    %v3078 = vpop.permute.xlu0 %3077
    %3081 = vset.pattern.permute.xlu0 0
    %3082 = vperm.xlu0 %3081, %v3038
    %v3083 = vpop.permute.xlu0 %3082
    %3086 = vset.pattern.permute.xlu0 0
    %3087 = vperm.xlu0 %3086, %v3039
    %v3088 = vpop.permute.xlu0 %3087
    %3091 = vset.pattern.permute.xlu0 0
    %3092 = vperm.xlu0 %3091, %v3040
    %v3093 = vpop.permute.xlu0 %3092
    %3096 = vset.pattern.permute.xlu0 0
    %3097 = vperm.xlu0 %3096, %v3041
    %v3098 = vpop.permute.xlu0 %3097
    %3101 = vset.pattern.permute.xlu0 0
    %3102 = vperm.xlu0 %3101, %v3042
    %v3103 = vpop.permute.xlu0 %3102
    %3106 = vset.pattern.permute.xlu0 0
    %3107 = vperm.xlu0 %3106, %v3043
    %v3108 = vpop.permute.xlu0 %3107
    %3111 = vset.pattern.permute.xlu0 0
    %3112 = vperm.xlu0 %3111, %v3044
    %v3113 = vpop.permute.xlu0 %3112
    %3116 = vset.pattern.permute.xlu0 0
    %3117 = vperm.xlu0 %3116, %v3045
    %v3118 = vpop.permute.xlu0 %3117
    %3121 = vset.pattern.permute.xlu0 0
    %3122 = vperm.xlu0 %3121, %v3046
    %v3123 = vpop.permute.xlu0 %3122
    %3126 = vset.pattern.permute.xlu0 0
    %3127 = vperm.xlu0 %3126, %v3047
    %v3128 = vpop.permute.xlu0 %3127
    %v3130 = vlaneseq
    %v3131 = vshrl.u32 %v3130, 7
    %v3132 = vsub.s32 0, %v3131
    %v3133 = vrot.slane %v3049, %v3132
    %v3134 = vmul.f32 %v3053, %v3133
    %v3135 = vmul.f32 %v3058, %v3133
    %v3136 = vmul.f32 %v3063, %v3133
    %v3137 = vmul.f32 %v3068, %v3133
    %v3138 = vmul.f32 %v3073, %v3133
    %v3139 = vmul.f32 %v3078, %v3133
    %v3140 = vmul.f32 %v3083, %v3133
    %v3141 = vmul.f32 %v3088, %v3133
    %v3142 = vmul.f32 %v3093, %v3133
    %v3143 = vmul.f32 %v3098, %v3133
    %v3144 = vmul.f32 %v3103, %v3133
    %v3145 = vmul.f32 %v3108, %v3133
    %v3146 = vmul.f32 %v3113, %v3133
    %v3147 = vmul.f32 %v3118, %v3133
    %v3148 = vmul.f32 %v3123, %v3133
    %v3149 = vmul.f32 %v3128, %v3133
    %v3150 = vld [vmem:[%s3048 + $0x1] sm:$0x1]
    %3151 = vset.pattern.permute.xlu0 1
    %3152 = vperm.xlu0 %3151, %v3032
    %v3153 = vpop.permute.xlu0 %3152
    %3155 = vset.pattern.permute.xlu0 1
    %3156 = vperm.xlu0 %3155, %v3033
    %v3157 = vpop.permute.xlu0 %3156
    %3159 = vset.pattern.permute.xlu0 1
    %3160 = vperm.xlu0 %3159, %v3034
    %v3161 = vpop.permute.xlu0 %3160
    %3163 = vset.pattern.permute.xlu0 1
    %3164 = vperm.xlu0 %3163, %v3035
    %v3165 = vpop.permute.xlu0 %3164
    %3167 = vset.pattern.permute.xlu0 1
    %3168 = vperm.xlu0 %3167, %v3036
    %v3169 = vpop.permute.xlu0 %3168
    %3171 = vset.pattern.permute.xlu0 1
    %3172 = vperm.xlu0 %3171, %v3037
    %v3173 = vpop.permute.xlu0 %3172
    %3175 = vset.pattern.permute.xlu0 1
    %3176 = vperm.xlu0 %3175, %v3038
    %v3177 = vpop.permute.xlu0 %3176
    %3179 = vset.pattern.permute.xlu0 1
    %3180 = vperm.xlu0 %3179, %v3039
    %v3181 = vpop.permute.xlu0 %3180
    %3183 = vset.pattern.permute.xlu0 1
    %3184 = vperm.xlu0 %3183, %v3040
    %v3185 = vpop.permute.xlu0 %3184
    %3187 = vset.pattern.permute.xlu0 1
    %3188 = vperm.xlu0 %3187, %v3041
    %v3189 = vpop.permute.xlu0 %3188
    %3191 = vset.pattern.permute.xlu0 1
    %3192 = vperm.xlu0 %3191, %v3042
    %v3193 = vpop.permute.xlu0 %3192
    %3195 = vset.pattern.permute.xlu0 1
    %3196 = vperm.xlu0 %3195, %v3043
    %v3197 = vpop.permute.xlu0 %3196
    %3199 = vset.pattern.permute.xlu0 1
    %3200 = vperm.xlu0 %3199, %v3044
    %v3201 = vpop.permute.xlu0 %3200
    %3203 = vset.pattern.permute.xlu0 1
    %3204 = vperm.xlu0 %3203, %v3045
    %v3205 = vpop.permute.xlu0 %3204
    %3207 = vset.pattern.permute.xlu0 1
    %3208 = vperm.xlu0 %3207, %v3046
    %v3209 = vpop.permute.xlu0 %3208
    %3211 = vset.pattern.permute.xlu0 1
    %3212 = vperm.xlu0 %3211, %v3047
    %v3213 = vpop.permute.xlu0 %3212
    %v3215 = vlaneseq
    %v3216 = vshrl.u32 %v3215, 7
    %v3217 = vsub.s32 0, %v3216
    %v3218 = vrot.slane %v3150, %v3217
    %v3219 = vmul.f32 %v3153, %v3218
    %v3220 = vmul.f32 %v3157, %v3218
    %v3221 = vmul.f32 %v3161, %v3218
    %v3222 = vmul.f32 %v3165, %v3218
    %v3223 = vmul.f32 %v3169, %v3218
    %v3224 = vmul.f32 %v3173, %v3218
    %v3225 = vmul.f32 %v3177, %v3218
    %v3226 = vmul.f32 %v3181, %v3218
    %v3227 = vmul.f32 %v3185, %v3218
    %v3228 = vmul.f32 %v3189, %v3218
    %v3229 = vmul.f32 %v3193, %v3218
    %v3230 = vmul.f32 %v3197, %v3218
    %v3231 = vmul.f32 %v3201, %v3218
    %v3232 = vmul.f32 %v3205, %v3218
    %v3233 = vmul.f32 %v3209, %v3218
    %v3234 = vmul.f32 %v3213, %v3218
    %v3235 = vadd.f32 %v3134, %v3219
    %v3236 = vadd.f32 %v3135, %v3220
    %v3237 = vadd.f32 %v3136, %v3221
    %v3238 = vadd.f32 %v3137, %v3222
    %v3239 = vadd.f32 %v3138, %v3223
    %v3240 = vadd.f32 %v3139, %v3224
    %v3241 = vadd.f32 %v3140, %v3225
    %v3242 = vadd.f32 %v3141, %v3226
    %v3243 = vadd.f32 %v3142, %v3227
    %v3244 = vadd.f32 %v3143, %v3228
    %v3245 = vadd.f32 %v3144, %v3229
    %v3246 = vadd.f32 %v3145, %v3230
    %v3247 = vadd.f32 %v3146, %v3231
    %v3248 = vadd.f32 %v3147, %v3232
    %v3249 = vadd.f32 %v3148, %v3233
    %v3250 = vadd.f32 %v3149, %v3234
    %v3251 = vld [vmem:[%s3048 + $0x2] sm:$0x1]
    %3252 = vset.pattern.permute.xlu0 2
    %3253 = vperm.xlu0 %3252, %v3032
    %v3254 = vpop.permute.xlu0 %3253
    %3256 = vset.pattern.permute.xlu0 2
    %3257 = vperm.xlu0 %3256, %v3033
    %v3258 = vpop.permute.xlu0 %3257
    %3260 = vset.pattern.permute.xlu0 2
    %3261 = vperm.xlu0 %3260, %v3034
    %v3262 = vpop.permute.xlu0 %3261
    %3264 = vset.pattern.permute.xlu0 2
    %3265 = vperm.xlu0 %3264, %v3035
    %v3266 = vpop.permute.xlu0 %3265
    %3268 = vset.pattern.permute.xlu0 2
    %3269 = vperm.xlu0 %3268, %v3036
    %v3270 = vpop.permute.xlu0 %3269
    %3272 = vset.pattern.permute.xlu0 2
    %3273 = vperm.xlu0 %3272, %v3037
    %v3274 = vpop.permute.xlu0 %3273
    %3276 = vset.pattern.permute.xlu0 2
    %3277 = vperm.xlu0 %3276, %v3038
    %v3278 = vpop.permute.xlu0 %3277
    %3280 = vset.pattern.permute.xlu0 2
    %3281 = vperm.xlu0 %3280, %v3039
    %v3282 = vpop.permute.xlu0 %3281
    %3284 = vset.pattern.permute.xlu0 2
    %3285 = vperm.xlu0 %3284, %v3040
    %v3286 = vpop.permute.xlu0 %3285
    %3288 = vset.pattern.permute.xlu0 2
    %3289 = vperm.xlu0 %3288, %v3041
    %v3290 = vpop.permute.xlu0 %3289
    %3292 = vset.pattern.permute.xlu0 2
    %3293 = vperm.xlu0 %3292, %v3042
    %v3294 = vpop.permute.xlu0 %3293
    %3296 = vset.pattern.permute.xlu0 2
    %3297 = vperm.xlu0 %3296, %v3043
    %v3298 = vpop.permute.xlu0 %3297
    %3300 = vset.pattern.permute.xlu0 2
    %3301 = vperm.xlu0 %3300, %v3044
    %v3302 = vpop.permute.xlu0 %3301
    %3304 = vset.pattern.permute.xlu0 2
    %3305 = vperm.xlu0 %3304, %v3045
    %v3306 = vpop.permute.xlu0 %3305
    %3308 = vset.pattern.permute.xlu0 2
    %3309 = vperm.xlu0 %3308, %v3046
    %v3310 = vpop.permute.xlu0 %3309
    %3312 = vset.pattern.permute.xlu0 2
    %3313 = vperm.xlu0 %3312, %v3047
    %v3314 = vpop.permute.xlu0 %3313
    %v3316 = vlaneseq
    %v3317 = vshrl.u32 %v3316, 7
    %v3318 = vsub.s32 0, %v3317
    %v3319 = vrot.slane %v3251, %v3318
    %v3320 = vmul.f32 %v3254, %v3319
    %v3321 = vmul.f32 %v3258, %v3319
    %v3322 = vmul.f32 %v3262, %v3319
    %v3323 = vmul.f32 %v3266, %v3319
    %v3324 = vmul.f32 %v3270, %v3319
    %v3325 = vmul.f32 %v3274, %v3319
    %v3326 = vmul.f32 %v3278, %v3319
    %v3327 = vmul.f32 %v3282, %v3319
    %v3328 = vmul.f32 %v3286, %v3319
    %v3329 = vmul.f32 %v3290, %v3319
    %v3330 = vmul.f32 %v3294, %v3319
    %v3331 = vmul.f32 %v3298, %v3319
    %v3332 = vmul.f32 %v3302, %v3319
    %v3333 = vmul.f32 %v3306, %v3319
    %v3334 = vmul.f32 %v3310, %v3319
    %v3335 = vmul.f32 %v3314, %v3319
    %v3336 = vadd.f32 %v3235, %v3320
    %v3337 = vadd.f32 %v3236, %v3321
    %v3338 = vadd.f32 %v3237, %v3322
    %v3339 = vadd.f32 %v3238, %v3323
    %v3340 = vadd.f32 %v3239, %v3324
    %v3341 = vadd.f32 %v3240, %v3325
    %v3342 = vadd.f32 %v3241, %v3326
    %v3343 = vadd.f32 %v3242, %v3327
    %v3344 = vadd.f32 %v3243, %v3328
    %v3345 = vadd.f32 %v3244, %v3329
    %v3346 = vadd.f32 %v3245, %v3330
    %v3347 = vadd.f32 %v3246, %v3331
    %v3348 = vadd.f32 %v3247, %v3332
    %v3349 = vadd.f32 %v3248, %v3333
    %v3350 = vadd.f32 %v3249, %v3334
    %v3351 = vadd.f32 %v3250, %v3335
    %v3352 = vmax.f32 %v3336, 0.0
    %v3353 = vmax.f32 %v3337, 0.0
    %v3354 = vmax.f32 %v3338, 0.0
    %v3355 = vmax.f32 %v3339, 0.0
    %v3356 = vmax.f32 %v3340, 0.0
    %v3357 = vmax.f32 %v3341, 0.0
    %v3358 = vmax.f32 %v3342, 0.0
    %v3359 = vmax.f32 %v3343, 0.0
    %v3360 = vmax.f32 %v3344, 0.0
    %v3361 = vmax.f32 %v3345, 0.0
    %v3362 = vmax.f32 %v3346, 0.0
    %v3363 = vmax.f32 %v3347, 0.0
    %v3364 = vmax.f32 %v3348, 0.0
    %v3365 = vmax.f32 %v3349, 0.0
    %v3366 = vmax.f32 %v3350, 0.0
    %v3367 = vmax.f32 %v3351, 0.0
    %v3368 = vld [vmem:[%s3048 + $0x4] sm:$0x1]
    %v3369 = vlaneseq
    %v3370 = vshrl.u32 %v3369, 7
    %v3371 = vsub.s32 0, %v3370
    %v3372 = vrot.slane %v3368, %v3371
    %v3373 = vmul.f32 %v3053, %v3372
    %v3374 = vmul.f32 %v3058, %v3372
    %v3375 = vmul.f32 %v3063, %v3372
    %v3376 = vmul.f32 %v3068, %v3372
    %v3377 = vmul.f32 %v3073, %v3372
    %v3378 = vmul.f32 %v3078, %v3372
    %v3379 = vmul.f32 %v3083, %v3372
    %v3380 = vmul.f32 %v3088, %v3372
    %v3381 = vmul.f32 %v3093, %v3372
    %v3382 = vmul.f32 %v3098, %v3372
    %v3383 = vmul.f32 %v3103, %v3372
    %v3384 = vmul.f32 %v3108, %v3372
    %v3385 = vmul.f32 %v3113, %v3372
    %v3386 = vmul.f32 %v3118, %v3372
    %v3387 = vmul.f32 %v3123, %v3372
    %v3388 = vmul.f32 %v3128, %v3372
    %v3389 = vld [vmem:[%s3048 + $0x5] sm:$0x1]
    %v3390 = vlaneseq
    %v3391 = vshrl.u32 %v3390, 7
    %v3392 = vsub.s32 0, %v3391
    %v3393 = vrot.slane %v3389, %v3392
    %v3394 = vmul.f32 %v3153, %v3393
    %v3395 = vmul.f32 %v3157, %v3393
    %v3396 = vmul.f32 %v3161, %v3393
    %v3397 = vmul.f32 %v3165, %v3393
    %v3398 = vmul.f32 %v3169, %v3393
    %v3399 = vmul.f32 %v3173, %v3393
    %v3400 = vmul.f32 %v3177, %v3393
    %v3401 = vmul.f32 %v3181, %v3393
    %v3402 = vmul.f32 %v3185, %v3393
    %v3403 = vmul.f32 %v3189, %v3393
    %v3404 = vmul.f32 %v3193, %v3393
    %v3405 = vmul.f32 %v3197, %v3393
    %v3406 = vmul.f32 %v3201, %v3393
    %v3407 = vmul.f32 %v3205, %v3393
    %v3408 = vmul.f32 %v3209, %v3393
    %v3409 = vmul.f32 %v3213, %v3393
    %v3410 = vadd.f32 %v3373, %v3394
    %v3411 = vadd.f32 %v3374, %v3395
    %v3412 = vadd.f32 %v3375, %v3396
    %v3413 = vadd.f32 %v3376, %v3397
    %v3414 = vadd.f32 %v3377, %v3398
    %v3415 = vadd.f32 %v3378, %v3399
    %v3416 = vadd.f32 %v3379, %v3400
    %v3417 = vadd.f32 %v3380, %v3401
    %v3418 = vadd.f32 %v3381, %v3402
    %v3419 = vadd.f32 %v3382, %v3403
    %v3420 = vadd.f32 %v3383, %v3404
    %v3421 = vadd.f32 %v3384, %v3405
    %v3422 = vadd.f32 %v3385, %v3406
    %v3423 = vadd.f32 %v3386, %v3407
    %v3424 = vadd.f32 %v3387, %v3408
    %v3425 = vadd.f32 %v3388, %v3409
    %v3426 = vld [vmem:[%s3048 + $0x6] sm:$0x1]
    %v3427 = vlaneseq
    %v3428 = vshrl.u32 %v3427, 7
    %v3429 = vsub.s32 0, %v3428
    %v3430 = vrot.slane %v3426, %v3429
    %v3431 = vmul.f32 %v3254, %v3430
    %v3432 = vmul.f32 %v3258, %v3430
    %v3433 = vmul.f32 %v3262, %v3430
    %v3434 = vmul.f32 %v3266, %v3430
    %v3435 = vmul.f32 %v3270, %v3430
    %v3436 = vmul.f32 %v3274, %v3430
    %v3437 = vmul.f32 %v3278, %v3430
    %v3438 = vmul.f32 %v3282, %v3430
    %v3439 = vmul.f32 %v3286, %v3430
    %v3440 = vmul.f32 %v3290, %v3430
    %v3441 = vmul.f32 %v3294, %v3430
    %v3442 = vmul.f32 %v3298, %v3430
    %v3443 = vmul.f32 %v3302, %v3430
    %v3444 = vmul.f32 %v3306, %v3430
    %v3445 = vmul.f32 %v3310, %v3430
    %v3446 = vmul.f32 %v3314, %v3430
    %v3447 = vadd.f32 %v3410, %v3431
    %v3448 = vadd.f32 %v3411, %v3432
    %v3449 = vadd.f32 %v3412, %v3433
    %v3450 = vadd.f32 %v3413, %v3434
    %v3451 = vadd.f32 %v3414, %v3435
    %v3452 = vadd.f32 %v3415, %v3436
    %v3453 = vadd.f32 %v3416, %v3437
    %v3454 = vadd.f32 %v3417, %v3438
    %v3455 = vadd.f32 %v3418, %v3439
    %v3456 = vadd.f32 %v3419, %v3440
    %v3457 = vadd.f32 %v3420, %v3441
    %v3458 = vadd.f32 %v3421, %v3442
    %v3459 = vadd.f32 %v3422, %v3443
    %v3460 = vadd.f32 %v3423, %v3444
    %v3461 = vadd.f32 %v3424, %v3445
    %v3462 = vadd.f32 %v3425, %v3446
    %v3463 = vmax.f32 %v3447, 0.0
    %v3464 = vmax.f32 %v3448, 0.0
    %v3465 = vmax.f32 %v3449, 0.0
    %v3466 = vmax.f32 %v3450, 0.0
    %v3467 = vmax.f32 %v3451, 0.0
    %v3468 = vmax.f32 %v3452, 0.0
    %v3469 = vmax.f32 %v3453, 0.0
    %v3470 = vmax.f32 %v3454, 0.0
    %v3471 = vmax.f32 %v3455, 0.0
    %v3472 = vmax.f32 %v3456, 0.0
    %v3473 = vmax.f32 %v3457, 0.0
    %v3474 = vmax.f32 %v3458, 0.0
    %v3475 = vmax.f32 %v3459, 0.0
    %v3476 = vmax.f32 %v3460, 0.0
    %v3477 = vmax.f32 %v3461, 0.0
    %v3478 = vmax.f32 %v3462, 0.0
    %3479 = vmatprep.subr.mxu0 0.0
    %3480 = vmatpush1.xpose.msra.mxu0 %v3478
    %3481 = vmatprep.subr.mxu0 0.0
    %3482 = vmatpush1.xpose.msra.mxu0 %v3477
    %3483 = vmatprep.subr.mxu0 0.0
    %3484 = vmatpush1.xpose.msra.mxu0 %v3476
    %3485 = vmatprep.subr.mxu0 0.0
    %3486 = vmatpush1.xpose.msra.mxu0 %v3475
    %3487 = vmatprep.subr.mxu0 0.0
    %3488 = vmatpush1.xpose.msra.mxu0 %v3474
    %3489 = vmatprep.subr.mxu0 0.0
    %3490 = vmatpush1.xpose.msra.mxu0 %v3473
    %3491 = vmatprep.subr.mxu0 0.0
    %3492 = vmatpush1.xpose.msra.mxu0 %v3472
    %3493 = vmatprep.subr.mxu0 0.0
    %3494 = vmatpush1.xpose.msra.mxu0 %v3471
    %3495 = vmatprep.subr.mxu0 0.0
    %3496 = vmatpush1.xpose.msra.mxu0 %v3470
    %3497 = vmatprep.subr.mxu0 0.0
    %3498 = vmatpush1.xpose.msra.mxu0 %v3469
    %3499 = vmatprep.subr.mxu0 0.0
    %3500 = vmatpush1.xpose.msra.mxu0 %v3468
    %3501 = vmatprep.subr.mxu0 0.0
    %3502 = vmatpush1.xpose.msra.mxu0 %v3467
    %3503 = vmatprep.subr.mxu0 0.0
    %3504 = vmatpush1.xpose.msra.mxu0 %v3466
    %3505 = vmatprep.subr.mxu0 0.0
    %3506 = vmatpush1.xpose.msra.mxu0 %v3465
    %3507 = vmatprep.subr.mxu0 0.0
    %3508 = vmatpush1.xpose.msra.mxu0 %v3464
    %3509 = vmatprep.subr.mxu0 0.0
    %3510 = vmatpush1.xpose.msra.mxu0 %v3463
    %3511 = vmatprep.subr.mxu0 0.0
    %3512 = vmatpush2.xpose.msra.mxu0 0.0
    %3513 = vmatprep.subr.mxu0 0.0
    %3514 = vmatpush2.xpose.msra.mxu0 0.0
    %3515 = vmatprep.subr.mxu0 0.0
    %3516 = vmatpush2.xpose.msra.mxu0 0.0
    %3517 = vmatprep.subr.mxu0 0.0
    %3518 = vmatpush2.xpose.msra.mxu0 0.0
    %3519 = vmatprep.subr.mxu0 0.0
    %3520 = vmatpush2.xpose.msra.mxu0 0.0
    %3521 = vmatprep.subr.mxu0 0.0
    %3522 = vmatpush2.xpose.msra.mxu0 0.0
    %3523 = vmatprep.subr.mxu0 0.0
    %3524 = vmatpush2.xpose.msra.mxu0 0.0
    %3525 = vmatprep.subr.mxu0 0.0
    %3526 = vmatpush2.xpose.msra.mxu0 0.0
    %3527 = vmatprep.subr.mxu0 0.0
    %3528 = vmatpush2.xpose.msra.mxu0 0.0
    %3529 = vmatprep.subr.mxu0 0.0
    %3530 = vmatpush2.xpose.msra.mxu0 0.0
    %3531 = vmatprep.subr.mxu0 0.0
    %3532 = vmatpush2.xpose.msra.mxu0 0.0
    %3533 = vmatprep.subr.mxu0 0.0
    %3534 = vmatpush2.xpose.msra.mxu0 0.0
    %3535 = vmatprep.subr.mxu0 0.0
    %3536 = vmatpush2.xpose.msra.mxu0 0.0
    %3537 = vmatprep.subr.mxu0 0.0
    %3538 = vmatpush2.xpose.msra.mxu0 0.0
    %3539 = vmatprep.subr.mxu0 0.0
    %3540 = vmatpush2.xpose.msra.mxu0 0.0
    %3541 = vmatprep.subr.mxu0 0.0
    %3542 = vmatpush2.xpose.msra.mxu0 0.0
    %3543 = vmatprep.mubr.f32.mxu0 0.0
    %3544 = vmatmul.mubr.f32.gmra.mxu0 1.0
    %v3545 = vpop.f32.mrf.mxu0
    %v3546 = vadd.f32 0.0, %v3545
    %v3547 = vpop.f32.mrf.mxu0
    %3548 = vdwg.mxu0
    %3549 = vmatprep.subr.mxu0 0.0
    %3550 = vmatpush1.xpose.msra.mxu0 %v3367
    %3551 = vmatprep.subr.mxu0 0.0
    %3552 = vmatpush1.xpose.msra.mxu0 %v3366
    %3553 = vmatprep.subr.mxu0 0.0
    %3554 = vmatpush1.xpose.msra.mxu0 %v3365
    %3555 = vmatprep.subr.mxu0 0.0
    %3556 = vmatpush1.xpose.msra.mxu0 %v3364
    %3557 = vmatprep.subr.mxu0 0.0
    %3558 = vmatpush1.xpose.msra.mxu0 %v3363
    %3559 = vmatprep.subr.mxu0 0.0
    %3560 = vmatpush1.xpose.msra.mxu0 %v3362
    %3561 = vmatprep.subr.mxu0 0.0
    %3562 = vmatpush1.xpose.msra.mxu0 %v3361
    %3563 = vmatprep.subr.mxu0 0.0
    %3564 = vmatpush1.xpose.msra.mxu0 %v3360
    %3565 = vmatprep.subr.mxu0 0.0
    %3566 = vmatpush1.xpose.msra.mxu0 %v3359
    %3567 = vmatprep.subr.mxu0 0.0
    %3568 = vmatpush1.xpose.msra.mxu0 %v3358
    %3569 = vmatprep.subr.mxu0 0.0
    %3570 = vmatpush1.xpose.msra.mxu0 %v3357
    %3571 = vmatprep.subr.mxu0 0.0
    %3572 = vmatpush1.xpose.msra.mxu0 %v3356
    %3573 = vmatprep.subr.mxu0 0.0
    %3574 = vmatpush1.xpose.msra.mxu0 %v3355
    %3575 = vmatprep.subr.mxu0 0.0
    %3576 = vmatpush1.xpose.msra.mxu0 %v3354
    %3577 = vmatprep.subr.mxu0 0.0
    %3578 = vmatpush1.xpose.msra.mxu0 %v3353
    %3579 = vmatprep.subr.mxu0 0.0
    %3580 = vmatpush1.xpose.msra.mxu0 %v3352
    %3581 = vmatprep.subr.mxu0 0.0
    %3582 = vmatpush2.xpose.msra.mxu0 0.0
    %3583 = vmatprep.subr.mxu0 0.0
    %3584 = vmatpush2.xpose.msra.mxu0 0.0
    %3585 = vmatprep.subr.mxu0 0.0
    %3586 = vmatpush2.xpose.msra.mxu0 0.0
    %3587 = vmatprep.subr.mxu0 0.0
    %3588 = vmatpush2.xpose.msra.mxu0 0.0
    %3589 = vmatprep.subr.mxu0 0.0
    %3590 = vmatpush2.xpose.msra.mxu0 0.0
    %3591 = vmatprep.subr.mxu0 0.0
    %3592 = vmatpush2.xpose.msra.mxu0 0.0
    %3593 = vmatprep.subr.mxu0 0.0
    %3594 = vmatpush2.xpose.msra.mxu0 0.0
    %3595 = vmatprep.subr.mxu0 0.0
    %3596 = vmatpush2.xpose.msra.mxu0 0.0
    %3597 = vmatprep.subr.mxu0 0.0
    %3598 = vmatpush2.xpose.msra.mxu0 0.0
    %3599 = vmatprep.subr.mxu0 0.0
    %3600 = vmatpush2.xpose.msra.mxu0 0.0
    %3601 = vmatprep.subr.mxu0 0.0
    %3602 = vmatpush2.xpose.msra.mxu0 0.0
    %3603 = vmatprep.subr.mxu0 0.0
    %3604 = vmatpush2.xpose.msra.mxu0 0.0
    %3605 = vmatprep.subr.mxu0 0.0
    %3606 = vmatpush2.xpose.msra.mxu0 0.0
    %3607 = vmatprep.subr.mxu0 0.0
    %3608 = vmatpush2.xpose.msra.mxu0 0.0
    %3609 = vmatprep.subr.mxu0 0.0
    %3610 = vmatpush2.xpose.msra.mxu0 0.0
    %3611 = vmatprep.subr.mxu0 0.0
    %3612 = vmatpush2.xpose.msra.mxu0 0.0
    %3613 = vmatprep.mubr.f32.mxu0 0.0
    %3614 = vmatmul.mubr.f32.gmra.mxu0 1.0
    %v3615 = vpop.f32.mrf.mxu0
    %v3616 = vadd.f32 %v3546, %v3615
    %v3617 = vpop.f32.mrf.mxu0
    %3618 = vdwg.mxu0
    %v3619 = vld [vmem:[#allocation9 + $0x5] sm:$0x1]
    %v3620 = vadd.f32 %v3619, %v3616
    %3621 = vst [vmem:[#allocation9 + $0x5] sm:$0x1] %v3620
    %v3622 = vld [vmem:[%s1] sm:$0xff]
    %v3623 = vld [vmem:[%s1 + $0x8] sm:$0xff]
    %v3624 = vld [vmem:[%s1 + $0x10] sm:$0xff]
    %v3625 = vld [vmem:[%s1 + $0x18] sm:$0xff]
    %v3626 = vld [vmem:[%s1 + $0x20] sm:$0xff]
    %v3627 = vld [vmem:[%s1 + $0x28] sm:$0xff]
    %v3628 = vld [vmem:[%s1 + $0x30] sm:$0xff]
    %v3629 = vld [vmem:[%s1 + $0x38] sm:$0xff]
    %v3630 = vld [vmem:[%s1 + $0x40] sm:$0xff]
    %v3631 = vld [vmem:[%s1 + $0x48] sm:$0xff]
    %v3632 = vld [vmem:[%s1 + $0x50] sm:$0xff]
    %v3633 = vld [vmem:[%s1 + $0x58] sm:$0xff]
    %v3634 = vld [vmem:[%s1 + $0x60] sm:$0xff]
    %v3635 = vld [vmem:[%s1 + $0x68] sm:$0xff]
    %v3636 = vld [vmem:[%s1 + $0x70] sm:$0xff]
    %v3637 = vld [vmem:[%s1 + $0x78] sm:$0xff]
    %s3638 = scalar_lea.vmem %s0, 48
    %v3639 = vld [vmem:[%s3638] sm:$0x1]
    %3641 = vset.pattern.permute.xlu0 0
    %3642 = vperm.xlu0 %3641, %v3622
    %v3643 = vpop.permute.xlu0 %3642
    %3646 = vset.pattern.permute.xlu0 0
    %3647 = vperm.xlu0 %3646, %v3623
    %v3648 = vpop.permute.xlu0 %3647
    %3651 = vset.pattern.permute.xlu0 0
    %3652 = vperm.xlu0 %3651, %v3624
    %v3653 = vpop.permute.xlu0 %3652
    %3656 = vset.pattern.permute.xlu0 0
    %3657 = vperm.xlu0 %3656, %v3625
    %v3658 = vpop.permute.xlu0 %3657
    %3661 = vset.pattern.permute.xlu0 0
    %3662 = vperm.xlu0 %3661, %v3626
    %v3663 = vpop.permute.xlu0 %3662
    %3666 = vset.pattern.permute.xlu0 0
    %3667 = vperm.xlu0 %3666, %v3627
    %v3668 = vpop.permute.xlu0 %3667
    %3671 = vset.pattern.permute.xlu0 0
    %3672 = vperm.xlu0 %3671, %v3628
    %v3673 = vpop.permute.xlu0 %3672
    %3676 = vset.pattern.permute.xlu0 0
    %3677 = vperm.xlu0 %3676, %v3629
    %v3678 = vpop.permute.xlu0 %3677
    %3681 = vset.pattern.permute.xlu0 0
    %3682 = vperm.xlu0 %3681, %v3630
    %v3683 = vpop.permute.xlu0 %3682
    %3686 = vset.pattern.permute.xlu0 0
    %3687 = vperm.xlu0 %3686, %v3631
    %v3688 = vpop.permute.xlu0 %3687
    %3691 = vset.pattern.permute.xlu0 0
    %3692 = vperm.xlu0 %3691, %v3632
    %v3693 = vpop.permute.xlu0 %3692
    %3696 = vset.pattern.permute.xlu0 0
    %3697 = vperm.xlu0 %3696, %v3633
    %v3698 = vpop.permute.xlu0 %3697
    %3701 = vset.pattern.permute.xlu0 0
    %3702 = vperm.xlu0 %3701, %v3634
    %v3703 = vpop.permute.xlu0 %3702
    %3706 = vset.pattern.permute.xlu0 0
    %3707 = vperm.xlu0 %3706, %v3635
    %v3708 = vpop.permute.xlu0 %3707
    %3711 = vset.pattern.permute.xlu0 0
    %3712 = vperm.xlu0 %3711, %v3636
    %v3713 = vpop.permute.xlu0 %3712
    %3716 = vset.pattern.permute.xlu0 0
    %3717 = vperm.xlu0 %3716, %v3637
    %v3718 = vpop.permute.xlu0 %3717
    %v3720 = vlaneseq
    %v3721 = vshrl.u32 %v3720, 7
    %v3722 = vsub.s32 0, %v3721
    %v3723 = vrot.slane %v3639, %v3722
    %v3724 = vmul.f32 %v3643, %v3723
    %v3725 = vmul.f32 %v3648, %v3723
    %v3726 = vmul.f32 %v3653, %v3723
    %v3727 = vmul.f32 %v3658, %v3723
    %v3728 = vmul.f32 %v3663, %v3723
    %v3729 = vmul.f32 %v3668, %v3723
    %v3730 = vmul.f32 %v3673, %v3723
    %v3731 = vmul.f32 %v3678, %v3723
    %v3732 = vmul.f32 %v3683, %v3723
    %v3733 = vmul.f32 %v3688, %v3723
    %v3734 = vmul.f32 %v3693, %v3723
    %v3735 = vmul.f32 %v3698, %v3723
    %v3736 = vmul.f32 %v3703, %v3723
    %v3737 = vmul.f32 %v3708, %v3723
    %v3738 = vmul.f32 %v3713, %v3723
    %v3739 = vmul.f32 %v3718, %v3723
    %v3740 = vld [vmem:[%s3638 + $0x1] sm:$0x1]
    %3741 = vset.pattern.permute.xlu0 1
    %3742 = vperm.xlu0 %3741, %v3622
    %v3743 = vpop.permute.xlu0 %3742
    %3745 = vset.pattern.permute.xlu0 1
    %3746 = vperm.xlu0 %3745, %v3623
    %v3747 = vpop.permute.xlu0 %3746
    %3749 = vset.pattern.permute.xlu0 1
    %3750 = vperm.xlu0 %3749, %v3624
    %v3751 = vpop.permute.xlu0 %3750
    %3753 = vset.pattern.permute.xlu0 1
    %3754 = vperm.xlu0 %3753, %v3625
    %v3755 = vpop.permute.xlu0 %3754
    %3757 = vset.pattern.permute.xlu0 1
    %3758 = vperm.xlu0 %3757, %v3626
    %v3759 = vpop.permute.xlu0 %3758
    %3761 = vset.pattern.permute.xlu0 1
    %3762 = vperm.xlu0 %3761, %v3627
    %v3763 = vpop.permute.xlu0 %3762
    %3765 = vset.pattern.permute.xlu0 1
    %3766 = vperm.xlu0 %3765, %v3628
    %v3767 = vpop.permute.xlu0 %3766
    %3769 = vset.pattern.permute.xlu0 1
    %3770 = vperm.xlu0 %3769, %v3629
    %v3771 = vpop.permute.xlu0 %3770
    %3773 = vset.pattern.permute.xlu0 1
    %3774 = vperm.xlu0 %3773, %v3630
    %v3775 = vpop.permute.xlu0 %3774
    %3777 = vset.pattern.permute.xlu0 1
    %3778 = vperm.xlu0 %3777, %v3631
    %v3779 = vpop.permute.xlu0 %3778
    %3781 = vset.pattern.permute.xlu0 1
    %3782 = vperm.xlu0 %3781, %v3632
    %v3783 = vpop.permute.xlu0 %3782
    %3785 = vset.pattern.permute.xlu0 1
    %3786 = vperm.xlu0 %3785, %v3633
    %v3787 = vpop.permute.xlu0 %3786
    %3789 = vset.pattern.permute.xlu0 1
    %3790 = vperm.xlu0 %3789, %v3634
    %v3791 = vpop.permute.xlu0 %3790
    %3793 = vset.pattern.permute.xlu0 1
    %3794 = vperm.xlu0 %3793, %v3635
    %v3795 = vpop.permute.xlu0 %3794
    %3797 = vset.pattern.permute.xlu0 1
    %3798 = vperm.xlu0 %3797, %v3636
    %v3799 = vpop.permute.xlu0 %3798
    %3801 = vset.pattern.permute.xlu0 1
    %3802 = vperm.xlu0 %3801, %v3637
    %v3803 = vpop.permute.xlu0 %3802
    %v3805 = vlaneseq
    %v3806 = vshrl.u32 %v3805, 7
    %v3807 = vsub.s32 0, %v3806
    %v3808 = vrot.slane %v3740, %v3807
    %v3809 = vmul.f32 %v3743, %v3808
    %v3810 = vmul.f32 %v3747, %v3808
    %v3811 = vmul.f32 %v3751, %v3808
    %v3812 = vmul.f32 %v3755, %v3808
    %v3813 = vmul.f32 %v3759, %v3808
    %v3814 = vmul.f32 %v3763, %v3808
    %v3815 = vmul.f32 %v3767, %v3808
    %v3816 = vmul.f32 %v3771, %v3808
    %v3817 = vmul.f32 %v3775, %v3808
    %v3818 = vmul.f32 %v3779, %v3808
    %v3819 = vmul.f32 %v3783, %v3808
    %v3820 = vmul.f32 %v3787, %v3808
    %v3821 = vmul.f32 %v3791, %v3808
    %v3822 = vmul.f32 %v3795, %v3808
    %v3823 = vmul.f32 %v3799, %v3808
    %v3824 = vmul.f32 %v3803, %v3808
    %v3825 = vadd.f32 %v3724, %v3809
    %v3826 = vadd.f32 %v3725, %v3810
    %v3827 = vadd.f32 %v3726, %v3811
    %v3828 = vadd.f32 %v3727, %v3812
    %v3829 = vadd.f32 %v3728, %v3813
    %v3830 = vadd.f32 %v3729, %v3814
    %v3831 = vadd.f32 %v3730, %v3815
    %v3832 = vadd.f32 %v3731, %v3816
    %v3833 = vadd.f32 %v3732, %v3817
    %v3834 = vadd.f32 %v3733, %v3818
    %v3835 = vadd.f32 %v3734, %v3819
    %v3836 = vadd.f32 %v3735, %v3820
    %v3837 = vadd.f32 %v3736, %v3821
    %v3838 = vadd.f32 %v3737, %v3822
    %v3839 = vadd.f32 %v3738, %v3823
    %v3840 = vadd.f32 %v3739, %v3824
    %v3841 = vld [vmem:[%s3638 + $0x2] sm:$0x1]
    %3842 = vset.pattern.permute.xlu0 2
    %3843 = vperm.xlu0 %3842, %v3622
    %v3844 = vpop.permute.xlu0 %3843
    %3846 = vset.pattern.permute.xlu0 2
    %3847 = vperm.xlu0 %3846, %v3623
    %v3848 = vpop.permute.xlu0 %3847
    %3850 = vset.pattern.permute.xlu0 2
    %3851 = vperm.xlu0 %3850, %v3624
    %v3852 = vpop.permute.xlu0 %3851
    %3854 = vset.pattern.permute.xlu0 2
    %3855 = vperm.xlu0 %3854, %v3625
    %v3856 = vpop.permute.xlu0 %3855
    %3858 = vset.pattern.permute.xlu0 2
    %3859 = vperm.xlu0 %3858, %v3626
    %v3860 = vpop.permute.xlu0 %3859
    %3862 = vset.pattern.permute.xlu0 2
    %3863 = vperm.xlu0 %3862, %v3627
    %v3864 = vpop.permute.xlu0 %3863
    %3866 = vset.pattern.permute.xlu0 2
    %3867 = vperm.xlu0 %3866, %v3628
    %v3868 = vpop.permute.xlu0 %3867
    %3870 = vset.pattern.permute.xlu0 2
    %3871 = vperm.xlu0 %3870, %v3629
    %v3872 = vpop.permute.xlu0 %3871
    %3874 = vset.pattern.permute.xlu0 2
    %3875 = vperm.xlu0 %3874, %v3630
    %v3876 = vpop.permute.xlu0 %3875
    %3878 = vset.pattern.permute.xlu0 2
    %3879 = vperm.xlu0 %3878, %v3631
    %v3880 = vpop.permute.xlu0 %3879
    %3882 = vset.pattern.permute.xlu0 2
    %3883 = vperm.xlu0 %3882, %v3632
    %v3884 = vpop.permute.xlu0 %3883
    %3886 = vset.pattern.permute.xlu0 2
    %3887 = vperm.xlu0 %3886, %v3633
    %v3888 = vpop.permute.xlu0 %3887
    %3890 = vset.pattern.permute.xlu0 2
    %3891 = vperm.xlu0 %3890, %v3634
    %v3892 = vpop.permute.xlu0 %3891
    %3894 = vset.pattern.permute.xlu0 2
    %3895 = vperm.xlu0 %3894, %v3635
    %v3896 = vpop.permute.xlu0 %3895
    %3898 = vset.pattern.permute.xlu0 2
    %3899 = vperm.xlu0 %3898, %v3636
    %v3900 = vpop.permute.xlu0 %3899
    %3902 = vset.pattern.permute.xlu0 2
    %3903 = vperm.xlu0 %3902, %v3637
    %v3904 = vpop.permute.xlu0 %3903
    %v3906 = vlaneseq
    %v3907 = vshrl.u32 %v3906, 7
    %v3908 = vsub.s32 0, %v3907
    %v3909 = vrot.slane %v3841, %v3908
    %v3910 = vmul.f32 %v3844, %v3909
    %v3911 = vmul.f32 %v3848, %v3909
    %v3912 = vmul.f32 %v3852, %v3909
    %v3913 = vmul.f32 %v3856, %v3909
    %v3914 = vmul.f32 %v3860, %v3909
    %v3915 = vmul.f32 %v3864, %v3909
    %v3916 = vmul.f32 %v3868, %v3909
    %v3917 = vmul.f32 %v3872, %v3909
    %v3918 = vmul.f32 %v3876, %v3909
    %v3919 = vmul.f32 %v3880, %v3909
    %v3920 = vmul.f32 %v3884, %v3909
    %v3921 = vmul.f32 %v3888, %v3909
    %v3922 = vmul.f32 %v3892, %v3909
    %v3923 = vmul.f32 %v3896, %v3909
    %v3924 = vmul.f32 %v3900, %v3909
    %v3925 = vmul.f32 %v3904, %v3909
    %v3926 = vadd.f32 %v3825, %v3910
    %v3927 = vadd.f32 %v3826, %v3911
    %v3928 = vadd.f32 %v3827, %v3912
    %v3929 = vadd.f32 %v3828, %v3913
    %v3930 = vadd.f32 %v3829, %v3914
    %v3931 = vadd.f32 %v3830, %v3915
    %v3932 = vadd.f32 %v3831, %v3916
    %v3933 = vadd.f32 %v3832, %v3917
    %v3934 = vadd.f32 %v3833, %v3918
    %v3935 = vadd.f32 %v3834, %v3919
    %v3936 = vadd.f32 %v3835, %v3920
    %v3937 = vadd.f32 %v3836, %v3921
    %v3938 = vadd.f32 %v3837, %v3922
    %v3939 = vadd.f32 %v3838, %v3923
    %v3940 = vadd.f32 %v3839, %v3924
    %v3941 = vadd.f32 %v3840, %v3925
    %v3942 = vmax.f32 %v3926, 0.0
    %v3943 = vmax.f32 %v3927, 0.0
    %v3944 = vmax.f32 %v3928, 0.0
    %v3945 = vmax.f32 %v3929, 0.0
    %v3946 = vmax.f32 %v3930, 0.0
    %v3947 = vmax.f32 %v3931, 0.0
    %v3948 = vmax.f32 %v3932, 0.0
    %v3949 = vmax.f32 %v3933, 0.0
    %v3950 = vmax.f32 %v3934, 0.0
    %v3951 = vmax.f32 %v3935, 0.0
    %v3952 = vmax.f32 %v3936, 0.0
    %v3953 = vmax.f32 %v3937, 0.0
    %v3954 = vmax.f32 %v3938, 0.0
    %v3955 = vmax.f32 %v3939, 0.0
    %v3956 = vmax.f32 %v3940, 0.0
    %v3957 = vmax.f32 %v3941, 0.0
    %v3958 = vld [vmem:[%s3638 + $0x4] sm:$0x1]
    %v3959 = vlaneseq
    %v3960 = vshrl.u32 %v3959, 7
    %v3961 = vsub.s32 0, %v3960
    %v3962 = vrot.slane %v3958, %v3961
    %v3963 = vmul.f32 %v3643, %v3962
    %v3964 = vmul.f32 %v3648, %v3962
    %v3965 = vmul.f32 %v3653, %v3962
    %v3966 = vmul.f32 %v3658, %v3962
    %v3967 = vmul.f32 %v3663, %v3962
    %v3968 = vmul.f32 %v3668, %v3962
    %v3969 = vmul.f32 %v3673, %v3962
    %v3970 = vmul.f32 %v3678, %v3962
    %v3971 = vmul.f32 %v3683, %v3962
    %v3972 = vmul.f32 %v3688, %v3962
    %v3973 = vmul.f32 %v3693, %v3962
    %v3974 = vmul.f32 %v3698, %v3962
    %v3975 = vmul.f32 %v3703, %v3962
    %v3976 = vmul.f32 %v3708, %v3962
    %v3977 = vmul.f32 %v3713, %v3962
    %v3978 = vmul.f32 %v3718, %v3962
    %v3979 = vld [vmem:[%s3638 + $0x5] sm:$0x1]
    %v3980 = vlaneseq
    %v3981 = vshrl.u32 %v3980, 7
    %v3982 = vsub.s32 0, %v3981
    %v3983 = vrot.slane %v3979, %v3982
    %v3984 = vmul.f32 %v3743, %v3983
    %v3985 = vmul.f32 %v3747, %v3983
    %v3986 = vmul.f32 %v3751, %v3983
    %v3987 = vmul.f32 %v3755, %v3983
    %v3988 = vmul.f32 %v3759, %v3983
    %v3989 = vmul.f32 %v3763, %v3983
    %v3990 = vmul.f32 %v3767, %v3983
    %v3991 = vmul.f32 %v3771, %v3983
    %v3992 = vmul.f32 %v3775, %v3983
    %v3993 = vmul.f32 %v3779, %v3983
    %v3994 = vmul.f32 %v3783, %v3983
    %v3995 = vmul.f32 %v3787, %v3983
    %v3996 = vmul.f32 %v3791, %v3983
    %v3997 = vmul.f32 %v3795, %v3983
    %v3998 = vmul.f32 %v3799, %v3983
    %v3999 = vmul.f32 %v3803, %v3983
    %v4000 = vadd.f32 %v3963, %v3984
    %v4001 = vadd.f32 %v3964, %v3985
    %v4002 = vadd.f32 %v3965, %v3986
    %v4003 = vadd.f32 %v3966, %v3987
    %v4004 = vadd.f32 %v3967, %v3988
    %v4005 = vadd.f32 %v3968, %v3989
    %v4006 = vadd.f32 %v3969, %v3990
    %v4007 = vadd.f32 %v3970, %v3991
    %v4008 = vadd.f32 %v3971, %v3992
    %v4009 = vadd.f32 %v3972, %v3993
    %v4010 = vadd.f32 %v3973, %v3994
    %v4011 = vadd.f32 %v3974, %v3995
    %v4012 = vadd.f32 %v3975, %v3996
    %v4013 = vadd.f32 %v3976, %v3997
    %v4014 = vadd.f32 %v3977, %v3998
    %v4015 = vadd.f32 %v3978, %v3999
    %v4016 = vld [vmem:[%s3638 + $0x6] sm:$0x1]
    %v4017 = vlaneseq
    %v4018 = vshrl.u32 %v4017, 7
    %v4019 = vsub.s32 0, %v4018
    %v4020 = vrot.slane %v4016, %v4019
    %v4021 = vmul.f32 %v3844, %v4020
    %v4022 = vmul.f32 %v3848, %v4020
    %v4023 = vmul.f32 %v3852, %v4020
    %v4024 = vmul.f32 %v3856, %v4020
    %v4025 = vmul.f32 %v3860, %v4020
    %v4026 = vmul.f32 %v3864, %v4020
    %v4027 = vmul.f32 %v3868, %v4020
    %v4028 = vmul.f32 %v3872, %v4020
    %v4029 = vmul.f32 %v3876, %v4020
    %v4030 = vmul.f32 %v3880, %v4020
    %v4031 = vmul.f32 %v3884, %v4020
    %v4032 = vmul.f32 %v3888, %v4020
    %v4033 = vmul.f32 %v3892, %v4020
    %v4034 = vmul.f32 %v3896, %v4020
    %v4035 = vmul.f32 %v3900, %v4020
    %v4036 = vmul.f32 %v3904, %v4020
    %v4037 = vadd.f32 %v4000, %v4021
    %v4038 = vadd.f32 %v4001, %v4022
    %v4039 = vadd.f32 %v4002, %v4023
    %v4040 = vadd.f32 %v4003, %v4024
    %v4041 = vadd.f32 %v4004, %v4025
    %v4042 = vadd.f32 %v4005, %v4026
    %v4043 = vadd.f32 %v4006, %v4027
    %v4044 = vadd.f32 %v4007, %v4028
    %v4045 = vadd.f32 %v4008, %v4029
    %v4046 = vadd.f32 %v4009, %v4030
    %v4047 = vadd.f32 %v4010, %v4031
    %v4048 = vadd.f32 %v4011, %v4032
    %v4049 = vadd.f32 %v4012, %v4033
    %v4050 = vadd.f32 %v4013, %v4034
    %v4051 = vadd.f32 %v4014, %v4035
    %v4052 = vadd.f32 %v4015, %v4036
    %v4053 = vmax.f32 %v4037, 0.0
    %v4054 = vmax.f32 %v4038, 0.0
    %v4055 = vmax.f32 %v4039, 0.0
    %v4056 = vmax.f32 %v4040, 0.0
    %v4057 = vmax.f32 %v4041, 0.0
    %v4058 = vmax.f32 %v4042, 0.0
    %v4059 = vmax.f32 %v4043, 0.0
    %v4060 = vmax.f32 %v4044, 0.0
    %v4061 = vmax.f32 %v4045, 0.0
    %v4062 = vmax.f32 %v4046, 0.0
    %v4063 = vmax.f32 %v4047, 0.0
    %v4064 = vmax.f32 %v4048, 0.0
    %v4065 = vmax.f32 %v4049, 0.0
    %v4066 = vmax.f32 %v4050, 0.0
    %v4067 = vmax.f32 %v4051, 0.0
    %v4068 = vmax.f32 %v4052, 0.0
    %4069 = vmatprep.subr.mxu0 0.0
    %4070 = vmatpush1.xpose.msra.mxu0 %v4068
    %4071 = vmatprep.subr.mxu0 0.0
    %4072 = vmatpush1.xpose.msra.mxu0 %v4067
    %4073 = vmatprep.subr.mxu0 0.0
    %4074 = vmatpush1.xpose.msra.mxu0 %v4066
    %4075 = vmatprep.subr.mxu0 0.0
    %4076 = vmatpush1.xpose.msra.mxu0 %v4065
    %4077 = vmatprep.subr.mxu0 0.0
    %4078 = vmatpush1.xpose.msra.mxu0 %v4064
    %4079 = vmatprep.subr.mxu0 0.0
    %4080 = vmatpush1.xpose.msra.mxu0 %v4063
    %4081 = vmatprep.subr.mxu0 0.0
    %4082 = vmatpush1.xpose.msra.mxu0 %v4062
    %4083 = vmatprep.subr.mxu0 0.0
    %4084 = vmatpush1.xpose.msra.mxu0 %v4061
    %4085 = vmatprep.subr.mxu0 0.0
    %4086 = vmatpush1.xpose.msra.mxu0 %v4060
    %4087 = vmatprep.subr.mxu0 0.0
    %4088 = vmatpush1.xpose.msra.mxu0 %v4059
    %4089 = vmatprep.subr.mxu0 0.0
    %4090 = vmatpush1.xpose.msra.mxu0 %v4058
    %4091 = vmatprep.subr.mxu0 0.0
    %4092 = vmatpush1.xpose.msra.mxu0 %v4057
    %4093 = vmatprep.subr.mxu0 0.0
    %4094 = vmatpush1.xpose.msra.mxu0 %v4056
    %4095 = vmatprep.subr.mxu0 0.0
    %4096 = vmatpush1.xpose.msra.mxu0 %v4055
    %4097 = vmatprep.subr.mxu0 0.0
    %4098 = vmatpush1.xpose.msra.mxu0 %v4054
    %4099 = vmatprep.subr.mxu0 0.0
    %4100 = vmatpush1.xpose.msra.mxu0 %v4053
    %4101 = vmatprep.subr.mxu0 0.0
    %4102 = vmatpush2.xpose.msra.mxu0 0.0
    %4103 = vmatprep.subr.mxu0 0.0
    %4104 = vmatpush2.xpose.msra.mxu0 0.0
    %4105 = vmatprep.subr.mxu0 0.0
    %4106 = vmatpush2.xpose.msra.mxu0 0.0
    %4107 = vmatprep.subr.mxu0 0.0
    %4108 = vmatpush2.xpose.msra.mxu0 0.0
    %4109 = vmatprep.subr.mxu0 0.0
    %4110 = vmatpush2.xpose.msra.mxu0 0.0
    %4111 = vmatprep.subr.mxu0 0.0
    %4112 = vmatpush2.xpose.msra.mxu0 0.0
    %4113 = vmatprep.subr.mxu0 0.0
    %4114 = vmatpush2.xpose.msra.mxu0 0.0
    %4115 = vmatprep.subr.mxu0 0.0
    %4116 = vmatpush2.xpose.msra.mxu0 0.0
    %4117 = vmatprep.subr.mxu0 0.0
    %4118 = vmatpush2.xpose.msra.mxu0 0.0
    %4119 = vmatprep.subr.mxu0 0.0
    %4120 = vmatpush2.xpose.msra.mxu0 0.0
    %4121 = vmatprep.subr.mxu0 0.0
    %4122 = vmatpush2.xpose.msra.mxu0 0.0
    %4123 = vmatprep.subr.mxu0 0.0
    %4124 = vmatpush2.xpose.msra.mxu0 0.0
    %4125 = vmatprep.subr.mxu0 0.0
    %4126 = vmatpush2.xpose.msra.mxu0 0.0
    %4127 = vmatprep.subr.mxu0 0.0
    %4128 = vmatpush2.xpose.msra.mxu0 0.0
    %4129 = vmatprep.subr.mxu0 0.0
    %4130 = vmatpush2.xpose.msra.mxu0 0.0
    %4131 = vmatprep.subr.mxu0 0.0
    %4132 = vmatpush2.xpose.msra.mxu0 0.0
    %4133 = vmatprep.mubr.f32.mxu0 0.0
    %4134 = vmatmul.mubr.f32.gmra.mxu0 1.0
    %v4135 = vpop.f32.mrf.mxu0
    %v4136 = vadd.f32 0.0, %v4135
    %v4137 = vpop.f32.mrf.mxu0
    %4138 = vdwg.mxu0
    %4139 = vmatprep.subr.mxu0 0.0
    %4140 = vmatpush1.xpose.msra.mxu0 %v3957
    %4141 = vmatprep.subr.mxu0 0.0
    %4142 = vmatpush1.xpose.msra.mxu0 %v3956
    %4143 = vmatprep.subr.mxu0 0.0
    %4144 = vmatpush1.xpose.msra.mxu0 %v3955
    %4145 = vmatprep.subr.mxu0 0.0
    %4146 = vmatpush1.xpose.msra.mxu0 %v3954
    %4147 = vmatprep.subr.mxu0 0.0
    %4148 = vmatpush1.xpose.msra.mxu0 %v3953
    %4149 = vmatprep.subr.mxu0 0.0
    %4150 = vmatpush1.xpose.msra.mxu0 %v3952
    %4151 = vmatprep.subr.mxu0 0.0
    %4152 = vmatpush1.xpose.msra.mxu0 %v3951
    %4153 = vmatprep.subr.mxu0 0.0
    %4154 = vmatpush1.xpose.msra.mxu0 %v3950
    %4155 = vmatprep.subr.mxu0 0.0
    %4156 = vmatpush1.xpose.msra.mxu0 %v3949
    %4157 = vmatprep.subr.mxu0 0.0
    %4158 = vmatpush1.xpose.msra.mxu0 %v3948
    %4159 = vmatprep.subr.mxu0 0.0
    %4160 = vmatpush1.xpose.msra.mxu0 %v3947
    %4161 = vmatprep.subr.mxu0 0.0
    %4162 = vmatpush1.xpose.msra.mxu0 %v3946
    %4163 = vmatprep.subr.mxu0 0.0
    %4164 = vmatpush1.xpose.msra.mxu0 %v3945
    %4165 = vmatprep.subr.mxu0 0.0
    %4166 = vmatpush1.xpose.msra.mxu0 %v3944
    %4167 = vmatprep.subr.mxu0 0.0
    %4168 = vmatpush1.xpose.msra.mxu0 %v3943
    %4169 = vmatprep.subr.mxu0 0.0
    %4170 = vmatpush1.xpose.msra.mxu0 %v3942
    %4171 = vmatprep.subr.mxu0 0.0
    %4172 = vmatpush2.xpose.msra.mxu0 0.0
    %4173 = vmatprep.subr.mxu0 0.0
    %4174 = vmatpush2.xpose.msra.mxu0 0.0
    %4175 = vmatprep.subr.mxu0 0.0
    %4176 = vmatpush2.xpose.msra.mxu0 0.0
    %4177 = vmatprep.subr.mxu0 0.0
    %4178 = vmatpush2.xpose.msra.mxu0 0.0
    %4179 = vmatprep.subr.mxu0 0.0
    %4180 = vmatpush2.xpose.msra.mxu0 0.0
    %4181 = vmatprep.subr.mxu0 0.0
    %4182 = vmatpush2.xpose.msra.mxu0 0.0
    %4183 = vmatprep.subr.mxu0 0.0
    %4184 = vmatpush2.xpose.msra.mxu0 0.0
    %4185 = vmatprep.subr.mxu0 0.0
    %4186 = vmatpush2.xpose.msra.mxu0 0.0
    %4187 = vmatprep.subr.mxu0 0.0
    %4188 = vmatpush2.xpose.msra.mxu0 0.0
    %4189 = vmatprep.subr.mxu0 0.0
    %4190 = vmatpush2.xpose.msra.mxu0 0.0
    %4191 = vmatprep.subr.mxu0 0.0
    %4192 = vmatpush2.xpose.msra.mxu0 0.0
    %4193 = vmatprep.subr.mxu0 0.0
    %4194 = vmatpush2.xpose.msra.mxu0 0.0
    %4195 = vmatprep.subr.mxu0 0.0
    %4196 = vmatpush2.xpose.msra.mxu0 0.0
    %4197 = vmatprep.subr.mxu0 0.0
    %4198 = vmatpush2.xpose.msra.mxu0 0.0
    %4199 = vmatprep.subr.mxu0 0.0
    %4200 = vmatpush2.xpose.msra.mxu0 0.0
    %4201 = vmatprep.subr.mxu0 0.0
    %4202 = vmatpush2.xpose.msra.mxu0 0.0
    %4203 = vmatprep.mubr.f32.mxu0 0.0
    %4204 = vmatmul.mubr.f32.gmra.mxu0 1.0
    %v4205 = vpop.f32.mrf.mxu0
    %v4206 = vadd.f32 %v4136, %v4205
    %v4207 = vpop.f32.mrf.mxu0
    %4208 = vdwg.mxu0
    %v4209 = vld [vmem:[#allocation9 + $0x6] sm:$0x1]
    %v4210 = vadd.f32 %v4209, %v4206
    %4211 = vst [vmem:[#allocation9 + $0x6] sm:$0x1] %v4210
    %v4212 = vld [vmem:[%s1] sm:$0xff]
    %v4213 = vld [vmem:[%s1 + $0x8] sm:$0xff]
    %v4214 = vld [vmem:[%s1 + $0x10] sm:$0xff]
    %v4215 = vld [vmem:[%s1 + $0x18] sm:$0xff]
    %v4216 = vld [vmem:[%s1 + $0x20] sm:$0xff]
    %v4217 = vld [vmem:[%s1 + $0x28] sm:$0xff]
    %v4218 = vld [vmem:[%s1 + $0x30] sm:$0xff]
    %v4219 = vld [vmem:[%s1 + $0x38] sm:$0xff]
    %v4220 = vld [vmem:[%s1 + $0x40] sm:$0xff]
    %v4221 = vld [vmem:[%s1 + $0x48] sm:$0xff]
    %v4222 = vld [vmem:[%s1 + $0x50] sm:$0xff]
    %v4223 = vld [vmem:[%s1 + $0x58] sm:$0xff]
    %v4224 = vld [vmem:[%s1 + $0x60] sm:$0xff]
    %v4225 = vld [vmem:[%s1 + $0x68] sm:$0xff]
    %v4226 = vld [vmem:[%s1 + $0x70] sm:$0xff]
    %v4227 = vld [vmem:[%s1 + $0x78] sm:$0xff]
    %s4228 = scalar_lea.vmem %s0, 56
    %v4229 = vld [vmem:[%s4228] sm:$0x1]
    %4231 = vset.pattern.permute.xlu0 0
    %4232 = vperm.xlu0 %4231, %v4212
    %v4233 = vpop.permute.xlu0 %4232
    %4236 = vset.pattern.permute.xlu0 0
    %4237 = vperm.xlu0 %4236, %v4213
    %v4238 = vpop.permute.xlu0 %4237
    %4241 = vset.pattern.permute.xlu0 0
    %4242 = vperm.xlu0 %4241, %v4214
    %v4243 = vpop.permute.xlu0 %4242
    %4246 = vset.pattern.permute.xlu0 0
    %4247 = vperm.xlu0 %4246, %v4215
    %v4248 = vpop.permute.xlu0 %4247
    %4251 = vset.pattern.permute.xlu0 0
    %4252 = vperm.xlu0 %4251, %v4216
    %v4253 = vpop.permute.xlu0 %4252
    %4256 = vset.pattern.permute.xlu0 0
    %4257 = vperm.xlu0 %4256, %v4217
    %v4258 = vpop.permute.xlu0 %4257
    %4261 = vset.pattern.permute.xlu0 0
    %4262 = vperm.xlu0 %4261, %v4218
    %v4263 = vpop.permute.xlu0 %4262
    %4266 = vset.pattern.permute.xlu0 0
    %4267 = vperm.xlu0 %4266, %v4219
    %v4268 = vpop.permute.xlu0 %4267
    %4271 = vset.pattern.permute.xlu0 0
    %4272 = vperm.xlu0 %4271, %v4220
    %v4273 = vpop.permute.xlu0 %4272
    %4276 = vset.pattern.permute.xlu0 0
    %4277 = vperm.xlu0 %4276, %v4221
    %v4278 = vpop.permute.xlu0 %4277
    %4281 = vset.pattern.permute.xlu0 0
    %4282 = vperm.xlu0 %4281, %v4222
    %v4283 = vpop.permute.xlu0 %4282
    %4286 = vset.pattern.permute.xlu0 0
    %4287 = vperm.xlu0 %4286, %v4223
    %v4288 = vpop.permute.xlu0 %4287
    %4291 = vset.pattern.permute.xlu0 0
    %4292 = vperm.xlu0 %4291, %v4224
    %v4293 = vpop.permute.xlu0 %4292
    %4296 = vset.pattern.permute.xlu0 0
    %4297 = vperm.xlu0 %4296, %v4225
    %v4298 = vpop.permute.xlu0 %4297
    %4301 = vset.pattern.permute.xlu0 0
    %4302 = vperm.xlu0 %4301, %v4226
    %v4303 = vpop.permute.xlu0 %4302
    %4306 = vset.pattern.permute.xlu0 0
    %4307 = vperm.xlu0 %4306, %v4227
    %v4308 = vpop.permute.xlu0 %4307
    %v4310 = vlaneseq
    %v4311 = vshrl.u32 %v4310, 7
    %v4312 = vsub.s32 0, %v4311
    %v4313 = vrot.slane %v4229, %v4312
    %v4314 = vmul.f32 %v4233, %v4313
    %v4315 = vmul.f32 %v4238, %v4313
    %v4316 = vmul.f32 %v4243, %v4313
    %v4317 = vmul.f32 %v4248, %v4313
    %v4318 = vmul.f32 %v4253, %v4313
    %v4319 = vmul.f32 %v4258, %v4313
    %v4320 = vmul.f32 %v4263, %v4313
    %v4321 = vmul.f32 %v4268, %v4313
    %v4322 = vmul.f32 %v4273, %v4313
    %v4323 = vmul.f32 %v4278, %v4313
    %v4324 = vmul.f32 %v4283, %v4313
    %v4325 = vmul.f32 %v4288, %v4313
    %v4326 = vmul.f32 %v4293, %v4313
    %v4327 = vmul.f32 %v4298, %v4313
    %v4328 = vmul.f32 %v4303, %v4313
    %v4329 = vmul.f32 %v4308, %v4313
    %v4330 = vld [vmem:[%s4228 + $0x1] sm:$0x1]
    %4331 = vset.pattern.permute.xlu0 1
    %4332 = vperm.xlu0 %4331, %v4212
    %v4333 = vpop.permute.xlu0 %4332
    %4335 = vset.pattern.permute.xlu0 1
    %4336 = vperm.xlu0 %4335, %v4213
    %v4337 = vpop.permute.xlu0 %4336
    %4339 = vset.pattern.permute.xlu0 1
    %4340 = vperm.xlu0 %4339, %v4214
    %v4341 = vpop.permute.xlu0 %4340
    %4343 = vset.pattern.permute.xlu0 1
    %4344 = vperm.xlu0 %4343, %v4215
    %v4345 = vpop.permute.xlu0 %4344
    %4347 = vset.pattern.permute.xlu0 1
    %4348 = vperm.xlu0 %4347, %v4216
    %v4349 = vpop.permute.xlu0 %4348
    %4351 = vset.pattern.permute.xlu0 1
    %4352 = vperm.xlu0 %4351, %v4217
    %v4353 = vpop.permute.xlu0 %4352
    %4355 = vset.pattern.permute.xlu0 1
    %4356 = vperm.xlu0 %4355, %v4218
    %v4357 = vpop.permute.xlu0 %4356
    %4359 = vset.pattern.permute.xlu0 1
    %4360 = vperm.xlu0 %4359, %v4219
    %v4361 = vpop.permute.xlu0 %4360
    %4363 = vset.pattern.permute.xlu0 1
    %4364 = vperm.xlu0 %4363, %v4220
    %v4365 = vpop.permute.xlu0 %4364
    %4367 = vset.pattern.permute.xlu0 1
    %4368 = vperm.xlu0 %4367, %v4221
    %v4369 = vpop.permute.xlu0 %4368
    %4371 = vset.pattern.permute.xlu0 1
    %4372 = vperm.xlu0 %4371, %v4222
    %v4373 = vpop.permute.xlu0 %4372
    %4375 = vset.pattern.permute.xlu0 1
    %4376 = vperm.xlu0 %4375, %v4223
    %v4377 = vpop.permute.xlu0 %4376
    %4379 = vset.pattern.permute.xlu0 1
    %4380 = vperm.xlu0 %4379, %v4224
    %v4381 = vpop.permute.xlu0 %4380
    %4383 = vset.pattern.permute.xlu0 1
    %4384 = vperm.xlu0 %4383, %v4225
    %v4385 = vpop.permute.xlu0 %4384
    %4387 = vset.pattern.permute.xlu0 1
    %4388 = vperm.xlu0 %4387, %v4226
    %v4389 = vpop.permute.xlu0 %4388
    %4391 = vset.pattern.permute.xlu0 1
    %4392 = vperm.xlu0 %4391, %v4227
    %v4393 = vpop.permute.xlu0 %4392
    %v4395 = vlaneseq
    %v4396 = vshrl.u32 %v4395, 7
    %v4397 = vsub.s32 0, %v4396
    %v4398 = vrot.slane %v4330, %v4397
    %v4399 = vmul.f32 %v4333, %v4398
    %v4400 = vmul.f32 %v4337, %v4398
    %v4401 = vmul.f32 %v4341, %v4398
    %v4402 = vmul.f32 %v4345, %v4398
    %v4403 = vmul.f32 %v4349, %v4398
    %v4404 = vmul.f32 %v4353, %v4398
    %v4405 = vmul.f32 %v4357, %v4398
    %v4406 = vmul.f32 %v4361, %v4398
    %v4407 = vmul.f32 %v4365, %v4398
    %v4408 = vmul.f32 %v4369, %v4398
    %v4409 = vmul.f32 %v4373, %v4398
    %v4410 = vmul.f32 %v4377, %v4398
    %v4411 = vmul.f32 %v4381, %v4398
    %v4412 = vmul.f32 %v4385, %v4398
    %v4413 = vmul.f32 %v4389, %v4398
    %v4414 = vmul.f32 %v4393, %v4398
    %v4415 = vadd.f32 %v4314, %v4399
    %v4416 = vadd.f32 %v4315, %v4400
    %v4417 = vadd.f32 %v4316, %v4401
    %v4418 = vadd.f32 %v4317, %v4402
    %v4419 = vadd.f32 %v4318, %v4403
    %v4420 = vadd.f32 %v4319, %v4404
    %v4421 = vadd.f32 %v4320, %v4405
    %v4422 = vadd.f32 %v4321, %v4406
    %v4423 = vadd.f32 %v4322, %v4407
    %v4424 = vadd.f32 %v4323, %v4408
    %v4425 = vadd.f32 %v4324, %v4409
    %v4426 = vadd.f32 %v4325, %v4410
    %v4427 = vadd.f32 %v4326, %v4411
    %v4428 = vadd.f32 %v4327, %v4412
    %v4429 = vadd.f32 %v4328, %v4413
    %v4430 = vadd.f32 %v4329, %v4414
    %v4431 = vld [vmem:[%s4228 + $0x2] sm:$0x1]
    %4432 = vset.pattern.permute.xlu0 2
    %4433 = vperm.xlu0 %4432, %v4212
    %v4434 = vpop.permute.xlu0 %4433
    %4436 = vset.pattern.permute.xlu0 2
    %4437 = vperm.xlu0 %4436, %v4213
    %v4438 = vpop.permute.xlu0 %4437
    %4440 = vset.pattern.permute.xlu0 2
    %4441 = vperm.xlu0 %4440, %v4214
    %v4442 = vpop.permute.xlu0 %4441
    %4444 = vset.pattern.permute.xlu0 2
    %4445 = vperm.xlu0 %4444, %v4215
    %v4446 = vpop.permute.xlu0 %4445
    %4448 = vset.pattern.permute.xlu0 2
    %4449 = vperm.xlu0 %4448, %v4216
    %v4450 = vpop.permute.xlu0 %4449
    %4452 = vset.pattern.permute.xlu0 2
    %4453 = vperm.xlu0 %4452, %v4217
    %v4454 = vpop.permute.xlu0 %4453
    %4456 = vset.pattern.permute.xlu0 2
    %4457 = vperm.xlu0 %4456, %v4218
    %v4458 = vpop.permute.xlu0 %4457
    %4460 = vset.pattern.permute.xlu0 2
    %4461 = vperm.xlu0 %4460, %v4219
    %v4462 = vpop.permute.xlu0 %4461
    %4464 = vset.pattern.permute.xlu0 2
    %4465 = vperm.xlu0 %4464, %v4220
    %v4466 = vpop.permute.xlu0 %4465
    %4468 = vset.pattern.permute.xlu0 2
    %4469 = vperm.xlu0 %4468, %v4221
    %v4470 = vpop.permute.xlu0 %4469
    %4472 = vset.pattern.permute.xlu0 2
    %4473 = vperm.xlu0 %4472, %v4222
    %v4474 = vpop.permute.xlu0 %4473
    %4476 = vset.pattern.permute.xlu0 2
    %4477 = vperm.xlu0 %4476, %v4223
    %v4478 = vpop.permute.xlu0 %4477
    %4480 = vset.pattern.permute.xlu0 2
    %4481 = vperm.xlu0 %4480, %v4224
    %v4482 = vpop.permute.xlu0 %4481
    %4484 = vset.pattern.permute.xlu0 2
    %4485 = vperm.xlu0 %4484, %v4225
    %v4486 = vpop.permute.xlu0 %4485
    %4488 = vset.pattern.permute.xlu0 2
    %4489 = vperm.xlu0 %4488, %v4226
    %v4490 = vpop.permute.xlu0 %4489
    %4492 = vset.pattern.permute.xlu0 2
    %4493 = vperm.xlu0 %4492, %v4227
    %v4494 = vpop.permute.xlu0 %4493
    %v4496 = vlaneseq
    %v4497 = vshrl.u32 %v4496, 7
    %v4498 = vsub.s32 0, %v4497
    %v4499 = vrot.slane %v4431, %v4498
    %v4500 = vmul.f32 %v4434, %v4499
    %v4501 = vmul.f32 %v4438, %v4499
    %v4502 = vmul.f32 %v4442, %v4499
    %v4503 = vmul.f32 %v4446, %v4499
    %v4504 = vmul.f32 %v4450, %v4499
    %v4505 = vmul.f32 %v4454, %v4499
    %v4506 = vmul.f32 %v4458, %v4499
    %v4507 = vmul.f32 %v4462, %v4499
    %v4508 = vmul.f32 %v4466, %v4499
    %v4509 = vmul.f32 %v4470, %v4499
    %v4510 = vmul.f32 %v4474, %v4499
    %v4511 = vmul.f32 %v4478, %v4499
    %v4512 = vmul.f32 %v4482, %v4499
    %v4513 = vmul.f32 %v4486, %v4499
    %v4514 = vmul.f32 %v4490, %v4499
    %v4515 = vmul.f32 %v4494, %v4499
    %v4516 = vadd.f32 %v4415, %v4500
    %v4517 = vadd.f32 %v4416, %v4501
    %v4518 = vadd.f32 %v4417, %v4502
    %v4519 = vadd.f32 %v4418, %v4503
    %v4520 = vadd.f32 %v4419, %v4504
    %v4521 = vadd.f32 %v4420, %v4505
    %v4522 = vadd.f32 %v4421, %v4506
    %v4523 = vadd.f32 %v4422, %v4507
    %v4524 = vadd.f32 %v4423, %v4508
    %v4525 = vadd.f32 %v4424, %v4509
    %v4526 = vadd.f32 %v4425, %v4510
    %v4527 = vadd.f32 %v4426, %v4511
    %v4528 = vadd.f32 %v4427, %v4512
    %v4529 = vadd.f32 %v4428, %v4513
    %v4530 = vadd.f32 %v4429, %v4514
    %v4531 = vadd.f32 %v4430, %v4515
    %v4532 = vmax.f32 %v4516, 0.0
    %v4533 = vmax.f32 %v4517, 0.0
    %v4534 = vmax.f32 %v4518, 0.0
    %v4535 = vmax.f32 %v4519, 0.0
    %v4536 = vmax.f32 %v4520, 0.0
    %v4537 = vmax.f32 %v4521, 0.0
    %v4538 = vmax.f32 %v4522, 0.0
    %v4539 = vmax.f32 %v4523, 0.0
    %v4540 = vmax.f32 %v4524, 0.0
    %v4541 = vmax.f32 %v4525, 0.0
    %v4542 = vmax.f32 %v4526, 0.0
    %v4543 = vmax.f32 %v4527, 0.0
    %v4544 = vmax.f32 %v4528, 0.0
    %v4545 = vmax.f32 %v4529, 0.0
    %v4546 = vmax.f32 %v4530, 0.0
    %v4547 = vmax.f32 %v4531, 0.0
    %v4548 = vld [vmem:[%s4228 + $0x4] sm:$0x1]
    %v4549 = vlaneseq
    %v4550 = vshrl.u32 %v4549, 7
    %v4551 = vsub.s32 0, %v4550
    %v4552 = vrot.slane %v4548, %v4551
    %v4553 = vmul.f32 %v4233, %v4552
    %v4554 = vmul.f32 %v4238, %v4552
    %v4555 = vmul.f32 %v4243, %v4552
    %v4556 = vmul.f32 %v4248, %v4552
    %v4557 = vmul.f32 %v4253, %v4552
    %v4558 = vmul.f32 %v4258, %v4552
    %v4559 = vmul.f32 %v4263, %v4552
    %v4560 = vmul.f32 %v4268, %v4552
    %v4561 = vmul.f32 %v4273, %v4552
    %v4562 = vmul.f32 %v4278, %v4552
    %v4563 = vmul.f32 %v4283, %v4552
    %v4564 = vmul.f32 %v4288, %v4552
    %v4565 = vmul.f32 %v4293, %v4552
    %v4566 = vmul.f32 %v4298, %v4552
    %v4567 = vmul.f32 %v4303, %v4552
    %v4568 = vmul.f32 %v4308, %v4552
    %v4569 = vld [vmem:[%s4228 + $0x5] sm:$0x1]
    %v4570 = vlaneseq
    %v4571 = vshrl.u32 %v4570, 7
    %v4572 = vsub.s32 0, %v4571
    %v4573 = vrot.slane %v4569, %v4572
    %v4574 = vmul.f32 %v4333, %v4573
    %v4575 = vmul.f32 %v4337, %v4573
    %v4576 = vmul.f32 %v4341, %v4573
    %v4577 = vmul.f32 %v4345, %v4573
    %v4578 = vmul.f32 %v4349, %v4573
    %v4579 = vmul.f32 %v4353, %v4573
    %v4580 = vmul.f32 %v4357, %v4573
    %v4581 = vmul.f32 %v4361, %v4573
    %v4582 = vmul.f32 %v4365, %v4573
    %v4583 = vmul.f32 %v4369, %v4573
    %v4584 = vmul.f32 %v4373, %v4573
    %v4585 = vmul.f32 %v4377, %v4573
    %v4586 = vmul.f32 %v4381, %v4573
    %v4587 = vmul.f32 %v4385, %v4573
    %v4588 = vmul.f32 %v4389, %v4573
    %v4589 = vmul.f32 %v4393, %v4573
    %v4590 = vadd.f32 %v4553, %v4574
    %v4591 = vadd.f32 %v4554, %v4575
    %v4592 = vadd.f32 %v4555, %v4576
    %v4593 = vadd.f32 %v4556, %v4577
    %v4594 = vadd.f32 %v4557, %v4578
    %v4595 = vadd.f32 %v4558, %v4579
    %v4596 = vadd.f32 %v4559, %v4580
    %v4597 = vadd.f32 %v4560, %v4581
    %v4598 = vadd.f32 %v4561, %v4582
    %v4599 = vadd.f32 %v4562, %v4583
    %v4600 = vadd.f32 %v4563, %v4584
    %v4601 = vadd.f32 %v4564, %v4585
    %v4602 = vadd.f32 %v4565, %v4586
    %v4603 = vadd.f32 %v4566, %v4587
    %v4604 = vadd.f32 %v4567, %v4588
    %v4605 = vadd.f32 %v4568, %v4589
    %v4606 = vld [vmem:[%s4228 + $0x6] sm:$0x1]
    %v4607 = vlaneseq
    %v4608 = vshrl.u32 %v4607, 7
    %v4609 = vsub.s32 0, %v4608
    %v4610 = vrot.slane %v4606, %v4609
    %v4611 = vmul.f32 %v4434, %v4610
    %v4612 = vmul.f32 %v4438, %v4610
    %v4613 = vmul.f32 %v4442, %v4610
    %v4614 = vmul.f32 %v4446, %v4610
    %v4615 = vmul.f32 %v4450, %v4610
    %v4616 = vmul.f32 %v4454, %v4610
    %v4617 = vmul.f32 %v4458, %v4610
    %v4618 = vmul.f32 %v4462, %v4610
    %v4619 = vmul.f32 %v4466, %v4610
    %v4620 = vmul.f32 %v4470, %v4610
    %v4621 = vmul.f32 %v4474, %v4610
    %v4622 = vmul.f32 %v4478, %v4610
    %v4623 = vmul.f32 %v4482, %v4610
    %v4624 = vmul.f32 %v4486, %v4610
    %v4625 = vmul.f32 %v4490, %v4610
    %v4626 = vmul.f32 %v4494, %v4610
    %v4627 = vadd.f32 %v4590, %v4611
    %v4628 = vadd.f32 %v4591, %v4612
    %v4629 = vadd.f32 %v4592, %v4613
    %v4630 = vadd.f32 %v4593, %v4614
    %v4631 = vadd.f32 %v4594, %v4615
    %v4632 = vadd.f32 %v4595, %v4616
    %v4633 = vadd.f32 %v4596, %v4617
    %v4634 = vadd.f32 %v4597, %v4618
    %v4635 = vadd.f32 %v4598, %v4619
    %v4636 = vadd.f32 %v4599, %v4620
    %v4637 = vadd.f32 %v4600, %v4621
    %v4638 = vadd.f32 %v4601, %v4622
    %v4639 = vadd.f32 %v4602, %v4623
    %v4640 = vadd.f32 %v4603, %v4624
    %v4641 = vadd.f32 %v4604, %v4625
    %v4642 = vadd.f32 %v4605, %v4626
    %v4643 = vmax.f32 %v4627, 0.0
    %v4644 = vmax.f32 %v4628, 0.0
    %v4645 = vmax.f32 %v4629, 0.0
    %v4646 = vmax.f32 %v4630, 0.0
    %v4647 = vmax.f32 %v4631, 0.0
    %v4648 = vmax.f32 %v4632, 0.0
    %v4649 = vmax.f32 %v4633, 0.0
    %v4650 = vmax.f32 %v4634, 0.0
    %v4651 = vmax.f32 %v4635, 0.0
    %v4652 = vmax.f32 %v4636, 0.0
    %v4653 = vmax.f32 %v4637, 0.0
    %v4654 = vmax.f32 %v4638, 0.0
    %v4655 = vmax.f32 %v4639, 0.0
    %v4656 = vmax.f32 %v4640, 0.0
    %v4657 = vmax.f32 %v4641, 0.0
    %v4658 = vmax.f32 %v4642, 0.0
    %4659 = vmatprep.subr.mxu0 0.0
    %4660 = vmatpush1.xpose.msra.mxu0 %v4658
    %4661 = vmatprep.subr.mxu0 0.0
    %4662 = vmatpush1.xpose.msra.mxu0 %v4657
    %4663 = vmatprep.subr.mxu0 0.0
    %4664 = vmatpush1.xpose.msra.mxu0 %v4656
    %4665 = vmatprep.subr.mxu0 0.0
    %4666 = vmatpush1.xpose.msra.mxu0 %v4655
    %4667 = vmatprep.subr.mxu0 0.0
    %4668 = vmatpush1.xpose.msra.mxu0 %v4654
    %4669 = vmatprep.subr.mxu0 0.0
    %4670 = vmatpush1.xpose.msra.mxu0 %v4653
    %4671 = vmatprep.subr.mxu0 0.0
    %4672 = vmatpush1.xpose.msra.mxu0 %v4652
    %4673 = vmatprep.subr.mxu0 0.0
    %4674 = vmatpush1.xpose.msra.mxu0 %v4651
    %4675 = vmatprep.subr.mxu0 0.0
    %4676 = vmatpush1.xpose.msra.mxu0 %v4650
    %4677 = vmatprep.subr.mxu0 0.0
    %4678 = vmatpush1.xpose.msra.mxu0 %v4649
    %4679 = vmatprep.subr.mxu0 0.0
    %4680 = vmatpush1.xpose.msra.mxu0 %v4648
    %4681 = vmatprep.subr.mxu0 0.0
    %4682 = vmatpush1.xpose.msra.mxu0 %v4647
    %4683 = vmatprep.subr.mxu0 0.0
    %4684 = vmatpush1.xpose.msra.mxu0 %v4646
    %4685 = vmatprep.subr.mxu0 0.0
    %4686 = vmatpush1.xpose.msra.mxu0 %v4645
    %4687 = vmatprep.subr.mxu0 0.0
    %4688 = vmatpush1.xpose.msra.mxu0 %v4644
    %4689 = vmatprep.subr.mxu0 0.0
    %4690 = vmatpush1.xpose.msra.mxu0 %v4643
    %4691 = vmatprep.subr.mxu0 0.0
    %4692 = vmatpush2.xpose.msra.mxu0 0.0
    %4693 = vmatprep.subr.mxu0 0.0
    %4694 = vmatpush2.xpose.msra.mxu0 0.0
    %4695 = vmatprep.subr.mxu0 0.0
    %4696 = vmatpush2.xpose.msra.mxu0 0.0
    %4697 = vmatprep.subr.mxu0 0.0
    %4698 = vmatpush2.xpose.msra.mxu0 0.0
    %4699 = vmatprep.subr.mxu0 0.0
    %4700 = vmatpush2.xpose.msra.mxu0 0.0
    %4701 = vmatprep.subr.mxu0 0.0
    %4702 = vmatpush2.xpose.msra.mxu0 0.0
    %4703 = vmatprep.subr.mxu0 0.0
    %4704 = vmatpush2.xpose.msra.mxu0 0.0
    %4705 = vmatprep.subr.mxu0 0.0
    %4706 = vmatpush2.xpose.msra.mxu0 0.0
    %4707 = vmatprep.subr.mxu0 0.0
    %4708 = vmatpush2.xpose.msra.mxu0 0.0
    %4709 = vmatprep.subr.mxu0 0.0
    %4710 = vmatpush2.xpose.msra.mxu0 0.0
    %4711 = vmatprep.subr.mxu0 0.0
    %4712 = vmatpush2.xpose.msra.mxu0 0.0
    %4713 = vmatprep.subr.mxu0 0.0
    %4714 = vmatpush2.xpose.msra.mxu0 0.0
    %4715 = vmatprep.subr.mxu0 0.0
    %4716 = vmatpush2.xpose.msra.mxu0 0.0
    %4717 = vmatprep.subr.mxu0 0.0
    %4718 = vmatpush2.xpose.msra.mxu0 0.0
    %4719 = vmatprep.subr.mxu0 0.0
    %4720 = vmatpush2.xpose.msra.mxu0 0.0
    %4721 = vmatprep.subr.mxu0 0.0
    %4722 = vmatpush2.xpose.msra.mxu0 0.0
    %4723 = vmatprep.mubr.f32.mxu0 0.0
    %4724 = vmatmul.mubr.f32.gmra.mxu0 1.0
    %v4725 = vpop.f32.mrf.mxu0
    %v4726 = vadd.f32 0.0, %v4725
    %v4727 = vpop.f32.mrf.mxu0
    %4728 = vdwg.mxu0
    %4729 = vmatprep.subr.mxu0 0.0
    %4730 = vmatpush1.xpose.msra.mxu0 %v4547
    %4731 = vmatprep.subr.mxu0 0.0
    %4732 = vmatpush1.xpose.msra.mxu0 %v4546
    %4733 = vmatprep.subr.mxu0 0.0
    %4734 = vmatpush1.xpose.msra.mxu0 %v4545
    %4735 = vmatprep.subr.mxu0 0.0
    %4736 = vmatpush1.xpose.msra.mxu0 %v4544
    %4737 = vmatprep.subr.mxu0 0.0
    %4738 = vmatpush1.xpose.msra.mxu0 %v4543
    %4739 = vmatprep.subr.mxu0 0.0
    %4740 = vmatpush1.xpose.msra.mxu0 %v4542
    %4741 = vmatprep.subr.mxu0 0.0
    %4742 = vmatpush1.xpose.msra.mxu0 %v4541
    %4743 = vmatprep.subr.mxu0 0.0
    %4744 = vmatpush1.xpose.msra.mxu0 %v4540
    %4745 = vmatprep.subr.mxu0 0.0
    %4746 = vmatpush1.xpose.msra.mxu0 %v4539
    %4747 = vmatprep.subr.mxu0 0.0
    %4748 = vmatpush1.xpose.msra.mxu0 %v4538
    %4749 = vmatprep.subr.mxu0 0.0
    %4750 = vmatpush1.xpose.msra.mxu0 %v4537
    %4751 = vmatprep.subr.mxu0 0.0
    %4752 = vmatpush1.xpose.msra.mxu0 %v4536
    %4753 = vmatprep.subr.mxu0 0.0
    %4754 = vmatpush1.xpose.msra.mxu0 %v4535
    %4755 = vmatprep.subr.mxu0 0.0
    %4756 = vmatpush1.xpose.msra.mxu0 %v4534
    %4757 = vmatprep.subr.mxu0 0.0
    %4758 = vmatpush1.xpose.msra.mxu0 %v4533
    %4759 = vmatprep.subr.mxu0 0.0
    %4760 = vmatpush1.xpose.msra.mxu0 %v4532
    %4761 = vmatprep.subr.mxu0 0.0
    %4762 = vmatpush2.xpose.msra.mxu0 0.0
    %4763 = vmatprep.subr.mxu0 0.0
    %4764 = vmatpush2.xpose.msra.mxu0 0.0
    %4765 = vmatprep.subr.mxu0 0.0
    %4766 = vmatpush2.xpose.msra.mxu0 0.0
    %4767 = vmatprep.subr.mxu0 0.0
    %4768 = vmatpush2.xpose.msra.mxu0 0.0
    %4769 = vmatprep.subr.mxu0 0.0
    %4770 = vmatpush2.xpose.msra.mxu0 0.0
    %4771 = vmatprep.subr.mxu0 0.0
    %4772 = vmatpush2.xpose.msra.mxu0 0.0
    %4773 = vmatprep.subr.mxu0 0.0
    %4774 = vmatpush2.xpose.msra.mxu0 0.0
    %4775 = vmatprep.subr.mxu0 0.0
    %4776 = vmatpush2.xpose.msra.mxu0 0.0
    %4777 = vmatprep.subr.mxu0 0.0
    %4778 = vmatpush2.xpose.msra.mxu0 0.0
    %4779 = vmatprep.subr.mxu0 0.0
    %4780 = vmatpush2.xpose.msra.mxu0 0.0
    %4781 = vmatprep.subr.mxu0 0.0
    %4782 = vmatpush2.xpose.msra.mxu0 0.0
    %4783 = vmatprep.subr.mxu0 0.0
    %4784 = vmatpush2.xpose.msra.mxu0 0.0
    %4785 = vmatprep.subr.mxu0 0.0
    %4786 = vmatpush2.xpose.msra.mxu0 0.0
    %4787 = vmatprep.subr.mxu0 0.0
    %4788 = vmatpush2.xpose.msra.mxu0 0.0
    %4789 = vmatprep.subr.mxu0 0.0
    %4790 = vmatpush2.xpose.msra.mxu0 0.0
    %4791 = vmatprep.subr.mxu0 0.0
    %4792 = vmatpush2.xpose.msra.mxu0 0.0
    %4793 = vmatprep.mubr.f32.mxu0 0.0
    %4794 = vmatmul.mubr.f32.gmra.mxu0 1.0
    %v4795 = vpop.f32.mrf.mxu0
    %v4796 = vadd.f32 %v4726, %v4795
    %v4797 = vpop.f32.mrf.mxu0
    %4798 = vdwg.mxu0
    %v4799 = vld [vmem:[#allocation9 + $0x7] sm:$0x1]
    %v4800 = vadd.f32 %v4799, %v4796
    %4801 = vst [vmem:[#allocation9 + $0x7] sm:$0x1] %v4800
    // Predicated region
    $region54: #{tpu_custom_call.1} parent=1 // pred_check
      %p4802 = pneg %p78
    $region55: #{tpu_custom_call.1} parent=1 // pred_check_branch
      %4804 = sbr.rel (%p4802) target = $region57
    $region56: #{tpu_custom_call.1} parent=1 // pred_region
      %v4805 = vld [vmem:[#allocation9] sm:$0xff]
      %v4806 = vmul.f32 %v4805, 0.00390625
      %4807 = vst [vmem:[#allocation9] sm:$0xff] %v4806
      %v4808 = vld [vmem:[#allocation9] sm:$0xff]
      %v4809 = vpack.c.bf16 %v4808, %v4808
      %v4810 = vld [vmem:[#allocation2] sm:$0xff]
      %v4811 = vld [vmem:[#allocation2 + $0x8] sm:$0xff]
      %v4812 = vld [vmem:[#allocation2 + $0x10] sm:$0xff]
      %v4813 = vld [vmem:[#allocation2 + $0x18] sm:$0xff]
      %v4814 = vld [vmem:[#allocation2 + $0x20] sm:$0xff]
      %v4815 = vld [vmem:[#allocation2 + $0x28] sm:$0xff]
      %v4816 = vld [vmem:[#allocation2 + $0x30] sm:$0xff]
      %v4817 = vld [vmem:[#allocation2 + $0x38] sm:$0xff]
      %v4818 = vld [vmem:[#allocation2 + $0x40] sm:$0xff]
      %v4819 = vld [vmem:[#allocation2 + $0x48] sm:$0xff]
      %v4820 = vld [vmem:[#allocation2 + $0x50] sm:$0xff]
      %v4821 = vld [vmem:[#allocation2 + $0x58] sm:$0xff]
      %v4822 = vld [vmem:[#allocation2 + $0x60] sm:$0xff]
      %v4823 = vld [vmem:[#allocation2 + $0x68] sm:$0xff]
      %v4824 = vld [vmem:[#allocation2 + $0x70] sm:$0xff]
      %v4825 = vld [vmem:[#allocation2 + $0x78] sm:$0xff]
      %v4826 = vld [vmem:[#allocation2 + $0x80] sm:$0xff]
      %v4827 = vld [vmem:[#allocation2 + $0x88] sm:$0xff]
      %v4828 = vld [vmem:[#allocation2 + $0x90] sm:$0xff]
      %v4829 = vld [vmem:[#allocation2 + $0x98] sm:$0xff]
      %v4830 = vld [vmem:[#allocation2 + $0xa0] sm:$0xff]
      %v4831 = vld [vmem:[#allocation2 + $0xa8] sm:$0xff]
      %v4832 = vld [vmem:[#allocation2 + $0xb0] sm:$0xff]
      %v4833 = vld [vmem:[#allocation2 + $0xb8] sm:$0xff]
      %v4834 = vld [vmem:[#allocation2 + $0xc0] sm:$0xff]
      %v4835 = vld [vmem:[#allocation2 + $0xc8] sm:$0xff]
      %v4836 = vld [vmem:[#allocation2 + $0xd0] sm:$0xff]
      %v4837 = vld [vmem:[#allocation2 + $0xd8] sm:$0xff]
      %v4838 = vld [vmem:[#allocation2 + $0xe0] sm:$0xff]
      %v4839 = vld [vmem:[#allocation2 + $0xe8] sm:$0xff]
      %v4840 = vld [vmem:[#allocation2 + $0xf0] sm:$0xff]
      %v4841 = vld [vmem:[#allocation2 + $0xf8] sm:$0xff]
      %v4874 = vunpack.c.l.b16 %v4810
      %v4875 = vunpack.c.h.b16 %v4810
      %v4876 = vunpack.c.l.b16 %v4811
      %v4877 = vunpack.c.h.b16 %v4811
      %v4878 = vunpack.c.l.b16 %v4812
      %v4879 = vunpack.c.h.b16 %v4812
      %v4880 = vunpack.c.l.b16 %v4813
      %v4881 = vunpack.c.h.b16 %v4813
      %v4882 = vunpack.c.l.b16 %v4814
      %v4883 = vunpack.c.h.b16 %v4814
      %v4884 = vunpack.c.l.b16 %v4815
      %v4885 = vunpack.c.h.b16 %v4815
      %v4886 = vunpack.c.l.b16 %v4816
      %v4887 = vunpack.c.h.b16 %v4816
      %v4888 = vunpack.c.l.b16 %v4817
      %v4889 = vunpack.c.h.b16 %v4817
      %v4890 = vunpack.c.l.b16 %v4818
      %v4891 = vunpack.c.h.b16 %v4818
      %v4892 = vunpack.c.l.b16 %v4819
      %v4893 = vunpack.c.h.b16 %v4819
      %v4894 = vunpack.c.l.b16 %v4820
      %v4895 = vunpack.c.h.b16 %v4820
      %v4896 = vunpack.c.l.b16 %v4821
      %v4897 = vunpack.c.h.b16 %v4821
      %v4898 = vunpack.c.l.b16 %v4822
      %v4899 = vunpack.c.h.b16 %v4822
      %v4900 = vunpack.c.l.b16 %v4823
      %v4901 = vunpack.c.h.b16 %v4823
      %v4902 = vunpack.c.l.b16 %v4824
      %v4903 = vunpack.c.h.b16 %v4824
      %v4904 = vunpack.c.l.b16 %v4825
      %v4905 = vunpack.c.h.b16 %v4825
      %v4906 = vunpack.c.l.b16 %v4826
      %v4907 = vunpack.c.h.b16 %v4826
      %v4908 = vunpack.c.l.b16 %v4827
      %v4909 = vunpack.c.h.b16 %v4827
      %v4910 = vunpack.c.l.b16 %v4828
      %v4911 = vunpack.c.h.b16 %v4828
      %v4912 = vunpack.c.l.b16 %v4829
      %v4913 = vunpack.c.h.b16 %v4829
      %v4914 = vunpack.c.l.b16 %v4830
      %v4915 = vunpack.c.h.b16 %v4830
      %v4916 = vunpack.c.l.b16 %v4831
      %v4917 = vunpack.c.h.b16 %v4831
      %v4918 = vunpack.c.l.b16 %v4832
      %v4919 = vunpack.c.h.b16 %v4832
      %v4920 = vunpack.c.l.b16 %v4833
      %v4921 = vunpack.c.h.b16 %v4833
      %v4922 = vunpack.c.l.b16 %v4834
      %v4923 = vunpack.c.h.b16 %v4834
      %v4924 = vunpack.c.l.b16 %v4835
      %v4925 = vunpack.c.h.b16 %v4835
      %v4926 = vunpack.c.l.b16 %v4836
      %v4927 = vunpack.c.h.b16 %v4836
      %v4928 = vunpack.c.l.b16 %v4837
      %v4929 = vunpack.c.h.b16 %v4837
      %v4930 = vunpack.c.l.b16 %v4838
      %v4931 = vunpack.c.h.b16 %v4838
      %v4932 = vunpack.c.l.b16 %v4839
      %v4933 = vunpack.c.h.b16 %v4839
      %v4934 = vunpack.c.l.b16 %v4840
      %v4935 = vunpack.c.h.b16 %v4840
      %v4936 = vunpack.c.l.b16 %v4841
      %v4937 = vunpack.c.h.b16 %v4841
      %v4938 = vpack.c.b16 %v4878, %v4874
      %v4939 = vpack.c.b16 %v4879, %v4875
      %v4940 = vpack.c.b16 %v4880, %v4876
      %v4941 = vpack.c.b16 %v4881, %v4877
      %v4942 = vpack.c.b16 %v4886, %v4882
      %v4943 = vpack.c.b16 %v4887, %v4883
      %v4944 = vpack.c.b16 %v4888, %v4884
      %v4945 = vpack.c.b16 %v4889, %v4885
      %v4946 = vpack.c.b16 %v4894, %v4890
      %v4947 = vpack.c.b16 %v4895, %v4891
      %v4948 = vpack.c.b16 %v4896, %v4892
      %v4949 = vpack.c.b16 %v4897, %v4893
      %v4950 = vpack.c.b16 %v4902, %v4898
      %v4951 = vpack.c.b16 %v4903, %v4899
      %v4952 = vpack.c.b16 %v4904, %v4900
      %v4953 = vpack.c.b16 %v4905, %v4901
      %v4954 = vpack.c.b16 %v4910, %v4906
      %v4955 = vpack.c.b16 %v4911, %v4907
      %v4956 = vpack.c.b16 %v4912, %v4908
      %v4957 = vpack.c.b16 %v4913, %v4909
      %v4958 = vpack.c.b16 %v4918, %v4914
      %v4959 = vpack.c.b16 %v4919, %v4915
      %v4960 = vpack.c.b16 %v4920, %v4916
      %v4961 = vpack.c.b16 %v4921, %v4917
      %v4962 = vpack.c.b16 %v4926, %v4922
      %v4963 = vpack.c.b16 %v4927, %v4923
      %v4964 = vpack.c.b16 %v4928, %v4924
      %v4965 = vpack.c.b16 %v4929, %v4925
      %v4966 = vpack.c.b16 %v4934, %v4930
      %v4967 = vpack.c.b16 %v4935, %v4931
      %v4968 = vpack.c.b16 %v4936, %v4932
      %v4969 = vpack.c.b16 %v4937, %v4933
      %5002 = vmatprep.subr.bf16.mxu0 %v4967
      %5003 = vmatpush1.bf16.msra.mxu0 %v4966
      %5004 = vmatprep.subr.bf16.mxu0 %v4963
      %5005 = vmatpush1.bf16.msra.mxu0 %v4962
      %5006 = vmatprep.subr.bf16.mxu0 %v4959
      %5007 = vmatpush1.bf16.msra.mxu0 %v4958
      %5008 = vmatprep.subr.bf16.mxu0 %v4955
      %5009 = vmatpush1.bf16.msra.mxu0 %v4954
      %5010 = vmatprep.subr.bf16.mxu0 %v4951
      %5011 = vmatpush1.bf16.msra.mxu0 %v4950
      %5012 = vmatprep.subr.bf16.mxu0 %v4947
      %5013 = vmatpush1.bf16.msra.mxu0 %v4946
      %5014 = vmatprep.subr.bf16.mxu0 %v4943
      %5015 = vmatpush1.bf16.msra.mxu0 %v4942
      %5016 = vmatprep.subr.bf16.mxu0 %v4939
      %5017 = vmatpush1.bf16.msra.mxu0 %v4938
      %5018 = vmatprep.subr.bf16.mxu0 0
      %5019 = vmatpush2.bf16.msra.mxu0 0
      %5020 = vmatprep.subr.bf16.mxu0 0
      %5021 = vmatpush2.bf16.msra.mxu0 0
      %5022 = vmatprep.subr.bf16.mxu0 0
      %5023 = vmatpush2.bf16.msra.mxu0 0
      %5024 = vmatprep.subr.bf16.mxu0 0
      %5025 = vmatpush2.bf16.msra.mxu0 0
      %5026 = vmatprep.subr.bf16.mxu0 0
      %5027 = vmatpush2.bf16.msra.mxu0 0
      %5028 = vmatprep.subr.bf16.mxu0 0
      %5029 = vmatpush2.bf16.msra.mxu0 0
      %5030 = vmatprep.subr.bf16.mxu0 0
      %5031 = vmatpush2.bf16.msra.mxu0 0
      %5032 = vmatprep.subr.bf16.mxu0 0
      %5033 = vmatpush2.bf16.msra.mxu0 0
      %5034 = vmatprep.mubr.bf16.mxu0 0
      %5035 = vmatmul.mubr.bf16.gmra.mxu0 %v4809
      %v5036 = vpop.f32.mrf.mxu0
      %v5037 = vadd.f32 0.0, %v5036
      %v5038 = vpop.f32.mrf.mxu0
      %v5039 = vadd.f32 0.0, %v5038
      %v5040 = vpop.f32.mrf.mxu0
      %v5041 = vpop.f32.mrf.mxu0
      %5042 = vdwg.mxu0
      %5043 = vmatprep.subr.bf16.mxu0 %v4969
      %5044 = vmatpush1.bf16.msra.mxu0 %v4968
      %5045 = vmatprep.subr.bf16.mxu0 %v4965
      %5046 = vmatpush1.bf16.msra.mxu0 %v4964
      %5047 = vmatprep.subr.bf16.mxu0 %v4961
      %5048 = vmatpush1.bf16.msra.mxu0 %v4960
      %5049 = vmatprep.subr.bf16.mxu0 %v4957
      %5050 = vmatpush1.bf16.msra.mxu0 %v4956
      %5051 = vmatprep.subr.bf16.mxu0 %v4953
      %5052 = vmatpush1.bf16.msra.mxu0 %v4952
      %5053 = vmatprep.subr.bf16.mxu0 %v4949
      %5054 = vmatpush1.bf16.msra.mxu0 %v4948
      %5055 = vmatprep.subr.bf16.mxu0 %v4945
      %5056 = vmatpush1.bf16.msra.mxu0 %v4944
      %5057 = vmatprep.subr.bf16.mxu0 %v4941
      %5058 = vmatpush1.bf16.msra.mxu0 %v4940
      %5059 = vmatprep.subr.bf16.mxu0 0
      %5060 = vmatpush2.bf16.msra.mxu0 0
      %5061 = vmatprep.subr.bf16.mxu0 0
      %5062 = vmatpush2.bf16.msra.mxu0 0
      %5063 = vmatprep.subr.bf16.mxu0 0
      %5064 = vmatpush2.bf16.msra.mxu0 0
      %5065 = vmatprep.subr.bf16.mxu0 0
      %5066 = vmatpush2.bf16.msra.mxu0 0
      %5067 = vmatprep.subr.bf16.mxu0 0
      %5068 = vmatpush2.bf16.msra.mxu0 0
      %5069 = vmatprep.subr.bf16.mxu0 0
      %5070 = vmatpush2.bf16.msra.mxu0 0
      %5071 = vmatprep.subr.bf16.mxu0 0
      %5072 = vmatpush2.bf16.msra.mxu0 0
      %5073 = vmatprep.subr.bf16.mxu0 0
      %5074 = vmatpush2.bf16.msra.mxu0 0
      %5075 = vmatprep.mubr.bf16.mxu0 0
      %5076 = vmatmul.mubr.bf16.gmra.mxu0 %v4809
      %v5077 = vpop.f32.mrf.mxu0
      %v5078 = vadd.f32 0.0, %v5077
      %v5079 = vpop.f32.mrf.mxu0
      %v5080 = vadd.f32 0.0, %v5079
      %v5081 = vpop.f32.mrf.mxu0
      %v5082 = vpop.f32.mrf.mxu0
      %5083 = vdwg.mxu0
      %v5084 = vld [vmem:[%s3] sm:$0xf]
      %v5085 = vld [vmem:[%s4] sm:$0xf]
      %v5086 = vrot.slane %v5037, 4
      %v5087 = vadd.f32 %v5037, %v5086
      %v5088 = vrot.slane %v5087, 2
      %v5089 = vadd.f32 %v5087, %v5088
      %v5090 = vrot.slane %v5089, 1
      %v5091 = vadd.f32 %v5089, %v5090
      %v5092 = vrot.slane %v5039, 4
      %v5093 = vadd.f32 %v5039, %v5092
      %v5094 = vrot.slane %v5093, 2
      %v5095 = vadd.f32 %v5093, %v5094
      %v5096 = vrot.slane %v5095, 1
      %v5097 = vadd.f32 %v5095, %v5096
      %v5098 = vrot.slane %v5078, 4
      %v5099 = vadd.f32 %v5078, %v5098
      %v5100 = vrot.slane %v5099, 2
      %v5101 = vadd.f32 %v5099, %v5100
      %v5102 = vrot.slane %v5101, 1
      %v5103 = vadd.f32 %v5101, %v5102
      %v5104 = vrot.slane %v5080, 4
      %v5105 = vadd.f32 %v5080, %v5104
      %v5106 = vrot.slane %v5105, 2
      %v5107 = vadd.f32 %v5105, %v5106
      %v5108 = vrot.slane %v5107, 1
      %v5109 = vadd.f32 %v5107, %v5108
      %v5110 = vrcp.pop 8.0
      %v5111 = vmul.f32 %v5091, %v5110
      %v5112 = vmul.f32 %v5097, %v5110
      %v5113 = vmul.f32 %v5103, %v5110
      %v5114 = vmul.f32 %v5109, %v5110
      %v5115 = vsub.f32 %v5037, %v5111
      %v5116 = vsub.f32 %v5039, %v5112
      %v5117 = vsub.f32 %v5078, %v5113
      %v5118 = vsub.f32 %v5080, %v5114
      %v5119 = vmul.f32 %v5115, %v5115
      %v5120 = vmul.f32 %v5116, %v5116
      %v5121 = vmul.f32 %v5117, %v5117
      %v5122 = vmul.f32 %v5118, %v5118
      %v5123 = vrot.slane %v5119, 4
      %v5124 = vadd.f32 %v5119, %v5123
      %v5125 = vrot.slane %v5124, 2
      %v5126 = vadd.f32 %v5124, %v5125
      %v5127 = vrot.slane %v5126, 1
      %v5128 = vadd.f32 %v5126, %v5127
      %v5129 = vrot.slane %v5120, 4
      %v5130 = vadd.f32 %v5120, %v5129
      %v5131 = vrot.slane %v5130, 2
      %v5132 = vadd.f32 %v5130, %v5131
      %v5133 = vrot.slane %v5132, 1
      %v5134 = vadd.f32 %v5132, %v5133
      %v5135 = vrot.slane %v5121, 4
      %v5136 = vadd.f32 %v5121, %v5135
      %v5137 = vrot.slane %v5136, 2
      %v5138 = vadd.f32 %v5136, %v5137
      %v5139 = vrot.slane %v5138, 1
      %v5140 = vadd.f32 %v5138, %v5139
      %v5141 = vrot.slane %v5122, 4
      %v5142 = vadd.f32 %v5122, %v5141
      %v5143 = vrot.slane %v5142, 2
      %v5144 = vadd.f32 %v5142, %v5143
      %v5145 = vrot.slane %v5144, 1
      %v5146 = vadd.f32 %v5144, %v5145
      %v5147 = vmul.f32 %v5128, %v5110
      %v5148 = vmul.f32 %v5134, %v5110
      %v5149 = vmul.f32 %v5140, %v5110
      %v5150 = vmul.f32 %v5146, %v5110
      %v5151 = vadd.f32 %v5147, 1e-05
      %v5152 = vadd.f32 %v5148, 1e-05
      %v5153 = vadd.f32 %v5149, 1e-05
      %v5154 = vadd.f32 %v5150, 1e-05
      %v5155 = vrsqrt.pop %v5151
      %v5156 = vrsqrt.pop %v5152
      %v5157 = vrsqrt.pop %v5153
      %v5158 = vrsqrt.pop %v5154
      %v5159 = vmul.f32 %v5115, %v5155
      %v5160 = vmul.f32 %v5116, %v5156
      %v5161 = vmul.f32 %v5117, %v5157
      %v5162 = vmul.f32 %v5118, %v5158
      %v5164 = vlaneseq
      %v5165 = vshrl.u32 %v5164, 7
      %v5166 = vsub.s32 0, %v5165
      %v5167 = vrot.slane %v5084, %v5166
      %v5168 = vlaneseq
      %v5169 = vshrl.u32 %v5168, 7
      %v5170 = vsub.s32 1, %v5169
      %v5171 = vrot.slane %v5084, %v5170
      %v5172 = vlaneseq
      %v5173 = vshrl.u32 %v5172, 7
      %v5174 = vsub.s32 2, %v5173
      %v5175 = vrot.slane %v5084, %v5174
      %v5176 = vlaneseq
      %v5177 = vshrl.u32 %v5176, 7
      %v5178 = vsub.s32 3, %v5177
      %v5179 = vrot.slane %v5084, %v5178
      %v5184 = vmul.f32 %v5159, %v5167
      %v5185 = vmul.f32 %v5160, %v5171
      %v5186 = vmul.f32 %v5161, %v5175
      %v5187 = vmul.f32 %v5162, %v5179
      %v5189 = vlaneseq
      %v5190 = vshrl.u32 %v5189, 7
      %v5191 = vsub.s32 0, %v5190
      %v5192 = vrot.slane %v5085, %v5191
      %v5193 = vlaneseq
      %v5194 = vshrl.u32 %v5193, 7
      %v5195 = vsub.s32 1, %v5194
      %v5196 = vrot.slane %v5085, %v5195
      %v5197 = vlaneseq
      %v5198 = vshrl.u32 %v5197, 7
      %v5199 = vsub.s32 2, %v5198
      %v5200 = vrot.slane %v5085, %v5199
      %v5201 = vlaneseq
      %v5202 = vshrl.u32 %v5201, 7
      %v5203 = vsub.s32 3, %v5202
      %v5204 = vrot.slane %v5085, %v5203
      %v5209 = vadd.f32 %v5184, %v5192
      %v5210 = vadd.f32 %v5185, %v5196
      %v5211 = vadd.f32 %v5186, %v5200
      %v5212 = vadd.f32 %v5187, %v5204
      %v5213 = vmax.f32 %v5209, 0.0
      %v5214 = vmax.f32 %v5210, 0.0
      %v5215 = vmax.f32 %v5211, 0.0
      %v5216 = vmax.f32 %v5212, 0.0
      %v5217 = vpack.c.bf16 %v5213, %v5213
      %v5218 = vpack.c.bf16 %v5214, %v5214
      %v5219 = vpack.c.bf16 %v5215, %v5215
      %v5220 = vpack.c.bf16 %v5216, %v5216
      %v5221 = vld [vmem:[#allocation5] sm:$0xff]
      %v5222 = vld [vmem:[#allocation5 + $0x8] sm:$0xff]
      %v5223 = vld [vmem:[#allocation5 + $0x10] sm:$0xff]
      %v5224 = vld [vmem:[#allocation5 + $0x18] sm:$0xff]
      %v5225 = vld [vmem:[#allocation5 + $0x20] sm:$0xff]
      %v5226 = vld [vmem:[#allocation5 + $0x28] sm:$0xff]
      %v5227 = vld [vmem:[#allocation5 + $0x30] sm:$0xff]
      %v5228 = vld [vmem:[#allocation5 + $0x38] sm:$0xff]
      %v5229 = vld [vmem:[#allocation5 + $0x40] sm:$0xff]
      %v5230 = vld [vmem:[#allocation5 + $0x48] sm:$0xff]
      %v5231 = vld [vmem:[#allocation5 + $0x50] sm:$0xff]
      %v5232 = vld [vmem:[#allocation5 + $0x58] sm:$0xff]
      %v5233 = vld [vmem:[#allocation5 + $0x60] sm:$0xff]
      %v5234 = vld [vmem:[#allocation5 + $0x68] sm:$0xff]
      %v5235 = vld [vmem:[#allocation5 + $0x70] sm:$0xff]
      %v5236 = vld [vmem:[#allocation5 + $0x78] sm:$0xff]
      %v5237 = vld [vmem:[#allocation5 + $0x80] sm:$0xff]
      %v5238 = vld [vmem:[#allocation5 + $0x88] sm:$0xff]
      %v5239 = vld [vmem:[#allocation5 + $0x90] sm:$0xff]
      %v5240 = vld [vmem:[#allocation5 + $0x98] sm:$0xff]
      %v5241 = vld [vmem:[#allocation5 + $0xa0] sm:$0xff]
      %v5242 = vld [vmem:[#allocation5 + $0xa8] sm:$0xff]
      %v5243 = vld [vmem:[#allocation5 + $0xb0] sm:$0xff]
      %v5244 = vld [vmem:[#allocation5 + $0xb8] sm:$0xff]
      %v5245 = vld [vmem:[#allocation5 + $0xc0] sm:$0xff]
      %v5246 = vld [vmem:[#allocation5 + $0xc8] sm:$0xff]
      %v5247 = vld [vmem:[#allocation5 + $0xd0] sm:$0xff]
      %v5248 = vld [vmem:[#allocation5 + $0xd8] sm:$0xff]
      %v5249 = vld [vmem:[#allocation5 + $0xe0] sm:$0xff]
      %v5250 = vld [vmem:[#allocation5 + $0xe8] sm:$0xff]
      %v5251 = vld [vmem:[#allocation5 + $0xf0] sm:$0xff]
      %v5252 = vld [vmem:[#allocation5 + $0xf8] sm:$0xff]
      %v5253 = vld [vmem:[#allocation5 + $0x100] sm:$0xff]
      %v5254 = vld [vmem:[#allocation5 + $0x108] sm:$0xff]
      %v5255 = vld [vmem:[#allocation5 + $0x110] sm:$0xff]
      %v5256 = vld [vmem:[#allocation5 + $0x118] sm:$0xff]
      %v5257 = vld [vmem:[#allocation5 + $0x120] sm:$0xff]
      %v5258 = vld [vmem:[#allocation5 + $0x128] sm:$0xff]
      %v5259 = vld [vmem:[#allocation5 + $0x130] sm:$0xff]
      %v5260 = vld [vmem:[#allocation5 + $0x138] sm:$0xff]
      %v5261 = vld [vmem:[#allocation5 + $0x140] sm:$0xff]
      %v5262 = vld [vmem:[#allocation5 + $0x148] sm:$0xff]
      %v5263 = vld [vmem:[#allocation5 + $0x150] sm:$0xff]
      %v5264 = vld [vmem:[#allocation5 + $0x158] sm:$0xff]
      %v5265 = vld [vmem:[#allocation5 + $0x160] sm:$0xff]
      %v5266 = vld [vmem:[#allocation5 + $0x168] sm:$0xff]
      %v5267 = vld [vmem:[#allocation5 + $0x170] sm:$0xff]
      %v5268 = vld [vmem:[#allocation5 + $0x178] sm:$0xff]
      %v5269 = vld [vmem:[#allocation5 + $0x180] sm:$0xff]
      %v5270 = vld [vmem:[#allocation5 + $0x188] sm:$0xff]
      %v5271 = vld [vmem:[#allocation5 + $0x190] sm:$0xff]
      %v5272 = vld [vmem:[#allocation5 + $0x198] sm:$0xff]
      %v5273 = vld [vmem:[#allocation5 + $0x1a0] sm:$0xff]
      %v5274 = vld [vmem:[#allocation5 + $0x1a8] sm:$0xff]
      %v5275 = vld [vmem:[#allocation5 + $0x1b0] sm:$0xff]
      %v5276 = vld [vmem:[#allocation5 + $0x1b8] sm:$0xff]
      %v5277 = vld [vmem:[#allocation5 + $0x1c0] sm:$0xff]
      %v5278 = vld [vmem:[#allocation5 + $0x1c8] sm:$0xff]
      %v5279 = vld [vmem:[#allocation5 + $0x1d0] sm:$0xff]
      %v5280 = vld [vmem:[#allocation5 + $0x1d8] sm:$0xff]
      %v5281 = vld [vmem:[#allocation5 + $0x1e0] sm:$0xff]
      %v5282 = vld [vmem:[#allocation5 + $0x1e8] sm:$0xff]
      %v5283 = vld [vmem:[#allocation5 + $0x1f0] sm:$0xff]
      %v5284 = vld [vmem:[#allocation5 + $0x1f8] sm:$0xff]
      %v5285 = vld [vmem:[#allocation5 + $0x200] sm:$0xff]
      %v5286 = vld [vmem:[#allocation5 + $0x208] sm:$0xff]
      %v5287 = vld [vmem:[#allocation5 + $0x210] sm:$0xff]
      %v5288 = vld [vmem:[#allocation5 + $0x218] sm:$0xff]
      %v5289 = vld [vmem:[#allocation5 + $0x220] sm:$0xff]
      %v5290 = vld [vmem:[#allocation5 + $0x228] sm:$0xff]
      %v5291 = vld [vmem:[#allocation5 + $0x230] sm:$0xff]
      %v5292 = vld [vmem:[#allocation5 + $0x238] sm:$0xff]
      %v5293 = vld [vmem:[#allocation5 + $0x240] sm:$0xff]
      %v5294 = vld [vmem:[#allocation5 + $0x248] sm:$0xff]
      %v5295 = vld [vmem:[#allocation5 + $0x250] sm:$0xff]
      %v5296 = vld [vmem:[#allocation5 + $0x258] sm:$0xff]
      %v5297 = vld [vmem:[#allocation5 + $0x260] sm:$0xff]
      %v5298 = vld [vmem:[#allocation5 + $0x268] sm:$0xff]
      %v5299 = vld [vmem:[#allocation5 + $0x270] sm:$0xff]
      %v5300 = vld [vmem:[#allocation5 + $0x278] sm:$0xff]
      %v5301 = vld [vmem:[#allocation5 + $0x280] sm:$0xff]
      %v5302 = vld [vmem:[#allocation5 + $0x288] sm:$0xff]
      %v5303 = vld [vmem:[#allocation5 + $0x290] sm:$0xff]
      %v5304 = vld [vmem:[#allocation5 + $0x298] sm:$0xff]
      %v5305 = vld [vmem:[#allocation5 + $0x2a0] sm:$0xff]
      %v5306 = vld [vmem:[#allocation5 + $0x2a8] sm:$0xff]
      %v5307 = vld [vmem:[#allocation5 + $0x2b0] sm:$0xff]
      %v5308 = vld [vmem:[#allocation5 + $0x2b8] sm:$0xff]
      %v5309 = vld [vmem:[#allocation5 + $0x2c0] sm:$0xff]
      %v5310 = vld [vmem:[#allocation5 + $0x2c8] sm:$0xff]
      %v5311 = vld [vmem:[#allocation5 + $0x2d0] sm:$0xff]
      %v5312 = vld [vmem:[#allocation5 + $0x2d8] sm:$0xff]
      %v5313 = vld [vmem:[#allocation5 + $0x2e0] sm:$0xff]
      %v5314 = vld [vmem:[#allocation5 + $0x2e8] sm:$0xff]
      %v5315 = vld [vmem:[#allocation5 + $0x2f0] sm:$0xff]
      %v5316 = vld [vmem:[#allocation5 + $0x2f8] sm:$0xff]
      %v5317 = vld [vmem:[#allocation5 + $0x300] sm:$0xff]
      %v5318 = vld [vmem:[#allocation5 + $0x308] sm:$0xff]
      %v5319 = vld [vmem:[#allocation5 + $0x310] sm:$0xff]
      %v5320 = vld [vmem:[#allocation5 + $0x318] sm:$0xff]
      %v5321 = vld [vmem:[#allocation5 + $0x320] sm:$0xff]
      %v5322 = vld [vmem:[#allocation5 + $0x328] sm:$0xff]
      %v5323 = vld [vmem:[#allocation5 + $0x330] sm:$0xff]
      %v5324 = vld [vmem:[#allocation5 + $0x338] sm:$0xff]
      %v5325 = vld [vmem:[#allocation5 + $0x340] sm:$0xff]
      %v5326 = vld [vmem:[#allocation5 + $0x348] sm:$0xff]
      %v5327 = vld [vmem:[#allocation5 + $0x350] sm:$0xff]
      %v5328 = vld [vmem:[#allocation5 + $0x358] sm:$0xff]
      %v5329 = vld [vmem:[#allocation5 + $0x360] sm:$0xff]
      %v5330 = vld [vmem:[#allocation5 + $0x368] sm:$0xff]
      %v5331 = vld [vmem:[#allocation5 + $0x370] sm:$0xff]
      %v5332 = vld [vmem:[#allocation5 + $0x378] sm:$0xff]
      %v5333 = vld [vmem:[#allocation5 + $0x380] sm:$0xff]
      %v5334 = vld [vmem:[#allocation5 + $0x388] sm:$0xff]
      %v5335 = vld [vmem:[#allocation5 + $0x390] sm:$0xff]
      %v5336 = vld [vmem:[#allocation5 + $0x398] sm:$0xff]
      %v5337 = vld [vmem:[#allocation5 + $0x3a0] sm:$0xff]
      %v5338 = vld [vmem:[#allocation5 + $0x3a8] sm:$0xff]
      %v5339 = vld [vmem:[#allocation5 + $0x3b0] sm:$0xff]
      %v5340 = vld [vmem:[#allocation5 + $0x3b8] sm:$0xff]
      %v5341 = vld [vmem:[#allocation5 + $0x3c0] sm:$0xff]
      %v5342 = vld [vmem:[#allocation5 + $0x3c8] sm:$0xff]
      %v5343 = vld [vmem:[#allocation5 + $0x3d0] sm:$0xff]
      %v5344 = vld [vmem:[#allocation5 + $0x3d8] sm:$0xff]
      %v5345 = vld [vmem:[#allocation5 + $0x3e0] sm:$0xff]
      %v5346 = vld [vmem:[#allocation5 + $0x3e8] sm:$0xff]
      %v5347 = vld [vmem:[#allocation5 + $0x3f0] sm:$0xff]
      %v5348 = vld [vmem:[#allocation5 + $0x3f8] sm:$0xff]
      %v5477 = vunpack.c.l.b16 %v5221
      %v5478 = vunpack.c.h.b16 %v5221
      %v5479 = vunpack.c.l.b16 %v5222
      %v5480 = vunpack.c.h.b16 %v5222
      %v5481 = vunpack.c.l.b16 %v5223
      %v5482 = vunpack.c.h.b16 %v5223
      %v5483 = vunpack.c.l.b16 %v5224
      %v5484 = vunpack.c.h.b16 %v5224
      %v5485 = vunpack.c.l.b16 %v5225
      %v5486 = vunpack.c.h.b16 %v5225
      %v5487 = vunpack.c.l.b16 %v5226
      %v5488 = vunpack.c.h.b16 %v5226
      %v5489 = vunpack.c.l.b16 %v5227
      %v5490 = vunpack.c.h.b16 %v5227
      %v5491 = vunpack.c.l.b16 %v5228
      %v5492 = vunpack.c.h.b16 %v5228
      %v5493 = vunpack.c.l.b16 %v5229
      %v5494 = vunpack.c.h.b16 %v5229
      %v5495 = vunpack.c.l.b16 %v5230
      %v5496 = vunpack.c.h.b16 %v5230
      %v5497 = vunpack.c.l.b16 %v5231
      %v5498 = vunpack.c.h.b16 %v5231
      %v5499 = vunpack.c.l.b16 %v5232
      %v5500 = vunpack.c.h.b16 %v5232
      %v5501 = vunpack.c.l.b16 %v5233
      %v5502 = vunpack.c.h.b16 %v5233
      %v5503 = vunpack.c.l.b16 %v5234
      %v5504 = vunpack.c.h.b16 %v5234
      %v5505 = vunpack.c.l.b16 %v5235
      %v5506 = vunpack.c.h.b16 %v5235
      %v5507 = vunpack.c.l.b16 %v5236
      %v5508 = vunpack.c.h.b16 %v5236
      %v5509 = vunpack.c.l.b16 %v5237
      %v5510 = vunpack.c.h.b16 %v5237
      %v5511 = vunpack.c.l.b16 %v5238
      %v5512 = vunpack.c.h.b16 %v5238
      %v5513 = vunpack.c.l.b16 %v5239
      %v5514 = vunpack.c.h.b16 %v5239
      %v5515 = vunpack.c.l.b16 %v5240
      %v5516 = vunpack.c.h.b16 %v5240
      %v5517 = vunpack.c.l.b16 %v5241
      %v5518 = vunpack.c.h.b16 %v5241
      %v5519 = vunpack.c.l.b16 %v5242
      %v5520 = vunpack.c.h.b16 %v5242
      %v5521 = vunpack.c.l.b16 %v5243
      %v5522 = vunpack.c.h.b16 %v5243
      %v5523 = vunpack.c.l.b16 %v5244
      %v5524 = vunpack.c.h.b16 %v5244
      %v5525 = vunpack.c.l.b16 %v5245
      %v5526 = vunpack.c.h.b16 %v5245
      %v5527 = vunpack.c.l.b16 %v5246
      %v5528 = vunpack.c.h.b16 %v5246
      %v5529 = vunpack.c.l.b16 %v5247
      %v5530 = vunpack.c.h.b16 %v5247
      %v5531 = vunpack.c.l.b16 %v5248
      %v5532 = vunpack.c.h.b16 %v5248
      %v5533 = vunpack.c.l.b16 %v5249
      %v5534 = vunpack.c.h.b16 %v5249
      %v5535 = vunpack.c.l.b16 %v5250
      %v5536 = vunpack.c.h.b16 %v5250
      %v5537 = vunpack.c.l.b16 %v5251
      %v5538 = vunpack.c.h.b16 %v5251
      %v5539 = vunpack.c.l.b16 %v5252
      %v5540 = vunpack.c.h.b16 %v5252
      %v5541 = vunpack.c.l.b16 %v5253
      %v5542 = vunpack.c.h.b16 %v5253
      %v5543 = vunpack.c.l.b16 %v5254
      %v5544 = vunpack.c.h.b16 %v5254
      %v5545 = vunpack.c.l.b16 %v5255
      %v5546 = vunpack.c.h.b16 %v5255
      %v5547 = vunpack.c.l.b16 %v5256
      %v5548 = vunpack.c.h.b16 %v5256
      %v5549 = vunpack.c.l.b16 %v5257
      %v5550 = vunpack.c.h.b16 %v5257
      %v5551 = vunpack.c.l.b16 %v5258
      %v5552 = vunpack.c.h.b16 %v5258
      %v5553 = vunpack.c.l.b16 %v5259
      %v5554 = vunpack.c.h.b16 %v5259
      %v5555 = vunpack.c.l.b16 %v5260
      %v5556 = vunpack.c.h.b16 %v5260
      %v5557 = vunpack.c.l.b16 %v5261
      %v5558 = vunpack.c.h.b16 %v5261
      %v5559 = vunpack.c.l.b16 %v5262
      %v5560 = vunpack.c.h.b16 %v5262
      %v5561 = vunpack.c.l.b16 %v5263
      %v5562 = vunpack.c.h.b16 %v5263
      %v5563 = vunpack.c.l.b16 %v5264
      %v5564 = vunpack.c.h.b16 %v5264
      %v5565 = vunpack.c.l.b16 %v5265
      %v5566 = vunpack.c.h.b16 %v5265
      %v5567 = vunpack.c.l.b16 %v5266
      %v5568 = vunpack.c.h.b16 %v5266
      %v5569 = vunpack.c.l.b16 %v5267
      %v5570 = vunpack.c.h.b16 %v5267
      %v5571 = vunpack.c.l.b16 %v5268
      %v5572 = vunpack.c.h.b16 %v5268
      %v5573 = vunpack.c.l.b16 %v5269
      %v5574 = vunpack.c.h.b16 %v5269
      %v5575 = vunpack.c.l.b16 %v5270
      %v5576 = vunpack.c.h.b16 %v5270
      %v5577 = vunpack.c.l.b16 %v5271
      %v5578 = vunpack.c.h.b16 %v5271
      %v5579 = vunpack.c.l.b16 %v5272
      %v5580 = vunpack.c.h.b16 %v5272
      %v5581 = vunpack.c.l.b16 %v5273
      %v5582 = vunpack.c.h.b16 %v5273
      %v5583 = vunpack.c.l.b16 %v5274
      %v5584 = vunpack.c.h.b16 %v5274
      %v5585 = vunpack.c.l.b16 %v5275
      %v5586 = vunpack.c.h.b16 %v5275
      %v5587 = vunpack.c.l.b16 %v5276
      %v5588 = vunpack.c.h.b16 %v5276
      %v5589 = vunpack.c.l.b16 %v5277
      %v5590 = vunpack.c.h.b16 %v5277
      %v5591 = vunpack.c.l.b16 %v5278
      %v5592 = vunpack.c.h.b16 %v5278
      %v5593 = vunpack.c.l.b16 %v5279
      %v5594 = vunpack.c.h.b16 %v5279
      %v5595 = vunpack.c.l.b16 %v5280
      %v5596 = vunpack.c.h.b16 %v5280
      %v5597 = vunpack.c.l.b16 %v5281
      %v5598 = vunpack.c.h.b16 %v5281
      %v5599 = vunpack.c.l.b16 %v5282
      %v5600 = vunpack.c.h.b16 %v5282
      %v5601 = vunpack.c.l.b16 %v5283
      %v5602 = vunpack.c.h.b16 %v5283
      %v5603 = vunpack.c.l.b16 %v5284
      %v5604 = vunpack.c.h.b16 %v5284
      %v5605 = vunpack.c.l.b16 %v5285
      %v5606 = vunpack.c.h.b16 %v5285
      %v5607 = vunpack.c.l.b16 %v5286
      %v5608 = vunpack.c.h.b16 %v5286
      %v5609 = vunpack.c.l.b16 %v5287
      %v5610 = vunpack.c.h.b16 %v5287
      %v5611 = vunpack.c.l.b16 %v5288
      %v5612 = vunpack.c.h.b16 %v5288
      %v5613 = vunpack.c.l.b16 %v5289
      %v5614 = vunpack.c.h.b16 %v5289
      %v5615 = vunpack.c.l.b16 %v5290
      %v5616 = vunpack.c.h.b16 %v5290
      %v5617 = vunpack.c.l.b16 %v5291
      %v5618 = vunpack.c.h.b16 %v5291
      %v5619 = vunpack.c.l.b16 %v5292
      %v5620 = vunpack.c.h.b16 %v5292
      %v5621 = vunpack.c.l.b16 %v5293
      %v5622 = vunpack.c.h.b16 %v5293
      %v5623 = vunpack.c.l.b16 %v5294
      %v5624 = vunpack.c.h.b16 %v5294
      %v5625 = vunpack.c.l.b16 %v5295
      %v5626 = vunpack.c.h.b16 %v5295
      %v5627 = vunpack.c.l.b16 %v5296
      %v5628 = vunpack.c.h.b16 %v5296
      %v5629 = vunpack.c.l.b16 %v5297
      %v5630 = vunpack.c.h.b16 %v5297
      %v5631 = vunpack.c.l.b16 %v5298
      %v5632 = vunpack.c.h.b16 %v5298
      %v5633 = vunpack.c.l.b16 %v5299
      %v5634 = vunpack.c.h.b16 %v5299
      %v5635 = vunpack.c.l.b16 %v5300
      %v5636 = vunpack.c.h.b16 %v5300
      %v5637 = vunpack.c.l.b16 %v5301
      %v5638 = vunpack.c.h.b16 %v5301
      %v5639 = vunpack.c.l.b16 %v5302
      %v5640 = vunpack.c.h.b16 %v5302
      %v5641 = vunpack.c.l.b16 %v5303
      %v5642 = vunpack.c.h.b16 %v5303
      %v5643 = vunpack.c.l.b16 %v5304
      %v5644 = vunpack.c.h.b16 %v5304
      %v5645 = vunpack.c.l.b16 %v5305
      %v5646 = vunpack.c.h.b16 %v5305
      %v5647 = vunpack.c.l.b16 %v5306
      %v5648 = vunpack.c.h.b16 %v5306
      %v5649 = vunpack.c.l.b16 %v5307
      %v5650 = vunpack.c.h.b16 %v5307
      %v5651 = vunpack.c.l.b16 %v5308
      %v5652 = vunpack.c.h.b16 %v5308
      %v5653 = vunpack.c.l.b16 %v5309
      %v5654 = vunpack.c.h.b16 %v5309
      %v5655 = vunpack.c.l.b16 %v5310
      %v5656 = vunpack.c.h.b16 %v5310
      %v5657 = vunpack.c.l.b16 %v5311
      %v5658 = vunpack.c.h.b16 %v5311
      %v5659 = vunpack.c.l.b16 %v5312
      %v5660 = vunpack.c.h.b16 %v5312
      %v5661 = vunpack.c.l.b16 %v5313
      %v5662 = vunpack.c.h.b16 %v5313
      %v5663 = vunpack.c.l.b16 %v5314
      %v5664 = vunpack.c.h.b16 %v5314
      %v5665 = vunpack.c.l.b16 %v5315
      %v5666 = vunpack.c.h.b16 %v5315
      %v5667 = vunpack.c.l.b16 %v5316
      %v5668 = vunpack.c.h.b16 %v5316
      %v5669 = vunpack.c.l.b16 %v5317
      %v5670 = vunpack.c.h.b16 %v5317
      %v5671 = vunpack.c.l.b16 %v5318
      %v5672 = vunpack.c.h.b16 %v5318
      %v5673 = vunpack.c.l.b16 %v5319
      %v5674 = vunpack.c.h.b16 %v5319
      %v5675 = vunpack.c.l.b16 %v5320
      %v5676 = vunpack.c.h.b16 %v5320
      %v5677 = vunpack.c.l.b16 %v5321
      %v5678 = vunpack.c.h.b16 %v5321
      %v5679 = vunpack.c.l.b16 %v5322
      %v5680 = vunpack.c.h.b16 %v5322
      %v5681 = vunpack.c.l.b16 %v5323
      %v5682 = vunpack.c.h.b16 %v5323
      %v5683 = vunpack.c.l.b16 %v5324
      %v5684 = vunpack.c.h.b16 %v5324
      %v5685 = vunpack.c.l.b16 %v5325
      %v5686 = vunpack.c.h.b16 %v5325
      %v5687 = vunpack.c.l.b16 %v5326
      %v5688 = vunpack.c.h.b16 %v5326
      %v5689 = vunpack.c.l.b16 %v5327
      %v5690 = vunpack.c.h.b16 %v5327
      %v5691 = vunpack.c.l.b16 %v5328
      %v5692 = vunpack.c.h.b16 %v5328
      %v5693 = vunpack.c.l.b16 %v5329
      %v5694 = vunpack.c.h.b16 %v5329
      %v5695 = vunpack.c.l.b16 %v5330
      %v5696 = vunpack.c.h.b16 %v5330
      %v5697 = vunpack.c.l.b16 %v5331
      %v5698 = vunpack.c.h.b16 %v5331
      %v5699 = vunpack.c.l.b16 %v5332
      %v5700 = vunpack.c.h.b16 %v5332
      %v5701 = vunpack.c.l.b16 %v5333
      %v5702 = vunpack.c.h.b16 %v5333
      %v5703 = vunpack.c.l.b16 %v5334
      %v5704 = vunpack.c.h.b16 %v5334
      %v5705 = vunpack.c.l.b16 %v5335
      %v5706 = vunpack.c.h.b16 %v5335
      %v5707 = vunpack.c.l.b16 %v5336
      %v5708 = vunpack.c.h.b16 %v5336
      %v5709 = vunpack.c.l.b16 %v5337
      %v5710 = vunpack.c.h.b16 %v5337
      %v5711 = vunpack.c.l.b16 %v5338
      %v5712 = vunpack.c.h.b16 %v5338
      %v5713 = vunpack.c.l.b16 %v5339
      %v5714 = vunpack.c.h.b16 %v5339
      %v5715 = vunpack.c.l.b16 %v5340
      %v5716 = vunpack.c.h.b16 %v5340
      %v5717 = vunpack.c.l.b16 %v5341
      %v5718 = vunpack.c.h.b16 %v5341
      %v5719 = vunpack.c.l.b16 %v5342
      %v5720 = vunpack.c.h.b16 %v5342
      %v5721 = vunpack.c.l.b16 %v5343
      %v5722 = vunpack.c.h.b16 %v5343
      %v5723 = vunpack.c.l.b16 %v5344
      %v5724 = vunpack.c.h.b16 %v5344
      %v5725 = vunpack.c.l.b16 %v5345
      %v5726 = vunpack.c.h.b16 %v5345
      %v5727 = vunpack.c.l.b16 %v5346
      %v5728 = vunpack.c.h.b16 %v5346
      %v5729 = vunpack.c.l.b16 %v5347
      %v5730 = vunpack.c.h.b16 %v5347
      %v5731 = vunpack.c.l.b16 %v5348
      %v5732 = vunpack.c.h.b16 %v5348
      %v5733 = vpack.c.b16 %v5481, %v5477
      %v5734 = vpack.c.b16 %v5482, %v5478
      %v5735 = vpack.c.b16 %v5483, %v5479
      %v5736 = vpack.c.b16 %v5484, %v5480
      %v5737 = vpack.c.b16 %v5489, %v5485
      %v5738 = vpack.c.b16 %v5490, %v5486
      %v5739 = vpack.c.b16 %v5491, %v5487
      %v5740 = vpack.c.b16 %v5492, %v5488
      %v5741 = vpack.c.b16 %v5497, %v5493
      %v5742 = vpack.c.b16 %v5498, %v5494
      %v5743 = vpack.c.b16 %v5499, %v5495
      %v5744 = vpack.c.b16 %v5500, %v5496
      %v5745 = vpack.c.b16 %v5505, %v5501
      %v5746 = vpack.c.b16 %v5506, %v5502
      %v5747 = vpack.c.b16 %v5507, %v5503
      %v5748 = vpack.c.b16 %v5508, %v5504
      %v5749 = vpack.c.b16 %v5513, %v5509
      %v5750 = vpack.c.b16 %v5514, %v5510
      %v5751 = vpack.c.b16 %v5515, %v5511
      %v5752 = vpack.c.b16 %v5516, %v5512
      %v5753 = vpack.c.b16 %v5521, %v5517
      %v5754 = vpack.c.b16 %v5522, %v5518
      %v5755 = vpack.c.b16 %v5523, %v5519
      %v5756 = vpack.c.b16 %v5524, %v5520
      %v5757 = vpack.c.b16 %v5529, %v5525
      %v5758 = vpack.c.b16 %v5530, %v5526
      %v5759 = vpack.c.b16 %v5531, %v5527
      %v5760 = vpack.c.b16 %v5532, %v5528
      %v5761 = vpack.c.b16 %v5537, %v5533
      %v5762 = vpack.c.b16 %v5538, %v5534
      %v5763 = vpack.c.b16 %v5539, %v5535
      %v5764 = vpack.c.b16 %v5540, %v5536
      %v5765 = vpack.c.b16 %v5545, %v5541
      %v5766 = vpack.c.b16 %v5546, %v5542
      %v5767 = vpack.c.b16 %v5547, %v5543
      %v5768 = vpack.c.b16 %v5548, %v5544
      %v5769 = vpack.c.b16 %v5553, %v5549
      %v5770 = vpack.c.b16 %v5554, %v5550
      %v5771 = vpack.c.b16 %v5555, %v5551
      %v5772 = vpack.c.b16 %v5556, %v5552
      %v5773 = vpack.c.b16 %v5561, %v5557
      %v5774 = vpack.c.b16 %v5562, %v5558
      %v5775 = vpack.c.b16 %v5563, %v5559
      %v5776 = vpack.c.b16 %v5564, %v5560
      %v5777 = vpack.c.b16 %v5569, %v5565
      %v5778 = vpack.c.b16 %v5570, %v5566
      %v5779 = vpack.c.b16 %v5571, %v5567
      %v5780 = vpack.c.b16 %v5572, %v5568
      %v5781 = vpack.c.b16 %v5577, %v5573
      %v5782 = vpack.c.b16 %v5578, %v5574
      %v5783 = vpack.c.b16 %v5579, %v5575
      %v5784 = vpack.c.b16 %v5580, %v5576
      %v5785 = vpack.c.b16 %v5585, %v5581
      %v5786 = vpack.c.b16 %v5586, %v5582
      %v5787 = vpack.c.b16 %v5587, %v5583
      %v5788 = vpack.c.b16 %v5588, %v5584
      %v5789 = vpack.c.b16 %v5593, %v5589
      %v5790 = vpack.c.b16 %v5594, %v5590
      %v5791 = vpack.c.b16 %v5595, %v5591
      %v5792 = vpack.c.b16 %v5596, %v5592
      %v5793 = vpack.c.b16 %v5601, %v5597
      %v5794 = vpack.c.b16 %v5602, %v5598
      %v5795 = vpack.c.b16 %v5603, %v5599
      %v5796 = vpack.c.b16 %v5604, %v5600
      %v5797 = vpack.c.b16 %v5609, %v5605
      %v5798 = vpack.c.b16 %v5610, %v5606
      %v5799 = vpack.c.b16 %v5611, %v5607
      %v5800 = vpack.c.b16 %v5612, %v5608
      %v5801 = vpack.c.b16 %v5617, %v5613
      %v5802 = vpack.c.b16 %v5618, %v5614
      %v5803 = vpack.c.b16 %v5619, %v5615
      %v5804 = vpack.c.b16 %v5620, %v5616
      %v5805 = vpack.c.b16 %v5625, %v5621
      %v5806 = vpack.c.b16 %v5626, %v5622
      %v5807 = vpack.c.b16 %v5627, %v5623
      %v5808 = vpack.c.b16 %v5628, %v5624
      %v5809 = vpack.c.b16 %v5633, %v5629
      %v5810 = vpack.c.b16 %v5634, %v5630
      %v5811 = vpack.c.b16 %v5635, %v5631
      %v5812 = vpack.c.b16 %v5636, %v5632
      %v5813 = vpack.c.b16 %v5641, %v5637
      %v5814 = vpack.c.b16 %v5642, %v5638
      %v5815 = vpack.c.b16 %v5643, %v5639
      %v5816 = vpack.c.b16 %v5644, %v5640
      %v5817 = vpack.c.b16 %v5649, %v5645
      %v5818 = vpack.c.b16 %v5650, %v5646
      %v5819 = vpack.c.b16 %v5651, %v5647
      %v5820 = vpack.c.b16 %v5652, %v5648
      %v5821 = vpack.c.b16 %v5657, %v5653
      %v5822 = vpack.c.b16 %v5658, %v5654
      %v5823 = vpack.c.b16 %v5659, %v5655
      %v5824 = vpack.c.b16 %v5660, %v5656
      %v5825 = vpack.c.b16 %v5665, %v5661
      %v5826 = vpack.c.b16 %v5666, %v5662
      %v5827 = vpack.c.b16 %v5667, %v5663
      %v5828 = vpack.c.b16 %v5668, %v5664
      %v5829 = vpack.c.b16 %v5673, %v5669
      %v5830 = vpack.c.b16 %v5674, %v5670
      %v5831 = vpack.c.b16 %v5675, %v5671
      %v5832 = vpack.c.b16 %v5676, %v5672
      %v5833 = vpack.c.b16 %v5681, %v5677
      %v5834 = vpack.c.b16 %v5682, %v5678
      %v5835 = vpack.c.b16 %v5683, %v5679
      %v5836 = vpack.c.b16 %v5684, %v5680
      %v5837 = vpack.c.b16 %v5689, %v5685
      %v5838 = vpack.c.b16 %v5690, %v5686
      %v5839 = vpack.c.b16 %v5691, %v5687
      %v5840 = vpack.c.b16 %v5692, %v5688
      %v5841 = vpack.c.b16 %v5697, %v5693
      %v5842 = vpack.c.b16 %v5698, %v5694
      %v5843 = vpack.c.b16 %v5699, %v5695
      %v5844 = vpack.c.b16 %v5700, %v5696
      %v5845 = vpack.c.b16 %v5705, %v5701
      %v5846 = vpack.c.b16 %v5706, %v5702
      %v5847 = vpack.c.b16 %v5707, %v5703
      %v5848 = vpack.c.b16 %v5708, %v5704
      %v5849 = vpack.c.b16 %v5713, %v5709
      %v5850 = vpack.c.b16 %v5714, %v5710
      %v5851 = vpack.c.b16 %v5715, %v5711
      %v5852 = vpack.c.b16 %v5716, %v5712
      %v5853 = vpack.c.b16 %v5721, %v5717
      %v5854 = vpack.c.b16 %v5722, %v5718
      %v5855 = vpack.c.b16 %v5723, %v5719
      %v5856 = vpack.c.b16 %v5724, %v5720
      %v5857 = vpack.c.b16 %v5729, %v5725
      %v5858 = vpack.c.b16 %v5730, %v5726
      %v5859 = vpack.c.b16 %v5731, %v5727
      %v5860 = vpack.c.b16 %v5732, %v5728
      %5989 = vmatprep.subr.bf16.mxu0 %v5762
      %5990 = vmatpush1.bf16.msra.mxu0 %v5761
      %5991 = vmatprep.subr.bf16.mxu0 %v5758
      %5992 = vmatpush1.bf16.msra.mxu0 %v5757
      %5993 = vmatprep.subr.bf16.mxu0 %v5754
      %5994 = vmatpush1.bf16.msra.mxu0 %v5753
      %5995 = vmatprep.subr.bf16.mxu0 %v5750
      %5996 = vmatpush1.bf16.msra.mxu0 %v5749
      %5997 = vmatprep.subr.bf16.mxu0 %v5746
      %5998 = vmatpush1.bf16.msra.mxu0 %v5745
      %5999 = vmatprep.subr.bf16.mxu0 %v5742
      %6000 = vmatpush1.bf16.msra.mxu0 %v5741
      %6001 = vmatprep.subr.bf16.mxu0 %v5738
      %6002 = vmatpush1.bf16.msra.mxu0 %v5737
      %6003 = vmatprep.subr.bf16.mxu0 %v5734
      %6004 = vmatpush1.bf16.msra.mxu0 %v5733
      %6005 = vmatprep.subr.bf16.mxu0 %v5794
      %6006 = vmatpush2.bf16.msra.mxu0 %v5793
      %6007 = vmatprep.subr.bf16.mxu0 %v5790
      %6008 = vmatpush2.bf16.msra.mxu0 %v5789
      %6009 = vmatprep.subr.bf16.mxu0 %v5786
      %6010 = vmatpush2.bf16.msra.mxu0 %v5785
      %6011 = vmatprep.subr.bf16.mxu0 %v5782
      %6012 = vmatpush2.bf16.msra.mxu0 %v5781
      %6013 = vmatprep.subr.bf16.mxu0 %v5778
      %6014 = vmatpush2.bf16.msra.mxu0 %v5777
      %6015 = vmatprep.subr.bf16.mxu0 %v5774
      %6016 = vmatpush2.bf16.msra.mxu0 %v5773
      %6017 = vmatprep.subr.bf16.mxu0 %v5770
      %6018 = vmatpush2.bf16.msra.mxu0 %v5769
      %6019 = vmatprep.subr.bf16.mxu0 %v5766
      %6020 = vmatpush2.bf16.msra.mxu0 %v5765
      %6021 = vmatprep.mubr.bf16.mxu0 %v5218
      %6022 = vmatmul.mubr.bf16.gmra.mxu0 %v5217
      %v6023 = vpop.f32.mrf.mxu0
      %v6024 = vadd.f32 0.0, %v6023
      %v6025 = vpop.f32.mrf.mxu0
      %v6026 = vadd.f32 0.0, %v6025
      %v6027 = vpop.f32.mrf.mxu0
      %v6028 = vpop.f32.mrf.mxu0
      %6029 = vdwg.mxu0
      %6030 = vmatprep.subr.bf16.mxu0 %v5826
      %6031 = vmatpush1.bf16.msra.mxu0 %v5825
      %6032 = vmatprep.subr.bf16.mxu0 %v5822
      %6033 = vmatpush1.bf16.msra.mxu0 %v5821
      %6034 = vmatprep.subr.bf16.mxu0 %v5818
      %6035 = vmatpush1.bf16.msra.mxu0 %v5817
      %6036 = vmatprep.subr.bf16.mxu0 %v5814
      %6037 = vmatpush1.bf16.msra.mxu0 %v5813
      %6038 = vmatprep.subr.bf16.mxu0 %v5810
      %6039 = vmatpush1.bf16.msra.mxu0 %v5809
      %6040 = vmatprep.subr.bf16.mxu0 %v5806
      %6041 = vmatpush1.bf16.msra.mxu0 %v5805
      %6042 = vmatprep.subr.bf16.mxu0 %v5802
      %6043 = vmatpush1.bf16.msra.mxu0 %v5801
      %6044 = vmatprep.subr.bf16.mxu0 %v5798
      %6045 = vmatpush1.bf16.msra.mxu0 %v5797
      %6046 = vmatprep.subr.bf16.mxu0 %v5858
      %6047 = vmatpush2.bf16.msra.mxu0 %v5857
      %6048 = vmatprep.subr.bf16.mxu0 %v5854
      %6049 = vmatpush2.bf16.msra.mxu0 %v5853
      %6050 = vmatprep.subr.bf16.mxu0 %v5850
      %6051 = vmatpush2.bf16.msra.mxu0 %v5849
      %6052 = vmatprep.subr.bf16.mxu0 %v5846
      %6053 = vmatpush2.bf16.msra.mxu0 %v5845
      %6054 = vmatprep.subr.bf16.mxu0 %v5842
      %6055 = vmatpush2.bf16.msra.mxu0 %v5841
      %6056 = vmatprep.subr.bf16.mxu0 %v5838
      %6057 = vmatpush2.bf16.msra.mxu0 %v5837
      %6058 = vmatprep.subr.bf16.mxu0 %v5834
      %6059 = vmatpush2.bf16.msra.mxu0 %v5833
      %6060 = vmatprep.subr.bf16.mxu0 %v5830
      %6061 = vmatpush2.bf16.msra.mxu0 %v5829
      %6062 = vmatprep.mubr.bf16.mxu0 %v5220
      %6063 = vmatmul.mubr.bf16.gmra.mxu0 %v5219
      %v6064 = vpop.f32.mrf.mxu0
      %v6065 = vadd.f32 %v6024, %v6064
      %v6066 = vpop.f32.mrf.mxu0
      %v6067 = vadd.f32 %v6026, %v6066
      %v6068 = vpop.f32.mrf.mxu0
      %v6069 = vpop.f32.mrf.mxu0
      %6070 = vdwg.mxu0
      %6071 = vmatprep.subr.bf16.mxu0 %v5764
      %6072 = vmatpush1.bf16.msra.mxu0 %v5763
      %6073 = vmatprep.subr.bf16.mxu0 %v5760
      %6074 = vmatpush1.bf16.msra.mxu0 %v5759
      %6075 = vmatprep.subr.bf16.mxu0 %v5756
      %6076 = vmatpush1.bf16.msra.mxu0 %v5755
      %6077 = vmatprep.subr.bf16.mxu0 %v5752
      %6078 = vmatpush1.bf16.msra.mxu0 %v5751
      %6079 = vmatprep.subr.bf16.mxu0 %v5748
      %6080 = vmatpush1.bf16.msra.mxu0 %v5747
      %6081 = vmatprep.subr.bf16.mxu0 %v5744
      %6082 = vmatpush1.bf16.msra.mxu0 %v5743
      %6083 = vmatprep.subr.bf16.mxu0 %v5740
      %6084 = vmatpush1.bf16.msra.mxu0 %v5739
      %6085 = vmatprep.subr.bf16.mxu0 %v5736
      %6086 = vmatpush1.bf16.msra.mxu0 %v5735
      %6087 = vmatprep.subr.bf16.mxu0 %v5796
      %6088 = vmatpush2.bf16.msra.mxu0 %v5795
      %6089 = vmatprep.subr.bf16.mxu0 %v5792
      %6090 = vmatpush2.bf16.msra.mxu0 %v5791
      %6091 = vmatprep.subr.bf16.mxu0 %v5788
      %6092 = vmatpush2.bf16.msra.mxu0 %v5787
      %6093 = vmatprep.subr.bf16.mxu0 %v5784
      %6094 = vmatpush2.bf16.msra.mxu0 %v5783
      %6095 = vmatprep.subr.bf16.mxu0 %v5780
      %6096 = vmatpush2.bf16.msra.mxu0 %v5779
      %6097 = vmatprep.subr.bf16.mxu0 %v5776
      %6098 = vmatpush2.bf16.msra.mxu0 %v5775
      %6099 = vmatprep.subr.bf16.mxu0 %v5772
      %6100 = vmatpush2.bf16.msra.mxu0 %v5771
      %6101 = vmatprep.subr.bf16.mxu0 %v5768
      %6102 = vmatpush2.bf16.msra.mxu0 %v5767
      %6103 = vmatprep.mubr.bf16.mxu0 %v5218
      %6104 = vmatmul.mubr.bf16.gmra.mxu0 %v5217
      %v6105 = vpop.f32.mrf.mxu0
      %v6106 = vadd.f32 0.0, %v6105
      %v6107 = vpop.f32.mrf.mxu0
      %v6108 = vadd.f32 0.0, %v6107
      %v6109 = vpop.f32.mrf.mxu0
      %v6110 = vpop.f32.mrf.mxu0
      %6111 = vdwg.mxu0
      %6112 = vmatprep.subr.bf16.mxu0 %v5828
      %6113 = vmatpush1.bf16.msra.mxu0 %v5827
      %6114 = vmatprep.subr.bf16.mxu0 %v5824
      %6115 = vmatpush1.bf16.msra.mxu0 %v5823
      %6116 = vmatprep.subr.bf16.mxu0 %v5820
      %6117 = vmatpush1.bf16.msra.mxu0 %v5819
      %6118 = vmatprep.subr.bf16.mxu0 %v5816
      %6119 = vmatpush1.bf16.msra.mxu0 %v5815
      %6120 = vmatprep.subr.bf16.mxu0 %v5812
      %6121 = vmatpush1.bf16.msra.mxu0 %v5811
      %6122 = vmatprep.subr.bf16.mxu0 %v5808
      %6123 = vmatpush1.bf16.msra.mxu0 %v5807
      %6124 = vmatprep.subr.bf16.mxu0 %v5804
      %6125 = vmatpush1.bf16.msra.mxu0 %v5803
      %6126 = vmatprep.subr.bf16.mxu0 %v5800
      %6127 = vmatpush1.bf16.msra.mxu0 %v5799
      %6128 = vmatprep.subr.bf16.mxu0 %v5860
      %6129 = vmatpush2.bf16.msra.mxu0 %v5859
      %6130 = vmatprep.subr.bf16.mxu0 %v5856
      %6131 = vmatpush2.bf16.msra.mxu0 %v5855
      %6132 = vmatprep.subr.bf16.mxu0 %v5852
      %6133 = vmatpush2.bf16.msra.mxu0 %v5851
      %6134 = vmatprep.subr.bf16.mxu0 %v5848
      %6135 = vmatpush2.bf16.msra.mxu0 %v5847
      %6136 = vmatprep.subr.bf16.mxu0 %v5844
      %6137 = vmatpush2.bf16.msra.mxu0 %v5843
      %6138 = vmatprep.subr.bf16.mxu0 %v5840
      %6139 = vmatpush2.bf16.msra.mxu0 %v5839
      %6140 = vmatprep.subr.bf16.mxu0 %v5836
      %6141 = vmatpush2.bf16.msra.mxu0 %v5835
      %6142 = vmatprep.subr.bf16.mxu0 %v5832
      %6143 = vmatpush2.bf16.msra.mxu0 %v5831
      %6144 = vmatprep.mubr.bf16.mxu0 %v5220
      %6145 = vmatmul.mubr.bf16.gmra.mxu0 %v5219
      %v6146 = vpop.f32.mrf.mxu0
      %v6147 = vadd.f32 %v6106, %v6146
      %v6148 = vpop.f32.mrf.mxu0
      %v6149 = vadd.f32 %v6108, %v6148
      %v6150 = vpop.f32.mrf.mxu0
      %v6151 = vpop.f32.mrf.mxu0
      %6152 = vdwg.mxu0
      %v6153 = vld [vmem:[%s6] sm:$0xf]
      %v6154 = vld [vmem:[%s7] sm:$0xf]
      %v6155 = vrot.slane %v6065, 4
      %v6156 = vadd.f32 %v6065, %v6155
      %v6157 = vrot.slane %v6156, 2
      %v6158 = vadd.f32 %v6156, %v6157
      %v6159 = vrot.slane %v6158, 1
      %v6160 = vadd.f32 %v6158, %v6159
      %v6161 = vrot.slane %v6067, 4
      %v6162 = vadd.f32 %v6067, %v6161
      %v6163 = vrot.slane %v6162, 2
      %v6164 = vadd.f32 %v6162, %v6163
      %v6165 = vrot.slane %v6164, 1
      %v6166 = vadd.f32 %v6164, %v6165
      %v6167 = vrot.slane %v6147, 4
      %v6168 = vadd.f32 %v6147, %v6167
      %v6169 = vrot.slane %v6168, 2
      %v6170 = vadd.f32 %v6168, %v6169
      %v6171 = vrot.slane %v6170, 1
      %v6172 = vadd.f32 %v6170, %v6171
      %v6173 = vrot.slane %v6149, 4
      %v6174 = vadd.f32 %v6149, %v6173
      %v6175 = vrot.slane %v6174, 2
      %v6176 = vadd.f32 %v6174, %v6175
      %v6177 = vrot.slane %v6176, 1
      %v6178 = vadd.f32 %v6176, %v6177
      %v6179 = vmul.f32 %v6160, %v5110
      %v6180 = vmul.f32 %v6166, %v5110
      %v6181 = vmul.f32 %v6172, %v5110
      %v6182 = vmul.f32 %v6178, %v5110
      %v6183 = vsub.f32 %v6065, %v6179
      %v6184 = vsub.f32 %v6067, %v6180
      %v6185 = vsub.f32 %v6147, %v6181
      %v6186 = vsub.f32 %v6149, %v6182
      %v6187 = vmul.f32 %v6183, %v6183
      %v6188 = vmul.f32 %v6184, %v6184
      %v6189 = vmul.f32 %v6185, %v6185
      %v6190 = vmul.f32 %v6186, %v6186
      %v6191 = vrot.slane %v6187, 4
      %v6192 = vadd.f32 %v6187, %v6191
      %v6193 = vrot.slane %v6192, 2
      %v6194 = vadd.f32 %v6192, %v6193
      %v6195 = vrot.slane %v6194, 1
      %v6196 = vadd.f32 %v6194, %v6195
      %v6197 = vrot.slane %v6188, 4
      %v6198 = vadd.f32 %v6188, %v6197
      %v6199 = vrot.slane %v6198, 2
      %v6200 = vadd.f32 %v6198, %v6199
      %v6201 = vrot.slane %v6200, 1
      %v6202 = vadd.f32 %v6200, %v6201
      %v6203 = vrot.slane %v6189, 4
      %v6204 = vadd.f32 %v6189, %v6203
      %v6205 = vrot.slane %v6204, 2
      %v6206 = vadd.f32 %v6204, %v6205
      %v6207 = vrot.slane %v6206, 1
      %v6208 = vadd.f32 %v6206, %v6207
      %v6209 = vrot.slane %v6190, 4
      %v6210 = vadd.f32 %v6190, %v6209
      %v6211 = vrot.slane %v6210, 2
      %v6212 = vadd.f32 %v6210, %v6211
      %v6213 = vrot.slane %v6212, 1
      %v6214 = vadd.f32 %v6212, %v6213
      %v6215 = vmul.f32 %v6196, %v5110
      %v6216 = vmul.f32 %v6202, %v5110
      %v6217 = vmul.f32 %v6208, %v5110
      %v6218 = vmul.f32 %v6214, %v5110
      %v6219 = vadd.f32 %v6215, 1e-05
      %v6220 = vadd.f32 %v6216, 1e-05
      %v6221 = vadd.f32 %v6217, 1e-05
      %v6222 = vadd.f32 %v6218, 1e-05
      %v6223 = vrsqrt.pop %v6219
      %v6224 = vrsqrt.pop %v6220
      %v6225 = vrsqrt.pop %v6221
      %v6226 = vrsqrt.pop %v6222
      %v6227 = vmul.f32 %v6183, %v6223
      %v6228 = vmul.f32 %v6184, %v6224
      %v6229 = vmul.f32 %v6185, %v6225
      %v6230 = vmul.f32 %v6186, %v6226
      %v6232 = vlaneseq
      %v6233 = vshrl.u32 %v6232, 7
      %v6234 = vsub.s32 0, %v6233
      %v6235 = vrot.slane %v6153, %v6234
      %v6236 = vlaneseq
      %v6237 = vshrl.u32 %v6236, 7
      %v6238 = vsub.s32 1, %v6237
      %v6239 = vrot.slane %v6153, %v6238
      %v6240 = vlaneseq
      %v6241 = vshrl.u32 %v6240, 7
      %v6242 = vsub.s32 2, %v6241
      %v6243 = vrot.slane %v6153, %v6242
      %v6244 = vlaneseq
      %v6245 = vshrl.u32 %v6244, 7
      %v6246 = vsub.s32 3, %v6245
      %v6247 = vrot.slane %v6153, %v6246
      %v6252 = vmul.f32 %v6227, %v6235
      %v6253 = vmul.f32 %v6228, %v6239
      %v6254 = vmul.f32 %v6229, %v6243
      %v6255 = vmul.f32 %v6230, %v6247
      %v6257 = vlaneseq
      %v6258 = vshrl.u32 %v6257, 7
      %v6259 = vsub.s32 0, %v6258
      %v6260 = vrot.slane %v6154, %v6259
      %v6261 = vlaneseq
      %v6262 = vshrl.u32 %v6261, 7
      %v6263 = vsub.s32 1, %v6262
      %v6264 = vrot.slane %v6154, %v6263
      %v6265 = vlaneseq
      %v6266 = vshrl.u32 %v6265, 7
      %v6267 = vsub.s32 2, %v6266
      %v6268 = vrot.slane %v6154, %v6267
      %v6269 = vlaneseq
      %v6270 = vshrl.u32 %v6269, 7
      %v6271 = vsub.s32 3, %v6270
      %v6272 = vrot.slane %v6154, %v6271
      %v6277 = vadd.f32 %v6252, %v6260
      %v6278 = vadd.f32 %v6253, %v6264
      %v6279 = vadd.f32 %v6254, %v6268
      %v6280 = vadd.f32 %v6255, %v6272
      %v6281 = vmax.f32 %v6277, 0.0
      %v6282 = vmax.f32 %v6278, 0.0
      %v6283 = vmax.f32 %v6279, 0.0
      %v6284 = vmax.f32 %v6280, 0.0
      %v6285 = vpack.c.bf16 %v6281, %v6281
      %v6286 = vpack.c.bf16 %v6282, %v6282
      %v6287 = vpack.c.bf16 %v6283, %v6283
      %v6288 = vpack.c.bf16 %v6284, %v6284
      %v6289 = vld [vmem:[#allocation7] sm:$0xff]
      %v6290 = vld [vmem:[#allocation7 + $0x8] sm:$0xff]
      %v6291 = vld [vmem:[#allocation7 + $0x10] sm:$0xff]
      %v6292 = vld [vmem:[#allocation7 + $0x18] sm:$0xff]
      %v6293 = vld [vmem:[#allocation7 + $0x20] sm:$0xff]
      %v6294 = vld [vmem:[#allocation7 + $0x28] sm:$0xff]
      %v6295 = vld [vmem:[#allocation7 + $0x30] sm:$0xff]
      %v6296 = vld [vmem:[#allocation7 + $0x38] sm:$0xff]
      %v6297 = vld [vmem:[#allocation7 + $0x40] sm:$0xff]
      %v6298 = vld [vmem:[#allocation7 + $0x48] sm:$0xff]
      %v6299 = vld [vmem:[#allocation7 + $0x50] sm:$0xff]
      %v6300 = vld [vmem:[#allocation7 + $0x58] sm:$0xff]
      %v6301 = vld [vmem:[#allocation7 + $0x60] sm:$0xff]
      %v6302 = vld [vmem:[#allocation7 + $0x68] sm:$0xff]
      %v6303 = vld [vmem:[#allocation7 + $0x70] sm:$0xff]
      %v6304 = vld [vmem:[#allocation7 + $0x78] sm:$0xff]
      %v6305 = vld [vmem:[#allocation7 + $0x80] sm:$0xff]
      %v6306 = vld [vmem:[#allocation7 + $0x88] sm:$0xff]
      %v6307 = vld [vmem:[#allocation7 + $0x90] sm:$0xff]
      %v6308 = vld [vmem:[#allocation7 + $0x98] sm:$0xff]
      %v6309 = vld [vmem:[#allocation7 + $0xa0] sm:$0xff]
      %v6310 = vld [vmem:[#allocation7 + $0xa8] sm:$0xff]
      %v6311 = vld [vmem:[#allocation7 + $0xb0] sm:$0xff]
      %v6312 = vld [vmem:[#allocation7 + $0xb8] sm:$0xff]
      %v6313 = vld [vmem:[#allocation7 + $0xc0] sm:$0xff]
      %v6314 = vld [vmem:[#allocation7 + $0xc8] sm:$0xff]
      %v6315 = vld [vmem:[#allocation7 + $0xd0] sm:$0xff]
      %v6316 = vld [vmem:[#allocation7 + $0xd8] sm:$0xff]
      %v6317 = vld [vmem:[#allocation7 + $0xe0] sm:$0xff]
      %v6318 = vld [vmem:[#allocation7 + $0xe8] sm:$0xff]
      %v6319 = vld [vmem:[#allocation7 + $0xf0] sm:$0xff]
      %v6320 = vld [vmem:[#allocation7 + $0xf8] sm:$0xff]
      %v6321 = vld [vmem:[#allocation7 + $0x100] sm:$0xff]
      %v6322 = vld [vmem:[#allocation7 + $0x108] sm:$0xff]
      %v6323 = vld [vmem:[#allocation7 + $0x110] sm:$0xff]
      %v6324 = vld [vmem:[#allocation7 + $0x118] sm:$0xff]
      %v6325 = vld [vmem:[#allocation7 + $0x120] sm:$0xff]
      %v6326 = vld [vmem:[#allocation7 + $0x128] sm:$0xff]
      %v6327 = vld [vmem:[#allocation7 + $0x130] sm:$0xff]
      %v6328 = vld [vmem:[#allocation7 + $0x138] sm:$0xff]
      %v6329 = vld [vmem:[#allocation7 + $0x140] sm:$0xff]
      %v6330 = vld [vmem:[#allocation7 + $0x148] sm:$0xff]
      %v6331 = vld [vmem:[#allocation7 + $0x150] sm:$0xff]
      %v6332 = vld [vmem:[#allocation7 + $0x158] sm:$0xff]
      %v6333 = vld [vmem:[#allocation7 + $0x160] sm:$0xff]
      %v6334 = vld [vmem:[#allocation7 + $0x168] sm:$0xff]
      %v6335 = vld [vmem:[#allocation7 + $0x170] sm:$0xff]
      %v6336 = vld [vmem:[#allocation7 + $0x178] sm:$0xff]
      %v6337 = vld [vmem:[#allocation7 + $0x180] sm:$0xff]
      %v6338 = vld [vmem:[#allocation7 + $0x188] sm:$0xff]
      %v6339 = vld [vmem:[#allocation7 + $0x190] sm:$0xff]
      %v6340 = vld [vmem:[#allocation7 + $0x198] sm:$0xff]
      %v6341 = vld [vmem:[#allocation7 + $0x1a0] sm:$0xff]
      %v6342 = vld [vmem:[#allocation7 + $0x1a8] sm:$0xff]
      %v6343 = vld [vmem:[#allocation7 + $0x1b0] sm:$0xff]
      %v6344 = vld [vmem:[#allocation7 + $0x1b8] sm:$0xff]
      %v6345 = vld [vmem:[#allocation7 + $0x1c0] sm:$0xff]
      %v6346 = vld [vmem:[#allocation7 + $0x1c8] sm:$0xff]
      %v6347 = vld [vmem:[#allocation7 + $0x1d0] sm:$0xff]
      %v6348 = vld [vmem:[#allocation7 + $0x1d8] sm:$0xff]
      %v6349 = vld [vmem:[#allocation7 + $0x1e0] sm:$0xff]
      %v6350 = vld [vmem:[#allocation7 + $0x1e8] sm:$0xff]
      %v6351 = vld [vmem:[#allocation7 + $0x1f0] sm:$0xff]
      %v6352 = vld [vmem:[#allocation7 + $0x1f8] sm:$0xff]
      %v6417 = vunpack.c.l.b16 %v6289
      %v6418 = vunpack.c.h.b16 %v6289
      %v6419 = vunpack.c.l.b16 %v6290
      %v6420 = vunpack.c.h.b16 %v6290
      %v6421 = vunpack.c.l.b16 %v6291
      %v6422 = vunpack.c.h.b16 %v6291
      %v6423 = vunpack.c.l.b16 %v6292
      %v6424 = vunpack.c.h.b16 %v6292
      %v6425 = vunpack.c.l.b16 %v6293
      %v6426 = vunpack.c.h.b16 %v6293
      %v6427 = vunpack.c.l.b16 %v6294
      %v6428 = vunpack.c.h.b16 %v6294
      %v6429 = vunpack.c.l.b16 %v6295
      %v6430 = vunpack.c.h.b16 %v6295
      %v6431 = vunpack.c.l.b16 %v6296
      %v6432 = vunpack.c.h.b16 %v6296
      %v6433 = vunpack.c.l.b16 %v6297
      %v6434 = vunpack.c.h.b16 %v6297
      %v6435 = vunpack.c.l.b16 %v6298
      %v6436 = vunpack.c.h.b16 %v6298
      %v6437 = vunpack.c.l.b16 %v6299
      %v6438 = vunpack.c.h.b16 %v6299
      %v6439 = vunpack.c.l.b16 %v6300
      %v6440 = vunpack.c.h.b16 %v6300
      %v6441 = vunpack.c.l.b16 %v6301
      %v6442 = vunpack.c.h.b16 %v6301
      %v6443 = vunpack.c.l.b16 %v6302
      %v6444 = vunpack.c.h.b16 %v6302
      %v6445 = vunpack.c.l.b16 %v6303
      %v6446 = vunpack.c.h.b16 %v6303
      %v6447 = vunpack.c.l.b16 %v6304
      %v6448 = vunpack.c.h.b16 %v6304
      %v6449 = vunpack.c.l.b16 %v6305
      %v6450 = vunpack.c.h.b16 %v6305
      %v6451 = vunpack.c.l.b16 %v6306
      %v6452 = vunpack.c.h.b16 %v6306
      %v6453 = vunpack.c.l.b16 %v6307
      %v6454 = vunpack.c.h.b16 %v6307
      %v6455 = vunpack.c.l.b16 %v6308
      %v6456 = vunpack.c.h.b16 %v6308
      %v6457 = vunpack.c.l.b16 %v6309
      %v6458 = vunpack.c.h.b16 %v6309
      %v6459 = vunpack.c.l.b16 %v6310
      %v6460 = vunpack.c.h.b16 %v6310
      %v6461 = vunpack.c.l.b16 %v6311
      %v6462 = vunpack.c.h.b16 %v6311
      %v6463 = vunpack.c.l.b16 %v6312
      %v6464 = vunpack.c.h.b16 %v6312
      %v6465 = vunpack.c.l.b16 %v6313
      %v6466 = vunpack.c.h.b16 %v6313
      %v6467 = vunpack.c.l.b16 %v6314
      %v6468 = vunpack.c.h.b16 %v6314
      %v6469 = vunpack.c.l.b16 %v6315
      %v6470 = vunpack.c.h.b16 %v6315
      %v6471 = vunpack.c.l.b16 %v6316
      %v6472 = vunpack.c.h.b16 %v6316
      %v6473 = vunpack.c.l.b16 %v6317
      %v6474 = vunpack.c.h.b16 %v6317
      %v6475 = vunpack.c.l.b16 %v6318
      %v6476 = vunpack.c.h.b16 %v6318
      %v6477 = vunpack.c.l.b16 %v6319
      %v6478 = vunpack.c.h.b16 %v6319
      %v6479 = vunpack.c.l.b16 %v6320
      %v6480 = vunpack.c.h.b16 %v6320
      %v6481 = vunpack.c.l.b16 %v6321
      %v6482 = vunpack.c.h.b16 %v6321
      %v6483 = vunpack.c.l.b16 %v6322
      %v6484 = vunpack.c.h.b16 %v6322
      %v6485 = vunpack.c.l.b16 %v6323
      %v6486 = vunpack.c.h.b16 %v6323
      %v6487 = vunpack.c.l.b16 %v6324
      %v6488 = vunpack.c.h.b16 %v6324
      %v6489 = vunpack.c.l.b16 %v6325
      %v6490 = vunpack.c.h.b16 %v6325
      %v6491 = vunpack.c.l.b16 %v6326
      %v6492 = vunpack.c.h.b16 %v6326
      %v6493 = vunpack.c.l.b16 %v6327
      %v6494 = vunpack.c.h.b16 %v6327
      %v6495 = vunpack.c.l.b16 %v6328
      %v6496 = vunpack.c.h.b16 %v6328
      %v6497 = vunpack.c.l.b16 %v6329
      %v6498 = vunpack.c.h.b16 %v6329
      %v6499 = vunpack.c.l.b16 %v6330
      %v6500 = vunpack.c.h.b16 %v6330
      %v6501 = vunpack.c.l.b16 %v6331
      %v6502 = vunpack.c.h.b16 %v6331
      %v6503 = vunpack.c.l.b16 %v6332
      %v6504 = vunpack.c.h.b16 %v6332
      %v6505 = vunpack.c.l.b16 %v6333
      %v6506 = vunpack.c.h.b16 %v6333
      %v6507 = vunpack.c.l.b16 %v6334
      %v6508 = vunpack.c.h.b16 %v6334
      %v6509 = vunpack.c.l.b16 %v6335
      %v6510 = vunpack.c.h.b16 %v6335
      %v6511 = vunpack.c.l.b16 %v6336
      %v6512 = vunpack.c.h.b16 %v6336
      %v6513 = vunpack.c.l.b16 %v6337
      %v6514 = vunpack.c.h.b16 %v6337
      %v6515 = vunpack.c.l.b16 %v6338
      %v6516 = vunpack.c.h.b16 %v6338
      %v6517 = vunpack.c.l.b16 %v6339
      %v6518 = vunpack.c.h.b16 %v6339
      %v6519 = vunpack.c.l.b16 %v6340
      %v6520 = vunpack.c.h.b16 %v6340
      %v6521 = vunpack.c.l.b16 %v6341
      %v6522 = vunpack.c.h.b16 %v6341
      %v6523 = vunpack.c.l.b16 %v6342
      %v6524 = vunpack.c.h.b16 %v6342
      %v6525 = vunpack.c.l.b16 %v6343
      %v6526 = vunpack.c.h.b16 %v6343
      %v6527 = vunpack.c.l.b16 %v6344
      %v6528 = vunpack.c.h.b16 %v6344
      %v6529 = vunpack.c.l.b16 %v6345
      %v6530 = vunpack.c.h.b16 %v6345
      %v6531 = vunpack.c.l.b16 %v6346
      %v6532 = vunpack.c.h.b16 %v6346
      %v6533 = vunpack.c.l.b16 %v6347
      %v6534 = vunpack.c.h.b16 %v6347
      %v6535 = vunpack.c.l.b16 %v6348
      %v6536 = vunpack.c.h.b16 %v6348
      %v6537 = vunpack.c.l.b16 %v6349
      %v6538 = vunpack.c.h.b16 %v6349
      %v6539 = vunpack.c.l.b16 %v6350
      %v6540 = vunpack.c.h.b16 %v6350
      %v6541 = vunpack.c.l.b16 %v6351
      %v6542 = vunpack.c.h.b16 %v6351
      %v6543 = vunpack.c.l.b16 %v6352
      %v6544 = vunpack.c.h.b16 %v6352
      %v6545 = vpack.c.b16 %v6419, %v6417
      %v6546 = vpack.c.b16 %v6420, %v6418
      %v6547 = vpack.c.b16 %v6423, %v6421
      %v6548 = vpack.c.b16 %v6424, %v6422
      %v6549 = vpack.c.b16 %v6427, %v6425
      %v6550 = vpack.c.b16 %v6428, %v6426
      %v6551 = vpack.c.b16 %v6431, %v6429
      %v6552 = vpack.c.b16 %v6432, %v6430
      %v6553 = vpack.c.b16 %v6435, %v6433
      %v6554 = vpack.c.b16 %v6436, %v6434
      %v6555 = vpack.c.b16 %v6439, %v6437
      %v6556 = vpack.c.b16 %v6440, %v6438
      %v6557 = vpack.c.b16 %v6443, %v6441
      %v6558 = vpack.c.b16 %v6444, %v6442
      %v6559 = vpack.c.b16 %v6447, %v6445
      %v6560 = vpack.c.b16 %v6448, %v6446
      %v6561 = vpack.c.b16 %v6451, %v6449
      %v6562 = vpack.c.b16 %v6452, %v6450
      %v6563 = vpack.c.b16 %v6455, %v6453
      %v6564 = vpack.c.b16 %v6456, %v6454
      %v6565 = vpack.c.b16 %v6459, %v6457
      %v6566 = vpack.c.b16 %v6460, %v6458
      %v6567 = vpack.c.b16 %v6463, %v6461
      %v6568 = vpack.c.b16 %v6464, %v6462
      %v6569 = vpack.c.b16 %v6467, %v6465
      %v6570 = vpack.c.b16 %v6468, %v6466
      %v6571 = vpack.c.b16 %v6471, %v6469
      %v6572 = vpack.c.b16 %v6472, %v6470
      %v6573 = vpack.c.b16 %v6475, %v6473
      %v6574 = vpack.c.b16 %v6476, %v6474
      %v6575 = vpack.c.b16 %v6479, %v6477
      %v6576 = vpack.c.b16 %v6480, %v6478
      %v6577 = vpack.c.b16 %v6483, %v6481
      %v6578 = vpack.c.b16 %v6484, %v6482
      %v6579 = vpack.c.b16 %v6487, %v6485
      %v6580 = vpack.c.b16 %v6488, %v6486
      %v6581 = vpack.c.b16 %v6491, %v6489
      %v6582 = vpack.c.b16 %v6492, %v6490
      %v6583 = vpack.c.b16 %v6495, %v6493
      %v6584 = vpack.c.b16 %v6496, %v6494
      %v6585 = vpack.c.b16 %v6499, %v6497
      %v6586 = vpack.c.b16 %v6500, %v6498
      %v6587 = vpack.c.b16 %v6503, %v6501
      %v6588 = vpack.c.b16 %v6504, %v6502
      %v6589 = vpack.c.b16 %v6507, %v6505
      %v6590 = vpack.c.b16 %v6508, %v6506
      %v6591 = vpack.c.b16 %v6511, %v6509
      %v6592 = vpack.c.b16 %v6512, %v6510
      %v6593 = vpack.c.b16 %v6515, %v6513
      %v6594 = vpack.c.b16 %v6516, %v6514
      %v6595 = vpack.c.b16 %v6519, %v6517
      %v6596 = vpack.c.b16 %v6520, %v6518
      %v6597 = vpack.c.b16 %v6523, %v6521
      %v6598 = vpack.c.b16 %v6524, %v6522
      %v6599 = vpack.c.b16 %v6527, %v6525
      %v6600 = vpack.c.b16 %v6528, %v6526
      %v6601 = vpack.c.b16 %v6531, %v6529
      %v6602 = vpack.c.b16 %v6532, %v6530
      %v6603 = vpack.c.b16 %v6535, %v6533
      %v6604 = vpack.c.b16 %v6536, %v6534
      %v6605 = vpack.c.b16 %v6539, %v6537
      %v6606 = vpack.c.b16 %v6540, %v6538
      %v6607 = vpack.c.b16 %v6543, %v6541
      %v6608 = vpack.c.b16 %v6544, %v6542
      %6673 = vmatprep.subr.bf16.mxu0 %v6560
      %6674 = vmatpush1.bf16.msra.mxu0 %v6559
      %6675 = vmatprep.subr.bf16.mxu0 %v6558
      %6676 = vmatpush1.bf16.msra.mxu0 %v6557
      %6677 = vmatprep.subr.bf16.mxu0 %v6556
      %6678 = vmatpush1.bf16.msra.mxu0 %v6555
      %6679 = vmatprep.subr.bf16.mxu0 %v6554
      %6680 = vmatpush1.bf16.msra.mxu0 %v6553
      %6681 = vmatprep.subr.bf16.mxu0 %v6552
      %6682 = vmatpush1.bf16.msra.mxu0 %v6551
      %6683 = vmatprep.subr.bf16.mxu0 %v6550
      %6684 = vmatpush1.bf16.msra.mxu0 %v6549
      %6685 = vmatprep.subr.bf16.mxu0 %v6548
      %6686 = vmatpush1.bf16.msra.mxu0 %v6547
      %6687 = vmatprep.subr.bf16.mxu0 %v6546
      %6688 = vmatpush1.bf16.msra.mxu0 %v6545
      %6689 = vmatprep.subr.bf16.mxu0 %v6576
      %6690 = vmatpush2.bf16.msra.mxu0 %v6575
      %6691 = vmatprep.subr.bf16.mxu0 %v6574
      %6692 = vmatpush2.bf16.msra.mxu0 %v6573
      %6693 = vmatprep.subr.bf16.mxu0 %v6572
      %6694 = vmatpush2.bf16.msra.mxu0 %v6571
      %6695 = vmatprep.subr.bf16.mxu0 %v6570
      %6696 = vmatpush2.bf16.msra.mxu0 %v6569
      %6697 = vmatprep.subr.bf16.mxu0 %v6568
      %6698 = vmatpush2.bf16.msra.mxu0 %v6567
      %6699 = vmatprep.subr.bf16.mxu0 %v6566
      %6700 = vmatpush2.bf16.msra.mxu0 %v6565
      %6701 = vmatprep.subr.bf16.mxu0 %v6564
      %6702 = vmatpush2.bf16.msra.mxu0 %v6563
      %6703 = vmatprep.subr.bf16.mxu0 %v6562
      %6704 = vmatpush2.bf16.msra.mxu0 %v6561
      %6705 = vmatprep.mubr.bf16.mxu0 %v6286
      %6706 = vmatmul.mubr.bf16.gmra.mxu0 %v6285
      %v6707 = vpop.f32.mrf.mxu0
      %v6708 = vadd.f32 0.0, %v6707
      %v6709 = vpop.f32.mrf.mxu0
      %v6710 = vadd.f32 0.0, %v6709
      %v6711 = vpop.f32.mrf.mxu0
      %v6712 = vpop.f32.mrf.mxu0
      %6713 = vdwg.mxu0
      %6714 = vmatprep.subr.bf16.mxu0 %v6592
      %6715 = vmatpush1.bf16.msra.mxu0 %v6591
      %6716 = vmatprep.subr.bf16.mxu0 %v6590
      %6717 = vmatpush1.bf16.msra.mxu0 %v6589
      %6718 = vmatprep.subr.bf16.mxu0 %v6588
      %6719 = vmatpush1.bf16.msra.mxu0 %v6587
      %6720 = vmatprep.subr.bf16.mxu0 %v6586
      %6721 = vmatpush1.bf16.msra.mxu0 %v6585
      %6722 = vmatprep.subr.bf16.mxu0 %v6584
      %6723 = vmatpush1.bf16.msra.mxu0 %v6583
      %6724 = vmatprep.subr.bf16.mxu0 %v6582
      %6725 = vmatpush1.bf16.msra.mxu0 %v6581
      %6726 = vmatprep.subr.bf16.mxu0 %v6580
      %6727 = vmatpush1.bf16.msra.mxu0 %v6579
      %6728 = vmatprep.subr.bf16.mxu0 %v6578
      %6729 = vmatpush1.bf16.msra.mxu0 %v6577
      %6730 = vmatprep.subr.bf16.mxu0 %v6608
      %6731 = vmatpush2.bf16.msra.mxu0 %v6607
      %6732 = vmatprep.subr.bf16.mxu0 %v6606
      %6733 = vmatpush2.bf16.msra.mxu0 %v6605
      %6734 = vmatprep.subr.bf16.mxu0 %v6604
      %6735 = vmatpush2.bf16.msra.mxu0 %v6603
      %6736 = vmatprep.subr.bf16.mxu0 %v6602
      %6737 = vmatpush2.bf16.msra.mxu0 %v6601
      %6738 = vmatprep.subr.bf16.mxu0 %v6600
      %6739 = vmatpush2.bf16.msra.mxu0 %v6599
      %6740 = vmatprep.subr.bf16.mxu0 %v6598
      %6741 = vmatpush2.bf16.msra.mxu0 %v6597
      %6742 = vmatprep.subr.bf16.mxu0 %v6596
      %6743 = vmatpush2.bf16.msra.mxu0 %v6595
      %6744 = vmatprep.subr.bf16.mxu0 %v6594
      %6745 = vmatpush2.bf16.msra.mxu0 %v6593
      %6746 = vmatprep.mubr.bf16.mxu0 %v6288
      %6747 = vmatmul.mubr.bf16.gmra.mxu0 %v6287
      %v6748 = vpop.f32.mrf.mxu0
      %v6749 = vadd.f32 %v6708, %v6748
      %v6750 = vpop.f32.mrf.mxu0
      %v6751 = vadd.f32 %v6710, %v6750
      %v6752 = vpop.f32.mrf.mxu0
      %v6753 = vpop.f32.mrf.mxu0
      %6754 = vdwg.mxu0
      %v6755 = vrot.slane %v6749, 4
      %v6756 = vadd.f32 %v6749, %v6755
      %v6757 = vrot.slane %v6756, 2
      %v6758 = vadd.f32 %v6756, %v6757
      %v6759 = vrot.slane %v6758, 1
      %v6760 = vadd.f32 %v6758, %v6759
      %v6761 = vrot.slane %v6751, 4
      %v6762 = vadd.f32 %v6751, %v6761
      %v6763 = vrot.slane %v6762, 2
      %v6764 = vadd.f32 %v6762, %v6763
      %v6765 = vrot.slane %v6764, 1
      %v6766 = vadd.f32 %v6764, %v6765
      %v6767 = vmul.f32 %v6760, %v5110
      %v6768 = vmul.f32 %v6766, %v5110
      %v6769 = vsub.f32 %v6749, %v6767
      %v6770 = vsub.f32 %v6751, %v6768
      %v6771 = vmul.f32 %v6769, %v6769
      %v6772 = vmul.f32 %v6770, %v6770
      %v6773 = vrot.slane %v6771, 4
      %v6774 = vadd.f32 %v6771, %v6773
      %v6775 = vrot.slane %v6774, 2
      %v6776 = vadd.f32 %v6774, %v6775
      %v6777 = vrot.slane %v6776, 1
      %v6778 = vadd.f32 %v6776, %v6777
      %v6779 = vrot.slane %v6772, 4
      %v6780 = vadd.f32 %v6772, %v6779
      %v6781 = vrot.slane %v6780, 2
      %v6782 = vadd.f32 %v6780, %v6781
      %v6783 = vrot.slane %v6782, 1
      %v6784 = vadd.f32 %v6782, %v6783
      %v6785 = vmul.f32 %v6778, %v5110
      %v6786 = vmul.f32 %v6784, %v5110
      %v6787 = vadd.f32 %v6785, 1e-05
      %v6788 = vadd.f32 %v6786, 1e-05
      %v6789 = vrsqrt.pop %v6787
      %v6790 = vrsqrt.pop %v6788
      %v6791 = vmul.f32 %v6769, %v6789
      %v6792 = vmul.f32 %v6770, %v6790
      %6793 = vst [vmem:[#allocation8] sm:$0xff] %v6791
      %6794 = vst [vmem:[#allocation8 + $0x8] sm:$0xff] %v6792
    $region57: #{tpu_custom_call.1} parent=1 // pred_fallthru
      _
    // Predicated region
    $region58: #{tpu_custom_call.1} parent=1 // pred_check
      _
    $region59: #{tpu_custom_call.1} parent=1 // pred_check_branch
      %6796 = sbr.rel (0) target = $region61
    $region60: #{tpu_custom_call.1} parent=1 // pred_region
      %s6798 = ssub.s32 256, 256
      %6799 = vsyncadd [#allocation4], %s6798
      %s6801 = sshll.u32 [#allocation8], 4
      %s6802 = int_to_ptr.vmem [resolvable:$true] %s6801
      %6804 = dma.vmem_to_hbm [thread:$0]  %s6802, 256, %s9, [#allocation4]
    $region61: #{tpu_custom_call.1} parent=1 // pred_fallthru
      _
    // Predicated region
    $region62: #{tpu_custom_call.1} parent=1 // pred_check
      _
    $region63: #{tpu_custom_call.1} parent=1 // pred_check_branch
      %6806 = sbr.rel (0) target = $region65
    $region64: #{tpu_custom_call.1} parent=1 // pred_region
      %s6808 = ssub.s32 128, 128
      %6809 = vsyncadd [#allocation10], %s6808
      %s6811 = sshll.u32 [#allocation9], 4
      %s6812 = int_to_ptr.vmem [resolvable:$true] %s6811
      %6814 = dma.vmem_to_hbm [thread:$0]  %s6812, 128, %s10, [#allocation10]
    $region65: #{tpu_custom_call.1} parent=1 // pred_fallthru
      _
    // Predicated region
    $region66: #{tpu_custom_call.1} parent=1 // pred_check
      _
    $region67: #{tpu_custom_call.1} parent=1 // pred_check_branch
      %6816 = sbr.rel (0) target = $region69
    $region68: #{tpu_custom_call.1} parent=1 // pred_region
      %6817 = dma.done [#allocation4], 256
    $region69: #{tpu_custom_call.1} parent=1 // pred_fallthru
      _
    // Predicated region
    $region70: #{tpu_custom_call.1} parent=1 // pred_check
      _
    $region71: #{tpu_custom_call.1} parent=1 // pred_check_branch
      %6819 = sbr.rel (0) target = $region73
    $region72: #{tpu_custom_call.1} parent=1 // pred_region
      %6820 = dma.done [#allocation10], 128
    $region73: #{tpu_custom_call.1} parent=1 // pred_fallthru
      _
    %6821 = vsyncpa [#allocation3], 1
    %6822 = vsyncpa [#allocation6], 1
    %6823 = vsyncpa [#allocation4], 1
    %6824 = vsyncpa [#allocation10], 1

</llo_original>
